<compile_context>
chip_gen: v7x
topology: tpu7x:2x2x1
jax: 0.10.0
libtpu: 0.0.40
codegen_flags: <defaults>
</compile_context>

<pallas_src>
import math
from functools import partial

import jax
import jax.numpy as jnp
from jax import lax
from jax.experimental import pallas as pl
from jax.experimental.pallas import tpu as pltpu


CFG = [8, "M", 16, 16, "M"]   # small VGG-style feature config
CPAD = 128                    # lane-tile channel padding for carried activations


# ----------------------------------------------------------------------------
# In-kernel building blocks (trace-time helpers on VMEM values / refs).
# ----------------------------------------------------------------------------
def _conv3x3_relu(x, w_ref, b_ref, pad_ref):
    """3x3 same-padding conv + bias + ReLU on one image.

    x      : (H, W, Cin) f32 value (Cin = real input channels for conv #1,
             CPAD afterwards; the padding channels are exactly zero).
    w_ref  : (9, Cin, CPAD) ref, tap-major: w_ref[dy*3+dx, ci, co]
             == torch_weight[co, ci, dy, dx] (zero-padded in ci / co).
    b_ref  : (1, CPAD) ref (zero-padded).
    pad_ref: (H+2, W+16, Cin) VMEM scratch; interior at row offset 1 and
             sublane-aligned column offset 8.
    Returns (H, W, CPAD) f32 value.
    """
    h, w, cin = x.shape
    wp = pad_ref.shape[1]              # W + 16 (multiple of 8)
    cout = w_ref.shape[-1]             # CPAD

    # Zero ONLY the halo ring; the interior is fully overwritten right after.
    # Must run every grid step: with dimension_semantics=("parallel",) the
    # second TensorCore on v7x never executes step 0, so persistent scratch
    # cannot rely on a one-time init.
    zrow = jnp.zeros((1, wp, cin), jnp.float32)
    pad_ref[0:1, :, :] = zrow
    pad_ref[h + 1:h + 2, :, :] = zrow
    zcol = jnp.zeros((h, 8, cin), jnp.float32)
    pad_ref[1:h + 1, 0:8, :] = zcol
    pad_ref[1:h + 1, w + 8:w + 16, :] = zcol
    pad_ref[1:h + 1, 8:w + 8, :] = x                 # aligned interior store

    acc = None
    for dy in range(3):
        # One aligned load of the dy row-slab; (h, wp, c) -> (h*wp, c) is a
        # layout no-op because wp is a multiple of 8.
        slab = pad_ref[dy:dy + h, :, :].reshape(h * wp, cin)
        for dx in range(3):
            if dx == 1:
                src = slab
            else:
                # tap(y, j) needs padded column j + 7 + dx; rolling by
                # (1 - dx) mod (h*wp) brings it under the 8-aligned window
                # [8 : 8 + w); wrapped elements land outside that window.
                src = pltpu.roll(slab, shift=(1 - dx) % (h * wp), axis=0)
            tap = src.reshape(h, wp, cin)[:, 8:8 + w, :].reshape(h * w, cin)
            contrib = jnp.dot(tap, w_ref[dy * 3 + dx],
                              preferred_element_type=jnp.float32)      # MXU
            acc = contrib if acc is None else acc + contrib
    acc = jnp.maximum(acc + b_ref[...], 0.0)                  # bias + ReLU
    return acc.reshape(h, w, cout)


def _maxpool2x2(x):
    """x: (H, W, C) -> (H/2, W/2, C), 2x2 window, stride 2."""
    h, w, c = x.shape
    x = x.reshape(h // 2, 2, w, c)
    x = jnp.maximum(x[:, 0], x[:, 1])                         # pool over H
    x = x.reshape(h // 2, w // 2, 2, c)
    return jnp.maximum(x[:, :, 0, :], x[:, :, 1, :])          # pool over W


def _make_trunk_kernel(cfg, out_channels, imgs_per_step):
    """Build the fused-trunk kernel for a given cfg (ints and 'M')."""
    n_conv = sum(1 for v in cfg if v != "M")

    def kernel(*refs):
        # refs = [x, w1, b1, ..., wK, bK, out, pad1, ..., padK]
        x_ref = refs[0]
        par = refs[1:1 + 2 * n_conv]
        o_ref = refs[1 + 2 * n_conv]
        pad_refs = refs[2 + 2 * n_conv:]

        for b in range(imgs_per_step):            # unrolled at trace time
            x = x_ref[b]                          # (H, W, Cin) for this image
            ci = 0
            for v in cfg:
                if v == "M":
                    x = _maxpool2x2(x)
                else:
                    x = _conv3x3_relu(x, par[2 * ci], par[2 * ci + 1],
                                      pad_refs[ci])
                    ci += 1
            # Only the real channels go back to HBM.
            o_ref[b] = x[:, :, :out_channels]

    return kernel


# ----------------------------------------------------------------------------
# Parameters.  init matches the PyTorch __init__ re-init:
#   weight ~ N(0, sqrt(2 / (kh*kw*out_channels))), bias = 0.
# ----------------------------------------------------------------------------
def init_vgg_params(key, in_channels, cfg):
    """PyTorch-layout params: [(w (Cout, Cin, 3, 3), b (Cout,)), ...]."""
    params = []
    cin = in_channels
    for v in cfg:
        if v == "M":
            continue
        key, wk = jax.random.split(key)
        n = 3 * 3 * v
        w = jax.random.normal(wk, (v, cin, 3, 3), jnp.float32) * math.sqrt(2.0 / n)
        b = jnp.zeros((v,), jnp.float32)
        params.append((w, b))
        cin = v
    return params


def pack_params_for_kernel(params, in_channels, cfg, cpad=CPAD):
    """Repack torch (Cout, Cin, 3, 3) weights into the kernel's tap-major,
    channel-padded layout (9, Cin_carried, cpad) and bias (1, cpad).

    Conv #1 keeps the real input-channel count (the image arrives with Cin
    lanes from HBM); later convs consume the cpad-wide activations whose
    padding channels are exactly zero, so the padded weight rows are zero."""
    packed = []
    cin_carried = in_channels
    for w, b in params:
        cout, cin, kh, kw = w.shape
        assert (kh, kw) == (3, 3) and cout <= cpad and cin <= cin_carried
        w9 = jnp.transpose(w, (2, 3, 1, 0)).reshape(9, cin, cout)   # tap-major
        wk = jnp.zeros((9, cin_carried, cpad), jnp.float32)
        wk = wk.at[:, :cin, :cout].set(w9)
        bk = jnp.zeros((1, cpad), jnp.float32).at[0, :cout].set(b)
        packed.append((wk, bk))
        cin_carried = cpad
    return packed


# ----------------------------------------------------------------------------
# Forward.  The fused kernel runs NHWC so channels map to the TPU lane dim.
# ----------------------------------------------------------------------------
def vgg_no_fc_forward_nhwc(x_nhwc, kernel_params, cfg, imgs_per_step=None):
    """Fused VGG trunk, NHWC in / NHWC out (no layout glue around the kernel)."""
    n, h, w, cin = x_nhwc.shape
    if imgs_per_step is None:
        # >= 2 grid steps whenever possible (feeds both v7x TensorCores) while
        # folding images per step to amortize the ~0.35us/step cost on the
        # single-TensorCore v5e/v6e.
        imgs_per_step = n // 2 if (n >= 2 and n % 2 == 0) else 1
    assert n % imgs_per_step == 0
    grid = (n // imgs_per_step,)

    # Walk cfg to derive per-conv halo-scratch shapes and the output shape.
    scratch_shapes = []
    hh, ww, ch = h, w, cin
    out_ch = cin
    for v in cfg:
        if v == "M":
            hh //= 2
            ww //= 2
        else:
            scratch_shapes.append(pltpu.VMEM((hh + 2, ww + 16, ch), jnp.float32))
            ch = CPAD
            out_ch = v

    in_specs = [pl.BlockSpec((imgs_per_step, h, w, cin), lambda i: (i, 0, 0, 0))]
    flat_params = []
    for wk, bk in kernel_params:
        flat_params += [wk, bk]
        in_specs += [pl.BlockSpec(wk.shape, lambda i: (0, 0, 0)),
                     pl.BlockSpec(bk.shape, lambda i: (0, 0))]

    return pl.pallas_call(
        _make_trunk_kernel(cfg, out_ch, imgs_per_step),
        out_shape=jax.ShapeDtypeStruct((n, hh, ww, out_ch), jnp.float32),
        grid=grid,
        in_specs=in_specs,
        out_specs=pl.BlockSpec((imgs_per_step, hh, ww, out_ch),
                               lambda i: (i, 0, 0, 0)),
        scratch_shapes=scratch_shapes,
        compiler_params=pltpu.CompilerParams(
            dimension_semantics=("parallel",)),
    )(x_nhwc, *flat_params)


def vgg_no_fc_forward(x_nchw, kernel_params, cfg, imgs_per_step=None):
    """PyTorch-layout (NCHW) wrapper.  The two transposes are pure layout glue
    (an HBM round trip each); layout-flexible callers should use
    vgg_no_fc_forward_nhwc directly."""
    x_nhwc = jnp.transpose(x_nchw, (0, 2, 3, 1)).astype(jnp.float32)
    y = vgg_no_fc_forward_nhwc(x_nhwc, kernel_params, cfg, imgs_per_step)
    return jnp.transpose(y, (0, 3, 1, 2))


# ----------------------------------------------------------------------------
# Pure-XLA reference (same math) for validation.
# ----------------------------------------------------------------------------
def vgg_ref_nchw(x, params, cfg):
    y = x
    i = 0
    for v in cfg:
        if v == "M":
            y = lax.reduce_window(y, -jnp.inf, lax.max,
                                  (1, 1, 2, 2), (1, 1, 2, 2), "VALID")
        else:
            w, b = params[i]
            i += 1
            y = lax.conv_general_dilated(
                y, w, window_strides=(1, 1), padding=((1, 1), (1, 1)),
                dimension_numbers=("NCHW", "OIHW", "NCHW"),
                precision=lax.Precision.HIGHEST)
            y = jnp.maximum(y + b[None, :, None, None], 0.0)
    return y


if __name__ == "__main__":
    key = jax.random.PRNGKey(0)
    key, xk = jax.random.split(key)

    # Small NCHW input consistent with the module's conv-stack forward.
    x = jax.random.normal(xk, (2, 4, 16, 16), jnp.float32)
    params = init_vgg_params(key, in_channels=4, cfg=CFG)
    kparams = pack_params_for_kernel(params, in_channels=4, cfg=CFG)

    fwd = jax.jit(partial(vgg_no_fc_forward, cfg=CFG))
    out = jax.block_until_ready(fwd(x, kparams))

    # [8,'M',16,16,'M'] on a 16x16 input -> (2, 16, 4, 4), finite, >= 0.
    assert out.shape == (2, 16, 4, 4), out.shape
    assert bool(jnp.all(jnp.isfinite(out)))
    assert bool(jnp.all(out >= 0.0))

    # Numerical check against the XLA reference.  The tolerance only absorbs
    # MXU-vs-XLA f32 accumulation differences; tap/layout bugs give O(1) error.
    ref = vgg_ref_nchw(x, params, CFG)
    max_err = float(jnp.max(jnp.abs(out - ref)))
    assert max_err < 1e-1, f"max |pallas - ref| = {max_err}"

    print("KERNEL_OK")
</pallas_src>

<mosaic_0001>
module attributes {stable_mosaic.version = 11 : i64} {
  func.func @kernel(%arg0: i32, %arg1: memref<1x16x16x4xf32, #tpu.memory_space<vmem>>, %arg2: memref<9x4x128xf32, #tpu.memory_space<vmem>>, %arg3: memref<1x128xf32, #tpu.memory_space<vmem>>, %arg4: memref<9x128x128xf32, #tpu.memory_space<vmem>>, %arg5: memref<1x128xf32, #tpu.memory_space<vmem>>, %arg6: memref<9x128x128xf32, #tpu.memory_space<vmem>>, %arg7: memref<1x128xf32, #tpu.memory_space<vmem>>, %arg8: memref<1x4x4x16xf32, #tpu.memory_space<vmem>>, %arg9: memref<18x32x4xf32, #tpu.memory_space<vmem>>, %arg10: memref<10x24x128xf32, #tpu.memory_space<vmem>>, %arg11: memref<10x24x128xf32, #tpu.memory_space<vmem>>) attributes {dimension_semantics = [#tpu.dimension_semantics<parallel>], iteration_bounds = array<i64: 2>, scalar_prefetch = 0 : i64, scratch_operands = 3 : i64, tpu.core_type = #tpu.core_type<tc>, window_params = [{transform_indices = @transform_0, window_bounds = array<i64: 1, 16, 16, 4>}, {pipeline_mode = #tpu.pipeline_mode<synchronous>, transform_indices = @transform_1, window_bounds = array<i64: 9, 4, 128>}, {pipeline_mode = #tpu.pipeline_mode<synchronous>, transform_indices = @transform_2, window_bounds = array<i64: 1, 128>}, {pipeline_mode = #tpu.pipeline_mode<synchronous>, transform_indices = @transform_3, window_bounds = array<i64: 9, 128, 128>}, {pipeline_mode = #tpu.pipeline_mode<synchronous>, transform_indices = @transform_4, window_bounds = array<i64: 1, 128>}, {pipeline_mode = #tpu.pipeline_mode<synchronous>, transform_indices = @transform_5, window_bounds = array<i64: 9, 128, 128>}, {pipeline_mode = #tpu.pipeline_mode<synchronous>, transform_indices = @transform_6, window_bounds = array<i64: 1, 128>}, {transform_indices = @transform_7, window_bounds = array<i64: 1, 4, 4, 16>}]} {
    %c0 = arith.constant 0 : index
    %c0_0 = arith.constant 0 : index
    %c0_1 = arith.constant 0 : index
    %c0_2 = arith.constant 0 : index
    %0 = vector.load %arg1[%c0, %c0_0, %c0_1, %c0_2] : memref<1x16x16x4xf32, #tpu.memory_space<vmem>>, vector<1x16x16x4xf32>
    %1 = vector.shape_cast %0 : vector<1x16x16x4xf32> to vector<16x16x4xf32>
    %cst = arith.constant 0.000000e+00 : f32
    %2 = vector.broadcast %cst : f32 to vector<1x32x4xf32>
    %c0_3 = arith.constant 0 : index
    %c0_4 = arith.constant 0 : index
    %c0_5 = arith.constant 0 : index
    %3 = vector.load %arg9[%c0_3, %c0_4, %c0_5] : memref<18x32x4xf32, #tpu.memory_space<vmem>>, vector<1x32x4xf32>
    tpu.vector_store %arg9[%c0_3, %c0_4, %c0_5], %2 {strides = array<i32>} : memref<18x32x4xf32, #tpu.memory_space<vmem>>, vector<1x32x4xf32>,
    %c17 = arith.constant 17 : index
    %c0_6 = arith.constant 0 : index
    %c0_7 = arith.constant 0 : index
    %4 = vector.load %arg9[%c17, %c0_6, %c0_7] : memref<18x32x4xf32, #tpu.memory_space<vmem>>, vector<1x32x4xf32>
    tpu.vector_store %arg9[%c17, %c0_6, %c0_7], %2 {strides = array<i32>} : memref<18x32x4xf32, #tpu.memory_space<vmem>>, vector<1x32x4xf32>,
    %cst_8 = arith.constant 0.000000e+00 : f32
    %5 = vector.broadcast %cst_8 : f32 to vector<16x8x4xf32>
    %c1 = arith.constant 1 : index
    %c0_9 = arith.constant 0 : index
    %c0_10 = arith.constant 0 : index
    %6 = vector.load %arg9[%c1, %c0_9, %c0_10] : memref<18x32x4xf32, #tpu.memory_space<vmem>>, vector<16x8x4xf32>
    tpu.vector_store %arg9[%c1, %c0_9, %c0_10], %5 {strides = array<i32>} : memref<18x32x4xf32, #tpu.memory_space<vmem>>, vector<16x8x4xf32>,
    %c1_11 = arith.constant 1 : index
    %c24 = arith.constant 24 : index
    %c0_12 = arith.constant 0 : index
    %7 = vector.load %arg9[%c1_11, %c24, %c0_12] : memref<18x32x4xf32, #tpu.memory_space<vmem>>, vector<16x8x4xf32>
    tpu.vector_store %arg9[%c1_11, %c24, %c0_12], %5 {strides = array<i32>} : memref<18x32x4xf32, #tpu.memory_space<vmem>>, vector<16x8x4xf32>,
    %c1_13 = arith.constant 1 : index
    %c8 = arith.constant 8 : index
    %c0_14 = arith.constant 0 : index
    %8 = vector.load %arg9[%c1_13, %c8, %c0_14] : memref<18x32x4xf32, #tpu.memory_space<vmem>>, vector<16x16x4xf32>
    tpu.vector_store %arg9[%c1_13, %c8, %c0_14], %1 {strides = array<i32>} : memref<18x32x4xf32, #tpu.memory_space<vmem>>, vector<16x16x4xf32>,
    %c0_15 = arith.constant 0 : index
    %c0_16 = arith.constant 0 : index
    %c0_17 = arith.constant 0 : index
    %9 = vector.load %arg9[%c0_15, %c0_16, %c0_17] : memref<18x32x4xf32, #tpu.memory_space<vmem>>, vector<16x32x4xf32>
    %10 = vector.shape_cast %9 : vector<16x32x4xf32> to vector<512x4xf32>
    %c1_i32 = arith.constant 1 : i32
    %11 = tpu.dynamic_rotate %10 by %c1_i32 dim 0 : vector<512x4xf32>, i32 -> vector<512x4xf32>
    %12 = vector.shape_cast %11 : vector<512x4xf32> to vector<16x32x4xf32>
    %13 = vector.extract_strided_slice %12 {offsets = [0, 8, 0], sizes = [16, 16, 4], strides = [1, 1, 1]} : vector<16x32x4xf32> to vector<16x16x4xf32>
    %14 = vector.shape_cast %13 : vector<16x16x4xf32> to vector<256x4xf32>
    %c0_18 = arith.constant 0 : index
    %c0_19 = arith.constant 0 : index
    %c0_20 = arith.constant 0 : index
    %15 = vector.load %arg2[%c0_18, %c0_19, %c0_20] : memref<9x4x128xf32, #tpu.memory_space<vmem>>, vector<1x4x128xf32>
    %16 = vector.shape_cast %15 : vector<1x4x128xf32> to vector<4x128xf32>
    %cst_21 = arith.constant dense<0.000000e+00> : vector<256x128xf32>
    %17 = tpu.matmul %14, %16, %cst_21 {dimension_numbers = #tpu.dot_dimension_numbers<[1], [0], [0], [1], [0, 0, 1, 1], [], []>} : vector<256x4xf32>, vector<4x128xf32>, vector<256x128xf32> -> vector<256x128xf32>
    %18 = vector.shape_cast %10 : vector<512x4xf32> to vector<16x32x4xf32>
    %19 = vector.extract_strided_slice %18 {offsets = [0, 8, 0], sizes = [16, 16, 4], strides = [1, 1, 1]} : vector<16x32x4xf32> to vector<16x16x4xf32>
    %20 = vector.shape_cast %19 : vector<16x16x4xf32> to vector<256x4xf32>
    %c1_22 = arith.constant 1 : index
    %c0_23 = arith.constant 0 : index
    %c0_24 = arith.constant 0 : index
    %21 = vector.load %arg2[%c1_22, %c0_23, %c0_24] : memref<9x4x128xf32, #tpu.memory_space<vmem>>, vector<1x4x128xf32>
    %22 = vector.shape_cast %21 : vector<1x4x128xf32> to vector<4x128xf32>
    %cst_25 = arith.constant dense<0.000000e+00> : vector<256x128xf32>
    %23 = tpu.matmul %20, %22, %cst_25 {dimension_numbers = #tpu.dot_dimension_numbers<[1], [0], [0], [1], [0, 0, 1, 1], [], []>} : vector<256x4xf32>, vector<4x128xf32>, vector<256x128xf32> -> vector<256x128xf32>
    %24 = arith.addf %17, %23 : vector<256x128xf32>
    %c511_i32 = arith.constant 511 : i32
    %25 = tpu.dynamic_rotate %10 by %c511_i32 dim 0 : vector<512x4xf32>, i32 -> vector<512x4xf32>
    %26 = vector.shape_cast %25 : vector<512x4xf32> to vector<16x32x4xf32>
    %27 = vector.extract_strided_slice %26 {offsets = [0, 8, 0], sizes = [16, 16, 4], strides = [1, 1, 1]} : vector<16x32x4xf32> to vector<16x16x4xf32>
    %28 = vector.shape_cast %27 : vector<16x16x4xf32> to vector<256x4xf32>
    %c2 = arith.constant 2 : index
    %c0_26 = arith.constant 0 : index
    %c0_27 = arith.constant 0 : index
    %29 = vector.load %arg2[%c2, %c0_26, %c0_27] : memref<9x4x128xf32, #tpu.memory_space<vmem>>, vector<1x4x128xf32>
    %30 = vector.shape_cast %29 : vector<1x4x128xf32> to vector<4x128xf32>
    %cst_28 = arith.constant dense<0.000000e+00> : vector<256x128xf32>
    %31 = tpu.matmul %28, %30, %cst_28 {dimension_numbers = #tpu.dot_dimension_numbers<[1], [0], [0], [1], [0, 0, 1, 1], [], []>} : vector<256x4xf32>, vector<4x128xf32>, vector<256x128xf32> -> vector<256x128xf32>
    %32 = arith.addf %24, %31 : vector<256x128xf32>
    %c1_29 = arith.constant 1 : index
    %c0_30 = arith.constant 0 : index
    %c0_31 = arith.constant 0 : index
    %33 = vector.load %arg9[%c1_29, %c0_30, %c0_31] : memref<18x32x4xf32, #tpu.memory_space<vmem>>, vector<16x32x4xf32>
    %34 = vector.shape_cast %33 : vector<16x32x4xf32> to vector<512x4xf32>
    %c1_i32_32 = arith.constant 1 : i32
    %35 = tpu.dynamic_rotate %34 by %c1_i32_32 dim 0 : vector<512x4xf32>, i32 -> vector<512x4xf32>
    %36 = vector.shape_cast %35 : vector<512x4xf32> to vector<16x32x4xf32>
    %37 = vector.extract_strided_slice %36 {offsets = [0, 8, 0], sizes = [16, 16, 4], strides = [1, 1, 1]} : vector<16x32x4xf32> to vector<16x16x4xf32>
    %38 = vector.shape_cast %37 : vector<16x16x4xf32> to vector<256x4xf32>
    %c3 = arith.constant 3 : index
    %c0_33 = arith.constant 0 : index
    %c0_34 = arith.constant 0 : index
    %39 = vector.load %arg2[%c3, %c0_33, %c0_34] : memref<9x4x128xf32, #tpu.memory_space<vmem>>, vector<1x4x128xf32>
    %40 = vector.shape_cast %39 : vector<1x4x128xf32> to vector<4x128xf32>
    %cst_35 = arith.constant dense<0.000000e+00> : vector<256x128xf32>
    %41 = tpu.matmul %38, %40, %cst_35 {dimension_numbers = #tpu.dot_dimension_numbers<[1], [0], [0], [1], [0, 0, 1, 1], [], []>} : vector<256x4xf32>, vector<4x128xf32>, vector<256x128xf32> -> vector<256x128xf32>
    %42 = arith.addf %32, %41 : vector<256x128xf32>
    %43 = vector.shape_cast %34 : vector<512x4xf32> to vector<16x32x4xf32>
    %44 = vector.extract_strided_slice %43 {offsets = [0, 8, 0], sizes = [16, 16, 4], strides = [1, 1, 1]} : vector<16x32x4xf32> to vector<16x16x4xf32>
    %45 = vector.shape_cast %44 : vector<16x16x4xf32> to vector<256x4xf32>
    %c4 = arith.constant 4 : index
    %c0_36 = arith.constant 0 : index
    %c0_37 = arith.constant 0 : index
    %46 = vector.load %arg2[%c4, %c0_36, %c0_37] : memref<9x4x128xf32, #tpu.memory_space<vmem>>, vector<1x4x128xf32>
    %47 = vector.shape_cast %46 : vector<1x4x128xf32> to vector<4x128xf32>
    %cst_38 = arith.constant dense<0.000000e+00> : vector<256x128xf32>
    %48 = tpu.matmul %45, %47, %cst_38 {dimension_numbers = #tpu.dot_dimension_numbers<[1], [0], [0], [1], [0, 0, 1, 1], [], []>} : vector<256x4xf32>, vector<4x128xf32>, vector<256x128xf32> -> vector<256x128xf32>
    %49 = arith.addf %42, %48 : vector<256x128xf32>
    %c511_i32_39 = arith.constant 511 : i32
    %50 = tpu.dynamic_rotate %34 by %c511_i32_39 dim 0 : vector<512x4xf32>, i32 -> vector<512x4xf32>
    %51 = vector.shape_cast %50 : vector<512x4xf32> to vector<16x32x4xf32>
    %52 = vector.extract_strided_slice %51 {offsets = [0, 8, 0], sizes = [16, 16, 4], strides = [1, 1, 1]} : vector<16x32x4xf32> to vector<16x16x4xf32>
    %53 = vector.shape_cast %52 : vector<16x16x4xf32> to vector<256x4xf32>
    %c5 = arith.constant 5 : index
    %c0_40 = arith.constant 0 : index
    %c0_41 = arith.constant 0 : index
    %54 = vector.load %arg2[%c5, %c0_40, %c0_41] : memref<9x4x128xf32, #tpu.memory_space<vmem>>, vector<1x4x128xf32>
    %55 = vector.shape_cast %54 : vector<1x4x128xf32> to vector<4x128xf32>
    %cst_42 = arith.constant dense<0.000000e+00> : vector<256x128xf32>
    %56 = tpu.matmul %53, %55, %cst_42 {dimension_numbers = #tpu.dot_dimension_numbers<[1], [0], [0], [1], [0, 0, 1, 1], [], []>} : vector<256x4xf32>, vector<4x128xf32>, vector<256x128xf32> -> vector<256x128xf32>
    %57 = arith.addf %49, %56 : vector<256x128xf32>
    %c2_43 = arith.constant 2 : index
    %c0_44 = arith.constant 0 : index
    %c0_45 = arith.constant 0 : index
    %58 = vector.load %arg9[%c2_43, %c0_44, %c0_45] : memref<18x32x4xf32, #tpu.memory_space<vmem>>, vector<16x32x4xf32>
    %59 = vector.shape_cast %58 : vector<16x32x4xf32> to vector<512x4xf32>
    %c1_i32_46 = arith.constant 1 : i32
    %60 = tpu.dynamic_rotate %59 by %c1_i32_46 dim 0 : vector<512x4xf32>, i32 -> vector<512x4xf32>
    %61 = vector.shape_cast %60 : vector<512x4xf32> to vector<16x32x4xf32>
    %62 = vector.extract_strided_slice %61 {offsets = [0, 8, 0], sizes = [16, 16, 4], strides = [1, 1, 1]} : vector<16x32x4xf32> to vector<16x16x4xf32>
    %63 = vector.shape_cast %62 : vector<16x16x4xf32> to vector<256x4xf32>
    %c6 = arith.constant 6 : index
    %c0_47 = arith.constant 0 : index
    %c0_48 = arith.constant 0 : index
    %64 = vector.load %arg2[%c6, %c0_47, %c0_48] : memref<9x4x128xf32, #tpu.memory_space<vmem>>, vector<1x4x128xf32>
    %65 = vector.shape_cast %64 : vector<1x4x128xf32> to vector<4x128xf32>
    %cst_49 = arith.constant dense<0.000000e+00> : vector<256x128xf32>
    %66 = tpu.matmul %63, %65, %cst_49 {dimension_numbers = #tpu.dot_dimension_numbers<[1], [0], [0], [1], [0, 0, 1, 1], [], []>} : vector<256x4xf32>, vector<4x128xf32>, vector<256x128xf32> -> vector<256x128xf32>
    %67 = arith.addf %57, %66 : vector<256x128xf32>
    %68 = vector.shape_cast %59 : vector<512x4xf32> to vector<16x32x4xf32>
    %69 = vector.extract_strided_slice %68 {offsets = [0, 8, 0], sizes = [16, 16, 4], strides = [1, 1, 1]} : vector<16x32x4xf32> to vector<16x16x4xf32>
    %70 = vector.shape_cast %69 : vector<16x16x4xf32> to vector<256x4xf32>
    %c7 = arith.constant 7 : index
    %c0_50 = arith.constant 0 : index
    %c0_51 = arith.constant 0 : index
    %71 = vector.load %arg2[%c7, %c0_50, %c0_51] : memref<9x4x128xf32, #tpu.memory_space<vmem>>, vector<1x4x128xf32>
    %72 = vector.shape_cast %71 : vector<1x4x128xf32> to vector<4x128xf32>
    %cst_52 = arith.constant dense<0.000000e+00> : vector<256x128xf32>
    %73 = tpu.matmul %70, %72, %cst_52 {dimension_numbers = #tpu.dot_dimension_numbers<[1], [0], [0], [1], [0, 0, 1, 1], [], []>} : vector<256x4xf32>, vector<4x128xf32>, vector<256x128xf32> -> vector<256x128xf32>
    %74 = arith.addf %67, %73 : vector<256x128xf32>
    %c511_i32_53 = arith.constant 511 : i32
    %75 = tpu.dynamic_rotate %59 by %c511_i32_53 dim 0 : vector<512x4xf32>, i32 -> vector<512x4xf32>
    %76 = vector.shape_cast %75 : vector<512x4xf32> to vector<16x32x4xf32>
    %77 = vector.extract_strided_slice %76 {offsets = [0, 8, 0], sizes = [16, 16, 4], strides = [1, 1, 1]} : vector<16x32x4xf32> to vector<16x16x4xf32>
    %78 = vector.shape_cast %77 : vector<16x16x4xf32> to vector<256x4xf32>
    %c8_54 = arith.constant 8 : index
    %c0_55 = arith.constant 0 : index
    %c0_56 = arith.constant 0 : index
    %79 = vector.load %arg2[%c8_54, %c0_55, %c0_56] : memref<9x4x128xf32, #tpu.memory_space<vmem>>, vector<1x4x128xf32>
    %80 = vector.shape_cast %79 : vector<1x4x128xf32> to vector<4x128xf32>
    %cst_57 = arith.constant dense<0.000000e+00> : vector<256x128xf32>
    %81 = tpu.matmul %78, %80, %cst_57 {dimension_numbers = #tpu.dot_dimension_numbers<[1], [0], [0], [1], [0, 0, 1, 1], [], []>} : vector<256x4xf32>, vector<4x128xf32>, vector<256x128xf32> -> vector<256x128xf32>
    %82 = arith.addf %74, %81 : vector<256x128xf32>
    %c0_58 = arith.constant 0 : index
    %c0_59 = arith.constant 0 : index
    %83 = vector.load %arg3[%c0_58, %c0_59] : memref<1x128xf32, #tpu.memory_space<vmem>>, vector<1x128xf32>
    %84 = vector.broadcast %83 : vector<1x128xf32> to vector<256x128xf32>
    %85 = arith.addf %82, %84 : vector<256x128xf32>
    %cst_60 = arith.constant 0.000000e+00 : f32
    %86 = vector.broadcast %cst_60 : f32 to vector<256x128xf32>
    %87 = arith.maximumf %85, %86 : vector<256x128xf32>
    %88 = vector.shape_cast %87 : vector<256x128xf32> to vector<16x16x128xf32>
    %89 = vector.shape_cast %88 : vector<16x16x128xf32> to vector<8x2x16x128xf32>
    %90 = vector.extract_strided_slice %89 {offsets = [0, 0, 0, 0], sizes = [8, 1, 16, 128], strides = [1, 1, 1, 1]} : vector<8x2x16x128xf32> to vector<8x1x16x128xf32>
    %91 = vector.shape_cast %90 : vector<8x1x16x128xf32> to vector<8x16x128xf32>
    %92 = vector.extract_strided_slice %89 {offsets = [0, 1, 0, 0], sizes = [8, 1, 16, 128], strides = [1, 1, 1, 1]} : vector<8x2x16x128xf32> to vector<8x1x16x128xf32>
    %93 = vector.shape_cast %92 : vector<8x1x16x128xf32> to vector<8x16x128xf32>
    %94 = arith.maximumf %91, %93 : vector<8x16x128xf32>
    %95 = vector.shape_cast %94 : vector<8x16x128xf32> to vector<8x8x2x128xf32>
    %96 = vector.extract_strided_slice %95 {offsets = [0, 0, 0, 0], sizes = [8, 8, 1, 128], strides = [1, 1, 1, 1]} : vector<8x8x2x128xf32> to vector<8x8x1x128xf32>
    %97 = vector.shape_cast %96 : vector<8x8x1x128xf32> to vector<8x8x128xf32>
    %98 = vector.extract_strided_slice %95 {offsets = [0, 0, 1, 0], sizes = [8, 8, 1, 128], strides = [1, 1, 1, 1]} : vector<8x8x2x128xf32> to vector<8x8x1x128xf32>
    %99 = vector.shape_cast %98 : vector<8x8x1x128xf32> to vector<8x8x128xf32>
    %100 = arith.maximumf %97, %99 : vector<8x8x128xf32>
    %cst_61 = arith.constant 0.000000e+00 : f32
    %101 = vector.broadcast %cst_61 : f32 to vector<1x24x128xf32>
    %c0_62 = arith.constant 0 : index
    %c0_63 = arith.constant 0 : index
    %c0_64 = arith.constant 0 : index
    %102 = vector.load %arg10[%c0_62, %c0_63, %c0_64] : memref<10x24x128xf32, #tpu.memory_space<vmem>>, vector<1x24x128xf32>
    tpu.vector_store %arg10[%c0_62, %c0_63, %c0_64], %101 {strides = array<i32>} : memref<10x24x128xf32, #tpu.memory_space<vmem>>, vector<1x24x128xf32>,
    %c9 = arith.constant 9 : index
    %c0_65 = arith.constant 0 : index
    %c0_66 = arith.constant 0 : index
    %103 = vector.load %arg10[%c9, %c0_65, %c0_66] : memref<10x24x128xf32, #tpu.memory_space<vmem>>, vector<1x24x128xf32>
    tpu.vector_store %arg10[%c9, %c0_65, %c0_66], %101 {strides = array<i32>} : memref<10x24x128xf32, #tpu.memory_space<vmem>>, vector<1x24x128xf32>,
    %cst_67 = arith.constant 0.000000e+00 : f32
    %104 = vector.broadcast %cst_67 : f32 to vector<8x8x128xf32>
    %c1_68 = arith.constant 1 : index
    %c0_69 = arith.constant 0 : index
    %c0_70 = arith.constant 0 : index
    %105 = vector.load %arg10[%c1_68, %c0_69, %c0_70] : memref<10x24x128xf32, #tpu.memory_space<vmem>>, vector<8x8x128xf32>
    tpu.vector_store %arg10[%c1_68, %c0_69, %c0_70], %104 {strides = array<i32>} : memref<10x24x128xf32, #tpu.memory_space<vmem>>, vector<8x8x128xf32>,
    %c1_71 = arith.constant 1 : index
    %c16 = arith.constant 16 : index
    %c0_72 = arith.constant 0 : index
    %106 = vector.load %arg10[%c1_71, %c16, %c0_72] : memref<10x24x128xf32, #tpu.memory_space<vmem>>, vector<8x8x128xf32>
    tpu.vector_store %arg10[%c1_71, %c16, %c0_72], %104 {strides = array<i32>} : memref<10x24x128xf32, #tpu.memory_space<vmem>>, vector<8x8x128xf32>,
    %c1_73 = arith.constant 1 : index
    %c8_74 = arith.constant 8 : index
    %c0_75 = arith.constant 0 : index
    %107 = vector.load %arg10[%c1_73, %c8_74, %c0_75] : memref<10x24x128xf32, #tpu.memory_space<vmem>>, vector<8x8x128xf32>
    tpu.vector_store %arg10[%c1_73, %c8_74, %c0_75], %100 {strides = array<i32>} : memref<10x24x128xf32, #tpu.memory_space<vmem>>, vector<8x8x128xf32>,
    %c0_76 = arith.constant 0 : index
    %c0_77 = arith.constant 0 : index
    %c0_78 = arith.constant 0 : index
    %108 = vector.load %arg10[%c0_76, %c0_77, %c0_78] : memref<10x24x128xf32, #tpu.memory_space<vmem>>, vector<8x24x128xf32>
    %109 = vector.shape_cast %108 : vector<8x24x128xf32> to vector<192x128xf32>
    %c1_i32_79 = arith.constant 1 : i32
    %110 = tpu.dynamic_rotate %109 by %c1_i32_79 dim 0 : vector<192x128xf32>, i32 -> vector<192x128xf32>
    %111 = vector.shape_cast %110 : vector<192x128xf32> to vector<8x24x128xf32>
    %112 = vector.extract_strided_slice %111 {offsets = [0, 8, 0], sizes = [8, 8, 128], strides = [1, 1, 1]} : vector<8x24x128xf32> to vector<8x8x128xf32>
    %113 = vector.shape_cast %112 : vector<8x8x128xf32> to vector<64x128xf32>
    %c0_80 = arith.constant 0 : index
    %c0_81 = arith.constant 0 : index
    %c0_82 = arith.constant 0 : index
    %114 = vector.load %arg4[%c0_80, %c0_81, %c0_82] : memref<9x128x128xf32, #tpu.memory_space<vmem>>, vector<1x128x128xf32>
    %115 = vector.shape_cast %114 : vector<1x128x128xf32> to vector<128x128xf32>
    %cst_83 = arith.constant dense<0.000000e+00> : vector<64x128xf32>
    %116 = tpu.matmul %113, %115, %cst_83 {dimension_numbers = #tpu.dot_dimension_numbers<[1], [0], [0], [1], [0, 0, 1, 1], [], []>} : vector<64x128xf32>, vector<128x128xf32>, vector<64x128xf32> -> vector<64x128xf32>
    %117 = vector.shape_cast %109 : vector<192x128xf32> to vector<8x24x128xf32>
    %118 = vector.extract_strided_slice %117 {offsets = [0, 8, 0], sizes = [8, 8, 128], strides = [1, 1, 1]} : vector<8x24x128xf32> to vector<8x8x128xf32>
    %119 = vector.shape_cast %118 : vector<8x8x128xf32> to vector<64x128xf32>
    %c1_84 = arith.constant 1 : index
    %c0_85 = arith.constant 0 : index
    %c0_86 = arith.constant 0 : index
    %120 = vector.load %arg4[%c1_84, %c0_85, %c0_86] : memref<9x128x128xf32, #tpu.memory_space<vmem>>, vector<1x128x128xf32>
    %121 = vector.shape_cast %120 : vector<1x128x128xf32> to vector<128x128xf32>
    %cst_87 = arith.constant dense<0.000000e+00> : vector<64x128xf32>
    %122 = tpu.matmul %119, %121, %cst_87 {dimension_numbers = #tpu.dot_dimension_numbers<[1], [0], [0], [1], [0, 0, 1, 1], [], []>} : vector<64x128xf32>, vector<128x128xf32>, vector<64x128xf32> -> vector<64x128xf32>
    %123 = arith.addf %116, %122 : vector<64x128xf32>
    %c191_i32 = arith.constant 191 : i32
    %124 = tpu.dynamic_rotate %109 by %c191_i32 dim 0 : vector<192x128xf32>, i32 -> vector<192x128xf32>
    %125 = vector.shape_cast %124 : vector<192x128xf32> to vector<8x24x128xf32>
    %126 = vector.extract_strided_slice %125 {offsets = [0, 8, 0], sizes = [8, 8, 128], strides = [1, 1, 1]} : vector<8x24x128xf32> to vector<8x8x128xf32>
    %127 = vector.shape_cast %126 : vector<8x8x128xf32> to vector<64x128xf32>
    %c2_88 = arith.constant 2 : index
    %c0_89 = arith.constant 0 : index
    %c0_90 = arith.constant 0 : index
    %128 = vector.load %arg4[%c2_88, %c0_89, %c0_90] : memref<9x128x128xf32, #tpu.memory_space<vmem>>, vector<1x128x128xf32>
    %129 = vector.shape_cast %128 : vector<1x128x128xf32> to vector<128x128xf32>
    %cst_91 = arith.constant dense<0.000000e+00> : vector<64x128xf32>
    %130 = tpu.matmul %127, %129, %cst_91 {dimension_numbers = #tpu.dot_dimension_numbers<[1], [0], [0], [1], [0, 0, 1, 1], [], []>} : vector<64x128xf32>, vector<128x128xf32>, vector<64x128xf32> -> vector<64x128xf32>
    %131 = arith.addf %123, %130 : vector<64x128xf32>
    %c1_92 = arith.constant 1 : index
    %c0_93 = arith.constant 0 : index
    %c0_94 = arith.constant 0 : index
    %132 = vector.load %arg10[%c1_92, %c0_93, %c0_94] : memref<10x24x128xf32, #tpu.memory_space<vmem>>, vector<8x24x128xf32>
    %133 = vector.shape_cast %132 : vector<8x24x128xf32> to vector<192x128xf32>
    %c1_i32_95 = arith.constant 1 : i32
    %134 = tpu.dynamic_rotate %133 by %c1_i32_95 dim 0 : vector<192x128xf32>, i32 -> vector<192x128xf32>
    %135 = vector.shape_cast %134 : vector<192x128xf32> to vector<8x24x128xf32>
    %136 = vector.extract_strided_slice %135 {offsets = [0, 8, 0], sizes = [8, 8, 128], strides = [1, 1, 1]} : vector<8x24x128xf32> to vector<8x8x128xf32>
    %137 = vector.shape_cast %136 : vector<8x8x128xf32> to vector<64x128xf32>
    %c3_96 = arith.constant 3 : index
    %c0_97 = arith.constant 0 : index
    %c0_98 = arith.constant 0 : index
    %138 = vector.load %arg4[%c3_96, %c0_97, %c0_98] : memref<9x128x128xf32, #tpu.memory_space<vmem>>, vector<1x128x128xf32>
    %139 = vector.shape_cast %138 : vector<1x128x128xf32> to vector<128x128xf32>
    %cst_99 = arith.constant dense<0.000000e+00> : vector<64x128xf32>
    %140 = tpu.matmul %137, %139, %cst_99 {dimension_numbers = #tpu.dot_dimension_numbers<[1], [0], [0], [1], [0, 0, 1, 1], [], []>} : vector<64x128xf32>, vector<128x128xf32>, vector<64x128xf32> -> vector<64x128xf32>
    %141 = arith.addf %131, %140 : vector<64x128xf32>
    %142 = vector.shape_cast %133 : vector<192x128xf32> to vector<8x24x128xf32>
    %143 = vector.extract_strided_slice %142 {offsets = [0, 8, 0], sizes = [8, 8, 128], strides = [1, 1, 1]} : vector<8x24x128xf32> to vector<8x8x128xf32>
    %144 = vector.shape_cast %143 : vector<8x8x128xf32> to vector<64x128xf32>
    %c4_100 = arith.constant 4 : index
    %c0_101 = arith.constant 0 : index
    %c0_102 = arith.constant 0 : index
    %145 = vector.load %arg4[%c4_100, %c0_101, %c0_102] : memref<9x128x128xf32, #tpu.memory_space<vmem>>, vector<1x128x128xf32>
    %146 = vector.shape_cast %145 : vector<1x128x128xf32> to vector<128x128xf32>
    %cst_103 = arith.constant dense<0.000000e+00> : vector<64x128xf32>
    %147 = tpu.matmul %144, %146, %cst_103 {dimension_numbers = #tpu.dot_dimension_numbers<[1], [0], [0], [1], [0, 0, 1, 1], [], []>} : vector<64x128xf32>, vector<128x128xf32>, vector<64x128xf32> -> vector<64x128xf32>
    %148 = arith.addf %141, %147 : vector<64x128xf32>
    %c191_i32_104 = arith.constant 191 : i32
    %149 = tpu.dynamic_rotate %133 by %c191_i32_104 dim 0 : vector<192x128xf32>, i32 -> vector<192x128xf32>
    %150 = vector.shape_cast %149 : vector<192x128xf32> to vector<8x24x128xf32>
    %151 = vector.extract_strided_slice %150 {offsets = [0, 8, 0], sizes = [8, 8, 128], strides = [1, 1, 1]} : vector<8x24x128xf32> to vector<8x8x128xf32>
    %152 = vector.shape_cast %151 : vector<8x8x128xf32> to vector<64x128xf32>
    %c5_105 = arith.constant 5 : index
    %c0_106 = arith.constant 0 : index
    %c0_107 = arith.constant 0 : index
    %153 = vector.load %arg4[%c5_105, %c0_106, %c0_107] : memref<9x128x128xf32, #tpu.memory_space<vmem>>, vector<1x128x128xf32>
    %154 = vector.shape_cast %153 : vector<1x128x128xf32> to vector<128x128xf32>
    %cst_108 = arith.constant dense<0.000000e+00> : vector<64x128xf32>
    %155 = tpu.matmul %152, %154, %cst_108 {dimension_numbers = #tpu.dot_dimension_numbers<[1], [0], [0], [1], [0, 0, 1, 1], [], []>} : vector<64x128xf32>, vector<128x128xf32>, vector<64x128xf32> -> vector<64x128xf32>
    %156 = arith.addf %148, %155 : vector<64x128xf32>
    %c2_109 = arith.constant 2 : index
    %c0_110 = arith.constant 0 : index
    %c0_111 = arith.constant 0 : index
    %157 = vector.load %arg10[%c2_109, %c0_110, %c0_111] : memref<10x24x128xf32, #tpu.memory_space<vmem>>, vector<8x24x128xf32>
    %158 = vector.shape_cast %157 : vector<8x24x128xf32> to vector<192x128xf32>
    %c1_i32_112 = arith.constant 1 : i32
    %159 = tpu.dynamic_rotate %158 by %c1_i32_112 dim 0 : vector<192x128xf32>, i32 -> vector<192x128xf32>
    %160 = vector.shape_cast %159 : vector<192x128xf32> to vector<8x24x128xf32>
    %161 = vector.extract_strided_slice %160 {offsets = [0, 8, 0], sizes = [8, 8, 128], strides = [1, 1, 1]} : vector<8x24x128xf32> to vector<8x8x128xf32>
    %162 = vector.shape_cast %161 : vector<8x8x128xf32> to vector<64x128xf32>
    %c6_113 = arith.constant 6 : index
    %c0_114 = arith.constant 0 : index
    %c0_115 = arith.constant 0 : index
    %163 = vector.load %arg4[%c6_113, %c0_114, %c0_115] : memref<9x128x128xf32, #tpu.memory_space<vmem>>, vector<1x128x128xf32>
    %164 = vector.shape_cast %163 : vector<1x128x128xf32> to vector<128x128xf32>
    %cst_116 = arith.constant dense<0.000000e+00> : vector<64x128xf32>
    %165 = tpu.matmul %162, %164, %cst_116 {dimension_numbers = #tpu.dot_dimension_numbers<[1], [0], [0], [1], [0, 0, 1, 1], [], []>} : vector<64x128xf32>, vector<128x128xf32>, vector<64x128xf32> -> vector<64x128xf32>
    %166 = arith.addf %156, %165 : vector<64x128xf32>
    %167 = vector.shape_cast %158 : vector<192x128xf32> to vector<8x24x128xf32>
    %168 = vector.extract_strided_slice %167 {offsets = [0, 8, 0], sizes = [8, 8, 128], strides = [1, 1, 1]} : vector<8x24x128xf32> to vector<8x8x128xf32>
    %169 = vector.shape_cast %168 : vector<8x8x128xf32> to vector<64x128xf32>
    %c7_117 = arith.constant 7 : index
    %c0_118 = arith.constant 0 : index
    %c0_119 = arith.constant 0 : index
    %170 = vector.load %arg4[%c7_117, %c0_118, %c0_119] : memref<9x128x128xf32, #tpu.memory_space<vmem>>, vector<1x128x128xf32>
    %171 = vector.shape_cast %170 : vector<1x128x128xf32> to vector<128x128xf32>
    %cst_120 = arith.constant dense<0.000000e+00> : vector<64x128xf32>
    %172 = tpu.matmul %169, %171, %cst_120 {dimension_numbers = #tpu.dot_dimension_numbers<[1], [0], [0], [1], [0, 0, 1, 1], [], []>} : vector<64x128xf32>, vector<128x128xf32>, vector<64x128xf32> -> vector<64x128xf32>
    %173 = arith.addf %166, %172 : vector<64x128xf32>
    %c191_i32_121 = arith.constant 191 : i32
    %174 = tpu.dynamic_rotate %158 by %c191_i32_121 dim 0 : vector<192x128xf32>, i32 -> vector<192x128xf32>
    %175 = vector.shape_cast %174 : vector<192x128xf32> to vector<8x24x128xf32>
    %176 = vector.extract_strided_slice %175 {offsets = [0, 8, 0], sizes = [8, 8, 128], strides = [1, 1, 1]} : vector<8x24x128xf32> to vector<8x8x128xf32>
    %177 = vector.shape_cast %176 : vector<8x8x128xf32> to vector<64x128xf32>
    %c8_122 = arith.constant 8 : index
    %c0_123 = arith.constant 0 : index
    %c0_124 = arith.constant 0 : index
    %178 = vector.load %arg4[%c8_122, %c0_123, %c0_124] : memref<9x128x128xf32, #tpu.memory_space<vmem>>, vector<1x128x128xf32>
    %179 = vector.shape_cast %178 : vector<1x128x128xf32> to vector<128x128xf32>
    %cst_125 = arith.constant dense<0.000000e+00> : vector<64x128xf32>
    %180 = tpu.matmul %177, %179, %cst_125 {dimension_numbers = #tpu.dot_dimension_numbers<[1], [0], [0], [1], [0, 0, 1, 1], [], []>} : vector<64x128xf32>, vector<128x128xf32>, vector<64x128xf32> -> vector<64x128xf32>
    %181 = arith.addf %173, %180 : vector<64x128xf32>
    %c0_126 = arith.constant 0 : index
    %c0_127 = arith.constant 0 : index
    %182 = vector.load %arg5[%c0_126, %c0_127] : memref<1x128xf32, #tpu.memory_space<vmem>>, vector<1x128xf32>
    %183 = vector.broadcast %182 : vector<1x128xf32> to vector<64x128xf32>
    %184 = arith.addf %181, %183 : vector<64x128xf32>
    %cst_128 = arith.constant 0.000000e+00 : f32
    %185 = vector.broadcast %cst_128 : f32 to vector<64x128xf32>
    %186 = arith.maximumf %184, %185 : vector<64x128xf32>
    %187 = vector.shape_cast %186 : vector<64x128xf32> to vector<8x8x128xf32>
    %cst_129 = arith.constant 0.000000e+00 : f32
    %188 = vector.broadcast %cst_129 : f32 to vector<1x24x128xf32>
    %c0_130 = arith.constant 0 : index
    %c0_131 = arith.constant 0 : index
    %c0_132 = arith.constant 0 : index
    %189 = vector.load %arg11[%c0_130, %c0_131, %c0_132] : memref<10x24x128xf32, #tpu.memory_space<vmem>>, vector<1x24x128xf32>
    tpu.vector_store %arg11[%c0_130, %c0_131, %c0_132], %188 {strides = array<i32>} : memref<10x24x128xf32, #tpu.memory_space<vmem>>, vector<1x24x128xf32>,
    %c9_133 = arith.constant 9 : index
    %c0_134 = arith.constant 0 : index
    %c0_135 = arith.constant 0 : index
    %190 = vector.load %arg11[%c9_133, %c0_134, %c0_135] : memref<10x24x128xf32, #tpu.memory_space<vmem>>, vector<1x24x128xf32>
    tpu.vector_store %arg11[%c9_133, %c0_134, %c0_135], %188 {strides = array<i32>} : memref<10x24x128xf32, #tpu.memory_space<vmem>>, vector<1x24x128xf32>,
    %cst_136 = arith.constant 0.000000e+00 : f32
    %191 = vector.broadcast %cst_136 : f32 to vector<8x8x128xf32>
    %c1_137 = arith.constant 1 : index
    %c0_138 = arith.constant 0 : index
    %c0_139 = arith.constant 0 : index
    %192 = vector.load %arg11[%c1_137, %c0_138, %c0_139] : memref<10x24x128xf32, #tpu.memory_space<vmem>>, vector<8x8x128xf32>
    tpu.vector_store %arg11[%c1_137, %c0_138, %c0_139], %191 {strides = array<i32>} : memref<10x24x128xf32, #tpu.memory_space<vmem>>, vector<8x8x128xf32>,
    %c1_140 = arith.constant 1 : index
    %c16_141 = arith.constant 16 : index
    %c0_142 = arith.constant 0 : index
    %193 = vector.load %arg11[%c1_140, %c16_141, %c0_142] : memref<10x24x128xf32, #tpu.memory_space<vmem>>, vector<8x8x128xf32>
    tpu.vector_store %arg11[%c1_140, %c16_141, %c0_142], %191 {strides = array<i32>} : memref<10x24x128xf32, #tpu.memory_space<vmem>>, vector<8x8x128xf32>,
    %c1_143 = arith.constant 1 : index
    %c8_144 = arith.constant 8 : index
    %c0_145 = arith.constant 0 : index
    %194 = vector.load %arg11[%c1_143, %c8_144, %c0_145] : memref<10x24x128xf32, #tpu.memory_space<vmem>>, vector<8x8x128xf32>
    tpu.vector_store %arg11[%c1_143, %c8_144, %c0_145], %187 {strides = array<i32>} : memref<10x24x128xf32, #tpu.memory_space<vmem>>, vector<8x8x128xf32>,
    %c0_146 = arith.constant 0 : index
    %c0_147 = arith.constant 0 : index
    %c0_148 = arith.constant 0 : index
    %195 = vector.load %arg11[%c0_146, %c0_147, %c0_148] : memref<10x24x128xf32, #tpu.memory_space<vmem>>, vector<8x24x128xf32>
    %196 = vector.shape_cast %195 : vector<8x24x128xf32> to vector<192x128xf32>
    %c1_i32_149 = arith.constant 1 : i32
    %197 = tpu.dynamic_rotate %196 by %c1_i32_149 dim 0 : vector<192x128xf32>, i32 -> vector<192x128xf32>
    %198 = vector.shape_cast %197 : vector<192x128xf32> to vector<8x24x128xf32>
    %199 = vector.extract_strided_slice %198 {offsets = [0, 8, 0], sizes = [8, 8, 128], strides = [1, 1, 1]} : vector<8x24x128xf32> to vector<8x8x128xf32>
    %200 = vector.shape_cast %199 : vector<8x8x128xf32> to vector<64x128xf32>
    %c0_150 = arith.constant 0 : index
    %c0_151 = arith.constant 0 : index
    %c0_152 = arith.constant 0 : index
    %201 = vector.load %arg6[%c0_150, %c0_151, %c0_152] : memref<9x128x128xf32, #tpu.memory_space<vmem>>, vector<1x128x128xf32>
    %202 = vector.shape_cast %201 : vector<1x128x128xf32> to vector<128x128xf32>
    %cst_153 = arith.constant dense<0.000000e+00> : vector<64x128xf32>
    %203 = tpu.matmul %200, %202, %cst_153 {dimension_numbers = #tpu.dot_dimension_numbers<[1], [0], [0], [1], [0, 0, 1, 1], [], []>} : vector<64x128xf32>, vector<128x128xf32>, vector<64x128xf32> -> vector<64x128xf32>
    %204 = vector.shape_cast %196 : vector<192x128xf32> to vector<8x24x128xf32>
    %205 = vector.extract_strided_slice %204 {offsets = [0, 8, 0], sizes = [8, 8, 128], strides = [1, 1, 1]} : vector<8x24x128xf32> to vector<8x8x128xf32>
    %206 = vector.shape_cast %205 : vector<8x8x128xf32> to vector<64x128xf32>
    %c1_154 = arith.constant 1 : index
    %c0_155 = arith.constant 0 : index
    %c0_156 = arith.constant 0 : index
    %207 = vector.load %arg6[%c1_154, %c0_155, %c0_156] : memref<9x128x128xf32, #tpu.memory_space<vmem>>, vector<1x128x128xf32>
    %208 = vector.shape_cast %207 : vector<1x128x128xf32> to vector<128x128xf32>
    %cst_157 = arith.constant dense<0.000000e+00> : vector<64x128xf32>
    %209 = tpu.matmul %206, %208, %cst_157 {dimension_numbers = #tpu.dot_dimension_numbers<[1], [0], [0], [1], [0, 0, 1, 1], [], []>} : vector<64x128xf32>, vector<128x128xf32>, vector<64x128xf32> -> vector<64x128xf32>
    %210 = arith.addf %203, %209 : vector<64x128xf32>
    %c191_i32_158 = arith.constant 191 : i32
    %211 = tpu.dynamic_rotate %196 by %c191_i32_158 dim 0 : vector<192x128xf32>, i32 -> vector<192x128xf32>
    %212 = vector.shape_cast %211 : vector<192x128xf32> to vector<8x24x128xf32>
    %213 = vector.extract_strided_slice %212 {offsets = [0, 8, 0], sizes = [8, 8, 128], strides = [1, 1, 1]} : vector<8x24x128xf32> to vector<8x8x128xf32>
    %214 = vector.shape_cast %213 : vector<8x8x128xf32> to vector<64x128xf32>
    %c2_159 = arith.constant 2 : index
    %c0_160 = arith.constant 0 : index
    %c0_161 = arith.constant 0 : index
    %215 = vector.load %arg6[%c2_159, %c0_160, %c0_161] : memref<9x128x128xf32, #tpu.memory_space<vmem>>, vector<1x128x128xf32>
    %216 = vector.shape_cast %215 : vector<1x128x128xf32> to vector<128x128xf32>
    %cst_162 = arith.constant dense<0.000000e+00> : vector<64x128xf32>
    %217 = tpu.matmul %214, %216, %cst_162 {dimension_numbers = #tpu.dot_dimension_numbers<[1], [0], [0], [1], [0, 0, 1, 1], [], []>} : vector<64x128xf32>, vector<128x128xf32>, vector<64x128xf32> -> vector<64x128xf32>
    %218 = arith.addf %210, %217 : vector<64x128xf32>
    %c1_163 = arith.constant 1 : index
    %c0_164 = arith.constant 0 : index
    %c0_165 = arith.constant 0 : index
    %219 = vector.load %arg11[%c1_163, %c0_164, %c0_165] : memref<10x24x128xf32, #tpu.memory_space<vmem>>, vector<8x24x128xf32>
    %220 = vector.shape_cast %219 : vector<8x24x128xf32> to vector<192x128xf32>
    %c1_i32_166 = arith.constant 1 : i32
    %221 = tpu.dynamic_rotate %220 by %c1_i32_166 dim 0 : vector<192x128xf32>, i32 -> vector<192x128xf32>
    %222 = vector.shape_cast %221 : vector<192x128xf32> to vector<8x24x128xf32>
    %223 = vector.extract_strided_slice %222 {offsets = [0, 8, 0], sizes = [8, 8, 128], strides = [1, 1, 1]} : vector<8x24x128xf32> to vector<8x8x128xf32>
    %224 = vector.shape_cast %223 : vector<8x8x128xf32> to vector<64x128xf32>
    %c3_167 = arith.constant 3 : index
    %c0_168 = arith.constant 0 : index
    %c0_169 = arith.constant 0 : index
    %225 = vector.load %arg6[%c3_167, %c0_168, %c0_169] : memref<9x128x128xf32, #tpu.memory_space<vmem>>, vector<1x128x128xf32>
    %226 = vector.shape_cast %225 : vector<1x128x128xf32> to vector<128x128xf32>
    %cst_170 = arith.constant dense<0.000000e+00> : vector<64x128xf32>
    %227 = tpu.matmul %224, %226, %cst_170 {dimension_numbers = #tpu.dot_dimension_numbers<[1], [0], [0], [1], [0, 0, 1, 1], [], []>} : vector<64x128xf32>, vector<128x128xf32>, vector<64x128xf32> -> vector<64x128xf32>
    %228 = arith.addf %218, %227 : vector<64x128xf32>
    %229 = vector.shape_cast %220 : vector<192x128xf32> to vector<8x24x128xf32>
    %230 = vector.extract_strided_slice %229 {offsets = [0, 8, 0], sizes = [8, 8, 128], strides = [1, 1, 1]} : vector<8x24x128xf32> to vector<8x8x128xf32>
    %231 = vector.shape_cast %230 : vector<8x8x128xf32> to vector<64x128xf32>
    %c4_171 = arith.constant 4 : index
    %c0_172 = arith.constant 0 : index
    %c0_173 = arith.constant 0 : index
    %232 = vector.load %arg6[%c4_171, %c0_172, %c0_173] : memref<9x128x128xf32, #tpu.memory_space<vmem>>, vector<1x128x128xf32>
    %233 = vector.shape_cast %232 : vector<1x128x128xf32> to vector<128x128xf32>
    %cst_174 = arith.constant dense<0.000000e+00> : vector<64x128xf32>
    %234 = tpu.matmul %231, %233, %cst_174 {dimension_numbers = #tpu.dot_dimension_numbers<[1], [0], [0], [1], [0, 0, 1, 1], [], []>} : vector<64x128xf32>, vector<128x128xf32>, vector<64x128xf32> -> vector<64x128xf32>
    %235 = arith.addf %228, %234 : vector<64x128xf32>
    %c191_i32_175 = arith.constant 191 : i32
    %236 = tpu.dynamic_rotate %220 by %c191_i32_175 dim 0 : vector<192x128xf32>, i32 -> vector<192x128xf32>
    %237 = vector.shape_cast %236 : vector<192x128xf32> to vector<8x24x128xf32>
    %238 = vector.extract_strided_slice %237 {offsets = [0, 8, 0], sizes = [8, 8, 128], strides = [1, 1, 1]} : vector<8x24x128xf32> to vector<8x8x128xf32>
    %239 = vector.shape_cast %238 : vector<8x8x128xf32> to vector<64x128xf32>
    %c5_176 = arith.constant 5 : index
    %c0_177 = arith.constant 0 : index
    %c0_178 = arith.constant 0 : index
    %240 = vector.load %arg6[%c5_176, %c0_177, %c0_178] : memref<9x128x128xf32, #tpu.memory_space<vmem>>, vector<1x128x128xf32>
    %241 = vector.shape_cast %240 : vector<1x128x128xf32> to vector<128x128xf32>
    %cst_179 = arith.constant dense<0.000000e+00> : vector<64x128xf32>
    %242 = tpu.matmul %239, %241, %cst_179 {dimension_numbers = #tpu.dot_dimension_numbers<[1], [0], [0], [1], [0, 0, 1, 1], [], []>} : vector<64x128xf32>, vector<128x128xf32>, vector<64x128xf32> -> vector<64x128xf32>
    %243 = arith.addf %235, %242 : vector<64x128xf32>
    %c2_180 = arith.constant 2 : index
    %c0_181 = arith.constant 0 : index
    %c0_182 = arith.constant 0 : index
    %244 = vector.load %arg11[%c2_180, %c0_181, %c0_182] : memref<10x24x128xf32, #tpu.memory_space<vmem>>, vector<8x24x128xf32>
    %245 = vector.shape_cast %244 : vector<8x24x128xf32> to vector<192x128xf32>
    %c1_i32_183 = arith.constant 1 : i32
    %246 = tpu.dynamic_rotate %245 by %c1_i32_183 dim 0 : vector<192x128xf32>, i32 -> vector<192x128xf32>
    %247 = vector.shape_cast %246 : vector<192x128xf32> to vector<8x24x128xf32>
    %248 = vector.extract_strided_slice %247 {offsets = [0, 8, 0], sizes = [8, 8, 128], strides = [1, 1, 1]} : vector<8x24x128xf32> to vector<8x8x128xf32>
    %249 = vector.shape_cast %248 : vector<8x8x128xf32> to vector<64x128xf32>
    %c6_184 = arith.constant 6 : index
    %c0_185 = arith.constant 0 : index
    %c0_186 = arith.constant 0 : index
    %250 = vector.load %arg6[%c6_184, %c0_185, %c0_186] : memref<9x128x128xf32, #tpu.memory_space<vmem>>, vector<1x128x128xf32>
    %251 = vector.shape_cast %250 : vector<1x128x128xf32> to vector<128x128xf32>
    %cst_187 = arith.constant dense<0.000000e+00> : vector<64x128xf32>
    %252 = tpu.matmul %249, %251, %cst_187 {dimension_numbers = #tpu.dot_dimension_numbers<[1], [0], [0], [1], [0, 0, 1, 1], [], []>} : vector<64x128xf32>, vector<128x128xf32>, vector<64x128xf32> -> vector<64x128xf32>
    %253 = arith.addf %243, %252 : vector<64x128xf32>
    %254 = vector.shape_cast %245 : vector<192x128xf32> to vector<8x24x128xf32>
    %255 = vector.extract_strided_slice %254 {offsets = [0, 8, 0], sizes = [8, 8, 128], strides = [1, 1, 1]} : vector<8x24x128xf32> to vector<8x8x128xf32>
    %256 = vector.shape_cast %255 : vector<8x8x128xf32> to vector<64x128xf32>
    %c7_188 = arith.constant 7 : index
    %c0_189 = arith.constant 0 : index
    %c0_190 = arith.constant 0 : index
    %257 = vector.load %arg6[%c7_188, %c0_189, %c0_190] : memref<9x128x128xf32, #tpu.memory_space<vmem>>, vector<1x128x128xf32>
    %258 = vector.shape_cast %257 : vector<1x128x128xf32> to vector<128x128xf32>
    %cst_191 = arith.constant dense<0.000000e+00> : vector<64x128xf32>
    %259 = tpu.matmul %256, %258, %cst_191 {dimension_numbers = #tpu.dot_dimension_numbers<[1], [0], [0], [1], [0, 0, 1, 1], [], []>} : vector<64x128xf32>, vector<128x128xf32>, vector<64x128xf32> -> vector<64x128xf32>
    %260 = arith.addf %253, %259 : vector<64x128xf32>
    %c191_i32_192 = arith.constant 191 : i32
    %261 = tpu.dynamic_rotate %245 by %c191_i32_192 dim 0 : vector<192x128xf32>, i32 -> vector<192x128xf32>
    %262 = vector.shape_cast %261 : vector<192x128xf32> to vector<8x24x128xf32>
    %263 = vector.extract_strided_slice %262 {offsets = [0, 8, 0], sizes = [8, 8, 128], strides = [1, 1, 1]} : vector<8x24x128xf32> to vector<8x8x128xf32>
    %264 = vector.shape_cast %263 : vector<8x8x128xf32> to vector<64x128xf32>
    %c8_193 = arith.constant 8 : index
    %c0_194 = arith.constant 0 : index
    %c0_195 = arith.constant 0 : index
    %265 = vector.load %arg6[%c8_193, %c0_194, %c0_195] : memref<9x128x128xf32, #tpu.memory_space<vmem>>, vector<1x128x128xf32>
    %266 = vector.shape_cast %265 : vector<1x128x128xf32> to vector<128x128xf32>
    %cst_196 = arith.constant dense<0.000000e+00> : vector<64x128xf32>
    %267 = tpu.matmul %264, %266, %cst_196 {dimension_numbers = #tpu.dot_dimension_numbers<[1], [0], [0], [1], [0, 0, 1, 1], [], []>} : vector<64x128xf32>, vector<128x128xf32>, vector<64x128xf32> -> vector<64x128xf32>
    %268 = arith.addf %260, %267 : vector<64x128xf32>
    %c0_197 = arith.constant 0 : index
    %c0_198 = arith.constant 0 : index
    %269 = vector.load %arg7[%c0_197, %c0_198] : memref<1x128xf32, #tpu.memory_space<vmem>>, vector<1x128xf32>
    %270 = vector.broadcast %269 : vector<1x128xf32> to vector<64x128xf32>
    %271 = arith.addf %268, %270 : vector<64x128xf32>
    %cst_199 = arith.constant 0.000000e+00 : f32
    %272 = vector.broadcast %cst_199 : f32 to vector<64x128xf32>
    %273 = arith.maximumf %271, %272 : vector<64x128xf32>
    %274 = vector.shape_cast %273 : vector<64x128xf32> to vector<8x8x128xf32>
    %275 = vector.shape_cast %274 : vector<8x8x128xf32> to vector<4x2x8x128xf32>
    %276 = vector.extract_strided_slice %275 {offsets = [0, 0, 0, 0], sizes = [4, 1, 8, 128], strides = [1, 1, 1, 1]} : vector<4x2x8x128xf32> to vector<4x1x8x128xf32>
    %277 = vector.shape_cast %276 : vector<4x1x8x128xf32> to vector<4x8x128xf32>
    %278 = vector.extract_strided_slice %275 {offsets = [0, 1, 0, 0], sizes = [4, 1, 8, 128], strides = [1, 1, 1, 1]} : vector<4x2x8x128xf32> to vector<4x1x8x128xf32>
    %279 = vector.shape_cast %278 : vector<4x1x8x128xf32> to vector<4x8x128xf32>
    %280 = arith.maximumf %277, %279 : vector<4x8x128xf32>
    %281 = vector.shape_cast %280 : vector<4x8x128xf32> to vector<4x4x2x128xf32>
    %282 = vector.extract_strided_slice %281 {offsets = [0, 0, 0, 0], sizes = [4, 4, 1, 128], strides = [1, 1, 1, 1]} : vector<4x4x2x128xf32> to vector<4x4x1x128xf32>
    %283 = vector.shape_cast %282 : vector<4x4x1x128xf32> to vector<4x4x128xf32>
    %284 = vector.extract_strided_slice %281 {offsets = [0, 0, 1, 0], sizes = [4, 4, 1, 128], strides = [1, 1, 1, 1]} : vector<4x4x2x128xf32> to vector<4x4x1x128xf32>
    %285 = vector.shape_cast %284 : vector<4x4x1x128xf32> to vector<4x4x128xf32>
    %286 = arith.maximumf %283, %285 : vector<4x4x128xf32>
    %287 = vector.extract_strided_slice %286 {offsets = [0, 0, 0], sizes = [4, 4, 16], strides = [1, 1, 1]} : vector<4x4x128xf32> to vector<4x4x16xf32>
    %c0_200 = arith.constant 0 : index
    %c0_201 = arith.constant 0 : index
    %c0_202 = arith.constant 0 : index
    %c0_203 = arith.constant 0 : index
    %288 = vector.load %arg8[%c0_200, %c0_201, %c0_202, %c0_203] : memref<1x4x4x16xf32, #tpu.memory_space<vmem>>, vector<1x4x4x16xf32>
    %289 = vector.shape_cast %288 : vector<1x4x4x16xf32> to vector<4x4x16xf32>
    %290 = vector.shape_cast %287 : vector<4x4x16xf32> to vector<1x4x4x16xf32>
    tpu.vector_store %arg8[%c0_200, %c0_201, %c0_202, %c0_203], %290 {strides = array<i32>} : memref<1x4x4x16xf32, #tpu.memory_space<vmem>>, vector<1x4x4x16xf32>,
    return
  }
  func.func @transform_0(%arg0: i32) -> (i32, i32, i32, i32) {
    %c0_i32 = arith.constant 0 : i32
    %c0_i32_0 = arith.constant 0 : i32
    %c0_i32_1 = arith.constant 0 : i32
    %c0_i32_2 = arith.constant 0 : i32
    return %arg0, %c0_i32, %c0_i32_0, %c0_i32_1 : i32, i32, i32, i32
  }
  func.func @transform_1(%arg0: i32) -> (i32, i32, i32) {
    %c0_i32 = arith.constant 0 : i32
    %c0_i32_0 = arith.constant 0 : i32
    %c0_i32_1 = arith.constant 0 : i32
    %c0_i32_2 = arith.constant 0 : i32
    return %c0_i32, %c0_i32_0, %c0_i32_1 : i32, i32, i32
  }
  func.func @transform_2(%arg0: i32) -> (i32, i32) {
    %c0_i32 = arith.constant 0 : i32
    %c0_i32_0 = arith.constant 0 : i32
    %c0_i32_1 = arith.constant 0 : i32
    return %c0_i32, %c0_i32_0 : i32, i32
  }
  func.func @transform_3(%arg0: i32) -> (i32, i32, i32) {
    %c0_i32 = arith.constant 0 : i32
    %c0_i32_0 = arith.constant 0 : i32
    %c0_i32_1 = arith.constant 0 : i32
    %c0_i32_2 = arith.constant 0 : i32
    return %c0_i32, %c0_i32_0, %c0_i32_1 : i32, i32, i32
  }
  func.func @transform_4(%arg0: i32) -> (i32, i32) {
    %c0_i32 = arith.constant 0 : i32
    %c0_i32_0 = arith.constant 0 : i32
    %c0_i32_1 = arith.constant 0 : i32
    return %c0_i32, %c0_i32_0 : i32, i32
  }
  func.func @transform_5(%arg0: i32) -> (i32, i32, i32) {
    %c0_i32 = arith.constant 0 : i32
    %c0_i32_0 = arith.constant 0 : i32
    %c0_i32_1 = arith.constant 0 : i32
    %c0_i32_2 = arith.constant 0 : i32
    return %c0_i32, %c0_i32_0, %c0_i32_1 : i32, i32, i32
  }
  func.func @transform_6(%arg0: i32) -> (i32, i32) {
    %c0_i32 = arith.constant 0 : i32
    %c0_i32_0 = arith.constant 0 : i32
    %c0_i32_1 = arith.constant 0 : i32
    return %c0_i32, %c0_i32_0 : i32, i32
  }
  func.func @transform_7(%arg0: i32) -> (i32, i32, i32, i32) {
    %c0_i32 = arith.constant 0 : i32
    %c0_i32_0 = arith.constant 0 : i32
    %c0_i32_1 = arith.constant 0 : i32
    %c0_i32_2 = arith.constant 0 : i32
    return %arg0, %c0_i32, %c0_i32_0, %c0_i32_1 : i32, i32, i32, i32
  }
}

</mosaic_0001>

<llo_original>
// kernel: vgg_no_fc_forward.1
$region0: #{vgg_no_fc_forward.1}
  #allocation0 [shape = 'u32[]', space=smem, size = 0x4, offset = 0x4, fixed_abs, tag = 'smem constant byte address 0x4 - core index']
  #allocation1 [shape = 'u32[144,128]{1,0:T(1,128)}', space=vmem, size = 0x12000, scoped, tag = 'internal scratch']
  #allocation2 [shape = 'f32[18,32,4]{2,1,0:T(8,128)}', space=vmem, size = 0x48000, scoped, tag = 'scratch operand']
  #allocation3 [shape = 'f32[10,24,128]{2,1,0:T(8,128)}', space=vmem, size = 0x1e000, scoped, tag = 'scratch operand']
  #allocation4 [shape = 'f32[10,24,128]{2,1,0:T(8,128)}', space=vmem, size = 0x1e000, scoped, tag = 'scratch operand']
  %s0 = inlined_call_operand.vmem [shape: f32[2,16,16,4], index: 0, kind: input, shape index: {}]
  %s1 = inlined_call_operand.vmem [shape: f32[9,4,128], index: 1, kind: input, shape index: {}]
  %s2 = inlined_call_operand.vmem [shape: f32[1,128], index: 2, kind: input, shape index: {}]
  %s3 = inlined_call_operand.hbm [shape: f32[9,128,128], index: 3, kind: input, shape index: {}]
  %s4 = inlined_call_operand.vmem [shape: f32[1,128], index: 4, kind: input, shape index: {}]
  %s5 = inlined_call_operand.hbm [shape: f32[9,128,128], index: 5, kind: input, shape index: {}]
  %s6 = inlined_call_operand.vmem [shape: f32[1,128], index: 6, kind: input, shape index: {}]
  %s7 = inlined_call_operand.hbm [shape: f32[2,4,4,16], index: 7, kind: output, shape index: {}]
  %s8 = sld [smem:[#allocation0]]
  $region69: #{vgg_no_fc_forward.1} parent=0
    _
  %s10 = ssub.s32 1, %s8
  %s11 = scalar_select 0, %s10, %s8
  $region1: #{vgg_no_fc_forward.1} parent=0
    #allocation5 [shape = 'u8[589824]{0}', space=vmem, size = 0x90000, scoped, tag = 'input window, operand 3, single buffered']
    #allocation6 [shape = 's32[2]{0}', space=sflag, size = 0x8, scoped, tag = 'scoped memory for vgg_no_fc_forward.1']
    #allocation7 [shape = 's32[2]{0}', space=sflag, size = 0x8, scoped, tag = 'scoped memory for vgg_no_fc_forward.1']
    #allocation8 [shape = 'u8[589824]{0}', space=vmem, size = 0x90000, scoped, tag = 'input window, operand 5, single buffered']
    #allocation9 [shape = 's32[1]{0}', space=sflag, size = 0x4, scoped, tag = 'scoped memory for vgg_no_fc_forward.1']
    #allocation10 [shape = 'u8[16384]{0}', space=vmem, size = 0x4000, scoped, tag = 'output window, operand 0']
    %12 = vsyncpa [#allocation6], 0
    %13 = vsyncpa [#allocation9], 0
    %14 = vsyncpa [#allocation7], 0
    %s15 = scalar_lea.sflag [#allocation7], 1
    %16 = vsyncpa %s15, 0
    loop: start=0, step=1, limit=4
    $region2: #{vgg_no_fc_forward.1} parent=1 // loop_pre_header
      _
    $region3: #{vgg_no_fc_forward.1} parent=1 // loop_header
      %s18 = sphi 0, %s22
      %p19 = scmp.ge.s32.totalorder %s18, 4
      %s28 = sphi 0, %s30
      %s31 = sphi 0, %s28
      %s32 = sphi 0, %s31
      %s48 = sphi 0, %s32
      %s52 = sphi 0, %s52
      %s54 = sphi 0, %s52
      %s55 = sphi 0, %s54
      %s69 = sphi 0, %s55
      %s73 = sphi 0, %s73
      %s75 = sphi 0, %s73
      %s76 = sphi 0, %s75
      %s90 = sphi 0, %s76
      %s94 = sphi 0, %s94
      %s96 = sphi 0, %s94
      %s97 = sphi 0, %s96
      %s111 = sphi 0, %s97
      %s115 = sphi 0, %s115
      %s117 = sphi 0, %s115
      %s118 = sphi 0, %s117
      %s132 = sphi 0, %s118
      %s136 = sphi 0, %s136
      %s138 = sphi 0, %s136
      %s139 = sphi 0, %s138
      %s153 = sphi 0, %s139
      %s157 = sphi 0, %s157
      %s159 = sphi 0, %s157
      %s160 = sphi 0, %s159
      %s174 = sphi 0, %s160
      %s180 = sphi 0, %s182
      %s183 = sphi 0, %s180
      %s184 = sphi 0, %s183
      %s200 = sphi 0, %s184
    $region4: #{vgg_no_fc_forward.1} parent=1 // loop_header_branch
      %21 = sbr.rel (%p19) target = $region8
    $region5: #{vgg_no_fc_forward.1} parent=1 // loop_body
      %s23 = ssub.s32 %s18, 1
      %s24 = ssub.s32 %s18, 2
      %s25 = sadd.s32 %s18, 1
      %s26 = ssub.s32 %s18, %s25
      %p27 = scmp.eq.s32.totalorder %s26, 0
      %s29 = sadd.s32 %s28, 1
      %s30 = scalar_select %p27, %s28, %s29
      %p33 = pneg %p27
      %p34 = scmp.eq.s32.totalorder %s18, 1
      %p35 = por %p33, %p34
      %p36 = scmp.ne.s32.totalorder %s28, %s31
      %p37 = scmp.eq.s32.totalorder %s18, 0
      %p38 = por %p36, %p37
      %p39 = scmp.ne.s32.totalorder %s28, %s31
      %p40 = scmp.eq.s32.totalorder %s23, 1
      %p41 = por %p39, %p40
      %p42 = scmp.ne.s32.totalorder %s31, %s32
      %p43 = scmp.eq.s32.totalorder %s23, 0
      %p44 = por %p42, %p43
      %p45 = scmp.ne.s32.totalorder %s31, %s32
      %p46 = scmp.eq.s32.totalorder %s24, 1
      %p47 = por %p45, %p46
      %p49 = scmp.ne.s32.totalorder %s32, %s48
      %p50 = scmp.eq.s32.totalorder %s24, 0
      %p51 = por %p49, %p50
      %s53 = sadd.s32 %s52, 1
      %p56 = scmp.eq.s32.totalorder %s18, 1
      %p57 = scmp.ne.s32.totalorder %s52, %s54
      %p58 = scmp.eq.s32.totalorder %s18, 0
      %p59 = por %p57, %p58
      %p60 = scmp.ne.s32.totalorder %s52, %s54
      %p61 = scmp.eq.s32.totalorder %s23, 1
      %p62 = por %p60, %p61
      %p63 = scmp.ne.s32.totalorder %s54, %s55
      %p64 = scmp.eq.s32.totalorder %s23, 0
      %p65 = por %p63, %p64
      %p66 = scmp.ne.s32.totalorder %s54, %s55
      %p67 = scmp.eq.s32.totalorder %s24, 1
      %p68 = por %p66, %p67
      %p70 = scmp.ne.s32.totalorder %s55, %s69
      %p71 = scmp.eq.s32.totalorder %s24, 0
      %p72 = por %p70, %p71
      %s74 = sadd.s32 %s73, 1
      %p77 = scmp.eq.s32.totalorder %s18, 1
      %p78 = scmp.ne.s32.totalorder %s73, %s75
      %p79 = scmp.eq.s32.totalorder %s18, 0
      %p80 = por %p78, %p79
      %p81 = scmp.ne.s32.totalorder %s73, %s75
      %p82 = scmp.eq.s32.totalorder %s23, 1
      %p83 = por %p81, %p82
      %p84 = scmp.ne.s32.totalorder %s75, %s76
      %p85 = scmp.eq.s32.totalorder %s23, 0
      %p86 = por %p84, %p85
      %p87 = scmp.ne.s32.totalorder %s75, %s76
      %p88 = scmp.eq.s32.totalorder %s24, 1
      %p89 = por %p87, %p88
      %p91 = scmp.ne.s32.totalorder %s76, %s90
      %p92 = scmp.eq.s32.totalorder %s24, 0
      %p93 = por %p91, %p92
      %s95 = sadd.s32 %s94, 1
      %p98 = scmp.eq.s32.totalorder %s18, 1
      %p99 = scmp.ne.s32.totalorder %s94, %s96
      %p100 = scmp.eq.s32.totalorder %s18, 0
      %p101 = por %p99, %p100
      %p102 = scmp.ne.s32.totalorder %s94, %s96
      %p103 = scmp.eq.s32.totalorder %s23, 1
      %p104 = por %p102, %p103
      %p105 = scmp.ne.s32.totalorder %s96, %s97
      %p106 = scmp.eq.s32.totalorder %s23, 0
      %p107 = por %p105, %p106
      %p108 = scmp.ne.s32.totalorder %s96, %s97
      %p109 = scmp.eq.s32.totalorder %s24, 1
      %p110 = por %p108, %p109
      %p112 = scmp.ne.s32.totalorder %s97, %s111
      %p113 = scmp.eq.s32.totalorder %s24, 0
      %p114 = por %p112, %p113
      %s116 = sadd.s32 %s115, 1
      %p119 = scmp.eq.s32.totalorder %s18, 1
      %p120 = scmp.ne.s32.totalorder %s115, %s117
      %p121 = scmp.eq.s32.totalorder %s18, 0
      %p122 = por %p120, %p121
      %p123 = scmp.ne.s32.totalorder %s115, %s117
      %p124 = scmp.eq.s32.totalorder %s23, 1
      %p125 = por %p123, %p124
      %p126 = scmp.ne.s32.totalorder %s117, %s118
      %p127 = scmp.eq.s32.totalorder %s23, 0
      %p128 = por %p126, %p127
      %p129 = scmp.ne.s32.totalorder %s117, %s118
      %p130 = scmp.eq.s32.totalorder %s24, 1
      %p131 = por %p129, %p130
      %p133 = scmp.ne.s32.totalorder %s118, %s132
      %p134 = scmp.eq.s32.totalorder %s24, 0
      %p135 = por %p133, %p134
      %s137 = sadd.s32 %s136, 1
      %p140 = scmp.eq.s32.totalorder %s18, 1
      %p141 = scmp.ne.s32.totalorder %s136, %s138
      %p142 = scmp.eq.s32.totalorder %s18, 0
      %p143 = por %p141, %p142
      %p144 = scmp.ne.s32.totalorder %s136, %s138
      %p145 = scmp.eq.s32.totalorder %s23, 1
      %p146 = por %p144, %p145
      %p147 = scmp.ne.s32.totalorder %s138, %s139
      %p148 = scmp.eq.s32.totalorder %s23, 0
      %p149 = por %p147, %p148
      %p150 = scmp.ne.s32.totalorder %s138, %s139
      %p151 = scmp.eq.s32.totalorder %s24, 1
      %p152 = por %p150, %p151
      %p154 = scmp.ne.s32.totalorder %s139, %s153
      %p155 = scmp.eq.s32.totalorder %s24, 0
      %p156 = por %p154, %p155
      %s158 = sadd.s32 %s157, 1
      %p161 = scmp.eq.s32.totalorder %s18, 1
      %p162 = scmp.ne.s32.totalorder %s157, %s159
      %p163 = scmp.eq.s32.totalorder %s18, 0
      %p164 = por %p162, %p163
      %p165 = scmp.ne.s32.totalorder %s157, %s159
      %p166 = scmp.eq.s32.totalorder %s23, 1
      %p167 = por %p165, %p166
      %p168 = scmp.ne.s32.totalorder %s159, %s160
      %p169 = scmp.eq.s32.totalorder %s23, 0
      %p170 = por %p168, %p169
      %p171 = scmp.ne.s32.totalorder %s159, %s160
      %p172 = scmp.eq.s32.totalorder %s24, 1
      %p173 = por %p171, %p172
      %p175 = scmp.ne.s32.totalorder %s160, %s174
      %p176 = scmp.eq.s32.totalorder %s24, 0
      %p177 = por %p175, %p176
      %s178 = ssub.s32 %s18, %s25
      %p179 = scmp.eq.s32.totalorder %s178, 0
      %s181 = sadd.s32 %s180, 1
      %s182 = scalar_select %p179, %s180, %s181
      %p185 = pneg %p179
      %p186 = scmp.eq.s32.totalorder %s18, 1
      %p187 = por %p185, %p186
      %p188 = scmp.ne.s32.totalorder %s180, %s183
      %p189 = scmp.eq.s32.totalorder %s18, 0
      %p190 = por %p188, %p189
      %p191 = scmp.ne.s32.totalorder %s180, %s183
      %p192 = scmp.eq.s32.totalorder %s23, 1
      %p193 = por %p191, %p192
      %p194 = scmp.ne.s32.totalorder %s183, %s184
      %p195 = scmp.eq.s32.totalorder %s23, 0
      %p196 = por %p194, %p195
      %p197 = scmp.ne.s32.totalorder %s183, %s184
      %p198 = scmp.eq.s32.totalorder %s24, 1
      %p199 = por %p197, %p198
      %p201 = scmp.ne.s32.totalorder %s184, %s200
      %p202 = scmp.eq.s32.totalorder %s24, 0
      %p203 = por %p201, %p202
      %p204 = scmp.le.s32.totalorder 1, %s18
      %p205 = scmp.lt.s32.totalorder %s18, 3
      %p206 = pnand %p204, %p205
      %p207 = pneg %p206
      // Predicated region
      $region9: #{vgg_no_fc_forward.1} parent=5 // pred_check
        _
      $region10: #{vgg_no_fc_forward.1} parent=5 // pred_check_branch
        %209 = sbr.rel (%p206) target = $region12
      $region11: #{vgg_no_fc_forward.1} parent=5 // pred_region
        %s210 = ssub.s32 %s18, 1
        // Predicated region
        $region13: #{vgg_no_fc_forward.1} parent=11 // pred_check
          %p211 = pneg %p65
        $region14: #{vgg_no_fc_forward.1} parent=11 // pred_check_branch
          %213 = sbr.rel (%p211) target = $region16
        $region15: #{vgg_no_fc_forward.1} parent=11 // pred_region
          _
        $region16: #{vgg_no_fc_forward.1} parent=11 // pred_fallthru
          _
        // Predicated region
        $region17: #{vgg_no_fc_forward.1} parent=11 // pred_check
          %p214 = pneg %p86
        $region18: #{vgg_no_fc_forward.1} parent=11 // pred_check_branch
          %216 = sbr.rel (%p214) target = $region20
        $region19: #{vgg_no_fc_forward.1} parent=11 // pred_region
          _
        $region20: #{vgg_no_fc_forward.1} parent=11 // pred_fallthru
          _
        // Predicated region
        $region21: #{vgg_no_fc_forward.1} parent=11 // pred_check
          %p217 = pneg %p107
        $region22: #{vgg_no_fc_forward.1} parent=11 // pred_check_branch
          %219 = sbr.rel (%p217) target = $region24
        $region23: #{vgg_no_fc_forward.1} parent=11 // pred_region
          %s221 = ssub.s32 18432, 18432
          %222 = vsyncadd [#allocation6], %s221
          %s223 = sshll.u32 [#allocation5], 4
          %s224 = int_to_ptr.vmem [resolvable:$true] %s223
          %229 = dma.hbm_to_vmem [thread:$0]  %s3, 18432, %s224, [#allocation6], 128, 128, 8
        $region24: #{vgg_no_fc_forward.1} parent=11 // pred_fallthru
          _
        // Predicated region
        $region25: #{vgg_no_fc_forward.1} parent=11 // pred_check
          %p230 = pneg %p128
        $region26: #{vgg_no_fc_forward.1} parent=11 // pred_check_branch
          %232 = sbr.rel (%p230) target = $region28
        $region27: #{vgg_no_fc_forward.1} parent=11 // pred_region
          _
        $region28: #{vgg_no_fc_forward.1} parent=11 // pred_fallthru
          _
        // Predicated region
        $region29: #{vgg_no_fc_forward.1} parent=11 // pred_check
          %p233 = pneg %p149
        $region30: #{vgg_no_fc_forward.1} parent=11 // pred_check_branch
          %235 = sbr.rel (%p233) target = $region32
        $region31: #{vgg_no_fc_forward.1} parent=11 // pred_region
          %s237 = ssub.s32 18432, 18432
          %238 = vsyncadd [#allocation9], %s237
          %s239 = sshll.u32 [#allocation8], 4
          %s240 = int_to_ptr.vmem [resolvable:$true] %s239
          %245 = dma.hbm_to_vmem [thread:$0]  %s5, 18432, %s240, [#allocation9], 128, 128, 8
        $region32: #{vgg_no_fc_forward.1} parent=11 // pred_fallthru
          _
        // Predicated region
        $region33: #{vgg_no_fc_forward.1} parent=11 // pred_check
          %p246 = pneg %p170
        $region34: #{vgg_no_fc_forward.1} parent=11 // pred_check_branch
          %248 = sbr.rel (%p246) target = $region36
        $region35: #{vgg_no_fc_forward.1} parent=11 // pred_region
          _
        $region36: #{vgg_no_fc_forward.1} parent=11 // pred_fallthru
          _
      $region12: #{vgg_no_fc_forward.1} parent=5 // pred_fallthru
        _
      %p249 = scmp.lt.s32.totalorder %s18, 2
      // Predicated region
      $region37: #{vgg_no_fc_forward.1} parent=5 // pred_check
        %p250 = pneg %p249
      $region38: #{vgg_no_fc_forward.1} parent=5 // pred_check_branch
        %252 = sbr.rel (%p250) target = $region40
      $region39: #{vgg_no_fc_forward.1} parent=5 // pred_region
        // Predicated region
        $region41: #{vgg_no_fc_forward.1} parent=39 // pred_check
          %p253 = pneg %p38
        $region42: #{vgg_no_fc_forward.1} parent=39 // pred_check_branch
          %255 = sbr.rel (%p253) target = $region44
        $region43: #{vgg_no_fc_forward.1} parent=39 // pred_region
          %p256 = scmp.lt.s32.totalorder %s18, 1
          %s257 = scalar_select %p256, %s18, 1
          %s258 = smul.addr %s257, 32
          %s259 = smul.addr %s258, 8
          %s260 = scalar_lea.vmem %s0, %s259
        $region44: #{vgg_no_fc_forward.1} parent=39 // pred_fallthru
          _
      $region40: #{vgg_no_fc_forward.1} parent=5 // pred_fallthru
        _
      %p261 = scmp.le.s32.totalorder 1, %s18
      %p262 = scmp.lt.s32.totalorder %s18, 3
      %p263 = pnand %p261, %p262
      %p264 = pneg %p263
      // Predicated region
      $region45: #{vgg_no_fc_forward.1} parent=5 // pred_check
        _
      $region46: #{vgg_no_fc_forward.1} parent=5 // pred_check_branch
        %266 = sbr.rel (%p263) target = $region48
      $region47: #{vgg_no_fc_forward.1} parent=5 // pred_region
        %s267 = ssub.s32 %s18, 1
        // Predicated region
        $region49: #{vgg_no_fc_forward.1} parent=47 // pred_check
          %p268 = pneg %p107
        $region50: #{vgg_no_fc_forward.1} parent=47 // pred_check_branch
          %270 = sbr.rel (%p268) target = $region52
        $region51: #{vgg_no_fc_forward.1} parent=47 // pred_region
          %271 = dma.done [#allocation6], 18432
        $region52: #{vgg_no_fc_forward.1} parent=47 // pred_fallthru
          _
        // Predicated region
        $region53: #{vgg_no_fc_forward.1} parent=47 // pred_check
          %p272 = pneg %p149
        $region54: #{vgg_no_fc_forward.1} parent=47 // pred_check_branch
          %274 = sbr.rel (%p272) target = $region56
        $region55: #{vgg_no_fc_forward.1} parent=47 // pred_region
          %275 = dma.done [#allocation9], 18432
        $region56: #{vgg_no_fc_forward.1} parent=47 // pred_fallthru
          _
        %p276 = scmp.lt.s32.totalorder %s23, 1
        %s277 = scalar_select %p276, %s23, 1
        %s278 = smul.addr %s277, 32
        %s279 = smul.addr %s278, 8
        %s280 = scalar_lea.vmem %s0, %s279
        %p281 = pneg %p44
        %p282 = pneg %p41
        %p283 = pneg %p65
        %p284 = pneg %p62
        %p285 = pneg %p86
        %p286 = pneg %p83
        %p287 = pneg %p107
        %p288 = pneg %p104
        %p289 = pneg %p128
        %p290 = pneg %p125
        %p291 = pneg %p149
        %p292 = pneg %p146
        %p293 = pneg %p170
        %p294 = pneg %p167
        %p295 = pneg %p196
        %p296 = pneg %p193
        %s297 = sand.u32 %s183, 1
        %s298 = scalar_lea.sflag [#allocation7], %s297
        %s299 = sand.u32 %s183, 1
        %s300 = smul.addr %s299, 16
        %s301 = scalar_lea.vmem [#allocation10], %s300
        %p302 = scmp.lt.s32.totalorder %s23, 1
        %s303 = scalar_select %p302, %s23, 1
        %s304 = smul.addr %s303, 32
        %s305 = smul.addr %s304, 8
        %s306 = scalar_lea.vmem %s0, %s305
        %v307 = vld [vmem:[%s306] sm:$0xff]
        %v308 = vld [vmem:[%s306 + $0x8] sm:$0xff]
        %v309 = vld [vmem:[%s306 + $0x10] sm:$0xff]
        %v310 = vld [vmem:[%s306 + $0x18] sm:$0xff]
        %v311 = vld [vmem:[%s306 + $0x20] sm:$0xff]
        %v312 = vld [vmem:[%s306 + $0x28] sm:$0xff]
        %v313 = vld [vmem:[%s306 + $0x30] sm:$0xff]
        %v314 = vld [vmem:[%s306 + $0x38] sm:$0xff]
        %v315 = vld [vmem:[%s306 + $0x40] sm:$0xff]
        %v316 = vld [vmem:[%s306 + $0x48] sm:$0xff]
        %v317 = vld [vmem:[%s306 + $0x50] sm:$0xff]
        %v318 = vld [vmem:[%s306 + $0x58] sm:$0xff]
        %v319 = vld [vmem:[%s306 + $0x60] sm:$0xff]
        %v320 = vld [vmem:[%s306 + $0x68] sm:$0xff]
        %v321 = vld [vmem:[%s306 + $0x70] sm:$0xff]
        %v322 = vld [vmem:[%s306 + $0x78] sm:$0xff]
        %v323 = vld [vmem:[%s306 + $0x80] sm:$0xff]
        %v324 = vld [vmem:[%s306 + $0x88] sm:$0xff]
        %v325 = vld [vmem:[%s306 + $0x90] sm:$0xff]
        %v326 = vld [vmem:[%s306 + $0x98] sm:$0xff]
        %v327 = vld [vmem:[%s306 + $0xa0] sm:$0xff]
        %v328 = vld [vmem:[%s306 + $0xa8] sm:$0xff]
        %v329 = vld [vmem:[%s306 + $0xb0] sm:$0xff]
        %v330 = vld [vmem:[%s306 + $0xb8] sm:$0xff]
        %v331 = vld [vmem:[%s306 + $0xc0] sm:$0xff]
        %v332 = vld [vmem:[%s306 + $0xc8] sm:$0xff]
        %v333 = vld [vmem:[%s306 + $0xd0] sm:$0xff]
        %v334 = vld [vmem:[%s306 + $0xd8] sm:$0xff]
        %v335 = vld [vmem:[%s306 + $0xe0] sm:$0xff]
        %v336 = vld [vmem:[%s306 + $0xe8] sm:$0xff]
        %v337 = vld [vmem:[%s306 + $0xf0] sm:$0xff]
        %v338 = vld [vmem:[%s306 + $0xf8] sm:$0xff]
        %vm339 = vcmask 31744
        %340 = vst.msk [vmem:[#allocation2] sm:$0xff] %vm339, 0.0
        %341 = vst.msk [vmem:[#allocation2 + $0x8] sm:$0xff] %vm339, 0.0
        %342 = vst.msk [vmem:[#allocation2 + $0x10] sm:$0xff] %vm339, 0.0
        %343 = vst.msk [vmem:[#allocation2 + $0x18] sm:$0xff] %vm339, 0.0
        %s344 = scalar_lea.vmem [#allocation2], 544
        %345 = vst.msk [vmem:[%s344] sm:$0xff] %vm339, 0.0
        %346 = vst.msk [vmem:[%s344 + $0x8] sm:$0xff] %vm339, 0.0
        %347 = vst.msk [vmem:[%s344 + $0x10] sm:$0xff] %vm339, 0.0
        %348 = vst.msk [vmem:[%s344 + $0x18] sm:$0xff] %vm339, 0.0
        %s349 = scalar_lea.vmem [#allocation2], 32
        %350 = vst.msk [vmem:[%s349] sm:$0xff] %vm339, 0.0
        %351 = vst.msk [vmem:[%s349 + $0x20] sm:$0xff] %vm339, 0.0
        %352 = vst.msk [vmem:[%s349 + $0x40] sm:$0xff] %vm339, 0.0
        %353 = vst.msk [vmem:[%s349 + $0x60] sm:$0xff] %vm339, 0.0
        %354 = vst.msk [vmem:[%s349 + $0x80] sm:$0xff] %vm339, 0.0
        %355 = vst.msk [vmem:[%s349 + $0xa0] sm:$0xff] %vm339, 0.0
        %356 = vst.msk [vmem:[%s349 + $0xc0] sm:$0xff] %vm339, 0.0
        %357 = vst.msk [vmem:[%s349 + $0xe0] sm:$0xff] %vm339, 0.0
        %358 = vst.msk [vmem:[%s349 + $0x100] sm:$0xff] %vm339, 0.0
        %359 = vst.msk [vmem:[%s349 + $0x120] sm:$0xff] %vm339, 0.0
        %360 = vst.msk [vmem:[%s349 + $0x140] sm:$0xff] %vm339, 0.0
        %361 = vst.msk [vmem:[%s349 + $0x160] sm:$0xff] %vm339, 0.0
        %362 = vst.msk [vmem:[%s349 + $0x180] sm:$0xff] %vm339, 0.0
        %363 = vst.msk [vmem:[%s349 + $0x1a0] sm:$0xff] %vm339, 0.0
        %364 = vst.msk [vmem:[%s349 + $0x1c0] sm:$0xff] %vm339, 0.0
        %365 = vst.msk [vmem:[%s349 + $0x1e0] sm:$0xff] %vm339, 0.0
        %366 = vst.msk [vmem:[%s349 + $0x18] sm:$0xff] %vm339, 0.0
        %367 = vst.msk [vmem:[%s349 + $0x38] sm:$0xff] %vm339, 0.0
        %368 = vst.msk [vmem:[%s349 + $0x58] sm:$0xff] %vm339, 0.0
        %369 = vst.msk [vmem:[%s349 + $0x78] sm:$0xff] %vm339, 0.0
        %370 = vst.msk [vmem:[%s349 + $0x98] sm:$0xff] %vm339, 0.0
        %371 = vst.msk [vmem:[%s349 + $0xb8] sm:$0xff] %vm339, 0.0
        %372 = vst.msk [vmem:[%s349 + $0xd8] sm:$0xff] %vm339, 0.0
        %373 = vst.msk [vmem:[%s349 + $0xf8] sm:$0xff] %vm339, 0.0
        %374 = vst.msk [vmem:[%s349 + $0x118] sm:$0xff] %vm339, 0.0
        %375 = vst.msk [vmem:[%s349 + $0x138] sm:$0xff] %vm339, 0.0
        %376 = vst.msk [vmem:[%s349 + $0x158] sm:$0xff] %vm339, 0.0
        %377 = vst.msk [vmem:[%s349 + $0x178] sm:$0xff] %vm339, 0.0
        %378 = vst.msk [vmem:[%s349 + $0x198] sm:$0xff] %vm339, 0.0
        %379 = vst.msk [vmem:[%s349 + $0x1b8] sm:$0xff] %vm339, 0.0
        %380 = vst.msk [vmem:[%s349 + $0x1d8] sm:$0xff] %vm339, 0.0
        %381 = vst.msk [vmem:[%s349 + $0x1f8] sm:$0xff] %vm339, 0.0
        %382 = vst.msk [vmem:[%s349 + $0x8] sm:$0xff] %vm339, %v307
        %383 = vst.msk [vmem:[%s349 + $0x10] sm:$0xff] %vm339, %v308
        %384 = vst.msk [vmem:[%s349 + $0x28] sm:$0xff] %vm339, %v309
        %385 = vst.msk [vmem:[%s349 + $0x30] sm:$0xff] %vm339, %v310
        %386 = vst.msk [vmem:[%s349 + $0x48] sm:$0xff] %vm339, %v311
        %387 = vst.msk [vmem:[%s349 + $0x50] sm:$0xff] %vm339, %v312
        %388 = vst.msk [vmem:[%s349 + $0x68] sm:$0xff] %vm339, %v313
        %389 = vst.msk [vmem:[%s349 + $0x70] sm:$0xff] %vm339, %v314
        %390 = vst.msk [vmem:[%s349 + $0x88] sm:$0xff] %vm339, %v315
        %391 = vst.msk [vmem:[%s349 + $0x90] sm:$0xff] %vm339, %v316
        %392 = vst.msk [vmem:[%s349 + $0xa8] sm:$0xff] %vm339, %v317
        %393 = vst.msk [vmem:[%s349 + $0xb0] sm:$0xff] %vm339, %v318
        %394 = vst.msk [vmem:[%s349 + $0xc8] sm:$0xff] %vm339, %v319
        %395 = vst.msk [vmem:[%s349 + $0xd0] sm:$0xff] %vm339, %v320
        %396 = vst.msk [vmem:[%s349 + $0xe8] sm:$0xff] %vm339, %v321
        %397 = vst.msk [vmem:[%s349 + $0xf0] sm:$0xff] %vm339, %v322
        %398 = vst.msk [vmem:[%s349 + $0x108] sm:$0xff] %vm339, %v323
        %399 = vst.msk [vmem:[%s349 + $0x110] sm:$0xff] %vm339, %v324
        %400 = vst.msk [vmem:[%s349 + $0x128] sm:$0xff] %vm339, %v325
        %401 = vst.msk [vmem:[%s349 + $0x130] sm:$0xff] %vm339, %v326
        %402 = vst.msk [vmem:[%s349 + $0x148] sm:$0xff] %vm339, %v327
        %403 = vst.msk [vmem:[%s349 + $0x150] sm:$0xff] %vm339, %v328
        %404 = vst.msk [vmem:[%s349 + $0x168] sm:$0xff] %vm339, %v329
        %405 = vst.msk [vmem:[%s349 + $0x170] sm:$0xff] %vm339, %v330
        %406 = vst.msk [vmem:[%s349 + $0x188] sm:$0xff] %vm339, %v331
        %407 = vst.msk [vmem:[%s349 + $0x190] sm:$0xff] %vm339, %v332
        %408 = vst.msk [vmem:[%s349 + $0x1a8] sm:$0xff] %vm339, %v333
        %409 = vst.msk [vmem:[%s349 + $0x1b0] sm:$0xff] %vm339, %v334
        %410 = vst.msk [vmem:[%s349 + $0x1c8] sm:$0xff] %vm339, %v335
        %411 = vst.msk [vmem:[%s349 + $0x1d0] sm:$0xff] %vm339, %v336
        %412 = vst.msk [vmem:[%s349 + $0x1e8] sm:$0xff] %vm339, %v337
        %413 = vst.msk [vmem:[%s349 + $0x1f0] sm:$0xff] %vm339, %v338
        %v414 = vld [vmem:[#allocation2] sm:$0xff]
        %v415 = vld [vmem:[#allocation2 + $0x8] sm:$0xff]
        %v416 = vld [vmem:[#allocation2 + $0x10] sm:$0xff]
        %v417 = vld [vmem:[#allocation2 + $0x18] sm:$0xff]
        %v418 = vld [vmem:[#allocation2 + $0x20] sm:$0xff]
        %v419 = vld [vmem:[#allocation2 + $0x28] sm:$0xff]
        %v420 = vld [vmem:[#allocation2 + $0x30] sm:$0xff]
        %v421 = vld [vmem:[#allocation2 + $0x38] sm:$0xff]
        %v422 = vld [vmem:[#allocation2 + $0x40] sm:$0xff]
        %v423 = vld [vmem:[#allocation2 + $0x48] sm:$0xff]
        %v424 = vld [vmem:[#allocation2 + $0x50] sm:$0xff]
        %v425 = vld [vmem:[#allocation2 + $0x58] sm:$0xff]
        %v426 = vld [vmem:[#allocation2 + $0x60] sm:$0xff]
        %v427 = vld [vmem:[#allocation2 + $0x68] sm:$0xff]
        %v428 = vld [vmem:[#allocation2 + $0x70] sm:$0xff]
        %v429 = vld [vmem:[#allocation2 + $0x78] sm:$0xff]
        %v430 = vld [vmem:[#allocation2 + $0x80] sm:$0xff]
        %v431 = vld [vmem:[#allocation2 + $0x88] sm:$0xff]
        %v432 = vld [vmem:[#allocation2 + $0x90] sm:$0xff]
        %v433 = vld [vmem:[#allocation2 + $0x98] sm:$0xff]
        %v434 = vld [vmem:[#allocation2 + $0xa0] sm:$0xff]
        %v435 = vld [vmem:[#allocation2 + $0xa8] sm:$0xff]
        %v436 = vld [vmem:[#allocation2 + $0xb0] sm:$0xff]
        %v437 = vld [vmem:[#allocation2 + $0xb8] sm:$0xff]
        %v438 = vld [vmem:[#allocation2 + $0xc0] sm:$0xff]
        %v439 = vld [vmem:[#allocation2 + $0xc8] sm:$0xff]
        %v440 = vld [vmem:[#allocation2 + $0xd0] sm:$0xff]
        %v441 = vld [vmem:[#allocation2 + $0xd8] sm:$0xff]
        %v442 = vld [vmem:[#allocation2 + $0xe0] sm:$0xff]
        %v443 = vld [vmem:[#allocation2 + $0xe8] sm:$0xff]
        %v444 = vld [vmem:[#allocation2 + $0xf0] sm:$0xff]
        %v445 = vld [vmem:[#allocation2 + $0xf8] sm:$0xff]
        %v446 = vld [vmem:[#allocation2 + $0x100] sm:$0xff]
        %v447 = vld [vmem:[#allocation2 + $0x108] sm:$0xff]
        %v448 = vld [vmem:[#allocation2 + $0x110] sm:$0xff]
        %v449 = vld [vmem:[#allocation2 + $0x118] sm:$0xff]
        %v450 = vld [vmem:[#allocation2 + $0x120] sm:$0xff]
        %v451 = vld [vmem:[#allocation2 + $0x128] sm:$0xff]
        %v452 = vld [vmem:[#allocation2 + $0x130] sm:$0xff]
        %v453 = vld [vmem:[#allocation2 + $0x138] sm:$0xff]
        %v454 = vld [vmem:[#allocation2 + $0x140] sm:$0xff]
        %v455 = vld [vmem:[#allocation2 + $0x148] sm:$0xff]
        %v456 = vld [vmem:[#allocation2 + $0x150] sm:$0xff]
        %v457 = vld [vmem:[#allocation2 + $0x158] sm:$0xff]
        %v458 = vld [vmem:[#allocation2 + $0x160] sm:$0xff]
        %v459 = vld [vmem:[#allocation2 + $0x168] sm:$0xff]
        %v460 = vld [vmem:[#allocation2 + $0x170] sm:$0xff]
        %v461 = vld [vmem:[#allocation2 + $0x178] sm:$0xff]
        %v462 = vld [vmem:[#allocation2 + $0x180] sm:$0xff]
        %v463 = vld [vmem:[#allocation2 + $0x188] sm:$0xff]
        %v464 = vld [vmem:[#allocation2 + $0x190] sm:$0xff]
        %v465 = vld [vmem:[#allocation2 + $0x198] sm:$0xff]
        %v466 = vld [vmem:[#allocation2 + $0x1a0] sm:$0xff]
        %v467 = vld [vmem:[#allocation2 + $0x1a8] sm:$0xff]
        %v468 = vld [vmem:[#allocation2 + $0x1b0] sm:$0xff]
        %v469 = vld [vmem:[#allocation2 + $0x1b8] sm:$0xff]
        %v470 = vld [vmem:[#allocation2 + $0x1c0] sm:$0xff]
        %v471 = vld [vmem:[#allocation2 + $0x1c8] sm:$0xff]
        %v472 = vld [vmem:[#allocation2 + $0x1d0] sm:$0xff]
        %v473 = vld [vmem:[#allocation2 + $0x1d8] sm:$0xff]
        %v474 = vld [vmem:[#allocation2 + $0x1e0] sm:$0xff]
        %v475 = vld [vmem:[#allocation2 + $0x1e8] sm:$0xff]
        %v476 = vld [vmem:[#allocation2 + $0x1f0] sm:$0xff]
        %v477 = vld [vmem:[#allocation2 + $0x1f8] sm:$0xff]
        %v478 = vrot.slane %v414, 7
        %v479 = vrot.slane %v415, 7
        %v480 = vrot.slane %v416, 7
        %v481 = vrot.slane %v418, 7
        %v482 = vrot.slane %v419, 7
        %v483 = vrot.slane %v420, 7
        %v484 = vrot.slane %v422, 7
        %v485 = vrot.slane %v423, 7
        %v486 = vrot.slane %v424, 7
        %v487 = vrot.slane %v426, 7
        %v488 = vrot.slane %v427, 7
        %v489 = vrot.slane %v428, 7
        %v490 = vrot.slane %v430, 7
        %v491 = vrot.slane %v431, 7
        %v492 = vrot.slane %v432, 7
        %v493 = vrot.slane %v434, 7
        %v494 = vrot.slane %v435, 7
        %v495 = vrot.slane %v436, 7
        %v496 = vrot.slane %v438, 7
        %v497 = vrot.slane %v439, 7
        %v498 = vrot.slane %v440, 7
        %v499 = vrot.slane %v442, 7
        %v500 = vrot.slane %v443, 7
        %v501 = vrot.slane %v444, 7
        %v502 = vrot.slane %v446, 7
        %v503 = vrot.slane %v447, 7
        %v504 = vrot.slane %v448, 7
        %v505 = vrot.slane %v450, 7
        %v506 = vrot.slane %v451, 7
        %v507 = vrot.slane %v452, 7
        %v508 = vrot.slane %v454, 7
        %v509 = vrot.slane %v455, 7
        %v510 = vrot.slane %v456, 7
        %v511 = vrot.slane %v458, 7
        %v512 = vrot.slane %v459, 7
        %v513 = vrot.slane %v460, 7
        %v514 = vrot.slane %v462, 7
        %v515 = vrot.slane %v463, 7
        %v516 = vrot.slane %v464, 7
        %v517 = vrot.slane %v466, 7
        %v518 = vrot.slane %v467, 7
        %v519 = vrot.slane %v468, 7
        %v520 = vrot.slane %v470, 7
        %v521 = vrot.slane %v471, 7
        %v522 = vrot.slane %v472, 7
        %v523 = vrot.slane %v474, 7
        %v524 = vrot.slane %v475, 7
        %v525 = vrot.slane %v476, 7
        %v526 = vlaneseq
        %v527 = vshrl.u32 %v526, 7
        %vm528 = vcmp.lt.s32.totalorder %v527, 1
        %v529 = vsel %vm528, %v524, %v525
        %v530 = vsel %vm528, %v523, %v524
        %v531 = vsel %vm528, %v521, %v522
        %v532 = vsel %vm528, %v520, %v521
        %v533 = vsel %vm528, %v518, %v519
        %v534 = vsel %vm528, %v517, %v518
        %v535 = vsel %vm528, %v515, %v516
        %v536 = vsel %vm528, %v514, %v515
        %v537 = vsel %vm528, %v512, %v513
        %v538 = vsel %vm528, %v511, %v512
        %v539 = vsel %vm528, %v509, %v510
        %v540 = vsel %vm528, %v508, %v509
        %v541 = vsel %vm528, %v506, %v507
        %v542 = vsel %vm528, %v505, %v506
        %v543 = vsel %vm528, %v503, %v504
        %v544 = vsel %vm528, %v502, %v503
        %v545 = vsel %vm528, %v500, %v501
        %v546 = vsel %vm528, %v499, %v500
        %v547 = vsel %vm528, %v497, %v498
        %v548 = vsel %vm528, %v496, %v497
        %v549 = vsel %vm528, %v494, %v495
        %v550 = vsel %vm528, %v493, %v494
        %v551 = vsel %vm528, %v491, %v492
        %v552 = vsel %vm528, %v490, %v491
        %v553 = vsel %vm528, %v488, %v489
        %v554 = vsel %vm528, %v487, %v488
        %v555 = vsel %vm528, %v485, %v486
        %v556 = vsel %vm528, %v484, %v485
        %v557 = vsel %vm528, %v482, %v483
        %v558 = vsel %vm528, %v481, %v482
        %v559 = vsel %vm528, %v479, %v480
        %v560 = vsel %vm528, %v478, %v479
        %v561 = vld [vmem:[%s1] sm:$0xf]
        %s562 = scalar_lea.vmem %s1, 4
        %v563 = vld [vmem:[%s562] sm:$0xf]
        %v565 = vsel %vm339, %v415, 0
        %v568 = vsel %vm339, %v416, 0
        %v571 = vsel %vm339, %v419, 0
        %v574 = vsel %vm339, %v420, 0
        %v577 = vsel %vm339, %v423, 0
        %v580 = vsel %vm339, %v424, 0
        %v583 = vsel %vm339, %v427, 0
        %v586 = vsel %vm339, %v428, 0
        %v589 = vsel %vm339, %v431, 0
        %v592 = vsel %vm339, %v432, 0
        %v595 = vsel %vm339, %v435, 0
        %v598 = vsel %vm339, %v436, 0
        %v601 = vsel %vm339, %v439, 0
        %v604 = vsel %vm339, %v440, 0
        %v607 = vsel %vm339, %v443, 0
        %v610 = vsel %vm339, %v444, 0
        %v613 = vsel %vm339, %v447, 0
        %v616 = vsel %vm339, %v448, 0
        %v619 = vsel %vm339, %v451, 0
        %v622 = vsel %vm339, %v452, 0
        %v625 = vsel %vm339, %v455, 0
        %v628 = vsel %vm339, %v456, 0
        %v631 = vsel %vm339, %v459, 0
        %v634 = vsel %vm339, %v460, 0
        %v637 = vsel %vm339, %v463, 0
        %v640 = vsel %vm339, %v464, 0
        %v643 = vsel %vm339, %v467, 0
        %v646 = vsel %vm339, %v468, 0
        %v649 = vsel %vm339, %v471, 0
        %v652 = vsel %vm339, %v472, 0
        %v655 = vsel %vm339, %v475, 0
        %v658 = vsel %vm339, %v476, 0
        %vm660 = vcmask 1043456
        %v662 = vsel %vm660, %v563, 0
        %664 = vmatprep.subr.mxu0 0.0
        %665 = vmatpush1.msra.mxu0 %v662
        %666 = vmatprep.subr.mxu0 0.0
        %667 = vmatpush1.msra.mxu0 0.0
        %668 = vmatprep.subr.mxu0 0.0
        %669 = vmatpush1.msra.mxu0 0.0
        %670 = vmatprep.subr.mxu0 0.0
        %671 = vmatpush1.msra.mxu0 0.0
        %672 = vmatprep.subr.mxu0 0.0
        %673 = vmatpush1.msra.mxu0 0.0
        %674 = vmatprep.subr.mxu0 0.0
        %675 = vmatpush1.msra.mxu0 0.0
        %676 = vmatprep.subr.mxu0 0.0
        %677 = vmatpush1.msra.mxu0 0.0
        %678 = vmatprep.subr.mxu0 0.0
        %679 = vmatpush1.msra.mxu0 0.0
        %680 = vmatprep.subr.mxu0 0.0
        %681 = vmatpush1.msra.mxu0 0.0
        %682 = vmatprep.subr.mxu0 0.0
        %683 = vmatpush1.msra.mxu0 0.0
        %684 = vmatprep.subr.mxu0 0.0
        %685 = vmatpush1.msra.mxu0 0.0
        %686 = vmatprep.subr.mxu0 0.0
        %687 = vmatpush1.msra.mxu0 0.0
        %688 = vmatprep.subr.mxu0 0.0
        %689 = vmatpush1.msra.mxu0 0.0
        %690 = vmatprep.subr.mxu0 0.0
        %691 = vmatpush1.msra.mxu0 0.0
        %692 = vmatprep.subr.mxu0 0.0
        %693 = vmatpush1.msra.mxu0 0.0
        %694 = vmatprep.subr.mxu0 0.0
        %695 = vmatpush1.msra.mxu0 0.0
        %696 = vmatprep.subr.mxu0 0.0
        %697 = vmatpush1.msra.mxu0 0.0
        %698 = vmatprep.subr.mxu0 0.0
        %699 = vmatpush1.msra.mxu0 0.0
        %700 = vmatprep.subr.mxu0 0.0
        %701 = vmatpush1.msra.mxu0 0.0
        %702 = vmatprep.subr.mxu0 0.0
        %703 = vmatpush1.msra.mxu0 0.0
        %704 = vmatprep.subr.mxu0 0.0
        %705 = vmatpush1.msra.mxu0 0.0
        %706 = vmatprep.subr.mxu0 0.0
        %707 = vmatpush1.msra.mxu0 0.0
        %708 = vmatprep.subr.mxu0 0.0
        %709 = vmatpush1.msra.mxu0 0.0
        %710 = vmatprep.subr.mxu0 0.0
        %711 = vmatpush1.msra.mxu0 0.0
        %712 = vmatprep.subr.mxu0 0.0
        %713 = vmatpush1.msra.mxu0 0.0
        %714 = vmatprep.subr.mxu0 0.0
        %715 = vmatpush1.msra.mxu0 0.0
        %716 = vmatprep.subr.mxu0 0.0
        %717 = vmatpush1.msra.mxu0 0.0
        %718 = vmatprep.subr.mxu0 0.0
        %719 = vmatpush1.msra.mxu0 0.0
        %720 = vmatprep.subr.mxu0 0.0
        %721 = vmatpush1.msra.mxu0 0.0
        %722 = vmatprep.subr.mxu0 0.0
        %723 = vmatpush1.msra.mxu0 0.0
        %724 = vmatprep.subr.mxu0 0.0
        %725 = vmatpush1.msra.mxu0 0.0
        %726 = vmatprep.subr.mxu0 0.0
        %727 = vmatpush1.msra.mxu0 0.0
        %728 = vmatprep.mubr.f32.mxu0 0.0
        %729 = vmatmul.mubr.f32.gmra.mrb[0].mxu0 %v565
        %v730 = vpop.f32.mrb[0].mxu0
        %v731 = vadd.f32 0.0, %v730
        %v732 = vpop.f32.mrb[0].mxu0
        %733 = vmatprep.mubr.f32.mxu0 0.0
        %734 = vmatmul.mubr.f32.gmra.mrb[0].mxu0 %v568
        %v735 = vpop.f32.mrb[0].mxu0
        %v736 = vadd.f32 0.0, %v735
        %v737 = vpop.f32.mrb[0].mxu0
        %738 = vmatprep.mubr.f32.mxu0 0.0
        %739 = vmatmul.mubr.f32.gmra.mrb[0].mxu0 %v571
        %v740 = vpop.f32.mrb[0].mxu0
        %v741 = vadd.f32 0.0, %v740
        %v742 = vpop.f32.mrb[0].mxu0
        %743 = vmatprep.mubr.f32.mxu0 0.0
        %744 = vmatmul.mubr.f32.gmra.mrb[0].mxu0 %v574
        %v745 = vpop.f32.mrb[0].mxu0
        %v746 = vadd.f32 0.0, %v745
        %v747 = vpop.f32.mrb[0].mxu0
        %748 = vmatprep.mubr.f32.mxu0 0.0
        %749 = vmatmul.mubr.f32.gmra.mrb[0].mxu0 %v577
        %v750 = vpop.f32.mrb[0].mxu0
        %v751 = vadd.f32 0.0, %v750
        %v752 = vpop.f32.mrb[0].mxu0
        %753 = vmatprep.mubr.f32.mxu0 0.0
        %754 = vmatmul.mubr.f32.gmra.mrb[0].mxu0 %v580
        %v755 = vpop.f32.mrb[0].mxu0
        %v756 = vadd.f32 0.0, %v755
        %v757 = vpop.f32.mrb[0].mxu0
        %758 = vmatprep.mubr.f32.mxu0 0.0
        %759 = vmatmul.mubr.f32.gmra.mrb[0].mxu0 %v583
        %v760 = vpop.f32.mrb[0].mxu0
        %v761 = vadd.f32 0.0, %v760
        %v762 = vpop.f32.mrb[0].mxu0
        %763 = vmatprep.mubr.f32.mxu0 0.0
        %764 = vmatmul.mubr.f32.gmra.mrb[0].mxu0 %v586
        %v765 = vpop.f32.mrb[0].mxu0
        %v766 = vadd.f32 0.0, %v765
        %v767 = vpop.f32.mrb[0].mxu0
        %768 = vmatprep.mubr.f32.mxu0 0.0
        %769 = vmatmul.mubr.f32.gmra.mrb[0].mxu0 %v589
        %v770 = vpop.f32.mrb[0].mxu0
        %v771 = vadd.f32 0.0, %v770
        %v772 = vpop.f32.mrb[0].mxu0
        %773 = vmatprep.mubr.f32.mxu0 0.0
        %774 = vmatmul.mubr.f32.gmra.mrb[0].mxu0 %v592
        %v775 = vpop.f32.mrb[0].mxu0
        %v776 = vadd.f32 0.0, %v775
        %v777 = vpop.f32.mrb[0].mxu0
        %778 = vmatprep.mubr.f32.mxu0 0.0
        %779 = vmatmul.mubr.f32.gmra.mrb[0].mxu0 %v595
        %v780 = vpop.f32.mrb[0].mxu0
        %v781 = vadd.f32 0.0, %v780
        %v782 = vpop.f32.mrb[0].mxu0
        %783 = vmatprep.mubr.f32.mxu0 0.0
        %784 = vmatmul.mubr.f32.gmra.mrb[0].mxu0 %v598
        %v785 = vpop.f32.mrb[0].mxu0
        %v786 = vadd.f32 0.0, %v785
        %v787 = vpop.f32.mrb[0].mxu0
        %788 = vmatprep.mubr.f32.mxu0 0.0
        %789 = vmatmul.mubr.f32.gmra.mrb[0].mxu0 %v601
        %v790 = vpop.f32.mrb[0].mxu0
        %v791 = vadd.f32 0.0, %v790
        %v792 = vpop.f32.mrb[0].mxu0
        %793 = vmatprep.mubr.f32.mxu0 0.0
        %794 = vmatmul.mubr.f32.gmra.mrb[0].mxu0 %v604
        %v795 = vpop.f32.mrb[0].mxu0
        %v796 = vadd.f32 0.0, %v795
        %v797 = vpop.f32.mrb[0].mxu0
        %798 = vmatprep.mubr.f32.mxu0 0.0
        %799 = vmatmul.mubr.f32.gmra.mrb[0].mxu0 %v607
        %v800 = vpop.f32.mrb[0].mxu0
        %v801 = vadd.f32 0.0, %v800
        %v802 = vpop.f32.mrb[0].mxu0
        %803 = vmatprep.mubr.f32.mxu0 0.0
        %804 = vmatmul.mubr.f32.gmra.mrb[0].mxu0 %v610
        %v805 = vpop.f32.mrb[0].mxu0
        %v806 = vadd.f32 0.0, %v805
        %v807 = vpop.f32.mrb[0].mxu0
        %808 = vmatprep.mubr.f32.mxu0 0.0
        %809 = vmatmul.mubr.f32.gmra.mrb[0].mxu0 %v613
        %v810 = vpop.f32.mrb[0].mxu0
        %v811 = vadd.f32 0.0, %v810
        %v812 = vpop.f32.mrb[0].mxu0
        %813 = vmatprep.mubr.f32.mxu0 0.0
        %814 = vmatmul.mubr.f32.gmra.mrb[0].mxu0 %v616
        %v815 = vpop.f32.mrb[0].mxu0
        %v816 = vadd.f32 0.0, %v815
        %v817 = vpop.f32.mrb[0].mxu0
        %818 = vmatprep.mubr.f32.mxu0 0.0
        %819 = vmatmul.mubr.f32.gmra.mrb[0].mxu0 %v619
        %v820 = vpop.f32.mrb[0].mxu0
        %v821 = vadd.f32 0.0, %v820
        %v822 = vpop.f32.mrb[0].mxu0
        %823 = vmatprep.mubr.f32.mxu0 0.0
        %824 = vmatmul.mubr.f32.gmra.mrb[0].mxu0 %v622
        %v825 = vpop.f32.mrb[0].mxu0
        %v826 = vadd.f32 0.0, %v825
        %v827 = vpop.f32.mrb[0].mxu0
        %828 = vmatprep.mubr.f32.mxu0 0.0
        %829 = vmatmul.mubr.f32.gmra.mrb[0].mxu0 %v625
        %v830 = vpop.f32.mrb[0].mxu0
        %v831 = vadd.f32 0.0, %v830
        %v832 = vpop.f32.mrb[0].mxu0
        %833 = vmatprep.mubr.f32.mxu0 0.0
        %834 = vmatmul.mubr.f32.gmra.mrb[0].mxu0 %v628
        %v835 = vpop.f32.mrb[0].mxu0
        %v836 = vadd.f32 0.0, %v835
        %v837 = vpop.f32.mrb[0].mxu0
        %838 = vmatprep.mubr.f32.mxu0 0.0
        %839 = vmatmul.mubr.f32.gmra.mrb[0].mxu0 %v631
        %v840 = vpop.f32.mrb[0].mxu0
        %v841 = vadd.f32 0.0, %v840
        %v842 = vpop.f32.mrb[0].mxu0
        %843 = vmatprep.mubr.f32.mxu0 0.0
        %844 = vmatmul.mubr.f32.gmra.mrb[0].mxu0 %v634
        %v845 = vpop.f32.mrb[0].mxu0
        %v846 = vadd.f32 0.0, %v845
        %v847 = vpop.f32.mrb[0].mxu0
        %848 = vmatprep.mubr.f32.mxu0 0.0
        %849 = vmatmul.mubr.f32.gmra.mrb[0].mxu0 %v637
        %v850 = vpop.f32.mrb[0].mxu0
        %v851 = vadd.f32 0.0, %v850
        %v852 = vpop.f32.mrb[0].mxu0
        %853 = vmatprep.mubr.f32.mxu0 0.0
        %854 = vmatmul.mubr.f32.gmra.mrb[0].mxu0 %v640
        %v855 = vpop.f32.mrb[0].mxu0
        %v856 = vadd.f32 0.0, %v855
        %v857 = vpop.f32.mrb[0].mxu0
        %858 = vmatprep.mubr.f32.mxu0 0.0
        %859 = vmatmul.mubr.f32.gmra.mrb[0].mxu0 %v643
        %v860 = vpop.f32.mrb[0].mxu0
        %v861 = vadd.f32 0.0, %v860
        %v862 = vpop.f32.mrb[0].mxu0
        %863 = vmatprep.mubr.f32.mxu0 0.0
        %864 = vmatmul.mubr.f32.gmra.mrb[0].mxu0 %v646
        %v865 = vpop.f32.mrb[0].mxu0
        %v866 = vadd.f32 0.0, %v865
        %v867 = vpop.f32.mrb[0].mxu0
        %868 = vmatprep.mubr.f32.mxu0 0.0
        %869 = vmatmul.mubr.f32.gmra.mrb[0].mxu0 %v649
        %v870 = vpop.f32.mrb[0].mxu0
        %v871 = vadd.f32 0.0, %v870
        %v872 = vpop.f32.mrb[0].mxu0
        %873 = vmatprep.mubr.f32.mxu0 0.0
        %874 = vmatmul.mubr.f32.gmra.mrb[0].mxu0 %v652
        %v875 = vpop.f32.mrb[0].mxu0
        %v876 = vadd.f32 0.0, %v875
        %v877 = vpop.f32.mrb[0].mxu0
        %878 = vmatprep.mubr.f32.mxu0 0.0
        %879 = vmatmul.mubr.f32.gmra.mrb[0].mxu0 %v655
        %v880 = vpop.f32.mrb[0].mxu0
        %v881 = vadd.f32 0.0, %v880
        %v882 = vpop.f32.mrb[0].mxu0
        %883 = vmatprep.mubr.f32.mxu0 0.0
        %884 = vmatmul.mubr.f32.gmra.mrb[0].mxu0 %v658
        %v885 = vpop.f32.mrb[0].mxu0
        %v886 = vadd.f32 0.0, %v885
        %v887 = vpop.f32.mrb[0].mxu0
        %888 = vdwg.mxu0
        %v890 = vsel %vm339, %v560, 0
        %v893 = vsel %vm339, %v559, 0
        %v896 = vsel %vm339, %v558, 0
        %v899 = vsel %vm339, %v557, 0
        %v902 = vsel %vm339, %v556, 0
        %v905 = vsel %vm339, %v555, 0
        %v908 = vsel %vm339, %v554, 0
        %v911 = vsel %vm339, %v553, 0
        %v914 = vsel %vm339, %v552, 0
        %v917 = vsel %vm339, %v551, 0
        %v920 = vsel %vm339, %v550, 0
        %v923 = vsel %vm339, %v549, 0
        %v926 = vsel %vm339, %v548, 0
        %v929 = vsel %vm339, %v547, 0
        %v932 = vsel %vm339, %v546, 0
        %v935 = vsel %vm339, %v545, 0
        %v938 = vsel %vm339, %v544, 0
        %v941 = vsel %vm339, %v543, 0
        %v944 = vsel %vm339, %v542, 0
        %v947 = vsel %vm339, %v541, 0
        %v950 = vsel %vm339, %v540, 0
        %v953 = vsel %vm339, %v539, 0
        %v956 = vsel %vm339, %v538, 0
        %v959 = vsel %vm339, %v537, 0
        %v962 = vsel %vm339, %v536, 0
        %v965 = vsel %vm339, %v535, 0
        %v968 = vsel %vm339, %v534, 0
        %v971 = vsel %vm339, %v533, 0
        %v974 = vsel %vm339, %v532, 0
        %v977 = vsel %vm339, %v531, 0
        %v980 = vsel %vm339, %v530, 0
        %v983 = vsel %vm339, %v529, 0
        %v986 = vsel %vm660, %v561, 0
        %988 = vmatprep.subr.mxu0 0.0
        %989 = vmatpush1.msra.mxu0 %v986
        %990 = vmatprep.subr.mxu0 0.0
        %991 = vmatpush1.msra.mxu0 0.0
        %992 = vmatprep.subr.mxu0 0.0
        %993 = vmatpush1.msra.mxu0 0.0
        %994 = vmatprep.subr.mxu0 0.0
        %995 = vmatpush1.msra.mxu0 0.0
        %996 = vmatprep.subr.mxu0 0.0
        %997 = vmatpush1.msra.mxu0 0.0
        %998 = vmatprep.subr.mxu0 0.0
        %999 = vmatpush1.msra.mxu0 0.0
        %1000 = vmatprep.subr.mxu0 0.0
        %1001 = vmatpush1.msra.mxu0 0.0
        %1002 = vmatprep.subr.mxu0 0.0
        %1003 = vmatpush1.msra.mxu0 0.0
        %1004 = vmatprep.subr.mxu0 0.0
        %1005 = vmatpush1.msra.mxu0 0.0
        %1006 = vmatprep.subr.mxu0 0.0
        %1007 = vmatpush1.msra.mxu0 0.0
        %1008 = vmatprep.subr.mxu0 0.0
        %1009 = vmatpush1.msra.mxu0 0.0
        %1010 = vmatprep.subr.mxu0 0.0
        %1011 = vmatpush1.msra.mxu0 0.0
        %1012 = vmatprep.subr.mxu0 0.0
        %1013 = vmatpush1.msra.mxu0 0.0
        %1014 = vmatprep.subr.mxu0 0.0
        %1015 = vmatpush1.msra.mxu0 0.0
        %1016 = vmatprep.subr.mxu0 0.0
        %1017 = vmatpush1.msra.mxu0 0.0
        %1018 = vmatprep.subr.mxu0 0.0
        %1019 = vmatpush1.msra.mxu0 0.0
        %1020 = vmatprep.subr.mxu0 0.0
        %1021 = vmatpush1.msra.mxu0 0.0
        %1022 = vmatprep.subr.mxu0 0.0
        %1023 = vmatpush1.msra.mxu0 0.0
        %1024 = vmatprep.subr.mxu0 0.0
        %1025 = vmatpush1.msra.mxu0 0.0
        %1026 = vmatprep.subr.mxu0 0.0
        %1027 = vmatpush1.msra.mxu0 0.0
        %1028 = vmatprep.subr.mxu0 0.0
        %1029 = vmatpush1.msra.mxu0 0.0
        %1030 = vmatprep.subr.mxu0 0.0
        %1031 = vmatpush1.msra.mxu0 0.0
        %1032 = vmatprep.subr.mxu0 0.0
        %1033 = vmatpush1.msra.mxu0 0.0
        %1034 = vmatprep.subr.mxu0 0.0
        %1035 = vmatpush1.msra.mxu0 0.0
        %1036 = vmatprep.subr.mxu0 0.0
        %1037 = vmatpush1.msra.mxu0 0.0
        %1038 = vmatprep.subr.mxu0 0.0
        %1039 = vmatpush1.msra.mxu0 0.0
        %1040 = vmatprep.subr.mxu0 0.0
        %1041 = vmatpush1.msra.mxu0 0.0
        %1042 = vmatprep.subr.mxu0 0.0
        %1043 = vmatpush1.msra.mxu0 0.0
        %1044 = vmatprep.subr.mxu0 0.0
        %1045 = vmatpush1.msra.mxu0 0.0
        %1046 = vmatprep.subr.mxu0 0.0
        %1047 = vmatpush1.msra.mxu0 0.0
        %1048 = vmatprep.subr.mxu0 0.0
        %1049 = vmatpush1.msra.mxu0 0.0
        %1050 = vmatprep.subr.mxu0 0.0
        %1051 = vmatpush1.msra.mxu0 0.0
        %1052 = vmatprep.mubr.f32.mxu0 0.0
        %1053 = vmatmul.mubr.f32.gmra.mrb[0].mxu0 %v890
        %v1054 = vpop.f32.mrb[0].mxu0
        %v1055 = vadd.f32 %v731, %v1054
        %v1056 = vpop.f32.mrb[0].mxu0
        %1057 = vmatprep.mubr.f32.mxu0 0.0
        %1058 = vmatmul.mubr.f32.gmra.mrb[0].mxu0 %v893
        %v1059 = vpop.f32.mrb[0].mxu0
        %v1060 = vadd.f32 %v736, %v1059
        %v1061 = vpop.f32.mrb[0].mxu0
        %1062 = vmatprep.mubr.f32.mxu0 0.0
        %1063 = vmatmul.mubr.f32.gmra.mrb[0].mxu0 %v896
        %v1064 = vpop.f32.mrb[0].mxu0
        %v1065 = vadd.f32 %v741, %v1064
        %v1066 = vpop.f32.mrb[0].mxu0
        %1067 = vmatprep.mubr.f32.mxu0 0.0
        %1068 = vmatmul.mubr.f32.gmra.mrb[0].mxu0 %v899
        %v1069 = vpop.f32.mrb[0].mxu0
        %v1070 = vadd.f32 %v746, %v1069
        %v1071 = vpop.f32.mrb[0].mxu0
        %1072 = vmatprep.mubr.f32.mxu0 0.0
        %1073 = vmatmul.mubr.f32.gmra.mrb[0].mxu0 %v902
        %v1074 = vpop.f32.mrb[0].mxu0
        %v1075 = vadd.f32 %v751, %v1074
        %v1076 = vpop.f32.mrb[0].mxu0
        %1077 = vmatprep.mubr.f32.mxu0 0.0
        %1078 = vmatmul.mubr.f32.gmra.mrb[0].mxu0 %v905
        %v1079 = vpop.f32.mrb[0].mxu0
        %v1080 = vadd.f32 %v756, %v1079
        %v1081 = vpop.f32.mrb[0].mxu0
        %1082 = vmatprep.mubr.f32.mxu0 0.0
        %1083 = vmatmul.mubr.f32.gmra.mrb[0].mxu0 %v908
        %v1084 = vpop.f32.mrb[0].mxu0
        %v1085 = vadd.f32 %v761, %v1084
        %v1086 = vpop.f32.mrb[0].mxu0
        %1087 = vmatprep.mubr.f32.mxu0 0.0
        %1088 = vmatmul.mubr.f32.gmra.mrb[0].mxu0 %v911
        %v1089 = vpop.f32.mrb[0].mxu0
        %v1090 = vadd.f32 %v766, %v1089
        %v1091 = vpop.f32.mrb[0].mxu0
        %1092 = vmatprep.mubr.f32.mxu0 0.0
        %1093 = vmatmul.mubr.f32.gmra.mrb[0].mxu0 %v914
        %v1094 = vpop.f32.mrb[0].mxu0
        %v1095 = vadd.f32 %v771, %v1094
        %v1096 = vpop.f32.mrb[0].mxu0
        %1097 = vmatprep.mubr.f32.mxu0 0.0
        %1098 = vmatmul.mubr.f32.gmra.mrb[0].mxu0 %v917
        %v1099 = vpop.f32.mrb[0].mxu0
        %v1100 = vadd.f32 %v776, %v1099
        %v1101 = vpop.f32.mrb[0].mxu0
        %1102 = vmatprep.mubr.f32.mxu0 0.0
        %1103 = vmatmul.mubr.f32.gmra.mrb[0].mxu0 %v920
        %v1104 = vpop.f32.mrb[0].mxu0
        %v1105 = vadd.f32 %v781, %v1104
        %v1106 = vpop.f32.mrb[0].mxu0
        %1107 = vmatprep.mubr.f32.mxu0 0.0
        %1108 = vmatmul.mubr.f32.gmra.mrb[0].mxu0 %v923
        %v1109 = vpop.f32.mrb[0].mxu0
        %v1110 = vadd.f32 %v786, %v1109
        %v1111 = vpop.f32.mrb[0].mxu0
        %1112 = vmatprep.mubr.f32.mxu0 0.0
        %1113 = vmatmul.mubr.f32.gmra.mrb[0].mxu0 %v926
        %v1114 = vpop.f32.mrb[0].mxu0
        %v1115 = vadd.f32 %v791, %v1114
        %v1116 = vpop.f32.mrb[0].mxu0
        %1117 = vmatprep.mubr.f32.mxu0 0.0
        %1118 = vmatmul.mubr.f32.gmra.mrb[0].mxu0 %v929
        %v1119 = vpop.f32.mrb[0].mxu0
        %v1120 = vadd.f32 %v796, %v1119
        %v1121 = vpop.f32.mrb[0].mxu0
        %1122 = vmatprep.mubr.f32.mxu0 0.0
        %1123 = vmatmul.mubr.f32.gmra.mrb[0].mxu0 %v932
        %v1124 = vpop.f32.mrb[0].mxu0
        %v1125 = vadd.f32 %v801, %v1124
        %v1126 = vpop.f32.mrb[0].mxu0
        %1127 = vmatprep.mubr.f32.mxu0 0.0
        %1128 = vmatmul.mubr.f32.gmra.mrb[0].mxu0 %v935
        %v1129 = vpop.f32.mrb[0].mxu0
        %v1130 = vadd.f32 %v806, %v1129
        %v1131 = vpop.f32.mrb[0].mxu0
        %1132 = vmatprep.mubr.f32.mxu0 0.0
        %1133 = vmatmul.mubr.f32.gmra.mrb[0].mxu0 %v938
        %v1134 = vpop.f32.mrb[0].mxu0
        %v1135 = vadd.f32 %v811, %v1134
        %v1136 = vpop.f32.mrb[0].mxu0
        %1137 = vmatprep.mubr.f32.mxu0 0.0
        %1138 = vmatmul.mubr.f32.gmra.mrb[0].mxu0 %v941
        %v1139 = vpop.f32.mrb[0].mxu0
        %v1140 = vadd.f32 %v816, %v1139
        %v1141 = vpop.f32.mrb[0].mxu0
        %1142 = vmatprep.mubr.f32.mxu0 0.0
        %1143 = vmatmul.mubr.f32.gmra.mrb[0].mxu0 %v944
        %v1144 = vpop.f32.mrb[0].mxu0
        %v1145 = vadd.f32 %v821, %v1144
        %v1146 = vpop.f32.mrb[0].mxu0
        %1147 = vmatprep.mubr.f32.mxu0 0.0
        %1148 = vmatmul.mubr.f32.gmra.mrb[0].mxu0 %v947
        %v1149 = vpop.f32.mrb[0].mxu0
        %v1150 = vadd.f32 %v826, %v1149
        %v1151 = vpop.f32.mrb[0].mxu0
        %1152 = vmatprep.mubr.f32.mxu0 0.0
        %1153 = vmatmul.mubr.f32.gmra.mrb[0].mxu0 %v950
        %v1154 = vpop.f32.mrb[0].mxu0
        %v1155 = vadd.f32 %v831, %v1154
        %v1156 = vpop.f32.mrb[0].mxu0
        %1157 = vmatprep.mubr.f32.mxu0 0.0
        %1158 = vmatmul.mubr.f32.gmra.mrb[0].mxu0 %v953
        %v1159 = vpop.f32.mrb[0].mxu0
        %v1160 = vadd.f32 %v836, %v1159
        %v1161 = vpop.f32.mrb[0].mxu0
        %1162 = vmatprep.mubr.f32.mxu0 0.0
        %1163 = vmatmul.mubr.f32.gmra.mrb[0].mxu0 %v956
        %v1164 = vpop.f32.mrb[0].mxu0
        %v1165 = vadd.f32 %v841, %v1164
        %v1166 = vpop.f32.mrb[0].mxu0
        %1167 = vmatprep.mubr.f32.mxu0 0.0
        %1168 = vmatmul.mubr.f32.gmra.mrb[0].mxu0 %v959
        %v1169 = vpop.f32.mrb[0].mxu0
        %v1170 = vadd.f32 %v846, %v1169
        %v1171 = vpop.f32.mrb[0].mxu0
        %1172 = vmatprep.mubr.f32.mxu0 0.0
        %1173 = vmatmul.mubr.f32.gmra.mrb[0].mxu0 %v962
        %v1174 = vpop.f32.mrb[0].mxu0
        %v1175 = vadd.f32 %v851, %v1174
        %v1176 = vpop.f32.mrb[0].mxu0
        %1177 = vmatprep.mubr.f32.mxu0 0.0
        %1178 = vmatmul.mubr.f32.gmra.mrb[0].mxu0 %v965
        %v1179 = vpop.f32.mrb[0].mxu0
        %v1180 = vadd.f32 %v856, %v1179
        %v1181 = vpop.f32.mrb[0].mxu0
        %1182 = vmatprep.mubr.f32.mxu0 0.0
        %1183 = vmatmul.mubr.f32.gmra.mrb[0].mxu0 %v968
        %v1184 = vpop.f32.mrb[0].mxu0
        %v1185 = vadd.f32 %v861, %v1184
        %v1186 = vpop.f32.mrb[0].mxu0
        %1187 = vmatprep.mubr.f32.mxu0 0.0
        %1188 = vmatmul.mubr.f32.gmra.mrb[0].mxu0 %v971
        %v1189 = vpop.f32.mrb[0].mxu0
        %v1190 = vadd.f32 %v866, %v1189
        %v1191 = vpop.f32.mrb[0].mxu0
        %1192 = vmatprep.mubr.f32.mxu0 0.0
        %1193 = vmatmul.mubr.f32.gmra.mrb[0].mxu0 %v974
        %v1194 = vpop.f32.mrb[0].mxu0
        %v1195 = vadd.f32 %v871, %v1194
        %v1196 = vpop.f32.mrb[0].mxu0
        %1197 = vmatprep.mubr.f32.mxu0 0.0
        %1198 = vmatmul.mubr.f32.gmra.mrb[0].mxu0 %v977
        %v1199 = vpop.f32.mrb[0].mxu0
        %v1200 = vadd.f32 %v876, %v1199
        %v1201 = vpop.f32.mrb[0].mxu0
        %1202 = vmatprep.mubr.f32.mxu0 0.0
        %1203 = vmatmul.mubr.f32.gmra.mrb[0].mxu0 %v980
        %v1204 = vpop.f32.mrb[0].mxu0
        %v1205 = vadd.f32 %v881, %v1204
        %v1206 = vpop.f32.mrb[0].mxu0
        %1207 = vmatprep.mubr.f32.mxu0 0.0
        %1208 = vmatmul.mubr.f32.gmra.mrb[0].mxu0 %v983
        %v1209 = vpop.f32.mrb[0].mxu0
        %v1210 = vadd.f32 %v886, %v1209
        %v1211 = vpop.f32.mrb[0].mxu0
        %1212 = vdwg.mxu0
        %v1213 = vrot.slane %v415, 1
        %v1214 = vrot.slane %v416, 1
        %v1215 = vrot.slane %v417, 1
        %v1216 = vrot.slane %v419, 1
        %v1217 = vrot.slane %v420, 1
        %v1218 = vrot.slane %v421, 1
        %v1219 = vrot.slane %v423, 1
        %v1220 = vrot.slane %v424, 1
        %v1221 = vrot.slane %v425, 1
        %v1222 = vrot.slane %v427, 1
        %v1223 = vrot.slane %v428, 1
        %v1224 = vrot.slane %v429, 1
        %v1225 = vrot.slane %v431, 1
        %v1226 = vrot.slane %v432, 1
        %v1227 = vrot.slane %v433, 1
        %v1228 = vrot.slane %v435, 1
        %v1229 = vrot.slane %v436, 1
        %v1230 = vrot.slane %v437, 1
        %v1231 = vrot.slane %v439, 1
        %v1232 = vrot.slane %v440, 1
        %v1233 = vrot.slane %v441, 1
        %v1234 = vrot.slane %v443, 1
        %v1235 = vrot.slane %v444, 1
        %v1236 = vrot.slane %v445, 1
        %v1237 = vrot.slane %v447, 1
        %v1238 = vrot.slane %v448, 1
        %v1239 = vrot.slane %v449, 1
        %v1240 = vrot.slane %v451, 1
        %v1241 = vrot.slane %v452, 1
        %v1242 = vrot.slane %v453, 1
        %v1243 = vrot.slane %v455, 1
        %v1244 = vrot.slane %v456, 1
        %v1245 = vrot.slane %v457, 1
        %v1246 = vrot.slane %v459, 1
        %v1247 = vrot.slane %v460, 1
        %v1248 = vrot.slane %v461, 1
        %v1249 = vrot.slane %v463, 1
        %v1250 = vrot.slane %v464, 1
        %v1251 = vrot.slane %v465, 1
        %v1252 = vrot.slane %v467, 1
        %v1253 = vrot.slane %v468, 1
        %v1254 = vrot.slane %v469, 1
        %v1255 = vrot.slane %v471, 1
        %v1256 = vrot.slane %v472, 1
        %v1257 = vrot.slane %v473, 1
        %v1258 = vrot.slane %v475, 1
        %v1259 = vrot.slane %v476, 1
        %v1260 = vrot.slane %v477, 1
        %vm1261 = vcmp.lt.s32.totalorder %v527, 7
        %v1262 = vsel %vm1261, %v1259, %v1260
        %v1263 = vsel %vm1261, %v1258, %v1259
        %v1264 = vsel %vm1261, %v1256, %v1257
        %v1265 = vsel %vm1261, %v1255, %v1256
        %v1266 = vsel %vm1261, %v1253, %v1254
        %v1267 = vsel %vm1261, %v1252, %v1253
        %v1268 = vsel %vm1261, %v1250, %v1251
        %v1269 = vsel %vm1261, %v1249, %v1250
        %v1270 = vsel %vm1261, %v1247, %v1248
        %v1271 = vsel %vm1261, %v1246, %v1247
        %v1272 = vsel %vm1261, %v1244, %v1245
        %v1273 = vsel %vm1261, %v1243, %v1244
        %v1274 = vsel %vm1261, %v1241, %v1242
        %v1275 = vsel %vm1261, %v1240, %v1241
        %v1276 = vsel %vm1261, %v1238, %v1239
        %v1277 = vsel %vm1261, %v1237, %v1238
        %v1278 = vsel %vm1261, %v1235, %v1236
        %v1279 = vsel %vm1261, %v1234, %v1235
        %v1280 = vsel %vm1261, %v1232, %v1233
        %v1281 = vsel %vm1261, %v1231, %v1232
        %v1282 = vsel %vm1261, %v1229, %v1230
        %v1283 = vsel %vm1261, %v1228, %v1229
        %v1284 = vsel %vm1261, %v1226, %v1227
        %v1285 = vsel %vm1261, %v1225, %v1226
        %v1286 = vsel %vm1261, %v1223, %v1224
        %v1287 = vsel %vm1261, %v1222, %v1223
        %v1288 = vsel %vm1261, %v1220, %v1221
        %v1289 = vsel %vm1261, %v1219, %v1220
        %v1290 = vsel %vm1261, %v1217, %v1218
        %v1291 = vsel %vm1261, %v1216, %v1217
        %v1292 = vsel %vm1261, %v1214, %v1215
        %v1293 = vsel %vm1261, %v1213, %v1214
        %s1294 = scalar_lea.vmem %s1, 8
        %v1295 = vld [vmem:[%s1294] sm:$0xf]
        %v1297 = vsel %vm339, %v1293, 0
        %v1300 = vsel %vm339, %v1292, 0
        %v1303 = vsel %vm339, %v1291, 0
        %v1306 = vsel %vm339, %v1290, 0
        %v1309 = vsel %vm339, %v1289, 0
        %v1312 = vsel %vm339, %v1288, 0
        %v1315 = vsel %vm339, %v1287, 0
        %v1318 = vsel %vm339, %v1286, 0
        %v1321 = vsel %vm339, %v1285, 0
        %v1324 = vsel %vm339, %v1284, 0
        %v1327 = vsel %vm339, %v1283, 0
        %v1330 = vsel %vm339, %v1282, 0
        %v1333 = vsel %vm339, %v1281, 0
        %v1336 = vsel %vm339, %v1280, 0
        %v1339 = vsel %vm339, %v1279, 0
        %v1342 = vsel %vm339, %v1278, 0
        %v1345 = vsel %vm339, %v1277, 0
        %v1348 = vsel %vm339, %v1276, 0
        %v1351 = vsel %vm339, %v1275, 0
        %v1354 = vsel %vm339, %v1274, 0
        %v1357 = vsel %vm339, %v1273, 0
        %v1360 = vsel %vm339, %v1272, 0
        %v1363 = vsel %vm339, %v1271, 0
        %v1366 = vsel %vm339, %v1270, 0
        %v1369 = vsel %vm339, %v1269, 0
        %v1372 = vsel %vm339, %v1268, 0
        %v1375 = vsel %vm339, %v1267, 0
        %v1378 = vsel %vm339, %v1266, 0
        %v1381 = vsel %vm339, %v1265, 0
        %v1384 = vsel %vm339, %v1264, 0
        %v1387 = vsel %vm339, %v1263, 0
        %v1390 = vsel %vm339, %v1262, 0
        %v1393 = vsel %vm660, %v1295, 0
        %1395 = vmatprep.subr.mxu0 0.0
        %1396 = vmatpush1.msra.mxu0 %v1393
        %1397 = vmatprep.subr.mxu0 0.0
        %1398 = vmatpush1.msra.mxu0 0.0
        %1399 = vmatprep.subr.mxu0 0.0
        %1400 = vmatpush1.msra.mxu0 0.0
        %1401 = vmatprep.subr.mxu0 0.0
        %1402 = vmatpush1.msra.mxu0 0.0
        %1403 = vmatprep.subr.mxu0 0.0
        %1404 = vmatpush1.msra.mxu0 0.0
        %1405 = vmatprep.subr.mxu0 0.0
        %1406 = vmatpush1.msra.mxu0 0.0
        %1407 = vmatprep.subr.mxu0 0.0
        %1408 = vmatpush1.msra.mxu0 0.0
        %1409 = vmatprep.subr.mxu0 0.0
        %1410 = vmatpush1.msra.mxu0 0.0
        %1411 = vmatprep.subr.mxu0 0.0
        %1412 = vmatpush1.msra.mxu0 0.0
        %1413 = vmatprep.subr.mxu0 0.0
        %1414 = vmatpush1.msra.mxu0 0.0
        %1415 = vmatprep.subr.mxu0 0.0
        %1416 = vmatpush1.msra.mxu0 0.0
        %1417 = vmatprep.subr.mxu0 0.0
        %1418 = vmatpush1.msra.mxu0 0.0
        %1419 = vmatprep.subr.mxu0 0.0
        %1420 = vmatpush1.msra.mxu0 0.0
        %1421 = vmatprep.subr.mxu0 0.0
        %1422 = vmatpush1.msra.mxu0 0.0
        %1423 = vmatprep.subr.mxu0 0.0
        %1424 = vmatpush1.msra.mxu0 0.0
        %1425 = vmatprep.subr.mxu0 0.0
        %1426 = vmatpush1.msra.mxu0 0.0
        %1427 = vmatprep.subr.mxu0 0.0
        %1428 = vmatpush1.msra.mxu0 0.0
        %1429 = vmatprep.subr.mxu0 0.0
        %1430 = vmatpush1.msra.mxu0 0.0
        %1431 = vmatprep.subr.mxu0 0.0
        %1432 = vmatpush1.msra.mxu0 0.0
        %1433 = vmatprep.subr.mxu0 0.0
        %1434 = vmatpush1.msra.mxu0 0.0
        %1435 = vmatprep.subr.mxu0 0.0
        %1436 = vmatpush1.msra.mxu0 0.0
        %1437 = vmatprep.subr.mxu0 0.0
        %1438 = vmatpush1.msra.mxu0 0.0
        %1439 = vmatprep.subr.mxu0 0.0
        %1440 = vmatpush1.msra.mxu0 0.0
        %1441 = vmatprep.subr.mxu0 0.0
        %1442 = vmatpush1.msra.mxu0 0.0
        %1443 = vmatprep.subr.mxu0 0.0
        %1444 = vmatpush1.msra.mxu0 0.0
        %1445 = vmatprep.subr.mxu0 0.0
        %1446 = vmatpush1.msra.mxu0 0.0
        %1447 = vmatprep.subr.mxu0 0.0
        %1448 = vmatpush1.msra.mxu0 0.0
        %1449 = vmatprep.subr.mxu0 0.0
        %1450 = vmatpush1.msra.mxu0 0.0
        %1451 = vmatprep.subr.mxu0 0.0
        %1452 = vmatpush1.msra.mxu0 0.0
        %1453 = vmatprep.subr.mxu0 0.0
        %1454 = vmatpush1.msra.mxu0 0.0
        %1455 = vmatprep.subr.mxu0 0.0
        %1456 = vmatpush1.msra.mxu0 0.0
        %1457 = vmatprep.subr.mxu0 0.0
        %1458 = vmatpush1.msra.mxu0 0.0
        %1459 = vmatprep.mubr.f32.mxu0 0.0
        %1460 = vmatmul.mubr.f32.gmra.mrb[0].mxu0 %v1297
        %v1461 = vpop.f32.mrb[0].mxu0
        %v1462 = vadd.f32 0.0, %v1461
        %v1463 = vpop.f32.mrb[0].mxu0
        %1464 = vmatprep.mubr.f32.mxu0 0.0
        %1465 = vmatmul.mubr.f32.gmra.mrb[0].mxu0 %v1300
        %v1466 = vpop.f32.mrb[0].mxu0
        %v1467 = vadd.f32 0.0, %v1466
        %v1468 = vpop.f32.mrb[0].mxu0
        %1469 = vmatprep.mubr.f32.mxu0 0.0
        %1470 = vmatmul.mubr.f32.gmra.mrb[0].mxu0 %v1303
        %v1471 = vpop.f32.mrb[0].mxu0
        %v1472 = vadd.f32 0.0, %v1471
        %v1473 = vpop.f32.mrb[0].mxu0
        %1474 = vmatprep.mubr.f32.mxu0 0.0
        %1475 = vmatmul.mubr.f32.gmra.mrb[0].mxu0 %v1306
        %v1476 = vpop.f32.mrb[0].mxu0
        %v1477 = vadd.f32 0.0, %v1476
        %v1478 = vpop.f32.mrb[0].mxu0
        %1479 = vmatprep.mubr.f32.mxu0 0.0
        %1480 = vmatmul.mubr.f32.gmra.mrb[0].mxu0 %v1309
        %v1481 = vpop.f32.mrb[0].mxu0
        %v1482 = vadd.f32 0.0, %v1481
        %v1483 = vpop.f32.mrb[0].mxu0
        %1484 = vmatprep.mubr.f32.mxu0 0.0
        %1485 = vmatmul.mubr.f32.gmra.mrb[0].mxu0 %v1312
        %v1486 = vpop.f32.mrb[0].mxu0
        %v1487 = vadd.f32 0.0, %v1486
        %v1488 = vpop.f32.mrb[0].mxu0
        %1489 = vmatprep.mubr.f32.mxu0 0.0
        %1490 = vmatmul.mubr.f32.gmra.mrb[0].mxu0 %v1315
        %v1491 = vpop.f32.mrb[0].mxu0
        %v1492 = vadd.f32 0.0, %v1491
        %v1493 = vpop.f32.mrb[0].mxu0
        %1494 = vmatprep.mubr.f32.mxu0 0.0
        %1495 = vmatmul.mubr.f32.gmra.mrb[0].mxu0 %v1318
        %v1496 = vpop.f32.mrb[0].mxu0
        %v1497 = vadd.f32 0.0, %v1496
        %v1498 = vpop.f32.mrb[0].mxu0
        %1499 = vmatprep.mubr.f32.mxu0 0.0
        %1500 = vmatmul.mubr.f32.gmra.mrb[0].mxu0 %v1321
        %v1501 = vpop.f32.mrb[0].mxu0
        %v1502 = vadd.f32 0.0, %v1501
        %v1503 = vpop.f32.mrb[0].mxu0
        %1504 = vmatprep.mubr.f32.mxu0 0.0
        %1505 = vmatmul.mubr.f32.gmra.mrb[0].mxu0 %v1324
        %v1506 = vpop.f32.mrb[0].mxu0
        %v1507 = vadd.f32 0.0, %v1506
        %v1508 = vpop.f32.mrb[0].mxu0
        %1509 = vmatprep.mubr.f32.mxu0 0.0
        %1510 = vmatmul.mubr.f32.gmra.mrb[0].mxu0 %v1327
        %v1511 = vpop.f32.mrb[0].mxu0
        %v1512 = vadd.f32 0.0, %v1511
        %v1513 = vpop.f32.mrb[0].mxu0
        %1514 = vmatprep.mubr.f32.mxu0 0.0
        %1515 = vmatmul.mubr.f32.gmra.mrb[0].mxu0 %v1330
        %v1516 = vpop.f32.mrb[0].mxu0
        %v1517 = vadd.f32 0.0, %v1516
        %v1518 = vpop.f32.mrb[0].mxu0
        %1519 = vmatprep.mubr.f32.mxu0 0.0
        %1520 = vmatmul.mubr.f32.gmra.mrb[0].mxu0 %v1333
        %v1521 = vpop.f32.mrb[0].mxu0
        %v1522 = vadd.f32 0.0, %v1521
        %v1523 = vpop.f32.mrb[0].mxu0
        %1524 = vmatprep.mubr.f32.mxu0 0.0
        %1525 = vmatmul.mubr.f32.gmra.mrb[0].mxu0 %v1336
        %v1526 = vpop.f32.mrb[0].mxu0
        %v1527 = vadd.f32 0.0, %v1526
        %v1528 = vpop.f32.mrb[0].mxu0
        %1529 = vmatprep.mubr.f32.mxu0 0.0
        %1530 = vmatmul.mubr.f32.gmra.mrb[0].mxu0 %v1339
        %v1531 = vpop.f32.mrb[0].mxu0
        %v1532 = vadd.f32 0.0, %v1531
        %v1533 = vpop.f32.mrb[0].mxu0
        %1534 = vmatprep.mubr.f32.mxu0 0.0
        %1535 = vmatmul.mubr.f32.gmra.mrb[0].mxu0 %v1342
        %v1536 = vpop.f32.mrb[0].mxu0
        %v1537 = vadd.f32 0.0, %v1536
        %v1538 = vpop.f32.mrb[0].mxu0
        %1539 = vmatprep.mubr.f32.mxu0 0.0
        %1540 = vmatmul.mubr.f32.gmra.mrb[0].mxu0 %v1345
        %v1541 = vpop.f32.mrb[0].mxu0
        %v1542 = vadd.f32 0.0, %v1541
        %v1543 = vpop.f32.mrb[0].mxu0
        %1544 = vmatprep.mubr.f32.mxu0 0.0
        %1545 = vmatmul.mubr.f32.gmra.mrb[0].mxu0 %v1348
        %v1546 = vpop.f32.mrb[0].mxu0
        %v1547 = vadd.f32 0.0, %v1546
        %v1548 = vpop.f32.mrb[0].mxu0
        %1549 = vmatprep.mubr.f32.mxu0 0.0
        %1550 = vmatmul.mubr.f32.gmra.mrb[0].mxu0 %v1351
        %v1551 = vpop.f32.mrb[0].mxu0
        %v1552 = vadd.f32 0.0, %v1551
        %v1553 = vpop.f32.mrb[0].mxu0
        %1554 = vmatprep.mubr.f32.mxu0 0.0
        %1555 = vmatmul.mubr.f32.gmra.mrb[0].mxu0 %v1354
        %v1556 = vpop.f32.mrb[0].mxu0
        %v1557 = vadd.f32 0.0, %v1556
        %v1558 = vpop.f32.mrb[0].mxu0
        %1559 = vmatprep.mubr.f32.mxu0 0.0
        %1560 = vmatmul.mubr.f32.gmra.mrb[0].mxu0 %v1357
        %v1561 = vpop.f32.mrb[0].mxu0
        %v1562 = vadd.f32 0.0, %v1561
        %v1563 = vpop.f32.mrb[0].mxu0
        %1564 = vmatprep.mubr.f32.mxu0 0.0
        %1565 = vmatmul.mubr.f32.gmra.mrb[0].mxu0 %v1360
        %v1566 = vpop.f32.mrb[0].mxu0
        %v1567 = vadd.f32 0.0, %v1566
        %v1568 = vpop.f32.mrb[0].mxu0
        %1569 = vmatprep.mubr.f32.mxu0 0.0
        %1570 = vmatmul.mubr.f32.gmra.mrb[0].mxu0 %v1363
        %v1571 = vpop.f32.mrb[0].mxu0
        %v1572 = vadd.f32 0.0, %v1571
        %v1573 = vpop.f32.mrb[0].mxu0
        %1574 = vmatprep.mubr.f32.mxu0 0.0
        %1575 = vmatmul.mubr.f32.gmra.mrb[0].mxu0 %v1366
        %v1576 = vpop.f32.mrb[0].mxu0
        %v1577 = vadd.f32 0.0, %v1576
        %v1578 = vpop.f32.mrb[0].mxu0
        %1579 = vmatprep.mubr.f32.mxu0 0.0
        %1580 = vmatmul.mubr.f32.gmra.mrb[0].mxu0 %v1369
        %v1581 = vpop.f32.mrb[0].mxu0
        %v1582 = vadd.f32 0.0, %v1581
        %v1583 = vpop.f32.mrb[0].mxu0
        %1584 = vmatprep.mubr.f32.mxu0 0.0
        %1585 = vmatmul.mubr.f32.gmra.mrb[0].mxu0 %v1372
        %v1586 = vpop.f32.mrb[0].mxu0
        %v1587 = vadd.f32 0.0, %v1586
        %v1588 = vpop.f32.mrb[0].mxu0
        %1589 = vmatprep.mubr.f32.mxu0 0.0
        %1590 = vmatmul.mubr.f32.gmra.mrb[0].mxu0 %v1375
        %v1591 = vpop.f32.mrb[0].mxu0
        %v1592 = vadd.f32 0.0, %v1591
        %v1593 = vpop.f32.mrb[0].mxu0
        %1594 = vmatprep.mubr.f32.mxu0 0.0
        %1595 = vmatmul.mubr.f32.gmra.mrb[0].mxu0 %v1378
        %v1596 = vpop.f32.mrb[0].mxu0
        %v1597 = vadd.f32 0.0, %v1596
        %v1598 = vpop.f32.mrb[0].mxu0
        %1599 = vmatprep.mubr.f32.mxu0 0.0
        %1600 = vmatmul.mubr.f32.gmra.mrb[0].mxu0 %v1381
        %v1601 = vpop.f32.mrb[0].mxu0
        %v1602 = vadd.f32 0.0, %v1601
        %v1603 = vpop.f32.mrb[0].mxu0
        %1604 = vmatprep.mubr.f32.mxu0 0.0
        %1605 = vmatmul.mubr.f32.gmra.mrb[0].mxu0 %v1384
        %v1606 = vpop.f32.mrb[0].mxu0
        %v1607 = vadd.f32 0.0, %v1606
        %v1608 = vpop.f32.mrb[0].mxu0
        %1609 = vmatprep.mubr.f32.mxu0 0.0
        %1610 = vmatmul.mubr.f32.gmra.mrb[0].mxu0 %v1387
        %v1611 = vpop.f32.mrb[0].mxu0
        %v1612 = vadd.f32 0.0, %v1611
        %v1613 = vpop.f32.mrb[0].mxu0
        %1614 = vmatprep.mubr.f32.mxu0 0.0
        %1615 = vmatmul.mubr.f32.gmra.mrb[0].mxu0 %v1390
        %v1616 = vpop.f32.mrb[0].mxu0
        %v1617 = vadd.f32 0.0, %v1616
        %v1618 = vpop.f32.mrb[0].mxu0
        %1619 = vdwg.mxu0
        %v1620 = vadd.f32 %v1055, %v1462
        %v1621 = vadd.f32 %v1060, %v1467
        %v1622 = vadd.f32 %v1065, %v1472
        %v1623 = vadd.f32 %v1070, %v1477
        %v1624 = vadd.f32 %v1075, %v1482
        %v1625 = vadd.f32 %v1080, %v1487
        %v1626 = vadd.f32 %v1085, %v1492
        %v1627 = vadd.f32 %v1090, %v1497
        %v1628 = vadd.f32 %v1095, %v1502
        %v1629 = vadd.f32 %v1100, %v1507
        %v1630 = vadd.f32 %v1105, %v1512
        %v1631 = vadd.f32 %v1110, %v1517
        %v1632 = vadd.f32 %v1115, %v1522
        %v1633 = vadd.f32 %v1120, %v1527
        %v1634 = vadd.f32 %v1125, %v1532
        %v1635 = vadd.f32 %v1130, %v1537
        %v1636 = vadd.f32 %v1135, %v1542
        %v1637 = vadd.f32 %v1140, %v1547
        %v1638 = vadd.f32 %v1145, %v1552
        %v1639 = vadd.f32 %v1150, %v1557
        %v1640 = vadd.f32 %v1155, %v1562
        %v1641 = vadd.f32 %v1160, %v1567
        %v1642 = vadd.f32 %v1165, %v1572
        %v1643 = vadd.f32 %v1170, %v1577
        %v1644 = vadd.f32 %v1175, %v1582
        %v1645 = vadd.f32 %v1180, %v1587
        %v1646 = vadd.f32 %v1185, %v1592
        %v1647 = vadd.f32 %v1190, %v1597
        %v1648 = vadd.f32 %v1195, %v1602
        %v1649 = vadd.f32 %v1200, %v1607
        %v1650 = vadd.f32 %v1205, %v1612
        %v1651 = vadd.f32 %v1210, %v1617
        %v1652 = vld [vmem:[%s349] sm:$0xff]
        %v1653 = vld [vmem:[%s349 + $0x8] sm:$0xff]
        %v1654 = vld [vmem:[%s349 + $0x10] sm:$0xff]
        %v1655 = vld [vmem:[%s349 + $0x18] sm:$0xff]
        %v1656 = vld [vmem:[%s349 + $0x20] sm:$0xff]
        %v1657 = vld [vmem:[%s349 + $0x28] sm:$0xff]
        %v1658 = vld [vmem:[%s349 + $0x30] sm:$0xff]
        %v1659 = vld [vmem:[%s349 + $0x38] sm:$0xff]
        %v1660 = vld [vmem:[%s349 + $0x40] sm:$0xff]
        %v1661 = vld [vmem:[%s349 + $0x48] sm:$0xff]
        %v1662 = vld [vmem:[%s349 + $0x50] sm:$0xff]
        %v1663 = vld [vmem:[%s349 + $0x58] sm:$0xff]
        %v1664 = vld [vmem:[%s349 + $0x60] sm:$0xff]
        %v1665 = vld [vmem:[%s349 + $0x68] sm:$0xff]
        %v1666 = vld [vmem:[%s349 + $0x70] sm:$0xff]
        %v1667 = vld [vmem:[%s349 + $0x78] sm:$0xff]
        %v1668 = vld [vmem:[%s349 + $0x80] sm:$0xff]
        %v1669 = vld [vmem:[%s349 + $0x88] sm:$0xff]
        %v1670 = vld [vmem:[%s349 + $0x90] sm:$0xff]
        %v1671 = vld [vmem:[%s349 + $0x98] sm:$0xff]
        %v1672 = vld [vmem:[%s349 + $0xa0] sm:$0xff]
        %v1673 = vld [vmem:[%s349 + $0xa8] sm:$0xff]
        %v1674 = vld [vmem:[%s349 + $0xb0] sm:$0xff]
        %v1675 = vld [vmem:[%s349 + $0xb8] sm:$0xff]
        %v1676 = vld [vmem:[%s349 + $0xc0] sm:$0xff]
        %v1677 = vld [vmem:[%s349 + $0xc8] sm:$0xff]
        %v1678 = vld [vmem:[%s349 + $0xd0] sm:$0xff]
        %v1679 = vld [vmem:[%s349 + $0xd8] sm:$0xff]
        %v1680 = vld [vmem:[%s349 + $0xe0] sm:$0xff]
        %v1681 = vld [vmem:[%s349 + $0xe8] sm:$0xff]
        %v1682 = vld [vmem:[%s349 + $0xf0] sm:$0xff]
        %v1683 = vld [vmem:[%s349 + $0xf8] sm:$0xff]
        %v1684 = vld [vmem:[%s349 + $0x100] sm:$0xff]
        %v1685 = vld [vmem:[%s349 + $0x108] sm:$0xff]
        %v1686 = vld [vmem:[%s349 + $0x110] sm:$0xff]
        %v1687 = vld [vmem:[%s349 + $0x118] sm:$0xff]
        %v1688 = vld [vmem:[%s349 + $0x120] sm:$0xff]
        %v1689 = vld [vmem:[%s349 + $0x128] sm:$0xff]
        %v1690 = vld [vmem:[%s349 + $0x130] sm:$0xff]
        %v1691 = vld [vmem:[%s349 + $0x138] sm:$0xff]
        %v1692 = vld [vmem:[%s349 + $0x140] sm:$0xff]
        %v1693 = vld [vmem:[%s349 + $0x148] sm:$0xff]
        %v1694 = vld [vmem:[%s349 + $0x150] sm:$0xff]
        %v1695 = vld [vmem:[%s349 + $0x158] sm:$0xff]
        %v1696 = vld [vmem:[%s349 + $0x160] sm:$0xff]
        %v1697 = vld [vmem:[%s349 + $0x168] sm:$0xff]
        %v1698 = vld [vmem:[%s349 + $0x170] sm:$0xff]
        %v1699 = vld [vmem:[%s349 + $0x178] sm:$0xff]
        %v1700 = vld [vmem:[%s349 + $0x180] sm:$0xff]
        %v1701 = vld [vmem:[%s349 + $0x188] sm:$0xff]
        %v1702 = vld [vmem:[%s349 + $0x190] sm:$0xff]
        %v1703 = vld [vmem:[%s349 + $0x198] sm:$0xff]
        %v1704 = vld [vmem:[%s349 + $0x1a0] sm:$0xff]
        %v1705 = vld [vmem:[%s349 + $0x1a8] sm:$0xff]
        %v1706 = vld [vmem:[%s349 + $0x1b0] sm:$0xff]
        %v1707 = vld [vmem:[%s349 + $0x1b8] sm:$0xff]
        %v1708 = vld [vmem:[%s349 + $0x1c0] sm:$0xff]
        %v1709 = vld [vmem:[%s349 + $0x1c8] sm:$0xff]
        %v1710 = vld [vmem:[%s349 + $0x1d0] sm:$0xff]
        %v1711 = vld [vmem:[%s349 + $0x1d8] sm:$0xff]
        %v1712 = vld [vmem:[%s349 + $0x1e0] sm:$0xff]
        %v1713 = vld [vmem:[%s349 + $0x1e8] sm:$0xff]
        %v1714 = vld [vmem:[%s349 + $0x1f0] sm:$0xff]
        %v1715 = vld [vmem:[%s349 + $0x1f8] sm:$0xff]
        %v1716 = vrot.slane %v1652, 7
        %v1717 = vrot.slane %v1653, 7
        %v1718 = vrot.slane %v1654, 7
        %v1719 = vrot.slane %v1656, 7
        %v1720 = vrot.slane %v1657, 7
        %v1721 = vrot.slane %v1658, 7
        %v1722 = vrot.slane %v1660, 7
        %v1723 = vrot.slane %v1661, 7
        %v1724 = vrot.slane %v1662, 7
        %v1725 = vrot.slane %v1664, 7
        %v1726 = vrot.slane %v1665, 7
        %v1727 = vrot.slane %v1666, 7
        %v1728 = vrot.slane %v1668, 7
        %v1729 = vrot.slane %v1669, 7
        %v1730 = vrot.slane %v1670, 7
        %v1731 = vrot.slane %v1672, 7
        %v1732 = vrot.slane %v1673, 7
        %v1733 = vrot.slane %v1674, 7
        %v1734 = vrot.slane %v1676, 7
        %v1735 = vrot.slane %v1677, 7
        %v1736 = vrot.slane %v1678, 7
        %v1737 = vrot.slane %v1680, 7
        %v1738 = vrot.slane %v1681, 7
        %v1739 = vrot.slane %v1682, 7
        %v1740 = vrot.slane %v1684, 7
        %v1741 = vrot.slane %v1685, 7
        %v1742 = vrot.slane %v1686, 7
        %v1743 = vrot.slane %v1688, 7
        %v1744 = vrot.slane %v1689, 7
        %v1745 = vrot.slane %v1690, 7
        %v1746 = vrot.slane %v1692, 7
        %v1747 = vrot.slane %v1693, 7
        %v1748 = vrot.slane %v1694, 7
        %v1749 = vrot.slane %v1696, 7
        %v1750 = vrot.slane %v1697, 7
        %v1751 = vrot.slane %v1698, 7
        %v1752 = vrot.slane %v1700, 7
        %v1753 = vrot.slane %v1701, 7
        %v1754 = vrot.slane %v1702, 7
        %v1755 = vrot.slane %v1704, 7
        %v1756 = vrot.slane %v1705, 7
        %v1757 = vrot.slane %v1706, 7
        %v1758 = vrot.slane %v1708, 7
        %v1759 = vrot.slane %v1709, 7
        %v1760 = vrot.slane %v1710, 7
        %v1761 = vrot.slane %v1712, 7
        %v1762 = vrot.slane %v1713, 7
        %v1763 = vrot.slane %v1714, 7
        %v1764 = vsel %vm528, %v1762, %v1763
        %v1765 = vsel %vm528, %v1761, %v1762
        %v1766 = vsel %vm528, %v1759, %v1760
        %v1767 = vsel %vm528, %v1758, %v1759
        %v1768 = vsel %vm528, %v1756, %v1757
        %v1769 = vsel %vm528, %v1755, %v1756
        %v1770 = vsel %vm528, %v1753, %v1754
        %v1771 = vsel %vm528, %v1752, %v1753
        %v1772 = vsel %vm528, %v1750, %v1751
        %v1773 = vsel %vm528, %v1749, %v1750
        %v1774 = vsel %vm528, %v1747, %v1748
        %v1775 = vsel %vm528, %v1746, %v1747
        %v1776 = vsel %vm528, %v1744, %v1745
        %v1777 = vsel %vm528, %v1743, %v1744
        %v1778 = vsel %vm528, %v1741, %v1742
        %v1779 = vsel %vm528, %v1740, %v1741
        %v1780 = vsel %vm528, %v1738, %v1739
        %v1781 = vsel %vm528, %v1737, %v1738
        %v1782 = vsel %vm528, %v1735, %v1736
        %v1783 = vsel %vm528, %v1734, %v1735
        %v1784 = vsel %vm528, %v1732, %v1733
        %v1785 = vsel %vm528, %v1731, %v1732
        %v1786 = vsel %vm528, %v1729, %v1730
        %v1787 = vsel %vm528, %v1728, %v1729
        %v1788 = vsel %vm528, %v1726, %v1727
        %v1789 = vsel %vm528, %v1725, %v1726
        %v1790 = vsel %vm528, %v1723, %v1724
        %v1791 = vsel %vm528, %v1722, %v1723
        %v1792 = vsel %vm528, %v1720, %v1721
        %v1793 = vsel %vm528, %v1719, %v1720
        %v1794 = vsel %vm528, %v1717, %v1718
        %v1795 = vsel %vm528, %v1716, %v1717
        %s1796 = scalar_lea.vmem %s1, 12
        %v1797 = vld [vmem:[%s1796] sm:$0xf]
        %v1799 = vsel %vm339, %v1795, 0
        %v1802 = vsel %vm339, %v1794, 0
        %v1805 = vsel %vm339, %v1793, 0
        %v1808 = vsel %vm339, %v1792, 0
        %v1811 = vsel %vm339, %v1791, 0
        %v1814 = vsel %vm339, %v1790, 0
        %v1817 = vsel %vm339, %v1789, 0
        %v1820 = vsel %vm339, %v1788, 0
        %v1823 = vsel %vm339, %v1787, 0
        %v1826 = vsel %vm339, %v1786, 0
        %v1829 = vsel %vm339, %v1785, 0
        %v1832 = vsel %vm339, %v1784, 0
        %v1835 = vsel %vm339, %v1783, 0
        %v1838 = vsel %vm339, %v1782, 0
        %v1841 = vsel %vm339, %v1781, 0
        %v1844 = vsel %vm339, %v1780, 0
        %v1847 = vsel %vm339, %v1779, 0
        %v1850 = vsel %vm339, %v1778, 0
        %v1853 = vsel %vm339, %v1777, 0
        %v1856 = vsel %vm339, %v1776, 0
        %v1859 = vsel %vm339, %v1775, 0
        %v1862 = vsel %vm339, %v1774, 0
        %v1865 = vsel %vm339, %v1773, 0
        %v1868 = vsel %vm339, %v1772, 0
        %v1871 = vsel %vm339, %v1771, 0
        %v1874 = vsel %vm339, %v1770, 0
        %v1877 = vsel %vm339, %v1769, 0
        %v1880 = vsel %vm339, %v1768, 0
        %v1883 = vsel %vm339, %v1767, 0
        %v1886 = vsel %vm339, %v1766, 0
        %v1889 = vsel %vm339, %v1765, 0
        %v1892 = vsel %vm339, %v1764, 0
        %v1895 = vsel %vm660, %v1797, 0
        %1897 = vmatprep.subr.mxu0 0.0
        %1898 = vmatpush1.msra.mxu0 %v1895
        %1899 = vmatprep.subr.mxu0 0.0
        %1900 = vmatpush1.msra.mxu0 0.0
        %1901 = vmatprep.subr.mxu0 0.0
        %1902 = vmatpush1.msra.mxu0 0.0
        %1903 = vmatprep.subr.mxu0 0.0
        %1904 = vmatpush1.msra.mxu0 0.0
        %1905 = vmatprep.subr.mxu0 0.0
        %1906 = vmatpush1.msra.mxu0 0.0
        %1907 = vmatprep.subr.mxu0 0.0
        %1908 = vmatpush1.msra.mxu0 0.0
        %1909 = vmatprep.subr.mxu0 0.0
        %1910 = vmatpush1.msra.mxu0 0.0
        %1911 = vmatprep.subr.mxu0 0.0
        %1912 = vmatpush1.msra.mxu0 0.0
        %1913 = vmatprep.subr.mxu0 0.0
        %1914 = vmatpush1.msra.mxu0 0.0
        %1915 = vmatprep.subr.mxu0 0.0
        %1916 = vmatpush1.msra.mxu0 0.0
        %1917 = vmatprep.subr.mxu0 0.0
        %1918 = vmatpush1.msra.mxu0 0.0
        %1919 = vmatprep.subr.mxu0 0.0
        %1920 = vmatpush1.msra.mxu0 0.0
        %1921 = vmatprep.subr.mxu0 0.0
        %1922 = vmatpush1.msra.mxu0 0.0
        %1923 = vmatprep.subr.mxu0 0.0
        %1924 = vmatpush1.msra.mxu0 0.0
        %1925 = vmatprep.subr.mxu0 0.0
        %1926 = vmatpush1.msra.mxu0 0.0
        %1927 = vmatprep.subr.mxu0 0.0
        %1928 = vmatpush1.msra.mxu0 0.0
        %1929 = vmatprep.subr.mxu0 0.0
        %1930 = vmatpush1.msra.mxu0 0.0
        %1931 = vmatprep.subr.mxu0 0.0
        %1932 = vmatpush1.msra.mxu0 0.0
        %1933 = vmatprep.subr.mxu0 0.0
        %1934 = vmatpush1.msra.mxu0 0.0
        %1935 = vmatprep.subr.mxu0 0.0
        %1936 = vmatpush1.msra.mxu0 0.0
        %1937 = vmatprep.subr.mxu0 0.0
        %1938 = vmatpush1.msra.mxu0 0.0
        %1939 = vmatprep.subr.mxu0 0.0
        %1940 = vmatpush1.msra.mxu0 0.0
        %1941 = vmatprep.subr.mxu0 0.0
        %1942 = vmatpush1.msra.mxu0 0.0
        %1943 = vmatprep.subr.mxu0 0.0
        %1944 = vmatpush1.msra.mxu0 0.0
        %1945 = vmatprep.subr.mxu0 0.0
        %1946 = vmatpush1.msra.mxu0 0.0
        %1947 = vmatprep.subr.mxu0 0.0
        %1948 = vmatpush1.msra.mxu0 0.0
        %1949 = vmatprep.subr.mxu0 0.0
        %1950 = vmatpush1.msra.mxu0 0.0
        %1951 = vmatprep.subr.mxu0 0.0
        %1952 = vmatpush1.msra.mxu0 0.0
        %1953 = vmatprep.subr.mxu0 0.0
        %1954 = vmatpush1.msra.mxu0 0.0
        %1955 = vmatprep.subr.mxu0 0.0
        %1956 = vmatpush1.msra.mxu0 0.0
        %1957 = vmatprep.subr.mxu0 0.0
        %1958 = vmatpush1.msra.mxu0 0.0
        %1959 = vmatprep.subr.mxu0 0.0
        %1960 = vmatpush1.msra.mxu0 0.0
        %1961 = vmatprep.mubr.f32.mxu0 0.0
        %1962 = vmatmul.mubr.f32.gmra.mrb[0].mxu0 %v1799
        %v1963 = vpop.f32.mrb[0].mxu0
        %v1964 = vadd.f32 0.0, %v1963
        %v1965 = vpop.f32.mrb[0].mxu0
        %1966 = vmatprep.mubr.f32.mxu0 0.0
        %1967 = vmatmul.mubr.f32.gmra.mrb[0].mxu0 %v1802
        %v1968 = vpop.f32.mrb[0].mxu0
        %v1969 = vadd.f32 0.0, %v1968
        %v1970 = vpop.f32.mrb[0].mxu0
        %1971 = vmatprep.mubr.f32.mxu0 0.0
        %1972 = vmatmul.mubr.f32.gmra.mrb[0].mxu0 %v1805
        %v1973 = vpop.f32.mrb[0].mxu0
        %v1974 = vadd.f32 0.0, %v1973
        %v1975 = vpop.f32.mrb[0].mxu0
        %1976 = vmatprep.mubr.f32.mxu0 0.0
        %1977 = vmatmul.mubr.f32.gmra.mrb[0].mxu0 %v1808
        %v1978 = vpop.f32.mrb[0].mxu0
        %v1979 = vadd.f32 0.0, %v1978
        %v1980 = vpop.f32.mrb[0].mxu0
        %1981 = vmatprep.mubr.f32.mxu0 0.0
        %1982 = vmatmul.mubr.f32.gmra.mrb[0].mxu0 %v1811
        %v1983 = vpop.f32.mrb[0].mxu0
        %v1984 = vadd.f32 0.0, %v1983
        %v1985 = vpop.f32.mrb[0].mxu0
        %1986 = vmatprep.mubr.f32.mxu0 0.0
        %1987 = vmatmul.mubr.f32.gmra.mrb[0].mxu0 %v1814
        %v1988 = vpop.f32.mrb[0].mxu0
        %v1989 = vadd.f32 0.0, %v1988
        %v1990 = vpop.f32.mrb[0].mxu0
        %1991 = vmatprep.mubr.f32.mxu0 0.0
        %1992 = vmatmul.mubr.f32.gmra.mrb[0].mxu0 %v1817
        %v1993 = vpop.f32.mrb[0].mxu0
        %v1994 = vadd.f32 0.0, %v1993
        %v1995 = vpop.f32.mrb[0].mxu0
        %1996 = vmatprep.mubr.f32.mxu0 0.0
        %1997 = vmatmul.mubr.f32.gmra.mrb[0].mxu0 %v1820
        %v1998 = vpop.f32.mrb[0].mxu0
        %v1999 = vadd.f32 0.0, %v1998
        %v2000 = vpop.f32.mrb[0].mxu0
        %2001 = vmatprep.mubr.f32.mxu0 0.0
        %2002 = vmatmul.mubr.f32.gmra.mrb[0].mxu0 %v1823
        %v2003 = vpop.f32.mrb[0].mxu0
        %v2004 = vadd.f32 0.0, %v2003
        %v2005 = vpop.f32.mrb[0].mxu0
        %2006 = vmatprep.mubr.f32.mxu0 0.0
        %2007 = vmatmul.mubr.f32.gmra.mrb[0].mxu0 %v1826
        %v2008 = vpop.f32.mrb[0].mxu0
        %v2009 = vadd.f32 0.0, %v2008
        %v2010 = vpop.f32.mrb[0].mxu0
        %2011 = vmatprep.mubr.f32.mxu0 0.0
        %2012 = vmatmul.mubr.f32.gmra.mrb[0].mxu0 %v1829
        %v2013 = vpop.f32.mrb[0].mxu0
        %v2014 = vadd.f32 0.0, %v2013
        %v2015 = vpop.f32.mrb[0].mxu0
        %2016 = vmatprep.mubr.f32.mxu0 0.0
        %2017 = vmatmul.mubr.f32.gmra.mrb[0].mxu0 %v1832
        %v2018 = vpop.f32.mrb[0].mxu0
        %v2019 = vadd.f32 0.0, %v2018
        %v2020 = vpop.f32.mrb[0].mxu0
        %2021 = vmatprep.mubr.f32.mxu0 0.0
        %2022 = vmatmul.mubr.f32.gmra.mrb[0].mxu0 %v1835
        %v2023 = vpop.f32.mrb[0].mxu0
        %v2024 = vadd.f32 0.0, %v2023
        %v2025 = vpop.f32.mrb[0].mxu0
        %2026 = vmatprep.mubr.f32.mxu0 0.0
        %2027 = vmatmul.mubr.f32.gmra.mrb[0].mxu0 %v1838
        %v2028 = vpop.f32.mrb[0].mxu0
        %v2029 = vadd.f32 0.0, %v2028
        %v2030 = vpop.f32.mrb[0].mxu0
        %2031 = vmatprep.mubr.f32.mxu0 0.0
        %2032 = vmatmul.mubr.f32.gmra.mrb[0].mxu0 %v1841
        %v2033 = vpop.f32.mrb[0].mxu0
        %v2034 = vadd.f32 0.0, %v2033
        %v2035 = vpop.f32.mrb[0].mxu0
        %2036 = vmatprep.mubr.f32.mxu0 0.0
        %2037 = vmatmul.mubr.f32.gmra.mrb[0].mxu0 %v1844
        %v2038 = vpop.f32.mrb[0].mxu0
        %v2039 = vadd.f32 0.0, %v2038
        %v2040 = vpop.f32.mrb[0].mxu0
        %2041 = vmatprep.mubr.f32.mxu0 0.0
        %2042 = vmatmul.mubr.f32.gmra.mrb[0].mxu0 %v1847
        %v2043 = vpop.f32.mrb[0].mxu0
        %v2044 = vadd.f32 0.0, %v2043
        %v2045 = vpop.f32.mrb[0].mxu0
        %2046 = vmatprep.mubr.f32.mxu0 0.0
        %2047 = vmatmul.mubr.f32.gmra.mrb[0].mxu0 %v1850
        %v2048 = vpop.f32.mrb[0].mxu0
        %v2049 = vadd.f32 0.0, %v2048
        %v2050 = vpop.f32.mrb[0].mxu0
        %2051 = vmatprep.mubr.f32.mxu0 0.0
        %2052 = vmatmul.mubr.f32.gmra.mrb[0].mxu0 %v1853
        %v2053 = vpop.f32.mrb[0].mxu0
        %v2054 = vadd.f32 0.0, %v2053
        %v2055 = vpop.f32.mrb[0].mxu0
        %2056 = vmatprep.mubr.f32.mxu0 0.0
        %2057 = vmatmul.mubr.f32.gmra.mrb[0].mxu0 %v1856
        %v2058 = vpop.f32.mrb[0].mxu0
        %v2059 = vadd.f32 0.0, %v2058
        %v2060 = vpop.f32.mrb[0].mxu0
        %2061 = vmatprep.mubr.f32.mxu0 0.0
        %2062 = vmatmul.mubr.f32.gmra.mrb[0].mxu0 %v1859
        %v2063 = vpop.f32.mrb[0].mxu0
        %v2064 = vadd.f32 0.0, %v2063
        %v2065 = vpop.f32.mrb[0].mxu0
        %2066 = vmatprep.mubr.f32.mxu0 0.0
        %2067 = vmatmul.mubr.f32.gmra.mrb[0].mxu0 %v1862
        %v2068 = vpop.f32.mrb[0].mxu0
        %v2069 = vadd.f32 0.0, %v2068
        %v2070 = vpop.f32.mrb[0].mxu0
        %2071 = vmatprep.mubr.f32.mxu0 0.0
        %2072 = vmatmul.mubr.f32.gmra.mrb[0].mxu0 %v1865
        %v2073 = vpop.f32.mrb[0].mxu0
        %v2074 = vadd.f32 0.0, %v2073
        %v2075 = vpop.f32.mrb[0].mxu0
        %2076 = vmatprep.mubr.f32.mxu0 0.0
        %2077 = vmatmul.mubr.f32.gmra.mrb[0].mxu0 %v1868
        %v2078 = vpop.f32.mrb[0].mxu0
        %v2079 = vadd.f32 0.0, %v2078
        %v2080 = vpop.f32.mrb[0].mxu0
        %2081 = vmatprep.mubr.f32.mxu0 0.0
        %2082 = vmatmul.mubr.f32.gmra.mrb[0].mxu0 %v1871
        %v2083 = vpop.f32.mrb[0].mxu0
        %v2084 = vadd.f32 0.0, %v2083
        %v2085 = vpop.f32.mrb[0].mxu0
        %2086 = vmatprep.mubr.f32.mxu0 0.0
        %2087 = vmatmul.mubr.f32.gmra.mrb[0].mxu0 %v1874
        %v2088 = vpop.f32.mrb[0].mxu0
        %v2089 = vadd.f32 0.0, %v2088
        %v2090 = vpop.f32.mrb[0].mxu0
        %2091 = vmatprep.mubr.f32.mxu0 0.0
        %2092 = vmatmul.mubr.f32.gmra.mrb[0].mxu0 %v1877
        %v2093 = vpop.f32.mrb[0].mxu0
        %v2094 = vadd.f32 0.0, %v2093
        %v2095 = vpop.f32.mrb[0].mxu0
        %2096 = vmatprep.mubr.f32.mxu0 0.0
        %2097 = vmatmul.mubr.f32.gmra.mrb[0].mxu0 %v1880
        %v2098 = vpop.f32.mrb[0].mxu0
        %v2099 = vadd.f32 0.0, %v2098
        %v2100 = vpop.f32.mrb[0].mxu0
        %2101 = vmatprep.mubr.f32.mxu0 0.0
        %2102 = vmatmul.mubr.f32.gmra.mrb[0].mxu0 %v1883
        %v2103 = vpop.f32.mrb[0].mxu0
        %v2104 = vadd.f32 0.0, %v2103
        %v2105 = vpop.f32.mrb[0].mxu0
        %2106 = vmatprep.mubr.f32.mxu0 0.0
        %2107 = vmatmul.mubr.f32.gmra.mrb[0].mxu0 %v1886
        %v2108 = vpop.f32.mrb[0].mxu0
        %v2109 = vadd.f32 0.0, %v2108
        %v2110 = vpop.f32.mrb[0].mxu0
        %2111 = vmatprep.mubr.f32.mxu0 0.0
        %2112 = vmatmul.mubr.f32.gmra.mrb[0].mxu0 %v1889
        %v2113 = vpop.f32.mrb[0].mxu0
        %v2114 = vadd.f32 0.0, %v2113
        %v2115 = vpop.f32.mrb[0].mxu0
        %2116 = vmatprep.mubr.f32.mxu0 0.0
        %2117 = vmatmul.mubr.f32.gmra.mrb[0].mxu0 %v1892
        %v2118 = vpop.f32.mrb[0].mxu0
        %v2119 = vadd.f32 0.0, %v2118
        %v2120 = vpop.f32.mrb[0].mxu0
        %2121 = vdwg.mxu0
        %v2122 = vadd.f32 %v1620, %v1964
        %v2123 = vadd.f32 %v1621, %v1969
        %v2124 = vadd.f32 %v1622, %v1974
        %v2125 = vadd.f32 %v1623, %v1979
        %v2126 = vadd.f32 %v1624, %v1984
        %v2127 = vadd.f32 %v1625, %v1989
        %v2128 = vadd.f32 %v1626, %v1994
        %v2129 = vadd.f32 %v1627, %v1999
        %v2130 = vadd.f32 %v1628, %v2004
        %v2131 = vadd.f32 %v1629, %v2009
        %v2132 = vadd.f32 %v1630, %v2014
        %v2133 = vadd.f32 %v1631, %v2019
        %v2134 = vadd.f32 %v1632, %v2024
        %v2135 = vadd.f32 %v1633, %v2029
        %v2136 = vadd.f32 %v1634, %v2034
        %v2137 = vadd.f32 %v1635, %v2039
        %v2138 = vadd.f32 %v1636, %v2044
        %v2139 = vadd.f32 %v1637, %v2049
        %v2140 = vadd.f32 %v1638, %v2054
        %v2141 = vadd.f32 %v1639, %v2059
        %v2142 = vadd.f32 %v1640, %v2064
        %v2143 = vadd.f32 %v1641, %v2069
        %v2144 = vadd.f32 %v1642, %v2074
        %v2145 = vadd.f32 %v1643, %v2079
        %v2146 = vadd.f32 %v1644, %v2084
        %v2147 = vadd.f32 %v1645, %v2089
        %v2148 = vadd.f32 %v1646, %v2094
        %v2149 = vadd.f32 %v1647, %v2099
        %v2150 = vadd.f32 %v1648, %v2104
        %v2151 = vadd.f32 %v1649, %v2109
        %v2152 = vadd.f32 %v1650, %v2114
        %v2153 = vadd.f32 %v1651, %v2119
        %s2154 = scalar_lea.vmem %s1, 16
        %v2155 = vld [vmem:[%s2154] sm:$0xf]
        %v2157 = vsel %vm339, %v1653, 0
        %v2160 = vsel %vm339, %v1654, 0
        %v2163 = vsel %vm339, %v1657, 0
        %v2166 = vsel %vm339, %v1658, 0
        %v2169 = vsel %vm339, %v1661, 0
        %v2172 = vsel %vm339, %v1662, 0
        %v2175 = vsel %vm339, %v1665, 0
        %v2178 = vsel %vm339, %v1666, 0
        %v2181 = vsel %vm339, %v1669, 0
        %v2184 = vsel %vm339, %v1670, 0
        %v2187 = vsel %vm339, %v1673, 0
        %v2190 = vsel %vm339, %v1674, 0
        %v2193 = vsel %vm339, %v1677, 0
        %v2196 = vsel %vm339, %v1678, 0
        %v2199 = vsel %vm339, %v1681, 0
        %v2202 = vsel %vm339, %v1682, 0
        %v2205 = vsel %vm339, %v1685, 0
        %v2208 = vsel %vm339, %v1686, 0
        %v2211 = vsel %vm339, %v1689, 0
        %v2214 = vsel %vm339, %v1690, 0
        %v2217 = vsel %vm339, %v1693, 0
        %v2220 = vsel %vm339, %v1694, 0
        %v2223 = vsel %vm339, %v1697, 0
        %v2226 = vsel %vm339, %v1698, 0
        %v2229 = vsel %vm339, %v1701, 0
        %v2232 = vsel %vm339, %v1702, 0
        %v2235 = vsel %vm339, %v1705, 0
        %v2238 = vsel %vm339, %v1706, 0
        %v2241 = vsel %vm339, %v1709, 0
        %v2244 = vsel %vm339, %v1710, 0
        %v2247 = vsel %vm339, %v1713, 0
        %v2250 = vsel %vm339, %v1714, 0
        %v2253 = vsel %vm660, %v2155, 0
        %2255 = vmatprep.subr.mxu0 0.0
        %2256 = vmatpush1.msra.mxu0 %v2253
        %2257 = vmatprep.subr.mxu0 0.0
        %2258 = vmatpush1.msra.mxu0 0.0
        %2259 = vmatprep.subr.mxu0 0.0
        %2260 = vmatpush1.msra.mxu0 0.0
        %2261 = vmatprep.subr.mxu0 0.0
        %2262 = vmatpush1.msra.mxu0 0.0
        %2263 = vmatprep.subr.mxu0 0.0
        %2264 = vmatpush1.msra.mxu0 0.0
        %2265 = vmatprep.subr.mxu0 0.0
        %2266 = vmatpush1.msra.mxu0 0.0
        %2267 = vmatprep.subr.mxu0 0.0
        %2268 = vmatpush1.msra.mxu0 0.0
        %2269 = vmatprep.subr.mxu0 0.0
        %2270 = vmatpush1.msra.mxu0 0.0
        %2271 = vmatprep.subr.mxu0 0.0
        %2272 = vmatpush1.msra.mxu0 0.0
        %2273 = vmatprep.subr.mxu0 0.0
        %2274 = vmatpush1.msra.mxu0 0.0
        %2275 = vmatprep.subr.mxu0 0.0
        %2276 = vmatpush1.msra.mxu0 0.0
        %2277 = vmatprep.subr.mxu0 0.0
        %2278 = vmatpush1.msra.mxu0 0.0
        %2279 = vmatprep.subr.mxu0 0.0
        %2280 = vmatpush1.msra.mxu0 0.0
        %2281 = vmatprep.subr.mxu0 0.0
        %2282 = vmatpush1.msra.mxu0 0.0
        %2283 = vmatprep.subr.mxu0 0.0
        %2284 = vmatpush1.msra.mxu0 0.0
        %2285 = vmatprep.subr.mxu0 0.0
        %2286 = vmatpush1.msra.mxu0 0.0
        %2287 = vmatprep.subr.mxu0 0.0
        %2288 = vmatpush1.msra.mxu0 0.0
        %2289 = vmatprep.subr.mxu0 0.0
        %2290 = vmatpush1.msra.mxu0 0.0
        %2291 = vmatprep.subr.mxu0 0.0
        %2292 = vmatpush1.msra.mxu0 0.0
        %2293 = vmatprep.subr.mxu0 0.0
        %2294 = vmatpush1.msra.mxu0 0.0
        %2295 = vmatprep.subr.mxu0 0.0
        %2296 = vmatpush1.msra.mxu0 0.0
        %2297 = vmatprep.subr.mxu0 0.0
        %2298 = vmatpush1.msra.mxu0 0.0
        %2299 = vmatprep.subr.mxu0 0.0
        %2300 = vmatpush1.msra.mxu0 0.0
        %2301 = vmatprep.subr.mxu0 0.0
        %2302 = vmatpush1.msra.mxu0 0.0
        %2303 = vmatprep.subr.mxu0 0.0
        %2304 = vmatpush1.msra.mxu0 0.0
        %2305 = vmatprep.subr.mxu0 0.0
        %2306 = vmatpush1.msra.mxu0 0.0
        %2307 = vmatprep.subr.mxu0 0.0
        %2308 = vmatpush1.msra.mxu0 0.0
        %2309 = vmatprep.subr.mxu0 0.0
        %2310 = vmatpush1.msra.mxu0 0.0
        %2311 = vmatprep.subr.mxu0 0.0
        %2312 = vmatpush1.msra.mxu0 0.0
        %2313 = vmatprep.subr.mxu0 0.0
        %2314 = vmatpush1.msra.mxu0 0.0
        %2315 = vmatprep.subr.mxu0 0.0
        %2316 = vmatpush1.msra.mxu0 0.0
        %2317 = vmatprep.subr.mxu0 0.0
        %2318 = vmatpush1.msra.mxu0 0.0
        %2319 = vmatprep.mubr.f32.mxu0 0.0
        %2320 = vmatmul.mubr.f32.gmra.mrb[0].mxu0 %v2157
        %v2321 = vpop.f32.mrb[0].mxu0
        %v2322 = vadd.f32 0.0, %v2321
        %v2323 = vpop.f32.mrb[0].mxu0
        %2324 = vmatprep.mubr.f32.mxu0 0.0
        %2325 = vmatmul.mubr.f32.gmra.mrb[0].mxu0 %v2160
        %v2326 = vpop.f32.mrb[0].mxu0
        %v2327 = vadd.f32 0.0, %v2326
        %v2328 = vpop.f32.mrb[0].mxu0
        %2329 = vmatprep.mubr.f32.mxu0 0.0
        %2330 = vmatmul.mubr.f32.gmra.mrb[0].mxu0 %v2163
        %v2331 = vpop.f32.mrb[0].mxu0
        %v2332 = vadd.f32 0.0, %v2331
        %v2333 = vpop.f32.mrb[0].mxu0
        %2334 = vmatprep.mubr.f32.mxu0 0.0
        %2335 = vmatmul.mubr.f32.gmra.mrb[0].mxu0 %v2166
        %v2336 = vpop.f32.mrb[0].mxu0
        %v2337 = vadd.f32 0.0, %v2336
        %v2338 = vpop.f32.mrb[0].mxu0
        %2339 = vmatprep.mubr.f32.mxu0 0.0
        %2340 = vmatmul.mubr.f32.gmra.mrb[0].mxu0 %v2169
        %v2341 = vpop.f32.mrb[0].mxu0
        %v2342 = vadd.f32 0.0, %v2341
        %v2343 = vpop.f32.mrb[0].mxu0
        %2344 = vmatprep.mubr.f32.mxu0 0.0
        %2345 = vmatmul.mubr.f32.gmra.mrb[0].mxu0 %v2172
        %v2346 = vpop.f32.mrb[0].mxu0
        %v2347 = vadd.f32 0.0, %v2346
        %v2348 = vpop.f32.mrb[0].mxu0
        %2349 = vmatprep.mubr.f32.mxu0 0.0
        %2350 = vmatmul.mubr.f32.gmra.mrb[0].mxu0 %v2175
        %v2351 = vpop.f32.mrb[0].mxu0
        %v2352 = vadd.f32 0.0, %v2351
        %v2353 = vpop.f32.mrb[0].mxu0
        %2354 = vmatprep.mubr.f32.mxu0 0.0
        %2355 = vmatmul.mubr.f32.gmra.mrb[0].mxu0 %v2178
        %v2356 = vpop.f32.mrb[0].mxu0
        %v2357 = vadd.f32 0.0, %v2356
        %v2358 = vpop.f32.mrb[0].mxu0
        %2359 = vmatprep.mubr.f32.mxu0 0.0
        %2360 = vmatmul.mubr.f32.gmra.mrb[0].mxu0 %v2181
        %v2361 = vpop.f32.mrb[0].mxu0
        %v2362 = vadd.f32 0.0, %v2361
        %v2363 = vpop.f32.mrb[0].mxu0
        %2364 = vmatprep.mubr.f32.mxu0 0.0
        %2365 = vmatmul.mubr.f32.gmra.mrb[0].mxu0 %v2184
        %v2366 = vpop.f32.mrb[0].mxu0
        %v2367 = vadd.f32 0.0, %v2366
        %v2368 = vpop.f32.mrb[0].mxu0
        %2369 = vmatprep.mubr.f32.mxu0 0.0
        %2370 = vmatmul.mubr.f32.gmra.mrb[0].mxu0 %v2187
        %v2371 = vpop.f32.mrb[0].mxu0
        %v2372 = vadd.f32 0.0, %v2371
        %v2373 = vpop.f32.mrb[0].mxu0
        %2374 = vmatprep.mubr.f32.mxu0 0.0
        %2375 = vmatmul.mubr.f32.gmra.mrb[0].mxu0 %v2190
        %v2376 = vpop.f32.mrb[0].mxu0
        %v2377 = vadd.f32 0.0, %v2376
        %v2378 = vpop.f32.mrb[0].mxu0
        %2379 = vmatprep.mubr.f32.mxu0 0.0
        %2380 = vmatmul.mubr.f32.gmra.mrb[0].mxu0 %v2193
        %v2381 = vpop.f32.mrb[0].mxu0
        %v2382 = vadd.f32 0.0, %v2381
        %v2383 = vpop.f32.mrb[0].mxu0
        %2384 = vmatprep.mubr.f32.mxu0 0.0
        %2385 = vmatmul.mubr.f32.gmra.mrb[0].mxu0 %v2196
        %v2386 = vpop.f32.mrb[0].mxu0
        %v2387 = vadd.f32 0.0, %v2386
        %v2388 = vpop.f32.mrb[0].mxu0
        %2389 = vmatprep.mubr.f32.mxu0 0.0
        %2390 = vmatmul.mubr.f32.gmra.mrb[0].mxu0 %v2199
        %v2391 = vpop.f32.mrb[0].mxu0
        %v2392 = vadd.f32 0.0, %v2391
        %v2393 = vpop.f32.mrb[0].mxu0
        %2394 = vmatprep.mubr.f32.mxu0 0.0
        %2395 = vmatmul.mubr.f32.gmra.mrb[0].mxu0 %v2202
        %v2396 = vpop.f32.mrb[0].mxu0
        %v2397 = vadd.f32 0.0, %v2396
        %v2398 = vpop.f32.mrb[0].mxu0
        %2399 = vmatprep.mubr.f32.mxu0 0.0
        %2400 = vmatmul.mubr.f32.gmra.mrb[0].mxu0 %v2205
        %v2401 = vpop.f32.mrb[0].mxu0
        %v2402 = vadd.f32 0.0, %v2401
        %v2403 = vpop.f32.mrb[0].mxu0
        %2404 = vmatprep.mubr.f32.mxu0 0.0
        %2405 = vmatmul.mubr.f32.gmra.mrb[0].mxu0 %v2208
        %v2406 = vpop.f32.mrb[0].mxu0
        %v2407 = vadd.f32 0.0, %v2406
        %v2408 = vpop.f32.mrb[0].mxu0
        %2409 = vmatprep.mubr.f32.mxu0 0.0
        %2410 = vmatmul.mubr.f32.gmra.mrb[0].mxu0 %v2211
        %v2411 = vpop.f32.mrb[0].mxu0
        %v2412 = vadd.f32 0.0, %v2411
        %v2413 = vpop.f32.mrb[0].mxu0
        %2414 = vmatprep.mubr.f32.mxu0 0.0
        %2415 = vmatmul.mubr.f32.gmra.mrb[0].mxu0 %v2214
        %v2416 = vpop.f32.mrb[0].mxu0
        %v2417 = vadd.f32 0.0, %v2416
        %v2418 = vpop.f32.mrb[0].mxu0
        %2419 = vmatprep.mubr.f32.mxu0 0.0
        %2420 = vmatmul.mubr.f32.gmra.mrb[0].mxu0 %v2217
        %v2421 = vpop.f32.mrb[0].mxu0
        %v2422 = vadd.f32 0.0, %v2421
        %v2423 = vpop.f32.mrb[0].mxu0
        %2424 = vmatprep.mubr.f32.mxu0 0.0
        %2425 = vmatmul.mubr.f32.gmra.mrb[0].mxu0 %v2220
        %v2426 = vpop.f32.mrb[0].mxu0
        %v2427 = vadd.f32 0.0, %v2426
        %v2428 = vpop.f32.mrb[0].mxu0
        %2429 = vmatprep.mubr.f32.mxu0 0.0
        %2430 = vmatmul.mubr.f32.gmra.mrb[0].mxu0 %v2223
        %v2431 = vpop.f32.mrb[0].mxu0
        %v2432 = vadd.f32 0.0, %v2431
        %v2433 = vpop.f32.mrb[0].mxu0
        %2434 = vmatprep.mubr.f32.mxu0 0.0
        %2435 = vmatmul.mubr.f32.gmra.mrb[0].mxu0 %v2226
        %v2436 = vpop.f32.mrb[0].mxu0
        %v2437 = vadd.f32 0.0, %v2436
        %v2438 = vpop.f32.mrb[0].mxu0
        %2439 = vmatprep.mubr.f32.mxu0 0.0
        %2440 = vmatmul.mubr.f32.gmra.mrb[0].mxu0 %v2229
        %v2441 = vpop.f32.mrb[0].mxu0
        %v2442 = vadd.f32 0.0, %v2441
        %v2443 = vpop.f32.mrb[0].mxu0
        %2444 = vmatprep.mubr.f32.mxu0 0.0
        %2445 = vmatmul.mubr.f32.gmra.mrb[0].mxu0 %v2232
        %v2446 = vpop.f32.mrb[0].mxu0
        %v2447 = vadd.f32 0.0, %v2446
        %v2448 = vpop.f32.mrb[0].mxu0
        %2449 = vmatprep.mubr.f32.mxu0 0.0
        %2450 = vmatmul.mubr.f32.gmra.mrb[0].mxu0 %v2235
        %v2451 = vpop.f32.mrb[0].mxu0
        %v2452 = vadd.f32 0.0, %v2451
        %v2453 = vpop.f32.mrb[0].mxu0
        %2454 = vmatprep.mubr.f32.mxu0 0.0
        %2455 = vmatmul.mubr.f32.gmra.mrb[0].mxu0 %v2238
        %v2456 = vpop.f32.mrb[0].mxu0
        %v2457 = vadd.f32 0.0, %v2456
        %v2458 = vpop.f32.mrb[0].mxu0
        %2459 = vmatprep.mubr.f32.mxu0 0.0
        %2460 = vmatmul.mubr.f32.gmra.mrb[0].mxu0 %v2241
        %v2461 = vpop.f32.mrb[0].mxu0
        %v2462 = vadd.f32 0.0, %v2461
        %v2463 = vpop.f32.mrb[0].mxu0
        %2464 = vmatprep.mubr.f32.mxu0 0.0
        %2465 = vmatmul.mubr.f32.gmra.mrb[0].mxu0 %v2244
        %v2466 = vpop.f32.mrb[0].mxu0
        %v2467 = vadd.f32 0.0, %v2466
        %v2468 = vpop.f32.mrb[0].mxu0
        %2469 = vmatprep.mubr.f32.mxu0 0.0
        %2470 = vmatmul.mubr.f32.gmra.mrb[0].mxu0 %v2247
        %v2471 = vpop.f32.mrb[0].mxu0
        %v2472 = vadd.f32 0.0, %v2471
        %v2473 = vpop.f32.mrb[0].mxu0
        %2474 = vmatprep.mubr.f32.mxu0 0.0
        %2475 = vmatmul.mubr.f32.gmra.mrb[0].mxu0 %v2250
        %v2476 = vpop.f32.mrb[0].mxu0
        %v2477 = vadd.f32 0.0, %v2476
        %v2478 = vpop.f32.mrb[0].mxu0
        %2479 = vdwg.mxu0
        %v2480 = vadd.f32 %v2122, %v2322
        %v2481 = vadd.f32 %v2123, %v2327
        %v2482 = vadd.f32 %v2124, %v2332
        %v2483 = vadd.f32 %v2125, %v2337
        %v2484 = vadd.f32 %v2126, %v2342
        %v2485 = vadd.f32 %v2127, %v2347
        %v2486 = vadd.f32 %v2128, %v2352
        %v2487 = vadd.f32 %v2129, %v2357
        %v2488 = vadd.f32 %v2130, %v2362
        %v2489 = vadd.f32 %v2131, %v2367
        %v2490 = vadd.f32 %v2132, %v2372
        %v2491 = vadd.f32 %v2133, %v2377
        %v2492 = vadd.f32 %v2134, %v2382
        %v2493 = vadd.f32 %v2135, %v2387
        %v2494 = vadd.f32 %v2136, %v2392
        %v2495 = vadd.f32 %v2137, %v2397
        %v2496 = vadd.f32 %v2138, %v2402
        %v2497 = vadd.f32 %v2139, %v2407
        %v2498 = vadd.f32 %v2140, %v2412
        %v2499 = vadd.f32 %v2141, %v2417
        %v2500 = vadd.f32 %v2142, %v2422
        %v2501 = vadd.f32 %v2143, %v2427
        %v2502 = vadd.f32 %v2144, %v2432
        %v2503 = vadd.f32 %v2145, %v2437
        %v2504 = vadd.f32 %v2146, %v2442
        %v2505 = vadd.f32 %v2147, %v2447
        %v2506 = vadd.f32 %v2148, %v2452
        %v2507 = vadd.f32 %v2149, %v2457
        %v2508 = vadd.f32 %v2150, %v2462
        %v2509 = vadd.f32 %v2151, %v2467
        %v2510 = vadd.f32 %v2152, %v2472
        %v2511 = vadd.f32 %v2153, %v2477
        %v2512 = vrot.slane %v1653, 1
        %v2513 = vrot.slane %v1654, 1
        %v2514 = vrot.slane %v1655, 1
        %v2515 = vrot.slane %v1657, 1
        %v2516 = vrot.slane %v1658, 1
        %v2517 = vrot.slane %v1659, 1
        %v2518 = vrot.slane %v1661, 1
        %v2519 = vrot.slane %v1662, 1
        %v2520 = vrot.slane %v1663, 1
        %v2521 = vrot.slane %v1665, 1
        %v2522 = vrot.slane %v1666, 1
        %v2523 = vrot.slane %v1667, 1
        %v2524 = vrot.slane %v1669, 1
        %v2525 = vrot.slane %v1670, 1
        %v2526 = vrot.slane %v1671, 1
        %v2527 = vrot.slane %v1673, 1
        %v2528 = vrot.slane %v1674, 1
        %v2529 = vrot.slane %v1675, 1
        %v2530 = vrot.slane %v1677, 1
        %v2531 = vrot.slane %v1678, 1
        %v2532 = vrot.slane %v1679, 1
        %v2533 = vrot.slane %v1681, 1
        %v2534 = vrot.slane %v1682, 1
        %v2535 = vrot.slane %v1683, 1
        %v2536 = vrot.slane %v1685, 1
        %v2537 = vrot.slane %v1686, 1
        %v2538 = vrot.slane %v1687, 1
        %v2539 = vrot.slane %v1689, 1
        %v2540 = vrot.slane %v1690, 1
        %v2541 = vrot.slane %v1691, 1
        %v2542 = vrot.slane %v1693, 1
        %v2543 = vrot.slane %v1694, 1
        %v2544 = vrot.slane %v1695, 1
        %v2545 = vrot.slane %v1697, 1
        %v2546 = vrot.slane %v1698, 1
        %v2547 = vrot.slane %v1699, 1
        %v2548 = vrot.slane %v1701, 1
        %v2549 = vrot.slane %v1702, 1
        %v2550 = vrot.slane %v1703, 1
        %v2551 = vrot.slane %v1705, 1
        %v2552 = vrot.slane %v1706, 1
        %v2553 = vrot.slane %v1707, 1
        %v2554 = vrot.slane %v1709, 1
        %v2555 = vrot.slane %v1710, 1
        %v2556 = vrot.slane %v1711, 1
        %v2557 = vrot.slane %v1713, 1
        %v2558 = vrot.slane %v1714, 1
        %v2559 = vrot.slane %v1715, 1
        %v2560 = vsel %vm1261, %v2558, %v2559
        %v2561 = vsel %vm1261, %v2557, %v2558
        %v2562 = vsel %vm1261, %v2555, %v2556
        %v2563 = vsel %vm1261, %v2554, %v2555
        %v2564 = vsel %vm1261, %v2552, %v2553
        %v2565 = vsel %vm1261, %v2551, %v2552
        %v2566 = vsel %vm1261, %v2549, %v2550
        %v2567 = vsel %vm1261, %v2548, %v2549
        %v2568 = vsel %vm1261, %v2546, %v2547
        %v2569 = vsel %vm1261, %v2545, %v2546
        %v2570 = vsel %vm1261, %v2543, %v2544
        %v2571 = vsel %vm1261, %v2542, %v2543
        %v2572 = vsel %vm1261, %v2540, %v2541
        %v2573 = vsel %vm1261, %v2539, %v2540
        %v2574 = vsel %vm1261, %v2537, %v2538
        %v2575 = vsel %vm1261, %v2536, %v2537
        %v2576 = vsel %vm1261, %v2534, %v2535
        %v2577 = vsel %vm1261, %v2533, %v2534
        %v2578 = vsel %vm1261, %v2531, %v2532
        %v2579 = vsel %vm1261, %v2530, %v2531
        %v2580 = vsel %vm1261, %v2528, %v2529
        %v2581 = vsel %vm1261, %v2527, %v2528
        %v2582 = vsel %vm1261, %v2525, %v2526
        %v2583 = vsel %vm1261, %v2524, %v2525
        %v2584 = vsel %vm1261, %v2522, %v2523
        %v2585 = vsel %vm1261, %v2521, %v2522
        %v2586 = vsel %vm1261, %v2519, %v2520
        %v2587 = vsel %vm1261, %v2518, %v2519
        %v2588 = vsel %vm1261, %v2516, %v2517
        %v2589 = vsel %vm1261, %v2515, %v2516
        %v2590 = vsel %vm1261, %v2513, %v2514
        %v2591 = vsel %vm1261, %v2512, %v2513
        %s2592 = scalar_lea.vmem %s1, 20
        %v2593 = vld [vmem:[%s2592] sm:$0xf]
        %v2595 = vsel %vm339, %v2591, 0
        %v2598 = vsel %vm339, %v2590, 0
        %v2601 = vsel %vm339, %v2589, 0
        %v2604 = vsel %vm339, %v2588, 0
        %v2607 = vsel %vm339, %v2587, 0
        %v2610 = vsel %vm339, %v2586, 0
        %v2613 = vsel %vm339, %v2585, 0
        %v2616 = vsel %vm339, %v2584, 0
        %v2619 = vsel %vm339, %v2583, 0
        %v2622 = vsel %vm339, %v2582, 0
        %v2625 = vsel %vm339, %v2581, 0
        %v2628 = vsel %vm339, %v2580, 0
        %v2631 = vsel %vm339, %v2579, 0
        %v2634 = vsel %vm339, %v2578, 0
        %v2637 = vsel %vm339, %v2577, 0
        %v2640 = vsel %vm339, %v2576, 0
        %v2643 = vsel %vm339, %v2575, 0
        %v2646 = vsel %vm339, %v2574, 0
        %v2649 = vsel %vm339, %v2573, 0
        %v2652 = vsel %vm339, %v2572, 0
        %v2655 = vsel %vm339, %v2571, 0
        %v2658 = vsel %vm339, %v2570, 0
        %v2661 = vsel %vm339, %v2569, 0
        %v2664 = vsel %vm339, %v2568, 0
        %v2667 = vsel %vm339, %v2567, 0
        %v2670 = vsel %vm339, %v2566, 0
        %v2673 = vsel %vm339, %v2565, 0
        %v2676 = vsel %vm339, %v2564, 0
        %v2679 = vsel %vm339, %v2563, 0
        %v2682 = vsel %vm339, %v2562, 0
        %v2685 = vsel %vm339, %v2561, 0
        %v2688 = vsel %vm339, %v2560, 0
        %v2691 = vsel %vm660, %v2593, 0
        %2693 = vmatprep.subr.mxu0 0.0
        %2694 = vmatpush1.msra.mxu0 %v2691
        %2695 = vmatprep.subr.mxu0 0.0
        %2696 = vmatpush1.msra.mxu0 0.0
        %2697 = vmatprep.subr.mxu0 0.0
        %2698 = vmatpush1.msra.mxu0 0.0
        %2699 = vmatprep.subr.mxu0 0.0
        %2700 = vmatpush1.msra.mxu0 0.0
        %2701 = vmatprep.subr.mxu0 0.0
        %2702 = vmatpush1.msra.mxu0 0.0
        %2703 = vmatprep.subr.mxu0 0.0
        %2704 = vmatpush1.msra.mxu0 0.0
        %2705 = vmatprep.subr.mxu0 0.0
        %2706 = vmatpush1.msra.mxu0 0.0
        %2707 = vmatprep.subr.mxu0 0.0
        %2708 = vmatpush1.msra.mxu0 0.0
        %2709 = vmatprep.subr.mxu0 0.0
        %2710 = vmatpush1.msra.mxu0 0.0
        %2711 = vmatprep.subr.mxu0 0.0
        %2712 = vmatpush1.msra.mxu0 0.0
        %2713 = vmatprep.subr.mxu0 0.0
        %2714 = vmatpush1.msra.mxu0 0.0
        %2715 = vmatprep.subr.mxu0 0.0
        %2716 = vmatpush1.msra.mxu0 0.0
        %2717 = vmatprep.subr.mxu0 0.0
        %2718 = vmatpush1.msra.mxu0 0.0
        %2719 = vmatprep.subr.mxu0 0.0
        %2720 = vmatpush1.msra.mxu0 0.0
        %2721 = vmatprep.subr.mxu0 0.0
        %2722 = vmatpush1.msra.mxu0 0.0
        %2723 = vmatprep.subr.mxu0 0.0
        %2724 = vmatpush1.msra.mxu0 0.0
        %2725 = vmatprep.subr.mxu0 0.0
        %2726 = vmatpush1.msra.mxu0 0.0
        %2727 = vmatprep.subr.mxu0 0.0
        %2728 = vmatpush1.msra.mxu0 0.0
        %2729 = vmatprep.subr.mxu0 0.0
        %2730 = vmatpush1.msra.mxu0 0.0
        %2731 = vmatprep.subr.mxu0 0.0
        %2732 = vmatpush1.msra.mxu0 0.0
        %2733 = vmatprep.subr.mxu0 0.0
        %2734 = vmatpush1.msra.mxu0 0.0
        %2735 = vmatprep.subr.mxu0 0.0
        %2736 = vmatpush1.msra.mxu0 0.0
        %2737 = vmatprep.subr.mxu0 0.0
        %2738 = vmatpush1.msra.mxu0 0.0
        %2739 = vmatprep.subr.mxu0 0.0
        %2740 = vmatpush1.msra.mxu0 0.0
        %2741 = vmatprep.subr.mxu0 0.0
        %2742 = vmatpush1.msra.mxu0 0.0
        %2743 = vmatprep.subr.mxu0 0.0
        %2744 = vmatpush1.msra.mxu0 0.0
        %2745 = vmatprep.subr.mxu0 0.0
        %2746 = vmatpush1.msra.mxu0 0.0
        %2747 = vmatprep.subr.mxu0 0.0
        %2748 = vmatpush1.msra.mxu0 0.0
        %2749 = vmatprep.subr.mxu0 0.0
        %2750 = vmatpush1.msra.mxu0 0.0
        %2751 = vmatprep.subr.mxu0 0.0
        %2752 = vmatpush1.msra.mxu0 0.0
        %2753 = vmatprep.subr.mxu0 0.0
        %2754 = vmatpush1.msra.mxu0 0.0
        %2755 = vmatprep.subr.mxu0 0.0
        %2756 = vmatpush1.msra.mxu0 0.0
        %2757 = vmatprep.mubr.f32.mxu0 0.0
        %2758 = vmatmul.mubr.f32.gmra.mrb[0].mxu0 %v2595
        %v2759 = vpop.f32.mrb[0].mxu0
        %v2760 = vadd.f32 0.0, %v2759
        %v2761 = vpop.f32.mrb[0].mxu0
        %2762 = vmatprep.mubr.f32.mxu0 0.0
        %2763 = vmatmul.mubr.f32.gmra.mrb[0].mxu0 %v2598
        %v2764 = vpop.f32.mrb[0].mxu0
        %v2765 = vadd.f32 0.0, %v2764
        %v2766 = vpop.f32.mrb[0].mxu0
        %2767 = vmatprep.mubr.f32.mxu0 0.0
        %2768 = vmatmul.mubr.f32.gmra.mrb[0].mxu0 %v2601
        %v2769 = vpop.f32.mrb[0].mxu0
        %v2770 = vadd.f32 0.0, %v2769
        %v2771 = vpop.f32.mrb[0].mxu0
        %2772 = vmatprep.mubr.f32.mxu0 0.0
        %2773 = vmatmul.mubr.f32.gmra.mrb[0].mxu0 %v2604
        %v2774 = vpop.f32.mrb[0].mxu0
        %v2775 = vadd.f32 0.0, %v2774
        %v2776 = vpop.f32.mrb[0].mxu0
        %2777 = vmatprep.mubr.f32.mxu0 0.0
        %2778 = vmatmul.mubr.f32.gmra.mrb[0].mxu0 %v2607
        %v2779 = vpop.f32.mrb[0].mxu0
        %v2780 = vadd.f32 0.0, %v2779
        %v2781 = vpop.f32.mrb[0].mxu0
        %2782 = vmatprep.mubr.f32.mxu0 0.0
        %2783 = vmatmul.mubr.f32.gmra.mrb[0].mxu0 %v2610
        %v2784 = vpop.f32.mrb[0].mxu0
        %v2785 = vadd.f32 0.0, %v2784
        %v2786 = vpop.f32.mrb[0].mxu0
        %2787 = vmatprep.mubr.f32.mxu0 0.0
        %2788 = vmatmul.mubr.f32.gmra.mrb[0].mxu0 %v2613
        %v2789 = vpop.f32.mrb[0].mxu0
        %v2790 = vadd.f32 0.0, %v2789
        %v2791 = vpop.f32.mrb[0].mxu0
        %2792 = vmatprep.mubr.f32.mxu0 0.0
        %2793 = vmatmul.mubr.f32.gmra.mrb[0].mxu0 %v2616
        %v2794 = vpop.f32.mrb[0].mxu0
        %v2795 = vadd.f32 0.0, %v2794
        %v2796 = vpop.f32.mrb[0].mxu0
        %2797 = vmatprep.mubr.f32.mxu0 0.0
        %2798 = vmatmul.mubr.f32.gmra.mrb[0].mxu0 %v2619
        %v2799 = vpop.f32.mrb[0].mxu0
        %v2800 = vadd.f32 0.0, %v2799
        %v2801 = vpop.f32.mrb[0].mxu0
        %2802 = vmatprep.mubr.f32.mxu0 0.0
        %2803 = vmatmul.mubr.f32.gmra.mrb[0].mxu0 %v2622
        %v2804 = vpop.f32.mrb[0].mxu0
        %v2805 = vadd.f32 0.0, %v2804
        %v2806 = vpop.f32.mrb[0].mxu0
        %2807 = vmatprep.mubr.f32.mxu0 0.0
        %2808 = vmatmul.mubr.f32.gmra.mrb[0].mxu0 %v2625
        %v2809 = vpop.f32.mrb[0].mxu0
        %v2810 = vadd.f32 0.0, %v2809
        %v2811 = vpop.f32.mrb[0].mxu0
        %2812 = vmatprep.mubr.f32.mxu0 0.0
        %2813 = vmatmul.mubr.f32.gmra.mrb[0].mxu0 %v2628
        %v2814 = vpop.f32.mrb[0].mxu0
        %v2815 = vadd.f32 0.0, %v2814
        %v2816 = vpop.f32.mrb[0].mxu0
        %2817 = vmatprep.mubr.f32.mxu0 0.0
        %2818 = vmatmul.mubr.f32.gmra.mrb[0].mxu0 %v2631
        %v2819 = vpop.f32.mrb[0].mxu0
        %v2820 = vadd.f32 0.0, %v2819
        %v2821 = vpop.f32.mrb[0].mxu0
        %2822 = vmatprep.mubr.f32.mxu0 0.0
        %2823 = vmatmul.mubr.f32.gmra.mrb[0].mxu0 %v2634
        %v2824 = vpop.f32.mrb[0].mxu0
        %v2825 = vadd.f32 0.0, %v2824
        %v2826 = vpop.f32.mrb[0].mxu0
        %2827 = vmatprep.mubr.f32.mxu0 0.0
        %2828 = vmatmul.mubr.f32.gmra.mrb[0].mxu0 %v2637
        %v2829 = vpop.f32.mrb[0].mxu0
        %v2830 = vadd.f32 0.0, %v2829
        %v2831 = vpop.f32.mrb[0].mxu0
        %2832 = vmatprep.mubr.f32.mxu0 0.0
        %2833 = vmatmul.mubr.f32.gmra.mrb[0].mxu0 %v2640
        %v2834 = vpop.f32.mrb[0].mxu0
        %v2835 = vadd.f32 0.0, %v2834
        %v2836 = vpop.f32.mrb[0].mxu0
        %2837 = vmatprep.mubr.f32.mxu0 0.0
        %2838 = vmatmul.mubr.f32.gmra.mrb[0].mxu0 %v2643
        %v2839 = vpop.f32.mrb[0].mxu0
        %v2840 = vadd.f32 0.0, %v2839
        %v2841 = vpop.f32.mrb[0].mxu0
        %2842 = vmatprep.mubr.f32.mxu0 0.0
        %2843 = vmatmul.mubr.f32.gmra.mrb[0].mxu0 %v2646
        %v2844 = vpop.f32.mrb[0].mxu0
        %v2845 = vadd.f32 0.0, %v2844
        %v2846 = vpop.f32.mrb[0].mxu0
        %2847 = vmatprep.mubr.f32.mxu0 0.0
        %2848 = vmatmul.mubr.f32.gmra.mrb[0].mxu0 %v2649
        %v2849 = vpop.f32.mrb[0].mxu0
        %v2850 = vadd.f32 0.0, %v2849
        %v2851 = vpop.f32.mrb[0].mxu0
        %2852 = vmatprep.mubr.f32.mxu0 0.0
        %2853 = vmatmul.mubr.f32.gmra.mrb[0].mxu0 %v2652
        %v2854 = vpop.f32.mrb[0].mxu0
        %v2855 = vadd.f32 0.0, %v2854
        %v2856 = vpop.f32.mrb[0].mxu0
        %2857 = vmatprep.mubr.f32.mxu0 0.0
        %2858 = vmatmul.mubr.f32.gmra.mrb[0].mxu0 %v2655
        %v2859 = vpop.f32.mrb[0].mxu0
        %v2860 = vadd.f32 0.0, %v2859
        %v2861 = vpop.f32.mrb[0].mxu0
        %2862 = vmatprep.mubr.f32.mxu0 0.0
        %2863 = vmatmul.mubr.f32.gmra.mrb[0].mxu0 %v2658
        %v2864 = vpop.f32.mrb[0].mxu0
        %v2865 = vadd.f32 0.0, %v2864
        %v2866 = vpop.f32.mrb[0].mxu0
        %2867 = vmatprep.mubr.f32.mxu0 0.0
        %2868 = vmatmul.mubr.f32.gmra.mrb[0].mxu0 %v2661
        %v2869 = vpop.f32.mrb[0].mxu0
        %v2870 = vadd.f32 0.0, %v2869
        %v2871 = vpop.f32.mrb[0].mxu0
        %2872 = vmatprep.mubr.f32.mxu0 0.0
        %2873 = vmatmul.mubr.f32.gmra.mrb[0].mxu0 %v2664
        %v2874 = vpop.f32.mrb[0].mxu0
        %v2875 = vadd.f32 0.0, %v2874
        %v2876 = vpop.f32.mrb[0].mxu0
        %2877 = vmatprep.mubr.f32.mxu0 0.0
        %2878 = vmatmul.mubr.f32.gmra.mrb[0].mxu0 %v2667
        %v2879 = vpop.f32.mrb[0].mxu0
        %v2880 = vadd.f32 0.0, %v2879
        %v2881 = vpop.f32.mrb[0].mxu0
        %2882 = vmatprep.mubr.f32.mxu0 0.0
        %2883 = vmatmul.mubr.f32.gmra.mrb[0].mxu0 %v2670
        %v2884 = vpop.f32.mrb[0].mxu0
        %v2885 = vadd.f32 0.0, %v2884
        %v2886 = vpop.f32.mrb[0].mxu0
        %2887 = vmatprep.mubr.f32.mxu0 0.0
        %2888 = vmatmul.mubr.f32.gmra.mrb[0].mxu0 %v2673
        %v2889 = vpop.f32.mrb[0].mxu0
        %v2890 = vadd.f32 0.0, %v2889
        %v2891 = vpop.f32.mrb[0].mxu0
        %2892 = vmatprep.mubr.f32.mxu0 0.0
        %2893 = vmatmul.mubr.f32.gmra.mrb[0].mxu0 %v2676
        %v2894 = vpop.f32.mrb[0].mxu0
        %v2895 = vadd.f32 0.0, %v2894
        %v2896 = vpop.f32.mrb[0].mxu0
        %2897 = vmatprep.mubr.f32.mxu0 0.0
        %2898 = vmatmul.mubr.f32.gmra.mrb[0].mxu0 %v2679
        %v2899 = vpop.f32.mrb[0].mxu0
        %v2900 = vadd.f32 0.0, %v2899
        %v2901 = vpop.f32.mrb[0].mxu0
        %2902 = vmatprep.mubr.f32.mxu0 0.0
        %2903 = vmatmul.mubr.f32.gmra.mrb[0].mxu0 %v2682
        %v2904 = vpop.f32.mrb[0].mxu0
        %v2905 = vadd.f32 0.0, %v2904
        %v2906 = vpop.f32.mrb[0].mxu0
        %2907 = vmatprep.mubr.f32.mxu0 0.0
        %2908 = vmatmul.mubr.f32.gmra.mrb[0].mxu0 %v2685
        %v2909 = vpop.f32.mrb[0].mxu0
        %v2910 = vadd.f32 0.0, %v2909
        %v2911 = vpop.f32.mrb[0].mxu0
        %2912 = vmatprep.mubr.f32.mxu0 0.0
        %2913 = vmatmul.mubr.f32.gmra.mrb[0].mxu0 %v2688
        %v2914 = vpop.f32.mrb[0].mxu0
        %v2915 = vadd.f32 0.0, %v2914
        %v2916 = vpop.f32.mrb[0].mxu0
        %2917 = vdwg.mxu0
        %v2918 = vadd.f32 %v2480, %v2760
        %v2919 = vadd.f32 %v2481, %v2765
        %v2920 = vadd.f32 %v2482, %v2770
        %v2921 = vadd.f32 %v2483, %v2775
        %v2922 = vadd.f32 %v2484, %v2780
        %v2923 = vadd.f32 %v2485, %v2785
        %v2924 = vadd.f32 %v2486, %v2790
        %v2925 = vadd.f32 %v2487, %v2795
        %v2926 = vadd.f32 %v2488, %v2800
        %v2927 = vadd.f32 %v2489, %v2805
        %v2928 = vadd.f32 %v2490, %v2810
        %v2929 = vadd.f32 %v2491, %v2815
        %v2930 = vadd.f32 %v2492, %v2820
        %v2931 = vadd.f32 %v2493, %v2825
        %v2932 = vadd.f32 %v2494, %v2830
        %v2933 = vadd.f32 %v2495, %v2835
        %v2934 = vadd.f32 %v2496, %v2840
        %v2935 = vadd.f32 %v2497, %v2845
        %v2936 = vadd.f32 %v2498, %v2850
        %v2937 = vadd.f32 %v2499, %v2855
        %v2938 = vadd.f32 %v2500, %v2860
        %v2939 = vadd.f32 %v2501, %v2865
        %v2940 = vadd.f32 %v2502, %v2870
        %v2941 = vadd.f32 %v2503, %v2875
        %v2942 = vadd.f32 %v2504, %v2880
        %v2943 = vadd.f32 %v2505, %v2885
        %v2944 = vadd.f32 %v2506, %v2890
        %v2945 = vadd.f32 %v2507, %v2895
        %v2946 = vadd.f32 %v2508, %v2900
        %v2947 = vadd.f32 %v2509, %v2905
        %v2948 = vadd.f32 %v2510, %v2910
        %v2949 = vadd.f32 %v2511, %v2915
        %s2950 = scalar_lea.vmem [#allocation2], 64
        %v2951 = vld [vmem:[%s2950] sm:$0xff]
        %v2952 = vld [vmem:[%s2950 + $0x8] sm:$0xff]
        %v2953 = vld [vmem:[%s2950 + $0x10] sm:$0xff]
        %v2954 = vld [vmem:[%s2950 + $0x18] sm:$0xff]
        %v2955 = vld [vmem:[%s2950 + $0x20] sm:$0xff]
        %v2956 = vld [vmem:[%s2950 + $0x28] sm:$0xff]
        %v2957 = vld [vmem:[%s2950 + $0x30] sm:$0xff]
        %v2958 = vld [vmem:[%s2950 + $0x38] sm:$0xff]
        %v2959 = vld [vmem:[%s2950 + $0x40] sm:$0xff]
        %v2960 = vld [vmem:[%s2950 + $0x48] sm:$0xff]
        %v2961 = vld [vmem:[%s2950 + $0x50] sm:$0xff]
        %v2962 = vld [vmem:[%s2950 + $0x58] sm:$0xff]
        %v2963 = vld [vmem:[%s2950 + $0x60] sm:$0xff]
        %v2964 = vld [vmem:[%s2950 + $0x68] sm:$0xff]
        %v2965 = vld [vmem:[%s2950 + $0x70] sm:$0xff]
        %v2966 = vld [vmem:[%s2950 + $0x78] sm:$0xff]
        %v2967 = vld [vmem:[%s2950 + $0x80] sm:$0xff]
        %v2968 = vld [vmem:[%s2950 + $0x88] sm:$0xff]
        %v2969 = vld [vmem:[%s2950 + $0x90] sm:$0xff]
        %v2970 = vld [vmem:[%s2950 + $0x98] sm:$0xff]
        %v2971 = vld [vmem:[%s2950 + $0xa0] sm:$0xff]
        %v2972 = vld [vmem:[%s2950 + $0xa8] sm:$0xff]
        %v2973 = vld [vmem:[%s2950 + $0xb0] sm:$0xff]
        %v2974 = vld [vmem:[%s2950 + $0xb8] sm:$0xff]
        %v2975 = vld [vmem:[%s2950 + $0xc0] sm:$0xff]
        %v2976 = vld [vmem:[%s2950 + $0xc8] sm:$0xff]
        %v2977 = vld [vmem:[%s2950 + $0xd0] sm:$0xff]
        %v2978 = vld [vmem:[%s2950 + $0xd8] sm:$0xff]
        %v2979 = vld [vmem:[%s2950 + $0xe0] sm:$0xff]
        %v2980 = vld [vmem:[%s2950 + $0xe8] sm:$0xff]
        %v2981 = vld [vmem:[%s2950 + $0xf0] sm:$0xff]
        %v2982 = vld [vmem:[%s2950 + $0xf8] sm:$0xff]
        %v2983 = vld [vmem:[%s2950 + $0x100] sm:$0xff]
        %v2984 = vld [vmem:[%s2950 + $0x108] sm:$0xff]
        %v2985 = vld [vmem:[%s2950 + $0x110] sm:$0xff]
        %v2986 = vld [vmem:[%s2950 + $0x118] sm:$0xff]
        %v2987 = vld [vmem:[%s2950 + $0x120] sm:$0xff]
        %v2988 = vld [vmem:[%s2950 + $0x128] sm:$0xff]
        %v2989 = vld [vmem:[%s2950 + $0x130] sm:$0xff]
        %v2990 = vld [vmem:[%s2950 + $0x138] sm:$0xff]
        %v2991 = vld [vmem:[%s2950 + $0x140] sm:$0xff]
        %v2992 = vld [vmem:[%s2950 + $0x148] sm:$0xff]
        %v2993 = vld [vmem:[%s2950 + $0x150] sm:$0xff]
        %v2994 = vld [vmem:[%s2950 + $0x158] sm:$0xff]
        %v2995 = vld [vmem:[%s2950 + $0x160] sm:$0xff]
        %v2996 = vld [vmem:[%s2950 + $0x168] sm:$0xff]
        %v2997 = vld [vmem:[%s2950 + $0x170] sm:$0xff]
        %v2998 = vld [vmem:[%s2950 + $0x178] sm:$0xff]
        %v2999 = vld [vmem:[%s2950 + $0x180] sm:$0xff]
        %v3000 = vld [vmem:[%s2950 + $0x188] sm:$0xff]
        %v3001 = vld [vmem:[%s2950 + $0x190] sm:$0xff]
        %v3002 = vld [vmem:[%s2950 + $0x198] sm:$0xff]
        %v3003 = vld [vmem:[%s2950 + $0x1a0] sm:$0xff]
        %v3004 = vld [vmem:[%s2950 + $0x1a8] sm:$0xff]
        %v3005 = vld [vmem:[%s2950 + $0x1b0] sm:$0xff]
        %v3006 = vld [vmem:[%s2950 + $0x1b8] sm:$0xff]
        %v3007 = vld [vmem:[%s2950 + $0x1c0] sm:$0xff]
        %v3008 = vld [vmem:[%s2950 + $0x1c8] sm:$0xff]
        %v3009 = vld [vmem:[%s2950 + $0x1d0] sm:$0xff]
        %v3010 = vld [vmem:[%s2950 + $0x1d8] sm:$0xff]
        %v3011 = vld [vmem:[%s2950 + $0x1e0] sm:$0xff]
        %v3012 = vld [vmem:[%s2950 + $0x1e8] sm:$0xff]
        %v3013 = vld [vmem:[%s2950 + $0x1f0] sm:$0xff]
        %v3014 = vld [vmem:[%s2950 + $0x1f8] sm:$0xff]
        %v3015 = vrot.slane %v2951, 7
        %v3016 = vrot.slane %v2952, 7
        %v3017 = vrot.slane %v2953, 7
        %v3018 = vrot.slane %v2955, 7
        %v3019 = vrot.slane %v2956, 7
        %v3020 = vrot.slane %v2957, 7
        %v3021 = vrot.slane %v2959, 7
        %v3022 = vrot.slane %v2960, 7
        %v3023 = vrot.slane %v2961, 7
        %v3024 = vrot.slane %v2963, 7
        %v3025 = vrot.slane %v2964, 7
        %v3026 = vrot.slane %v2965, 7
        %v3027 = vrot.slane %v2967, 7
        %v3028 = vrot.slane %v2968, 7
        %v3029 = vrot.slane %v2969, 7
        %v3030 = vrot.slane %v2971, 7
        %v3031 = vrot.slane %v2972, 7
        %v3032 = vrot.slane %v2973, 7
        %v3033 = vrot.slane %v2975, 7
        %v3034 = vrot.slane %v2976, 7
        %v3035 = vrot.slane %v2977, 7
        %v3036 = vrot.slane %v2979, 7
        %v3037 = vrot.slane %v2980, 7
        %v3038 = vrot.slane %v2981, 7
        %v3039 = vrot.slane %v2983, 7
        %v3040 = vrot.slane %v2984, 7
        %v3041 = vrot.slane %v2985, 7
        %v3042 = vrot.slane %v2987, 7
        %v3043 = vrot.slane %v2988, 7
        %v3044 = vrot.slane %v2989, 7
        %v3045 = vrot.slane %v2991, 7
        %v3046 = vrot.slane %v2992, 7
        %v3047 = vrot.slane %v2993, 7
        %v3048 = vrot.slane %v2995, 7
        %v3049 = vrot.slane %v2996, 7
        %v3050 = vrot.slane %v2997, 7
        %v3051 = vrot.slane %v2999, 7
        %v3052 = vrot.slane %v3000, 7
        %v3053 = vrot.slane %v3001, 7
        %v3054 = vrot.slane %v3003, 7
        %v3055 = vrot.slane %v3004, 7
        %v3056 = vrot.slane %v3005, 7
        %v3057 = vrot.slane %v3007, 7
        %v3058 = vrot.slane %v3008, 7
        %v3059 = vrot.slane %v3009, 7
        %v3060 = vrot.slane %v3011, 7
        %v3061 = vrot.slane %v3012, 7
        %v3062 = vrot.slane %v3013, 7
        %v3063 = vsel %vm528, %v3061, %v3062
        %v3064 = vsel %vm528, %v3060, %v3061
        %v3065 = vsel %vm528, %v3058, %v3059
        %v3066 = vsel %vm528, %v3057, %v3058
        %v3067 = vsel %vm528, %v3055, %v3056
        %v3068 = vsel %vm528, %v3054, %v3055
        %v3069 = vsel %vm528, %v3052, %v3053
        %v3070 = vsel %vm528, %v3051, %v3052
        %v3071 = vsel %vm528, %v3049, %v3050
        %v3072 = vsel %vm528, %v3048, %v3049
        %v3073 = vsel %vm528, %v3046, %v3047
        %v3074 = vsel %vm528, %v3045, %v3046
        %v3075 = vsel %vm528, %v3043, %v3044
        %v3076 = vsel %vm528, %v3042, %v3043
        %v3077 = vsel %vm528, %v3040, %v3041
        %v3078 = vsel %vm528, %v3039, %v3040
        %v3079 = vsel %vm528, %v3037, %v3038
        %v3080 = vsel %vm528, %v3036, %v3037
        %v3081 = vsel %vm528, %v3034, %v3035
        %v3082 = vsel %vm528, %v3033, %v3034
        %v3083 = vsel %vm528, %v3031, %v3032
        %v3084 = vsel %vm528, %v3030, %v3031
        %v3085 = vsel %vm528, %v3028, %v3029
        %v3086 = vsel %vm528, %v3027, %v3028
        %v3087 = vsel %vm528, %v3025, %v3026
        %v3088 = vsel %vm528, %v3024, %v3025
        %v3089 = vsel %vm528, %v3022, %v3023
        %v3090 = vsel %vm528, %v3021, %v3022
        %v3091 = vsel %vm528, %v3019, %v3020
        %v3092 = vsel %vm528, %v3018, %v3019
        %v3093 = vsel %vm528, %v3016, %v3017
        %v3094 = vsel %vm528, %v3015, %v3016
        %s3095 = scalar_lea.vmem %s1, 24
        %v3096 = vld [vmem:[%s3095] sm:$0xf]
        %v3098 = vsel %vm339, %v3094, 0
        %v3101 = vsel %vm339, %v3093, 0
        %v3104 = vsel %vm339, %v3092, 0
        %v3107 = vsel %vm339, %v3091, 0
        %v3110 = vsel %vm339, %v3090, 0
        %v3113 = vsel %vm339, %v3089, 0
        %v3116 = vsel %vm339, %v3088, 0
        %v3119 = vsel %vm339, %v3087, 0
        %v3122 = vsel %vm339, %v3086, 0
        %v3125 = vsel %vm339, %v3085, 0
        %v3128 = vsel %vm339, %v3084, 0
        %v3131 = vsel %vm339, %v3083, 0
        %v3134 = vsel %vm339, %v3082, 0
        %v3137 = vsel %vm339, %v3081, 0
        %v3140 = vsel %vm339, %v3080, 0
        %v3143 = vsel %vm339, %v3079, 0
        %v3146 = vsel %vm339, %v3078, 0
        %v3149 = vsel %vm339, %v3077, 0
        %v3152 = vsel %vm339, %v3076, 0
        %v3155 = vsel %vm339, %v3075, 0
        %v3158 = vsel %vm339, %v3074, 0
        %v3161 = vsel %vm339, %v3073, 0
        %v3164 = vsel %vm339, %v3072, 0
        %v3167 = vsel %vm339, %v3071, 0
        %v3170 = vsel %vm339, %v3070, 0
        %v3173 = vsel %vm339, %v3069, 0
        %v3176 = vsel %vm339, %v3068, 0
        %v3179 = vsel %vm339, %v3067, 0
        %v3182 = vsel %vm339, %v3066, 0
        %v3185 = vsel %vm339, %v3065, 0
        %v3188 = vsel %vm339, %v3064, 0
        %v3191 = vsel %vm339, %v3063, 0
        %v3194 = vsel %vm660, %v3096, 0
        %3196 = vmatprep.subr.mxu0 0.0
        %3197 = vmatpush1.msra.mxu0 %v3194
        %3198 = vmatprep.subr.mxu0 0.0
        %3199 = vmatpush1.msra.mxu0 0.0
        %3200 = vmatprep.subr.mxu0 0.0
        %3201 = vmatpush1.msra.mxu0 0.0
        %3202 = vmatprep.subr.mxu0 0.0
        %3203 = vmatpush1.msra.mxu0 0.0
        %3204 = vmatprep.subr.mxu0 0.0
        %3205 = vmatpush1.msra.mxu0 0.0
        %3206 = vmatprep.subr.mxu0 0.0
        %3207 = vmatpush1.msra.mxu0 0.0
        %3208 = vmatprep.subr.mxu0 0.0
        %3209 = vmatpush1.msra.mxu0 0.0
        %3210 = vmatprep.subr.mxu0 0.0
        %3211 = vmatpush1.msra.mxu0 0.0
        %3212 = vmatprep.subr.mxu0 0.0
        %3213 = vmatpush1.msra.mxu0 0.0
        %3214 = vmatprep.subr.mxu0 0.0
        %3215 = vmatpush1.msra.mxu0 0.0
        %3216 = vmatprep.subr.mxu0 0.0
        %3217 = vmatpush1.msra.mxu0 0.0
        %3218 = vmatprep.subr.mxu0 0.0
        %3219 = vmatpush1.msra.mxu0 0.0
        %3220 = vmatprep.subr.mxu0 0.0
        %3221 = vmatpush1.msra.mxu0 0.0
        %3222 = vmatprep.subr.mxu0 0.0
        %3223 = vmatpush1.msra.mxu0 0.0
        %3224 = vmatprep.subr.mxu0 0.0
        %3225 = vmatpush1.msra.mxu0 0.0
        %3226 = vmatprep.subr.mxu0 0.0
        %3227 = vmatpush1.msra.mxu0 0.0
        %3228 = vmatprep.subr.mxu0 0.0
        %3229 = vmatpush1.msra.mxu0 0.0
        %3230 = vmatprep.subr.mxu0 0.0
        %3231 = vmatpush1.msra.mxu0 0.0
        %3232 = vmatprep.subr.mxu0 0.0
        %3233 = vmatpush1.msra.mxu0 0.0
        %3234 = vmatprep.subr.mxu0 0.0
        %3235 = vmatpush1.msra.mxu0 0.0
        %3236 = vmatprep.subr.mxu0 0.0
        %3237 = vmatpush1.msra.mxu0 0.0
        %3238 = vmatprep.subr.mxu0 0.0
        %3239 = vmatpush1.msra.mxu0 0.0
        %3240 = vmatprep.subr.mxu0 0.0
        %3241 = vmatpush1.msra.mxu0 0.0
        %3242 = vmatprep.subr.mxu0 0.0
        %3243 = vmatpush1.msra.mxu0 0.0
        %3244 = vmatprep.subr.mxu0 0.0
        %3245 = vmatpush1.msra.mxu0 0.0
        %3246 = vmatprep.subr.mxu0 0.0
        %3247 = vmatpush1.msra.mxu0 0.0
        %3248 = vmatprep.subr.mxu0 0.0
        %3249 = vmatpush1.msra.mxu0 0.0
        %3250 = vmatprep.subr.mxu0 0.0
        %3251 = vmatpush1.msra.mxu0 0.0
        %3252 = vmatprep.subr.mxu0 0.0
        %3253 = vmatpush1.msra.mxu0 0.0
        %3254 = vmatprep.subr.mxu0 0.0
        %3255 = vmatpush1.msra.mxu0 0.0
        %3256 = vmatprep.subr.mxu0 0.0
        %3257 = vmatpush1.msra.mxu0 0.0
        %3258 = vmatprep.subr.mxu0 0.0
        %3259 = vmatpush1.msra.mxu0 0.0
        %3260 = vmatprep.mubr.f32.mxu0 0.0
        %3261 = vmatmul.mubr.f32.gmra.mrb[0].mxu0 %v3098
        %v3262 = vpop.f32.mrb[0].mxu0
        %v3263 = vadd.f32 0.0, %v3262
        %v3264 = vpop.f32.mrb[0].mxu0
        %3265 = vmatprep.mubr.f32.mxu0 0.0
        %3266 = vmatmul.mubr.f32.gmra.mrb[0].mxu0 %v3101
        %v3267 = vpop.f32.mrb[0].mxu0
        %v3268 = vadd.f32 0.0, %v3267
        %v3269 = vpop.f32.mrb[0].mxu0
        %3270 = vmatprep.mubr.f32.mxu0 0.0
        %3271 = vmatmul.mubr.f32.gmra.mrb[0].mxu0 %v3104
        %v3272 = vpop.f32.mrb[0].mxu0
        %v3273 = vadd.f32 0.0, %v3272
        %v3274 = vpop.f32.mrb[0].mxu0
        %3275 = vmatprep.mubr.f32.mxu0 0.0
        %3276 = vmatmul.mubr.f32.gmra.mrb[0].mxu0 %v3107
        %v3277 = vpop.f32.mrb[0].mxu0
        %v3278 = vadd.f32 0.0, %v3277
        %v3279 = vpop.f32.mrb[0].mxu0
        %3280 = vmatprep.mubr.f32.mxu0 0.0
        %3281 = vmatmul.mubr.f32.gmra.mrb[0].mxu0 %v3110
        %v3282 = vpop.f32.mrb[0].mxu0
        %v3283 = vadd.f32 0.0, %v3282
        %v3284 = vpop.f32.mrb[0].mxu0
        %3285 = vmatprep.mubr.f32.mxu0 0.0
        %3286 = vmatmul.mubr.f32.gmra.mrb[0].mxu0 %v3113
        %v3287 = vpop.f32.mrb[0].mxu0
        %v3288 = vadd.f32 0.0, %v3287
        %v3289 = vpop.f32.mrb[0].mxu0
        %3290 = vmatprep.mubr.f32.mxu0 0.0
        %3291 = vmatmul.mubr.f32.gmra.mrb[0].mxu0 %v3116
        %v3292 = vpop.f32.mrb[0].mxu0
        %v3293 = vadd.f32 0.0, %v3292
        %v3294 = vpop.f32.mrb[0].mxu0
        %3295 = vmatprep.mubr.f32.mxu0 0.0
        %3296 = vmatmul.mubr.f32.gmra.mrb[0].mxu0 %v3119
        %v3297 = vpop.f32.mrb[0].mxu0
        %v3298 = vadd.f32 0.0, %v3297
        %v3299 = vpop.f32.mrb[0].mxu0
        %3300 = vmatprep.mubr.f32.mxu0 0.0
        %3301 = vmatmul.mubr.f32.gmra.mrb[0].mxu0 %v3122
        %v3302 = vpop.f32.mrb[0].mxu0
        %v3303 = vadd.f32 0.0, %v3302
        %v3304 = vpop.f32.mrb[0].mxu0
        %3305 = vmatprep.mubr.f32.mxu0 0.0
        %3306 = vmatmul.mubr.f32.gmra.mrb[0].mxu0 %v3125
        %v3307 = vpop.f32.mrb[0].mxu0
        %v3308 = vadd.f32 0.0, %v3307
        %v3309 = vpop.f32.mrb[0].mxu0
        %3310 = vmatprep.mubr.f32.mxu0 0.0
        %3311 = vmatmul.mubr.f32.gmra.mrb[0].mxu0 %v3128
        %v3312 = vpop.f32.mrb[0].mxu0
        %v3313 = vadd.f32 0.0, %v3312
        %v3314 = vpop.f32.mrb[0].mxu0
        %3315 = vmatprep.mubr.f32.mxu0 0.0
        %3316 = vmatmul.mubr.f32.gmra.mrb[0].mxu0 %v3131
        %v3317 = vpop.f32.mrb[0].mxu0
        %v3318 = vadd.f32 0.0, %v3317
        %v3319 = vpop.f32.mrb[0].mxu0
        %3320 = vmatprep.mubr.f32.mxu0 0.0
        %3321 = vmatmul.mubr.f32.gmra.mrb[0].mxu0 %v3134
        %v3322 = vpop.f32.mrb[0].mxu0
        %v3323 = vadd.f32 0.0, %v3322
        %v3324 = vpop.f32.mrb[0].mxu0
        %3325 = vmatprep.mubr.f32.mxu0 0.0
        %3326 = vmatmul.mubr.f32.gmra.mrb[0].mxu0 %v3137
        %v3327 = vpop.f32.mrb[0].mxu0
        %v3328 = vadd.f32 0.0, %v3327
        %v3329 = vpop.f32.mrb[0].mxu0
        %3330 = vmatprep.mubr.f32.mxu0 0.0
        %3331 = vmatmul.mubr.f32.gmra.mrb[0].mxu0 %v3140
        %v3332 = vpop.f32.mrb[0].mxu0
        %v3333 = vadd.f32 0.0, %v3332
        %v3334 = vpop.f32.mrb[0].mxu0
        %3335 = vmatprep.mubr.f32.mxu0 0.0
        %3336 = vmatmul.mubr.f32.gmra.mrb[0].mxu0 %v3143
        %v3337 = vpop.f32.mrb[0].mxu0
        %v3338 = vadd.f32 0.0, %v3337
        %v3339 = vpop.f32.mrb[0].mxu0
        %3340 = vmatprep.mubr.f32.mxu0 0.0
        %3341 = vmatmul.mubr.f32.gmra.mrb[0].mxu0 %v3146
        %v3342 = vpop.f32.mrb[0].mxu0
        %v3343 = vadd.f32 0.0, %v3342
        %v3344 = vpop.f32.mrb[0].mxu0
        %3345 = vmatprep.mubr.f32.mxu0 0.0
        %3346 = vmatmul.mubr.f32.gmra.mrb[0].mxu0 %v3149
        %v3347 = vpop.f32.mrb[0].mxu0
        %v3348 = vadd.f32 0.0, %v3347
        %v3349 = vpop.f32.mrb[0].mxu0
        %3350 = vmatprep.mubr.f32.mxu0 0.0
        %3351 = vmatmul.mubr.f32.gmra.mrb[0].mxu0 %v3152
        %v3352 = vpop.f32.mrb[0].mxu0
        %v3353 = vadd.f32 0.0, %v3352
        %v3354 = vpop.f32.mrb[0].mxu0
        %3355 = vmatprep.mubr.f32.mxu0 0.0
        %3356 = vmatmul.mubr.f32.gmra.mrb[0].mxu0 %v3155
        %v3357 = vpop.f32.mrb[0].mxu0
        %v3358 = vadd.f32 0.0, %v3357
        %v3359 = vpop.f32.mrb[0].mxu0
        %3360 = vmatprep.mubr.f32.mxu0 0.0
        %3361 = vmatmul.mubr.f32.gmra.mrb[0].mxu0 %v3158
        %v3362 = vpop.f32.mrb[0].mxu0
        %v3363 = vadd.f32 0.0, %v3362
        %v3364 = vpop.f32.mrb[0].mxu0
        %3365 = vmatprep.mubr.f32.mxu0 0.0
        %3366 = vmatmul.mubr.f32.gmra.mrb[0].mxu0 %v3161
        %v3367 = vpop.f32.mrb[0].mxu0
        %v3368 = vadd.f32 0.0, %v3367
        %v3369 = vpop.f32.mrb[0].mxu0
        %3370 = vmatprep.mubr.f32.mxu0 0.0
        %3371 = vmatmul.mubr.f32.gmra.mrb[0].mxu0 %v3164
        %v3372 = vpop.f32.mrb[0].mxu0
        %v3373 = vadd.f32 0.0, %v3372
        %v3374 = vpop.f32.mrb[0].mxu0
        %3375 = vmatprep.mubr.f32.mxu0 0.0
        %3376 = vmatmul.mubr.f32.gmra.mrb[0].mxu0 %v3167
        %v3377 = vpop.f32.mrb[0].mxu0
        %v3378 = vadd.f32 0.0, %v3377
        %v3379 = vpop.f32.mrb[0].mxu0
        %3380 = vmatprep.mubr.f32.mxu0 0.0
        %3381 = vmatmul.mubr.f32.gmra.mrb[0].mxu0 %v3170
        %v3382 = vpop.f32.mrb[0].mxu0
        %v3383 = vadd.f32 0.0, %v3382
        %v3384 = vpop.f32.mrb[0].mxu0
        %3385 = vmatprep.mubr.f32.mxu0 0.0
        %3386 = vmatmul.mubr.f32.gmra.mrb[0].mxu0 %v3173
        %v3387 = vpop.f32.mrb[0].mxu0
        %v3388 = vadd.f32 0.0, %v3387
        %v3389 = vpop.f32.mrb[0].mxu0
        %3390 = vmatprep.mubr.f32.mxu0 0.0
        %3391 = vmatmul.mubr.f32.gmra.mrb[0].mxu0 %v3176
        %v3392 = vpop.f32.mrb[0].mxu0
        %v3393 = vadd.f32 0.0, %v3392
        %v3394 = vpop.f32.mrb[0].mxu0
        %3395 = vmatprep.mubr.f32.mxu0 0.0
        %3396 = vmatmul.mubr.f32.gmra.mrb[0].mxu0 %v3179
        %v3397 = vpop.f32.mrb[0].mxu0
        %v3398 = vadd.f32 0.0, %v3397
        %v3399 = vpop.f32.mrb[0].mxu0
        %3400 = vmatprep.mubr.f32.mxu0 0.0
        %3401 = vmatmul.mubr.f32.gmra.mrb[0].mxu0 %v3182
        %v3402 = vpop.f32.mrb[0].mxu0
        %v3403 = vadd.f32 0.0, %v3402
        %v3404 = vpop.f32.mrb[0].mxu0
        %3405 = vmatprep.mubr.f32.mxu0 0.0
        %3406 = vmatmul.mubr.f32.gmra.mrb[0].mxu0 %v3185
        %v3407 = vpop.f32.mrb[0].mxu0
        %v3408 = vadd.f32 0.0, %v3407
        %v3409 = vpop.f32.mrb[0].mxu0
        %3410 = vmatprep.mubr.f32.mxu0 0.0
        %3411 = vmatmul.mubr.f32.gmra.mrb[0].mxu0 %v3188
        %v3412 = vpop.f32.mrb[0].mxu0
        %v3413 = vadd.f32 0.0, %v3412
        %v3414 = vpop.f32.mrb[0].mxu0
        %3415 = vmatprep.mubr.f32.mxu0 0.0
        %3416 = vmatmul.mubr.f32.gmra.mrb[0].mxu0 %v3191
        %v3417 = vpop.f32.mrb[0].mxu0
        %v3418 = vadd.f32 0.0, %v3417
        %v3419 = vpop.f32.mrb[0].mxu0
        %3420 = vdwg.mxu0
        %v3421 = vadd.f32 %v2918, %v3263
        %v3422 = vadd.f32 %v2919, %v3268
        %v3423 = vadd.f32 %v2920, %v3273
        %v3424 = vadd.f32 %v2921, %v3278
        %v3425 = vadd.f32 %v2922, %v3283
        %v3426 = vadd.f32 %v2923, %v3288
        %v3427 = vadd.f32 %v2924, %v3293
        %v3428 = vadd.f32 %v2925, %v3298
        %v3429 = vadd.f32 %v2926, %v3303
        %v3430 = vadd.f32 %v2927, %v3308
        %v3431 = vadd.f32 %v2928, %v3313
        %v3432 = vadd.f32 %v2929, %v3318
        %v3433 = vadd.f32 %v2930, %v3323
        %v3434 = vadd.f32 %v2931, %v3328
        %v3435 = vadd.f32 %v2932, %v3333
        %v3436 = vadd.f32 %v2933, %v3338
        %v3437 = vadd.f32 %v2934, %v3343
        %v3438 = vadd.f32 %v2935, %v3348
        %v3439 = vadd.f32 %v2936, %v3353
        %v3440 = vadd.f32 %v2937, %v3358
        %v3441 = vadd.f32 %v2938, %v3363
        %v3442 = vadd.f32 %v2939, %v3368
        %v3443 = vadd.f32 %v2940, %v3373
        %v3444 = vadd.f32 %v2941, %v3378
        %v3445 = vadd.f32 %v2942, %v3383
        %v3446 = vadd.f32 %v2943, %v3388
        %v3447 = vadd.f32 %v2944, %v3393
        %v3448 = vadd.f32 %v2945, %v3398
        %v3449 = vadd.f32 %v2946, %v3403
        %v3450 = vadd.f32 %v2947, %v3408
        %v3451 = vadd.f32 %v2948, %v3413
        %v3452 = vadd.f32 %v2949, %v3418
        %s3453 = scalar_lea.vmem %s1, 28
        %v3454 = vld [vmem:[%s3453] sm:$0xf]
        %v3456 = vsel %vm339, %v2952, 0
        %v3459 = vsel %vm339, %v2953, 0
        %v3462 = vsel %vm339, %v2956, 0
        %v3465 = vsel %vm339, %v2957, 0
        %v3468 = vsel %vm339, %v2960, 0
        %v3471 = vsel %vm339, %v2961, 0
        %v3474 = vsel %vm339, %v2964, 0
        %v3477 = vsel %vm339, %v2965, 0
        %v3480 = vsel %vm339, %v2968, 0
        %v3483 = vsel %vm339, %v2969, 0
        %v3486 = vsel %vm339, %v2972, 0
        %v3489 = vsel %vm339, %v2973, 0
        %v3492 = vsel %vm339, %v2976, 0
        %v3495 = vsel %vm339, %v2977, 0
        %v3498 = vsel %vm339, %v2980, 0
        %v3501 = vsel %vm339, %v2981, 0
        %v3504 = vsel %vm339, %v2984, 0
        %v3507 = vsel %vm339, %v2985, 0
        %v3510 = vsel %vm339, %v2988, 0
        %v3513 = vsel %vm339, %v2989, 0
        %v3516 = vsel %vm339, %v2992, 0
        %v3519 = vsel %vm339, %v2993, 0
        %v3522 = vsel %vm339, %v2996, 0
        %v3525 = vsel %vm339, %v2997, 0
        %v3528 = vsel %vm339, %v3000, 0
        %v3531 = vsel %vm339, %v3001, 0
        %v3534 = vsel %vm339, %v3004, 0
        %v3537 = vsel %vm339, %v3005, 0
        %v3540 = vsel %vm339, %v3008, 0
        %v3543 = vsel %vm339, %v3009, 0
        %v3546 = vsel %vm339, %v3012, 0
        %v3549 = vsel %vm339, %v3013, 0
        %v3552 = vsel %vm660, %v3454, 0
        %3554 = vmatprep.subr.mxu0 0.0
        %3555 = vmatpush1.msra.mxu0 %v3552
        %3556 = vmatprep.subr.mxu0 0.0
        %3557 = vmatpush1.msra.mxu0 0.0
        %3558 = vmatprep.subr.mxu0 0.0
        %3559 = vmatpush1.msra.mxu0 0.0
        %3560 = vmatprep.subr.mxu0 0.0
        %3561 = vmatpush1.msra.mxu0 0.0
        %3562 = vmatprep.subr.mxu0 0.0
        %3563 = vmatpush1.msra.mxu0 0.0
        %3564 = vmatprep.subr.mxu0 0.0
        %3565 = vmatpush1.msra.mxu0 0.0
        %3566 = vmatprep.subr.mxu0 0.0
        %3567 = vmatpush1.msra.mxu0 0.0
        %3568 = vmatprep.subr.mxu0 0.0
        %3569 = vmatpush1.msra.mxu0 0.0
        %3570 = vmatprep.subr.mxu0 0.0
        %3571 = vmatpush1.msra.mxu0 0.0
        %3572 = vmatprep.subr.mxu0 0.0
        %3573 = vmatpush1.msra.mxu0 0.0
        %3574 = vmatprep.subr.mxu0 0.0
        %3575 = vmatpush1.msra.mxu0 0.0
        %3576 = vmatprep.subr.mxu0 0.0
        %3577 = vmatpush1.msra.mxu0 0.0
        %3578 = vmatprep.subr.mxu0 0.0
        %3579 = vmatpush1.msra.mxu0 0.0
        %3580 = vmatprep.subr.mxu0 0.0
        %3581 = vmatpush1.msra.mxu0 0.0
        %3582 = vmatprep.subr.mxu0 0.0
        %3583 = vmatpush1.msra.mxu0 0.0
        %3584 = vmatprep.subr.mxu0 0.0
        %3585 = vmatpush1.msra.mxu0 0.0
        %3586 = vmatprep.subr.mxu0 0.0
        %3587 = vmatpush1.msra.mxu0 0.0
        %3588 = vmatprep.subr.mxu0 0.0
        %3589 = vmatpush1.msra.mxu0 0.0
        %3590 = vmatprep.subr.mxu0 0.0
        %3591 = vmatpush1.msra.mxu0 0.0
        %3592 = vmatprep.subr.mxu0 0.0
        %3593 = vmatpush1.msra.mxu0 0.0
        %3594 = vmatprep.subr.mxu0 0.0
        %3595 = vmatpush1.msra.mxu0 0.0
        %3596 = vmatprep.subr.mxu0 0.0
        %3597 = vmatpush1.msra.mxu0 0.0
        %3598 = vmatprep.subr.mxu0 0.0
        %3599 = vmatpush1.msra.mxu0 0.0
        %3600 = vmatprep.subr.mxu0 0.0
        %3601 = vmatpush1.msra.mxu0 0.0
        %3602 = vmatprep.subr.mxu0 0.0
        %3603 = vmatpush1.msra.mxu0 0.0
        %3604 = vmatprep.subr.mxu0 0.0
        %3605 = vmatpush1.msra.mxu0 0.0
        %3606 = vmatprep.subr.mxu0 0.0
        %3607 = vmatpush1.msra.mxu0 0.0
        %3608 = vmatprep.subr.mxu0 0.0
        %3609 = vmatpush1.msra.mxu0 0.0
        %3610 = vmatprep.subr.mxu0 0.0
        %3611 = vmatpush1.msra.mxu0 0.0
        %3612 = vmatprep.subr.mxu0 0.0
        %3613 = vmatpush1.msra.mxu0 0.0
        %3614 = vmatprep.subr.mxu0 0.0
        %3615 = vmatpush1.msra.mxu0 0.0
        %3616 = vmatprep.subr.mxu0 0.0
        %3617 = vmatpush1.msra.mxu0 0.0
        %3618 = vmatprep.mubr.f32.mxu0 0.0
        %3619 = vmatmul.mubr.f32.gmra.mrb[0].mxu0 %v3456
        %v3620 = vpop.f32.mrb[0].mxu0
        %v3621 = vadd.f32 0.0, %v3620
        %v3622 = vpop.f32.mrb[0].mxu0
        %3623 = vmatprep.mubr.f32.mxu0 0.0
        %3624 = vmatmul.mubr.f32.gmra.mrb[0].mxu0 %v3459
        %v3625 = vpop.f32.mrb[0].mxu0
        %v3626 = vadd.f32 0.0, %v3625
        %v3627 = vpop.f32.mrb[0].mxu0
        %3628 = vmatprep.mubr.f32.mxu0 0.0
        %3629 = vmatmul.mubr.f32.gmra.mrb[0].mxu0 %v3462
        %v3630 = vpop.f32.mrb[0].mxu0
        %v3631 = vadd.f32 0.0, %v3630
        %v3632 = vpop.f32.mrb[0].mxu0
        %3633 = vmatprep.mubr.f32.mxu0 0.0
        %3634 = vmatmul.mubr.f32.gmra.mrb[0].mxu0 %v3465
        %v3635 = vpop.f32.mrb[0].mxu0
        %v3636 = vadd.f32 0.0, %v3635
        %v3637 = vpop.f32.mrb[0].mxu0
        %3638 = vmatprep.mubr.f32.mxu0 0.0
        %3639 = vmatmul.mubr.f32.gmra.mrb[0].mxu0 %v3468
        %v3640 = vpop.f32.mrb[0].mxu0
        %v3641 = vadd.f32 0.0, %v3640
        %v3642 = vpop.f32.mrb[0].mxu0
        %3643 = vmatprep.mubr.f32.mxu0 0.0
        %3644 = vmatmul.mubr.f32.gmra.mrb[0].mxu0 %v3471
        %v3645 = vpop.f32.mrb[0].mxu0
        %v3646 = vadd.f32 0.0, %v3645
        %v3647 = vpop.f32.mrb[0].mxu0
        %3648 = vmatprep.mubr.f32.mxu0 0.0
        %3649 = vmatmul.mubr.f32.gmra.mrb[0].mxu0 %v3474
        %v3650 = vpop.f32.mrb[0].mxu0
        %v3651 = vadd.f32 0.0, %v3650
        %v3652 = vpop.f32.mrb[0].mxu0
        %3653 = vmatprep.mubr.f32.mxu0 0.0
        %3654 = vmatmul.mubr.f32.gmra.mrb[0].mxu0 %v3477
        %v3655 = vpop.f32.mrb[0].mxu0
        %v3656 = vadd.f32 0.0, %v3655
        %v3657 = vpop.f32.mrb[0].mxu0
        %3658 = vmatprep.mubr.f32.mxu0 0.0
        %3659 = vmatmul.mubr.f32.gmra.mrb[0].mxu0 %v3480
        %v3660 = vpop.f32.mrb[0].mxu0
        %v3661 = vadd.f32 0.0, %v3660
        %v3662 = vpop.f32.mrb[0].mxu0
        %3663 = vmatprep.mubr.f32.mxu0 0.0
        %3664 = vmatmul.mubr.f32.gmra.mrb[0].mxu0 %v3483
        %v3665 = vpop.f32.mrb[0].mxu0
        %v3666 = vadd.f32 0.0, %v3665
        %v3667 = vpop.f32.mrb[0].mxu0
        %3668 = vmatprep.mubr.f32.mxu0 0.0
        %3669 = vmatmul.mubr.f32.gmra.mrb[0].mxu0 %v3486
        %v3670 = vpop.f32.mrb[0].mxu0
        %v3671 = vadd.f32 0.0, %v3670
        %v3672 = vpop.f32.mrb[0].mxu0
        %3673 = vmatprep.mubr.f32.mxu0 0.0
        %3674 = vmatmul.mubr.f32.gmra.mrb[0].mxu0 %v3489
        %v3675 = vpop.f32.mrb[0].mxu0
        %v3676 = vadd.f32 0.0, %v3675
        %v3677 = vpop.f32.mrb[0].mxu0
        %3678 = vmatprep.mubr.f32.mxu0 0.0
        %3679 = vmatmul.mubr.f32.gmra.mrb[0].mxu0 %v3492
        %v3680 = vpop.f32.mrb[0].mxu0
        %v3681 = vadd.f32 0.0, %v3680
        %v3682 = vpop.f32.mrb[0].mxu0
        %3683 = vmatprep.mubr.f32.mxu0 0.0
        %3684 = vmatmul.mubr.f32.gmra.mrb[0].mxu0 %v3495
        %v3685 = vpop.f32.mrb[0].mxu0
        %v3686 = vadd.f32 0.0, %v3685
        %v3687 = vpop.f32.mrb[0].mxu0
        %3688 = vmatprep.mubr.f32.mxu0 0.0
        %3689 = vmatmul.mubr.f32.gmra.mrb[0].mxu0 %v3498
        %v3690 = vpop.f32.mrb[0].mxu0
        %v3691 = vadd.f32 0.0, %v3690
        %v3692 = vpop.f32.mrb[0].mxu0
        %3693 = vmatprep.mubr.f32.mxu0 0.0
        %3694 = vmatmul.mubr.f32.gmra.mrb[0].mxu0 %v3501
        %v3695 = vpop.f32.mrb[0].mxu0
        %v3696 = vadd.f32 0.0, %v3695
        %v3697 = vpop.f32.mrb[0].mxu0
        %3698 = vmatprep.mubr.f32.mxu0 0.0
        %3699 = vmatmul.mubr.f32.gmra.mrb[0].mxu0 %v3504
        %v3700 = vpop.f32.mrb[0].mxu0
        %v3701 = vadd.f32 0.0, %v3700
        %v3702 = vpop.f32.mrb[0].mxu0
        %3703 = vmatprep.mubr.f32.mxu0 0.0
        %3704 = vmatmul.mubr.f32.gmra.mrb[0].mxu0 %v3507
        %v3705 = vpop.f32.mrb[0].mxu0
        %v3706 = vadd.f32 0.0, %v3705
        %v3707 = vpop.f32.mrb[0].mxu0
        %3708 = vmatprep.mubr.f32.mxu0 0.0
        %3709 = vmatmul.mubr.f32.gmra.mrb[0].mxu0 %v3510
        %v3710 = vpop.f32.mrb[0].mxu0
        %v3711 = vadd.f32 0.0, %v3710
        %v3712 = vpop.f32.mrb[0].mxu0
        %3713 = vmatprep.mubr.f32.mxu0 0.0
        %3714 = vmatmul.mubr.f32.gmra.mrb[0].mxu0 %v3513
        %v3715 = vpop.f32.mrb[0].mxu0
        %v3716 = vadd.f32 0.0, %v3715
        %v3717 = vpop.f32.mrb[0].mxu0
        %3718 = vmatprep.mubr.f32.mxu0 0.0
        %3719 = vmatmul.mubr.f32.gmra.mrb[0].mxu0 %v3516
        %v3720 = vpop.f32.mrb[0].mxu0
        %v3721 = vadd.f32 0.0, %v3720
        %v3722 = vpop.f32.mrb[0].mxu0
        %3723 = vmatprep.mubr.f32.mxu0 0.0
        %3724 = vmatmul.mubr.f32.gmra.mrb[0].mxu0 %v3519
        %v3725 = vpop.f32.mrb[0].mxu0
        %v3726 = vadd.f32 0.0, %v3725
        %v3727 = vpop.f32.mrb[0].mxu0
        %3728 = vmatprep.mubr.f32.mxu0 0.0
        %3729 = vmatmul.mubr.f32.gmra.mrb[0].mxu0 %v3522
        %v3730 = vpop.f32.mrb[0].mxu0
        %v3731 = vadd.f32 0.0, %v3730
        %v3732 = vpop.f32.mrb[0].mxu0
        %3733 = vmatprep.mubr.f32.mxu0 0.0
        %3734 = vmatmul.mubr.f32.gmra.mrb[0].mxu0 %v3525
        %v3735 = vpop.f32.mrb[0].mxu0
        %v3736 = vadd.f32 0.0, %v3735
        %v3737 = vpop.f32.mrb[0].mxu0
        %3738 = vmatprep.mubr.f32.mxu0 0.0
        %3739 = vmatmul.mubr.f32.gmra.mrb[0].mxu0 %v3528
        %v3740 = vpop.f32.mrb[0].mxu0
        %v3741 = vadd.f32 0.0, %v3740
        %v3742 = vpop.f32.mrb[0].mxu0
        %3743 = vmatprep.mubr.f32.mxu0 0.0
        %3744 = vmatmul.mubr.f32.gmra.mrb[0].mxu0 %v3531
        %v3745 = vpop.f32.mrb[0].mxu0
        %v3746 = vadd.f32 0.0, %v3745
        %v3747 = vpop.f32.mrb[0].mxu0
        %3748 = vmatprep.mubr.f32.mxu0 0.0
        %3749 = vmatmul.mubr.f32.gmra.mrb[0].mxu0 %v3534
        %v3750 = vpop.f32.mrb[0].mxu0
        %v3751 = vadd.f32 0.0, %v3750
        %v3752 = vpop.f32.mrb[0].mxu0
        %3753 = vmatprep.mubr.f32.mxu0 0.0
        %3754 = vmatmul.mubr.f32.gmra.mrb[0].mxu0 %v3537
        %v3755 = vpop.f32.mrb[0].mxu0
        %v3756 = vadd.f32 0.0, %v3755
        %v3757 = vpop.f32.mrb[0].mxu0
        %3758 = vmatprep.mubr.f32.mxu0 0.0
        %3759 = vmatmul.mubr.f32.gmra.mrb[0].mxu0 %v3540
        %v3760 = vpop.f32.mrb[0].mxu0
        %v3761 = vadd.f32 0.0, %v3760
        %v3762 = vpop.f32.mrb[0].mxu0
        %3763 = vmatprep.mubr.f32.mxu0 0.0
        %3764 = vmatmul.mubr.f32.gmra.mrb[0].mxu0 %v3543
        %v3765 = vpop.f32.mrb[0].mxu0
        %v3766 = vadd.f32 0.0, %v3765
        %v3767 = vpop.f32.mrb[0].mxu0
        %3768 = vmatprep.mubr.f32.mxu0 0.0
        %3769 = vmatmul.mubr.f32.gmra.mrb[0].mxu0 %v3546
        %v3770 = vpop.f32.mrb[0].mxu0
        %v3771 = vadd.f32 0.0, %v3770
        %v3772 = vpop.f32.mrb[0].mxu0
        %3773 = vmatprep.mubr.f32.mxu0 0.0
        %3774 = vmatmul.mubr.f32.gmra.mrb[0].mxu0 %v3549
        %v3775 = vpop.f32.mrb[0].mxu0
        %v3776 = vadd.f32 0.0, %v3775
        %v3777 = vpop.f32.mrb[0].mxu0
        %3778 = vdwg.mxu0
        %v3779 = vadd.f32 %v3421, %v3621
        %v3780 = vadd.f32 %v3422, %v3626
        %v3781 = vadd.f32 %v3423, %v3631
        %v3782 = vadd.f32 %v3424, %v3636
        %v3783 = vadd.f32 %v3425, %v3641
        %v3784 = vadd.f32 %v3426, %v3646
        %v3785 = vadd.f32 %v3427, %v3651
        %v3786 = vadd.f32 %v3428, %v3656
        %v3787 = vadd.f32 %v3429, %v3661
        %v3788 = vadd.f32 %v3430, %v3666
        %v3789 = vadd.f32 %v3431, %v3671
        %v3790 = vadd.f32 %v3432, %v3676
        %v3791 = vadd.f32 %v3433, %v3681
        %v3792 = vadd.f32 %v3434, %v3686
        %v3793 = vadd.f32 %v3435, %v3691
        %v3794 = vadd.f32 %v3436, %v3696
        %v3795 = vadd.f32 %v3437, %v3701
        %v3796 = vadd.f32 %v3438, %v3706
        %v3797 = vadd.f32 %v3439, %v3711
        %v3798 = vadd.f32 %v3440, %v3716
        %v3799 = vadd.f32 %v3441, %v3721
        %v3800 = vadd.f32 %v3442, %v3726
        %v3801 = vadd.f32 %v3443, %v3731
        %v3802 = vadd.f32 %v3444, %v3736
        %v3803 = vadd.f32 %v3445, %v3741
        %v3804 = vadd.f32 %v3446, %v3746
        %v3805 = vadd.f32 %v3447, %v3751
        %v3806 = vadd.f32 %v3448, %v3756
        %v3807 = vadd.f32 %v3449, %v3761
        %v3808 = vadd.f32 %v3450, %v3766
        %v3809 = vadd.f32 %v3451, %v3771
        %v3810 = vadd.f32 %v3452, %v3776
        %v3811 = vrot.slane %v2952, 1
        %v3812 = vrot.slane %v2953, 1
        %v3813 = vrot.slane %v2954, 1
        %v3814 = vrot.slane %v2956, 1
        %v3815 = vrot.slane %v2957, 1
        %v3816 = vrot.slane %v2958, 1
        %v3817 = vrot.slane %v2960, 1
        %v3818 = vrot.slane %v2961, 1
        %v3819 = vrot.slane %v2962, 1
        %v3820 = vrot.slane %v2964, 1
        %v3821 = vrot.slane %v2965, 1
        %v3822 = vrot.slane %v2966, 1
        %v3823 = vrot.slane %v2968, 1
        %v3824 = vrot.slane %v2969, 1
        %v3825 = vrot.slane %v2970, 1
        %v3826 = vrot.slane %v2972, 1
        %v3827 = vrot.slane %v2973, 1
        %v3828 = vrot.slane %v2974, 1
        %v3829 = vrot.slane %v2976, 1
        %v3830 = vrot.slane %v2977, 1
        %v3831 = vrot.slane %v2978, 1
        %v3832 = vrot.slane %v2980, 1
        %v3833 = vrot.slane %v2981, 1
        %v3834 = vrot.slane %v2982, 1
        %v3835 = vrot.slane %v2984, 1
        %v3836 = vrot.slane %v2985, 1
        %v3837 = vrot.slane %v2986, 1
        %v3838 = vrot.slane %v2988, 1
        %v3839 = vrot.slane %v2989, 1
        %v3840 = vrot.slane %v2990, 1
        %v3841 = vrot.slane %v2992, 1
        %v3842 = vrot.slane %v2993, 1
        %v3843 = vrot.slane %v2994, 1
        %v3844 = vrot.slane %v2996, 1
        %v3845 = vrot.slane %v2997, 1
        %v3846 = vrot.slane %v2998, 1
        %v3847 = vrot.slane %v3000, 1
        %v3848 = vrot.slane %v3001, 1
        %v3849 = vrot.slane %v3002, 1
        %v3850 = vrot.slane %v3004, 1
        %v3851 = vrot.slane %v3005, 1
        %v3852 = vrot.slane %v3006, 1
        %v3853 = vrot.slane %v3008, 1
        %v3854 = vrot.slane %v3009, 1
        %v3855 = vrot.slane %v3010, 1
        %v3856 = vrot.slane %v3012, 1
        %v3857 = vrot.slane %v3013, 1
        %v3858 = vrot.slane %v3014, 1
        %v3859 = vsel %vm1261, %v3857, %v3858
        %v3860 = vsel %vm1261, %v3856, %v3857
        %v3861 = vsel %vm1261, %v3854, %v3855
        %v3862 = vsel %vm1261, %v3853, %v3854
        %v3863 = vsel %vm1261, %v3851, %v3852
        %v3864 = vsel %vm1261, %v3850, %v3851
        %v3865 = vsel %vm1261, %v3848, %v3849
        %v3866 = vsel %vm1261, %v3847, %v3848
        %v3867 = vsel %vm1261, %v3845, %v3846
        %v3868 = vsel %vm1261, %v3844, %v3845
        %v3869 = vsel %vm1261, %v3842, %v3843
        %v3870 = vsel %vm1261, %v3841, %v3842
        %v3871 = vsel %vm1261, %v3839, %v3840
        %v3872 = vsel %vm1261, %v3838, %v3839
        %v3873 = vsel %vm1261, %v3836, %v3837
        %v3874 = vsel %vm1261, %v3835, %v3836
        %v3875 = vsel %vm1261, %v3833, %v3834
        %v3876 = vsel %vm1261, %v3832, %v3833
        %v3877 = vsel %vm1261, %v3830, %v3831
        %v3878 = vsel %vm1261, %v3829, %v3830
        %v3879 = vsel %vm1261, %v3827, %v3828
        %v3880 = vsel %vm1261, %v3826, %v3827
        %v3881 = vsel %vm1261, %v3824, %v3825
        %v3882 = vsel %vm1261, %v3823, %v3824
        %v3883 = vsel %vm1261, %v3821, %v3822
        %v3884 = vsel %vm1261, %v3820, %v3821
        %v3885 = vsel %vm1261, %v3818, %v3819
        %v3886 = vsel %vm1261, %v3817, %v3818
        %v3887 = vsel %vm1261, %v3815, %v3816
        %v3888 = vsel %vm1261, %v3814, %v3815
        %v3889 = vsel %vm1261, %v3812, %v3813
        %v3890 = vsel %vm1261, %v3811, %v3812
        %s3891 = scalar_lea.vmem %s1, 32
        %v3892 = vld [vmem:[%s3891] sm:$0xf]
        %v3894 = vsel %vm339, %v3890, 0
        %v3897 = vsel %vm339, %v3889, 0
        %v3900 = vsel %vm339, %v3888, 0
        %v3903 = vsel %vm339, %v3887, 0
        %v3906 = vsel %vm339, %v3886, 0
        %v3909 = vsel %vm339, %v3885, 0
        %v3912 = vsel %vm339, %v3884, 0
        %v3915 = vsel %vm339, %v3883, 0
        %v3918 = vsel %vm339, %v3882, 0
        %v3921 = vsel %vm339, %v3881, 0
        %v3924 = vsel %vm339, %v3880, 0
        %v3927 = vsel %vm339, %v3879, 0
        %v3930 = vsel %vm339, %v3878, 0
        %v3933 = vsel %vm339, %v3877, 0
        %v3936 = vsel %vm339, %v3876, 0
        %v3939 = vsel %vm339, %v3875, 0
        %v3942 = vsel %vm339, %v3874, 0
        %v3945 = vsel %vm339, %v3873, 0
        %v3948 = vsel %vm339, %v3872, 0
        %v3951 = vsel %vm339, %v3871, 0
        %v3954 = vsel %vm339, %v3870, 0
        %v3957 = vsel %vm339, %v3869, 0
        %v3960 = vsel %vm339, %v3868, 0
        %v3963 = vsel %vm339, %v3867, 0
        %v3966 = vsel %vm339, %v3866, 0
        %v3969 = vsel %vm339, %v3865, 0
        %v3972 = vsel %vm339, %v3864, 0
        %v3975 = vsel %vm339, %v3863, 0
        %v3978 = vsel %vm339, %v3862, 0
        %v3981 = vsel %vm339, %v3861, 0
        %v3984 = vsel %vm339, %v3860, 0
        %v3987 = vsel %vm339, %v3859, 0
        %v3990 = vsel %vm660, %v3892, 0
        %3992 = vmatprep.subr.mxu0 0.0
        %3993 = vmatpush1.msra.mxu0 %v3990
        %3994 = vmatprep.subr.mxu0 0.0
        %3995 = vmatpush1.msra.mxu0 0.0
        %3996 = vmatprep.subr.mxu0 0.0
        %3997 = vmatpush1.msra.mxu0 0.0
        %3998 = vmatprep.subr.mxu0 0.0
        %3999 = vmatpush1.msra.mxu0 0.0
        %4000 = vmatprep.subr.mxu0 0.0
        %4001 = vmatpush1.msra.mxu0 0.0
        %4002 = vmatprep.subr.mxu0 0.0
        %4003 = vmatpush1.msra.mxu0 0.0
        %4004 = vmatprep.subr.mxu0 0.0
        %4005 = vmatpush1.msra.mxu0 0.0
        %4006 = vmatprep.subr.mxu0 0.0
        %4007 = vmatpush1.msra.mxu0 0.0
        %4008 = vmatprep.subr.mxu0 0.0
        %4009 = vmatpush1.msra.mxu0 0.0
        %4010 = vmatprep.subr.mxu0 0.0
        %4011 = vmatpush1.msra.mxu0 0.0
        %4012 = vmatprep.subr.mxu0 0.0
        %4013 = vmatpush1.msra.mxu0 0.0
        %4014 = vmatprep.subr.mxu0 0.0
        %4015 = vmatpush1.msra.mxu0 0.0
        %4016 = vmatprep.subr.mxu0 0.0
        %4017 = vmatpush1.msra.mxu0 0.0
        %4018 = vmatprep.subr.mxu0 0.0
        %4019 = vmatpush1.msra.mxu0 0.0
        %4020 = vmatprep.subr.mxu0 0.0
        %4021 = vmatpush1.msra.mxu0 0.0
        %4022 = vmatprep.subr.mxu0 0.0
        %4023 = vmatpush1.msra.mxu0 0.0
        %4024 = vmatprep.subr.mxu0 0.0
        %4025 = vmatpush1.msra.mxu0 0.0
        %4026 = vmatprep.subr.mxu0 0.0
        %4027 = vmatpush1.msra.mxu0 0.0
        %4028 = vmatprep.subr.mxu0 0.0
        %4029 = vmatpush1.msra.mxu0 0.0
        %4030 = vmatprep.subr.mxu0 0.0
        %4031 = vmatpush1.msra.mxu0 0.0
        %4032 = vmatprep.subr.mxu0 0.0
        %4033 = vmatpush1.msra.mxu0 0.0
        %4034 = vmatprep.subr.mxu0 0.0
        %4035 = vmatpush1.msra.mxu0 0.0
        %4036 = vmatprep.subr.mxu0 0.0
        %4037 = vmatpush1.msra.mxu0 0.0
        %4038 = vmatprep.subr.mxu0 0.0
        %4039 = vmatpush1.msra.mxu0 0.0
        %4040 = vmatprep.subr.mxu0 0.0
        %4041 = vmatpush1.msra.mxu0 0.0
        %4042 = vmatprep.subr.mxu0 0.0
        %4043 = vmatpush1.msra.mxu0 0.0
        %4044 = vmatprep.subr.mxu0 0.0
        %4045 = vmatpush1.msra.mxu0 0.0
        %4046 = vmatprep.subr.mxu0 0.0
        %4047 = vmatpush1.msra.mxu0 0.0
        %4048 = vmatprep.subr.mxu0 0.0
        %4049 = vmatpush1.msra.mxu0 0.0
        %4050 = vmatprep.subr.mxu0 0.0
        %4051 = vmatpush1.msra.mxu0 0.0
        %4052 = vmatprep.subr.mxu0 0.0
        %4053 = vmatpush1.msra.mxu0 0.0
        %4054 = vmatprep.subr.mxu0 0.0
        %4055 = vmatpush1.msra.mxu0 0.0
        %4056 = vmatprep.mubr.f32.mxu0 0.0
        %4057 = vmatmul.mubr.f32.gmra.mrb[0].mxu0 %v3894
        %v4058 = vpop.f32.mrb[0].mxu0
        %v4059 = vadd.f32 0.0, %v4058
        %v4060 = vpop.f32.mrb[0].mxu0
        %4061 = vmatprep.mubr.f32.mxu0 0.0
        %4062 = vmatmul.mubr.f32.gmra.mrb[0].mxu0 %v3897
        %v4063 = vpop.f32.mrb[0].mxu0
        %v4064 = vadd.f32 0.0, %v4063
        %v4065 = vpop.f32.mrb[0].mxu0
        %4066 = vmatprep.mubr.f32.mxu0 0.0
        %4067 = vmatmul.mubr.f32.gmra.mrb[0].mxu0 %v3900
        %v4068 = vpop.f32.mrb[0].mxu0
        %v4069 = vadd.f32 0.0, %v4068
        %v4070 = vpop.f32.mrb[0].mxu0
        %4071 = vmatprep.mubr.f32.mxu0 0.0
        %4072 = vmatmul.mubr.f32.gmra.mrb[0].mxu0 %v3903
        %v4073 = vpop.f32.mrb[0].mxu0
        %v4074 = vadd.f32 0.0, %v4073
        %v4075 = vpop.f32.mrb[0].mxu0
        %4076 = vmatprep.mubr.f32.mxu0 0.0
        %4077 = vmatmul.mubr.f32.gmra.mrb[0].mxu0 %v3906
        %v4078 = vpop.f32.mrb[0].mxu0
        %v4079 = vadd.f32 0.0, %v4078
        %v4080 = vpop.f32.mrb[0].mxu0
        %4081 = vmatprep.mubr.f32.mxu0 0.0
        %4082 = vmatmul.mubr.f32.gmra.mrb[0].mxu0 %v3909
        %v4083 = vpop.f32.mrb[0].mxu0
        %v4084 = vadd.f32 0.0, %v4083
        %v4085 = vpop.f32.mrb[0].mxu0
        %4086 = vmatprep.mubr.f32.mxu0 0.0
        %4087 = vmatmul.mubr.f32.gmra.mrb[0].mxu0 %v3912
        %v4088 = vpop.f32.mrb[0].mxu0
        %v4089 = vadd.f32 0.0, %v4088
        %v4090 = vpop.f32.mrb[0].mxu0
        %4091 = vmatprep.mubr.f32.mxu0 0.0
        %4092 = vmatmul.mubr.f32.gmra.mrb[0].mxu0 %v3915
        %v4093 = vpop.f32.mrb[0].mxu0
        %v4094 = vadd.f32 0.0, %v4093
        %v4095 = vpop.f32.mrb[0].mxu0
        %4096 = vmatprep.mubr.f32.mxu0 0.0
        %4097 = vmatmul.mubr.f32.gmra.mrb[0].mxu0 %v3918
        %v4098 = vpop.f32.mrb[0].mxu0
        %v4099 = vadd.f32 0.0, %v4098
        %v4100 = vpop.f32.mrb[0].mxu0
        %4101 = vmatprep.mubr.f32.mxu0 0.0
        %4102 = vmatmul.mubr.f32.gmra.mrb[0].mxu0 %v3921
        %v4103 = vpop.f32.mrb[0].mxu0
        %v4104 = vadd.f32 0.0, %v4103
        %v4105 = vpop.f32.mrb[0].mxu0
        %4106 = vmatprep.mubr.f32.mxu0 0.0
        %4107 = vmatmul.mubr.f32.gmra.mrb[0].mxu0 %v3924
        %v4108 = vpop.f32.mrb[0].mxu0
        %v4109 = vadd.f32 0.0, %v4108
        %v4110 = vpop.f32.mrb[0].mxu0
        %4111 = vmatprep.mubr.f32.mxu0 0.0
        %4112 = vmatmul.mubr.f32.gmra.mrb[0].mxu0 %v3927
        %v4113 = vpop.f32.mrb[0].mxu0
        %v4114 = vadd.f32 0.0, %v4113
        %v4115 = vpop.f32.mrb[0].mxu0
        %4116 = vmatprep.mubr.f32.mxu0 0.0
        %4117 = vmatmul.mubr.f32.gmra.mrb[0].mxu0 %v3930
        %v4118 = vpop.f32.mrb[0].mxu0
        %v4119 = vadd.f32 0.0, %v4118
        %v4120 = vpop.f32.mrb[0].mxu0
        %4121 = vmatprep.mubr.f32.mxu0 0.0
        %4122 = vmatmul.mubr.f32.gmra.mrb[0].mxu0 %v3933
        %v4123 = vpop.f32.mrb[0].mxu0
        %v4124 = vadd.f32 0.0, %v4123
        %v4125 = vpop.f32.mrb[0].mxu0
        %4126 = vmatprep.mubr.f32.mxu0 0.0
        %4127 = vmatmul.mubr.f32.gmra.mrb[0].mxu0 %v3936
        %v4128 = vpop.f32.mrb[0].mxu0
        %v4129 = vadd.f32 0.0, %v4128
        %v4130 = vpop.f32.mrb[0].mxu0
        %4131 = vmatprep.mubr.f32.mxu0 0.0
        %4132 = vmatmul.mubr.f32.gmra.mrb[0].mxu0 %v3939
        %v4133 = vpop.f32.mrb[0].mxu0
        %v4134 = vadd.f32 0.0, %v4133
        %v4135 = vpop.f32.mrb[0].mxu0
        %4136 = vmatprep.mubr.f32.mxu0 0.0
        %4137 = vmatmul.mubr.f32.gmra.mrb[0].mxu0 %v3942
        %v4138 = vpop.f32.mrb[0].mxu0
        %v4139 = vadd.f32 0.0, %v4138
        %v4140 = vpop.f32.mrb[0].mxu0
        %4141 = vmatprep.mubr.f32.mxu0 0.0
        %4142 = vmatmul.mubr.f32.gmra.mrb[0].mxu0 %v3945
        %v4143 = vpop.f32.mrb[0].mxu0
        %v4144 = vadd.f32 0.0, %v4143
        %v4145 = vpop.f32.mrb[0].mxu0
        %4146 = vmatprep.mubr.f32.mxu0 0.0
        %4147 = vmatmul.mubr.f32.gmra.mrb[0].mxu0 %v3948
        %v4148 = vpop.f32.mrb[0].mxu0
        %v4149 = vadd.f32 0.0, %v4148
        %v4150 = vpop.f32.mrb[0].mxu0
        %4151 = vmatprep.mubr.f32.mxu0 0.0
        %4152 = vmatmul.mubr.f32.gmra.mrb[0].mxu0 %v3951
        %v4153 = vpop.f32.mrb[0].mxu0
        %v4154 = vadd.f32 0.0, %v4153
        %v4155 = vpop.f32.mrb[0].mxu0
        %4156 = vmatprep.mubr.f32.mxu0 0.0
        %4157 = vmatmul.mubr.f32.gmra.mrb[0].mxu0 %v3954
        %v4158 = vpop.f32.mrb[0].mxu0
        %v4159 = vadd.f32 0.0, %v4158
        %v4160 = vpop.f32.mrb[0].mxu0
        %4161 = vmatprep.mubr.f32.mxu0 0.0
        %4162 = vmatmul.mubr.f32.gmra.mrb[0].mxu0 %v3957
        %v4163 = vpop.f32.mrb[0].mxu0
        %v4164 = vadd.f32 0.0, %v4163
        %v4165 = vpop.f32.mrb[0].mxu0
        %4166 = vmatprep.mubr.f32.mxu0 0.0
        %4167 = vmatmul.mubr.f32.gmra.mrb[0].mxu0 %v3960
        %v4168 = vpop.f32.mrb[0].mxu0
        %v4169 = vadd.f32 0.0, %v4168
        %v4170 = vpop.f32.mrb[0].mxu0
        %4171 = vmatprep.mubr.f32.mxu0 0.0
        %4172 = vmatmul.mubr.f32.gmra.mrb[0].mxu0 %v3963
        %v4173 = vpop.f32.mrb[0].mxu0
        %v4174 = vadd.f32 0.0, %v4173
        %v4175 = vpop.f32.mrb[0].mxu0
        %4176 = vmatprep.mubr.f32.mxu0 0.0
        %4177 = vmatmul.mubr.f32.gmra.mrb[0].mxu0 %v3966
        %v4178 = vpop.f32.mrb[0].mxu0
        %v4179 = vadd.f32 0.0, %v4178
        %v4180 = vpop.f32.mrb[0].mxu0
        %4181 = vmatprep.mubr.f32.mxu0 0.0
        %4182 = vmatmul.mubr.f32.gmra.mrb[0].mxu0 %v3969
        %v4183 = vpop.f32.mrb[0].mxu0
        %v4184 = vadd.f32 0.0, %v4183
        %v4185 = vpop.f32.mrb[0].mxu0
        %4186 = vmatprep.mubr.f32.mxu0 0.0
        %4187 = vmatmul.mubr.f32.gmra.mrb[0].mxu0 %v3972
        %v4188 = vpop.f32.mrb[0].mxu0
        %v4189 = vadd.f32 0.0, %v4188
        %v4190 = vpop.f32.mrb[0].mxu0
        %4191 = vmatprep.mubr.f32.mxu0 0.0
        %4192 = vmatmul.mubr.f32.gmra.mrb[0].mxu0 %v3975
        %v4193 = vpop.f32.mrb[0].mxu0
        %v4194 = vadd.f32 0.0, %v4193
        %v4195 = vpop.f32.mrb[0].mxu0
        %4196 = vmatprep.mubr.f32.mxu0 0.0
        %4197 = vmatmul.mubr.f32.gmra.mrb[0].mxu0 %v3978
        %v4198 = vpop.f32.mrb[0].mxu0
        %v4199 = vadd.f32 0.0, %v4198
        %v4200 = vpop.f32.mrb[0].mxu0
        %4201 = vmatprep.mubr.f32.mxu0 0.0
        %4202 = vmatmul.mubr.f32.gmra.mrb[0].mxu0 %v3981
        %v4203 = vpop.f32.mrb[0].mxu0
        %v4204 = vadd.f32 0.0, %v4203
        %v4205 = vpop.f32.mrb[0].mxu0
        %4206 = vmatprep.mubr.f32.mxu0 0.0
        %4207 = vmatmul.mubr.f32.gmra.mrb[0].mxu0 %v3984
        %v4208 = vpop.f32.mrb[0].mxu0
        %v4209 = vadd.f32 0.0, %v4208
        %v4210 = vpop.f32.mrb[0].mxu0
        %4211 = vmatprep.mubr.f32.mxu0 0.0
        %4212 = vmatmul.mubr.f32.gmra.mrb[0].mxu0 %v3987
        %v4213 = vpop.f32.mrb[0].mxu0
        %v4214 = vadd.f32 0.0, %v4213
        %v4215 = vpop.f32.mrb[0].mxu0
        %4216 = vdwg.mxu0
        %v4217 = vadd.f32 %v3779, %v4059
        %v4218 = vadd.f32 %v3780, %v4064
        %v4219 = vadd.f32 %v3781, %v4069
        %v4220 = vadd.f32 %v3782, %v4074
        %v4221 = vadd.f32 %v3783, %v4079
        %v4222 = vadd.f32 %v3784, %v4084
        %v4223 = vadd.f32 %v3785, %v4089
        %v4224 = vadd.f32 %v3786, %v4094
        %v4225 = vadd.f32 %v3787, %v4099
        %v4226 = vadd.f32 %v3788, %v4104
        %v4227 = vadd.f32 %v3789, %v4109
        %v4228 = vadd.f32 %v3790, %v4114
        %v4229 = vadd.f32 %v3791, %v4119
        %v4230 = vadd.f32 %v3792, %v4124
        %v4231 = vadd.f32 %v3793, %v4129
        %v4232 = vadd.f32 %v3794, %v4134
        %v4233 = vadd.f32 %v3795, %v4139
        %v4234 = vadd.f32 %v3796, %v4144
        %v4235 = vadd.f32 %v3797, %v4149
        %v4236 = vadd.f32 %v3798, %v4154
        %v4237 = vadd.f32 %v3799, %v4159
        %v4238 = vadd.f32 %v3800, %v4164
        %v4239 = vadd.f32 %v3801, %v4169
        %v4240 = vadd.f32 %v3802, %v4174
        %v4241 = vadd.f32 %v3803, %v4179
        %v4242 = vadd.f32 %v3804, %v4184
        %v4243 = vadd.f32 %v3805, %v4189
        %v4244 = vadd.f32 %v3806, %v4194
        %v4245 = vadd.f32 %v3807, %v4199
        %v4246 = vadd.f32 %v3808, %v4204
        %v4247 = vadd.f32 %v3809, %v4209
        %v4248 = vadd.f32 %v3810, %v4214
        %v4249 = vld [vmem:[%s2] sm:$0x1]
        %v4251 = vlaneseq
        %v4252 = vshrl.u32 %v4251, 7
        %v4253 = vsub.s32 0, %v4252
        %v4254 = vrot.slane %v4249, %v4253
        %v4256 = vadd.f32 %v4217, %v4254
        %v4257 = vadd.f32 %v4218, %v4254
        %v4258 = vadd.f32 %v4219, %v4254
        %v4259 = vadd.f32 %v4220, %v4254
        %v4260 = vadd.f32 %v4221, %v4254
        %v4261 = vadd.f32 %v4222, %v4254
        %v4262 = vadd.f32 %v4223, %v4254
        %v4263 = vadd.f32 %v4224, %v4254
        %v4264 = vadd.f32 %v4225, %v4254
        %v4265 = vadd.f32 %v4226, %v4254
        %v4266 = vadd.f32 %v4227, %v4254
        %v4267 = vadd.f32 %v4228, %v4254
        %v4268 = vadd.f32 %v4229, %v4254
        %v4269 = vadd.f32 %v4230, %v4254
        %v4270 = vadd.f32 %v4231, %v4254
        %v4271 = vadd.f32 %v4232, %v4254
        %v4272 = vadd.f32 %v4233, %v4254
        %v4273 = vadd.f32 %v4234, %v4254
        %v4274 = vadd.f32 %v4235, %v4254
        %v4275 = vadd.f32 %v4236, %v4254
        %v4276 = vadd.f32 %v4237, %v4254
        %v4277 = vadd.f32 %v4238, %v4254
        %v4278 = vadd.f32 %v4239, %v4254
        %v4279 = vadd.f32 %v4240, %v4254
        %v4280 = vadd.f32 %v4241, %v4254
        %v4281 = vadd.f32 %v4242, %v4254
        %v4282 = vadd.f32 %v4243, %v4254
        %v4283 = vadd.f32 %v4244, %v4254
        %v4284 = vadd.f32 %v4245, %v4254
        %v4285 = vadd.f32 %v4246, %v4254
        %v4286 = vadd.f32 %v4247, %v4254
        %v4287 = vadd.f32 %v4248, %v4254
        %v4288 = vmax.f32 %v4256, 0.0
        %v4289 = vmax.f32 %v4257, 0.0
        %v4290 = vmax.f32 %v4258, 0.0
        %v4291 = vmax.f32 %v4259, 0.0
        %v4292 = vmax.f32 %v4260, 0.0
        %v4293 = vmax.f32 %v4261, 0.0
        %v4294 = vmax.f32 %v4262, 0.0
        %v4295 = vmax.f32 %v4263, 0.0
        %v4296 = vmax.f32 %v4264, 0.0
        %v4297 = vmax.f32 %v4265, 0.0
        %v4298 = vmax.f32 %v4266, 0.0
        %v4299 = vmax.f32 %v4267, 0.0
        %v4300 = vmax.f32 %v4268, 0.0
        %v4301 = vmax.f32 %v4269, 0.0
        %v4302 = vmax.f32 %v4270, 0.0
        %v4303 = vmax.f32 %v4271, 0.0
        %v4304 = vmax.f32 %v4272, 0.0
        %v4305 = vmax.f32 %v4273, 0.0
        %v4306 = vmax.f32 %v4274, 0.0
        %v4307 = vmax.f32 %v4275, 0.0
        %v4308 = vmax.f32 %v4276, 0.0
        %v4309 = vmax.f32 %v4277, 0.0
        %v4310 = vmax.f32 %v4278, 0.0
        %v4311 = vmax.f32 %v4279, 0.0
        %v4312 = vmax.f32 %v4280, 0.0
        %v4313 = vmax.f32 %v4281, 0.0
        %v4314 = vmax.f32 %v4282, 0.0
        %v4315 = vmax.f32 %v4283, 0.0
        %v4316 = vmax.f32 %v4284, 0.0
        %v4317 = vmax.f32 %v4285, 0.0
        %v4318 = vmax.f32 %v4286, 0.0
        %v4319 = vmax.f32 %v4287, 0.0
        %v4320 = vmax.f32 %v4288, %v4290
        %v4321 = vmax.f32 %v4289, %v4291
        %v4322 = vmax.f32 %v4292, %v4294
        %v4323 = vmax.f32 %v4293, %v4295
        %v4324 = vmax.f32 %v4296, %v4298
        %v4325 = vmax.f32 %v4297, %v4299
        %v4326 = vmax.f32 %v4300, %v4302
        %v4327 = vmax.f32 %v4301, %v4303
        %v4328 = vmax.f32 %v4304, %v4306
        %v4329 = vmax.f32 %v4305, %v4307
        %v4330 = vmax.f32 %v4308, %v4310
        %v4331 = vmax.f32 %v4309, %v4311
        %v4332 = vmax.f32 %v4312, %v4314
        %v4333 = vmax.f32 %v4313, %v4315
        %v4334 = vmax.f32 %v4316, %v4318
        %v4335 = vmax.f32 %v4317, %v4319
        %v4352 = vcombine.high %v4320, %v4320
        %v4354 = vunpack.c.l.s4 1983009808
        %v4355 = vunpack.c.0.s8 %v4354
        %v4356 = vlaneseq
        %v4357 = vshrl.u32 %v4356, 7
        %v4358 = vsub.s32 %v4355, %v4357
        %v4359 = vrot.slane %v4320, %v4358
        %v4361 = vunpack.c.l.s4 1983009808
        %v4362 = vunpack.c.0.s8 %v4361
        %v4363 = vlaneseq
        %v4364 = vshrl.u32 %v4363, 7
        %v4365 = vsub.s32 %v4362, %v4364
        %v4366 = vrot.slane %v4352, %v4365
        %v4367 = vcombine.high %v4359, %v4359
        %v4368 = vcombine.high %v4366, %v4366
        %v4369 = vcombine.high %v4321, %v4321
        %v4371 = vunpack.c.l.s4 1983009808
        %v4372 = vunpack.c.0.s8 %v4371
        %v4373 = vlaneseq
        %v4374 = vshrl.u32 %v4373, 7
        %v4375 = vsub.s32 %v4372, %v4374
        %v4376 = vrot.slane %v4321, %v4375
        %v4378 = vunpack.c.l.s4 1983009808
        %v4379 = vunpack.c.0.s8 %v4378
        %v4380 = vlaneseq
        %v4381 = vshrl.u32 %v4380, 7
        %v4382 = vsub.s32 %v4379, %v4381
        %v4383 = vrot.slane %v4369, %v4382
        %v4384 = vcombine.high %v4376, %v4376
        %v4385 = vcombine.high %v4383, %v4383
        %v4386 = vcombine.high %v4322, %v4322
        %v4388 = vunpack.c.l.s4 1983009808
        %v4389 = vunpack.c.0.s8 %v4388
        %v4390 = vlaneseq
        %v4391 = vshrl.u32 %v4390, 7
        %v4392 = vsub.s32 %v4389, %v4391
        %v4393 = vrot.slane %v4322, %v4392
        %v4395 = vunpack.c.l.s4 1983009808
        %v4396 = vunpack.c.0.s8 %v4395
        %v4397 = vlaneseq
        %v4398 = vshrl.u32 %v4397, 7
        %v4399 = vsub.s32 %v4396, %v4398
        %v4400 = vrot.slane %v4386, %v4399
        %v4401 = vcombine.high %v4393, %v4393
        %v4402 = vcombine.high %v4400, %v4400
        %v4403 = vcombine.high %v4323, %v4323
        %v4405 = vunpack.c.l.s4 1983009808
        %v4406 = vunpack.c.0.s8 %v4405
        %v4407 = vlaneseq
        %v4408 = vshrl.u32 %v4407, 7
        %v4409 = vsub.s32 %v4406, %v4408
        %v4410 = vrot.slane %v4323, %v4409
        %v4412 = vunpack.c.l.s4 1983009808
        %v4413 = vunpack.c.0.s8 %v4412
        %v4414 = vlaneseq
        %v4415 = vshrl.u32 %v4414, 7
        %v4416 = vsub.s32 %v4413, %v4415
        %v4417 = vrot.slane %v4403, %v4416
        %v4418 = vcombine.high %v4410, %v4410
        %v4419 = vcombine.high %v4417, %v4417
        %v4420 = vcombine.high %v4324, %v4324
        %v4422 = vunpack.c.l.s4 1983009808
        %v4423 = vunpack.c.0.s8 %v4422
        %v4424 = vlaneseq
        %v4425 = vshrl.u32 %v4424, 7
        %v4426 = vsub.s32 %v4423, %v4425
        %v4427 = vrot.slane %v4324, %v4426
        %v4429 = vunpack.c.l.s4 1983009808
        %v4430 = vunpack.c.0.s8 %v4429
        %v4431 = vlaneseq
        %v4432 = vshrl.u32 %v4431, 7
        %v4433 = vsub.s32 %v4430, %v4432
        %v4434 = vrot.slane %v4420, %v4433
        %v4435 = vcombine.high %v4427, %v4427
        %v4436 = vcombine.high %v4434, %v4434
        %v4437 = vcombine.high %v4325, %v4325
        %v4439 = vunpack.c.l.s4 1983009808
        %v4440 = vunpack.c.0.s8 %v4439
        %v4441 = vlaneseq
        %v4442 = vshrl.u32 %v4441, 7
        %v4443 = vsub.s32 %v4440, %v4442
        %v4444 = vrot.slane %v4325, %v4443
        %v4446 = vunpack.c.l.s4 1983009808
        %v4447 = vunpack.c.0.s8 %v4446
        %v4448 = vlaneseq
        %v4449 = vshrl.u32 %v4448, 7
        %v4450 = vsub.s32 %v4447, %v4449
        %v4451 = vrot.slane %v4437, %v4450
        %v4452 = vcombine.high %v4444, %v4444
        %v4453 = vcombine.high %v4451, %v4451
        %v4454 = vcombine.high %v4326, %v4326
        %v4456 = vunpack.c.l.s4 1983009808
        %v4457 = vunpack.c.0.s8 %v4456
        %v4458 = vlaneseq
        %v4459 = vshrl.u32 %v4458, 7
        %v4460 = vsub.s32 %v4457, %v4459
        %v4461 = vrot.slane %v4326, %v4460
        %v4463 = vunpack.c.l.s4 1983009808
        %v4464 = vunpack.c.0.s8 %v4463
        %v4465 = vlaneseq
        %v4466 = vshrl.u32 %v4465, 7
        %v4467 = vsub.s32 %v4464, %v4466
        %v4468 = vrot.slane %v4454, %v4467
        %v4469 = vcombine.high %v4461, %v4461
        %v4470 = vcombine.high %v4468, %v4468
        %v4471 = vcombine.high %v4327, %v4327
        %v4473 = vunpack.c.l.s4 1983009808
        %v4474 = vunpack.c.0.s8 %v4473
        %v4475 = vlaneseq
        %v4476 = vshrl.u32 %v4475, 7
        %v4477 = vsub.s32 %v4474, %v4476
        %v4478 = vrot.slane %v4327, %v4477
        %v4480 = vunpack.c.l.s4 1983009808
        %v4481 = vunpack.c.0.s8 %v4480
        %v4482 = vlaneseq
        %v4483 = vshrl.u32 %v4482, 7
        %v4484 = vsub.s32 %v4481, %v4483
        %v4485 = vrot.slane %v4471, %v4484
        %v4486 = vcombine.high %v4478, %v4478
        %v4487 = vcombine.high %v4485, %v4485
        %v4488 = vcombine.high %v4328, %v4328
        %v4490 = vunpack.c.l.s4 1983009808
        %v4491 = vunpack.c.0.s8 %v4490
        %v4492 = vlaneseq
        %v4493 = vshrl.u32 %v4492, 7
        %v4494 = vsub.s32 %v4491, %v4493
        %v4495 = vrot.slane %v4328, %v4494
        %v4497 = vunpack.c.l.s4 1983009808
        %v4498 = vunpack.c.0.s8 %v4497
        %v4499 = vlaneseq
        %v4500 = vshrl.u32 %v4499, 7
        %v4501 = vsub.s32 %v4498, %v4500
        %v4502 = vrot.slane %v4488, %v4501
        %v4503 = vcombine.high %v4495, %v4495
        %v4504 = vcombine.high %v4502, %v4502
        %v4505 = vcombine.high %v4329, %v4329
        %v4507 = vunpack.c.l.s4 1983009808
        %v4508 = vunpack.c.0.s8 %v4507
        %v4509 = vlaneseq
        %v4510 = vshrl.u32 %v4509, 7
        %v4511 = vsub.s32 %v4508, %v4510
        %v4512 = vrot.slane %v4329, %v4511
        %v4514 = vunpack.c.l.s4 1983009808
        %v4515 = vunpack.c.0.s8 %v4514
        %v4516 = vlaneseq
        %v4517 = vshrl.u32 %v4516, 7
        %v4518 = vsub.s32 %v4515, %v4517
        %v4519 = vrot.slane %v4505, %v4518
        %v4520 = vcombine.high %v4512, %v4512
        %v4521 = vcombine.high %v4519, %v4519
        %v4522 = vcombine.high %v4330, %v4330
        %v4524 = vunpack.c.l.s4 1983009808
        %v4525 = vunpack.c.0.s8 %v4524
        %v4526 = vlaneseq
        %v4527 = vshrl.u32 %v4526, 7
        %v4528 = vsub.s32 %v4525, %v4527
        %v4529 = vrot.slane %v4330, %v4528
        %v4531 = vunpack.c.l.s4 1983009808
        %v4532 = vunpack.c.0.s8 %v4531
        %v4533 = vlaneseq
        %v4534 = vshrl.u32 %v4533, 7
        %v4535 = vsub.s32 %v4532, %v4534
        %v4536 = vrot.slane %v4522, %v4535
        %v4537 = vcombine.high %v4529, %v4529
        %v4538 = vcombine.high %v4536, %v4536
        %v4539 = vcombine.high %v4331, %v4331
        %v4541 = vunpack.c.l.s4 1983009808
        %v4542 = vunpack.c.0.s8 %v4541
        %v4543 = vlaneseq
        %v4544 = vshrl.u32 %v4543, 7
        %v4545 = vsub.s32 %v4542, %v4544
        %v4546 = vrot.slane %v4331, %v4545
        %v4548 = vunpack.c.l.s4 1983009808
        %v4549 = vunpack.c.0.s8 %v4548
        %v4550 = vlaneseq
        %v4551 = vshrl.u32 %v4550, 7
        %v4552 = vsub.s32 %v4549, %v4551
        %v4553 = vrot.slane %v4539, %v4552
        %v4554 = vcombine.high %v4546, %v4546
        %v4555 = vcombine.high %v4553, %v4553
        %v4556 = vcombine.high %v4332, %v4332
        %v4558 = vunpack.c.l.s4 1983009808
        %v4559 = vunpack.c.0.s8 %v4558
        %v4560 = vlaneseq
        %v4561 = vshrl.u32 %v4560, 7
        %v4562 = vsub.s32 %v4559, %v4561
        %v4563 = vrot.slane %v4332, %v4562
        %v4565 = vunpack.c.l.s4 1983009808
        %v4566 = vunpack.c.0.s8 %v4565
        %v4567 = vlaneseq
        %v4568 = vshrl.u32 %v4567, 7
        %v4569 = vsub.s32 %v4566, %v4568
        %v4570 = vrot.slane %v4556, %v4569
        %v4571 = vcombine.high %v4563, %v4563
        %v4572 = vcombine.high %v4570, %v4570
        %v4573 = vcombine.high %v4333, %v4333
        %v4575 = vunpack.c.l.s4 1983009808
        %v4576 = vunpack.c.0.s8 %v4575
        %v4577 = vlaneseq
        %v4578 = vshrl.u32 %v4577, 7
        %v4579 = vsub.s32 %v4576, %v4578
        %v4580 = vrot.slane %v4333, %v4579
        %v4582 = vunpack.c.l.s4 1983009808
        %v4583 = vunpack.c.0.s8 %v4582
        %v4584 = vlaneseq
        %v4585 = vshrl.u32 %v4584, 7
        %v4586 = vsub.s32 %v4583, %v4585
        %v4587 = vrot.slane %v4573, %v4586
        %v4588 = vcombine.high %v4580, %v4580
        %v4589 = vcombine.high %v4587, %v4587
        %v4590 = vcombine.high %v4334, %v4334
        %v4592 = vunpack.c.l.s4 1983009808
        %v4593 = vunpack.c.0.s8 %v4592
        %v4594 = vlaneseq
        %v4595 = vshrl.u32 %v4594, 7
        %v4596 = vsub.s32 %v4593, %v4595
        %v4597 = vrot.slane %v4334, %v4596
        %v4599 = vunpack.c.l.s4 1983009808
        %v4600 = vunpack.c.0.s8 %v4599
        %v4601 = vlaneseq
        %v4602 = vshrl.u32 %v4601, 7
        %v4603 = vsub.s32 %v4600, %v4602
        %v4604 = vrot.slane %v4590, %v4603
        %v4605 = vcombine.high %v4597, %v4597
        %v4606 = vcombine.high %v4604, %v4604
        %v4607 = vcombine.high %v4335, %v4335
        %v4609 = vunpack.c.l.s4 1983009808
        %v4610 = vunpack.c.0.s8 %v4609
        %v4611 = vlaneseq
        %v4612 = vshrl.u32 %v4611, 7
        %v4613 = vsub.s32 %v4610, %v4612
        %v4614 = vrot.slane %v4335, %v4613
        %v4616 = vunpack.c.l.s4 1983009808
        %v4617 = vunpack.c.0.s8 %v4616
        %v4618 = vlaneseq
        %v4619 = vshrl.u32 %v4618, 7
        %v4620 = vsub.s32 %v4617, %v4619
        %v4621 = vrot.slane %v4607, %v4620
        %v4622 = vcombine.high %v4614, %v4614
        %v4623 = vcombine.high %v4621, %v4621
        %v4688 = vrot.slane %v4359, 7
        %v4689 = vrot.slane %v4688, 2
        %v4690 = vrot.slane %v4367, 7
        %v4691 = vrot.slane %v4690, 2
        %v4692 = vrot.slane %v4366, 7
        %v4693 = vrot.slane %v4692, 2
        %v4694 = vrot.slane %v4368, 7
        %v4695 = vrot.slane %v4694, 2
        %v4696 = vrot.slane %v4376, 7
        %v4697 = vrot.slane %v4696, 2
        %v4698 = vrot.slane %v4384, 7
        %v4699 = vrot.slane %v4698, 2
        %v4700 = vrot.slane %v4383, 7
        %v4701 = vrot.slane %v4700, 2
        %v4702 = vrot.slane %v4385, 7
        %v4703 = vrot.slane %v4702, 2
        %v4704 = vrot.slane %v4393, 7
        %v4705 = vrot.slane %v4704, 2
        %v4706 = vrot.slane %v4401, 7
        %v4707 = vrot.slane %v4706, 2
        %v4708 = vrot.slane %v4400, 7
        %v4709 = vrot.slane %v4708, 2
        %v4710 = vrot.slane %v4402, 7
        %v4711 = vrot.slane %v4710, 2
        %v4712 = vrot.slane %v4410, 7
        %v4713 = vrot.slane %v4712, 2
        %v4714 = vrot.slane %v4418, 7
        %v4715 = vrot.slane %v4714, 2
        %v4716 = vrot.slane %v4417, 7
        %v4717 = vrot.slane %v4716, 2
        %v4718 = vrot.slane %v4419, 7
        %v4719 = vrot.slane %v4718, 2
        %v4720 = vrot.slane %v4427, 7
        %v4721 = vrot.slane %v4720, 2
        %v4722 = vrot.slane %v4435, 7
        %v4723 = vrot.slane %v4722, 2
        %v4724 = vrot.slane %v4434, 7
        %v4725 = vrot.slane %v4724, 2
        %v4726 = vrot.slane %v4436, 7
        %v4727 = vrot.slane %v4726, 2
        %v4728 = vrot.slane %v4444, 7
        %v4729 = vrot.slane %v4728, 2
        %v4730 = vrot.slane %v4452, 7
        %v4731 = vrot.slane %v4730, 2
        %v4732 = vrot.slane %v4451, 7
        %v4733 = vrot.slane %v4732, 2
        %v4734 = vrot.slane %v4453, 7
        %v4735 = vrot.slane %v4734, 2
        %v4736 = vrot.slane %v4461, 7
        %v4737 = vrot.slane %v4736, 2
        %v4738 = vrot.slane %v4469, 7
        %v4739 = vrot.slane %v4738, 2
        %v4740 = vrot.slane %v4468, 7
        %v4741 = vrot.slane %v4740, 2
        %v4742 = vrot.slane %v4470, 7
        %v4743 = vrot.slane %v4742, 2
        %v4744 = vrot.slane %v4478, 7
        %v4745 = vrot.slane %v4744, 2
        %v4746 = vrot.slane %v4486, 7
        %v4747 = vrot.slane %v4746, 2
        %v4748 = vrot.slane %v4485, 7
        %v4749 = vrot.slane %v4748, 2
        %v4750 = vrot.slane %v4487, 7
        %v4751 = vrot.slane %v4750, 2
        %v4752 = vrot.slane %v4495, 7
        %v4753 = vrot.slane %v4752, 2
        %v4754 = vrot.slane %v4503, 7
        %v4755 = vrot.slane %v4754, 2
        %v4756 = vrot.slane %v4502, 7
        %v4757 = vrot.slane %v4756, 2
        %v4758 = vrot.slane %v4504, 7
        %v4759 = vrot.slane %v4758, 2
        %v4760 = vrot.slane %v4512, 7
        %v4761 = vrot.slane %v4760, 2
        %v4762 = vrot.slane %v4520, 7
        %v4763 = vrot.slane %v4762, 2
        %v4764 = vrot.slane %v4519, 7
        %v4765 = vrot.slane %v4764, 2
        %v4766 = vrot.slane %v4521, 7
        %v4767 = vrot.slane %v4766, 2
        %v4768 = vrot.slane %v4529, 7
        %v4769 = vrot.slane %v4768, 2
        %v4770 = vrot.slane %v4537, 7
        %v4771 = vrot.slane %v4770, 2
        %v4772 = vrot.slane %v4536, 7
        %v4773 = vrot.slane %v4772, 2
        %v4774 = vrot.slane %v4538, 7
        %v4775 = vrot.slane %v4774, 2
        %v4776 = vrot.slane %v4546, 7
        %v4777 = vrot.slane %v4776, 2
        %v4778 = vrot.slane %v4554, 7
        %v4779 = vrot.slane %v4778, 2
        %v4780 = vrot.slane %v4553, 7
        %v4781 = vrot.slane %v4780, 2
        %v4782 = vrot.slane %v4555, 7
        %v4783 = vrot.slane %v4782, 2
        %v4784 = vrot.slane %v4563, 7
        %v4785 = vrot.slane %v4784, 2
        %v4786 = vrot.slane %v4571, 7
        %v4787 = vrot.slane %v4786, 2
        %v4788 = vrot.slane %v4570, 7
        %v4789 = vrot.slane %v4788, 2
        %v4790 = vrot.slane %v4572, 7
        %v4791 = vrot.slane %v4790, 2
        %v4792 = vrot.slane %v4580, 7
        %v4793 = vrot.slane %v4792, 2
        %v4794 = vrot.slane %v4588, 7
        %v4795 = vrot.slane %v4794, 2
        %v4796 = vrot.slane %v4587, 7
        %v4797 = vrot.slane %v4796, 2
        %v4798 = vrot.slane %v4589, 7
        %v4799 = vrot.slane %v4798, 2
        %v4800 = vrot.slane %v4597, 7
        %v4801 = vrot.slane %v4800, 2
        %v4802 = vrot.slane %v4605, 7
        %v4803 = vrot.slane %v4802, 2
        %v4804 = vrot.slane %v4604, 7
        %v4805 = vrot.slane %v4804, 2
        %v4806 = vrot.slane %v4606, 7
        %v4807 = vrot.slane %v4806, 2
        %v4808 = vrot.slane %v4614, 7
        %v4809 = vrot.slane %v4808, 2
        %v4810 = vrot.slane %v4622, 7
        %v4811 = vrot.slane %v4810, 2
        %v4812 = vrot.slane %v4621, 7
        %v4813 = vrot.slane %v4812, 2
        %v4814 = vrot.slane %v4623, 7
        %v4815 = vrot.slane %v4814, 2
        %v4880 = vmax.f32 %v4359, %v4689
        %v4881 = vmax.f32 %v4367, %v4691
        %v4882 = vmax.f32 %v4366, %v4693
        %v4883 = vmax.f32 %v4368, %v4695
        %v4884 = vmax.f32 %v4376, %v4697
        %v4885 = vmax.f32 %v4384, %v4699
        %v4886 = vmax.f32 %v4383, %v4701
        %v4887 = vmax.f32 %v4385, %v4703
        %v4888 = vmax.f32 %v4393, %v4705
        %v4889 = vmax.f32 %v4401, %v4707
        %v4890 = vmax.f32 %v4400, %v4709
        %v4891 = vmax.f32 %v4402, %v4711
        %v4892 = vmax.f32 %v4410, %v4713
        %v4893 = vmax.f32 %v4418, %v4715
        %v4894 = vmax.f32 %v4417, %v4717
        %v4895 = vmax.f32 %v4419, %v4719
        %v4896 = vmax.f32 %v4427, %v4721
        %v4897 = vmax.f32 %v4435, %v4723
        %v4898 = vmax.f32 %v4434, %v4725
        %v4899 = vmax.f32 %v4436, %v4727
        %v4900 = vmax.f32 %v4444, %v4729
        %v4901 = vmax.f32 %v4452, %v4731
        %v4902 = vmax.f32 %v4451, %v4733
        %v4903 = vmax.f32 %v4453, %v4735
        %v4904 = vmax.f32 %v4461, %v4737
        %v4905 = vmax.f32 %v4469, %v4739
        %v4906 = vmax.f32 %v4468, %v4741
        %v4907 = vmax.f32 %v4470, %v4743
        %v4908 = vmax.f32 %v4478, %v4745
        %v4909 = vmax.f32 %v4486, %v4747
        %v4910 = vmax.f32 %v4485, %v4749
        %v4911 = vmax.f32 %v4487, %v4751
        %v4912 = vmax.f32 %v4495, %v4753
        %v4913 = vmax.f32 %v4503, %v4755
        %v4914 = vmax.f32 %v4502, %v4757
        %v4915 = vmax.f32 %v4504, %v4759
        %v4916 = vmax.f32 %v4512, %v4761
        %v4917 = vmax.f32 %v4520, %v4763
        %v4918 = vmax.f32 %v4519, %v4765
        %v4919 = vmax.f32 %v4521, %v4767
        %v4920 = vmax.f32 %v4529, %v4769
        %v4921 = vmax.f32 %v4537, %v4771
        %v4922 = vmax.f32 %v4536, %v4773
        %v4923 = vmax.f32 %v4538, %v4775
        %v4924 = vmax.f32 %v4546, %v4777
        %v4925 = vmax.f32 %v4554, %v4779
        %v4926 = vmax.f32 %v4553, %v4781
        %v4927 = vmax.f32 %v4555, %v4783
        %v4928 = vmax.f32 %v4563, %v4785
        %v4929 = vmax.f32 %v4571, %v4787
        %v4930 = vmax.f32 %v4570, %v4789
        %v4931 = vmax.f32 %v4572, %v4791
        %v4932 = vmax.f32 %v4580, %v4793
        %v4933 = vmax.f32 %v4588, %v4795
        %v4934 = vmax.f32 %v4587, %v4797
        %v4935 = vmax.f32 %v4589, %v4799
        %v4936 = vmax.f32 %v4597, %v4801
        %v4937 = vmax.f32 %v4605, %v4803
        %v4938 = vmax.f32 %v4604, %v4805
        %v4939 = vmax.f32 %v4606, %v4807
        %v4940 = vmax.f32 %v4614, %v4809
        %v4941 = vmax.f32 %v4622, %v4811
        %v4942 = vmax.f32 %v4621, %v4813
        %v4943 = vmax.f32 %v4623, %v4815
        %4944 = vst [vmem:[#allocation3] sm:$0xff] 0.0
        %4945 = vst [vmem:[#allocation3 + $0x8] sm:$0xff] 0.0
        %4946 = vst [vmem:[#allocation3 + $0x10] sm:$0xff] 0.0
        %s4947 = scalar_lea.vmem [#allocation3], 216
        %4948 = vst [vmem:[%s4947] sm:$0xff] 0.0
        %4949 = vst [vmem:[%s4947 + $0x8] sm:$0xff] 0.0
        %4950 = vst [vmem:[%s4947 + $0x10] sm:$0xff] 0.0
        %s4951 = scalar_lea.vmem [#allocation3], 24
        %4952 = vst [vmem:[%s4951] sm:$0xff] 0.0
        %4953 = vst [vmem:[%s4951 + $0x18] sm:$0xff] 0.0
        %4954 = vst [vmem:[%s4951 + $0x30] sm:$0xff] 0.0
        %4955 = vst [vmem:[%s4951 + $0x48] sm:$0xff] 0.0
        %4956 = vst [vmem:[%s4951 + $0x60] sm:$0xff] 0.0
        %4957 = vst [vmem:[%s4951 + $0x78] sm:$0xff] 0.0
        %4958 = vst [vmem:[%s4951 + $0x90] sm:$0xff] 0.0
        %4959 = vst [vmem:[%s4951 + $0xa8] sm:$0xff] 0.0
        %4960 = vst [vmem:[%s4951 + $0x10] sm:$0xff] 0.0
        %4961 = vst [vmem:[%s4951 + $0x28] sm:$0xff] 0.0
        %4962 = vst [vmem:[%s4951 + $0x40] sm:$0xff] 0.0
        %4963 = vst [vmem:[%s4951 + $0x58] sm:$0xff] 0.0
        %4964 = vst [vmem:[%s4951 + $0x70] sm:$0xff] 0.0
        %4965 = vst [vmem:[%s4951 + $0x88] sm:$0xff] 0.0
        %4966 = vst [vmem:[%s4951 + $0xa0] sm:$0xff] 0.0
        %4967 = vst [vmem:[%s4951 + $0xb8] sm:$0xff] 0.0
        %v5032 = vlaneseq
        %v5033 = vshrl.u32 %v5032, 7
        %v5034 = vsub.s32 0, %v5033
        %v5035 = vrot.slane %v4880, %v5034
        %v5036 = vlaneseq
        %v5037 = vshrl.u32 %v5036, 7
        %v5038 = vsub.s32 0, %v5037
        %v5039 = vrot.slane %v4881, %v5038
        %v5040 = vlaneseq
        %v5041 = vshrl.u32 %v5040, 7
        %v5042 = vsub.s32 0, %v5041
        %v5043 = vrot.slane %v4882, %v5042
        %v5044 = vlaneseq
        %v5045 = vshrl.u32 %v5044, 7
        %v5046 = vsub.s32 0, %v5045
        %v5047 = vrot.slane %v4883, %v5046
        %v5048 = vlaneseq
        %v5049 = vshrl.u32 %v5048, 7
        %v5050 = vsub.s32 0, %v5049
        %v5051 = vrot.slane %v4884, %v5050
        %v5052 = vlaneseq
        %v5053 = vshrl.u32 %v5052, 7
        %v5054 = vsub.s32 0, %v5053
        %v5055 = vrot.slane %v4885, %v5054
        %v5056 = vlaneseq
        %v5057 = vshrl.u32 %v5056, 7
        %v5058 = vsub.s32 0, %v5057
        %v5059 = vrot.slane %v4886, %v5058
        %v5060 = vlaneseq
        %v5061 = vshrl.u32 %v5060, 7
        %v5062 = vsub.s32 0, %v5061
        %v5063 = vrot.slane %v4887, %v5062
        %v5064 = vlaneseq
        %v5065 = vshrl.u32 %v5064, 7
        %v5066 = vsub.s32 0, %v5065
        %v5067 = vrot.slane %v4888, %v5066
        %v5068 = vlaneseq
        %v5069 = vshrl.u32 %v5068, 7
        %v5070 = vsub.s32 0, %v5069
        %v5071 = vrot.slane %v4889, %v5070
        %v5072 = vlaneseq
        %v5073 = vshrl.u32 %v5072, 7
        %v5074 = vsub.s32 0, %v5073
        %v5075 = vrot.slane %v4890, %v5074
        %v5076 = vlaneseq
        %v5077 = vshrl.u32 %v5076, 7
        %v5078 = vsub.s32 0, %v5077
        %v5079 = vrot.slane %v4891, %v5078
        %v5080 = vlaneseq
        %v5081 = vshrl.u32 %v5080, 7
        %v5082 = vsub.s32 0, %v5081
        %v5083 = vrot.slane %v4892, %v5082
        %v5084 = vlaneseq
        %v5085 = vshrl.u32 %v5084, 7
        %v5086 = vsub.s32 0, %v5085
        %v5087 = vrot.slane %v4893, %v5086
        %v5088 = vlaneseq
        %v5089 = vshrl.u32 %v5088, 7
        %v5090 = vsub.s32 0, %v5089
        %v5091 = vrot.slane %v4894, %v5090
        %v5092 = vlaneseq
        %v5093 = vshrl.u32 %v5092, 7
        %v5094 = vsub.s32 0, %v5093
        %v5095 = vrot.slane %v4895, %v5094
        %v5096 = vlaneseq
        %v5097 = vshrl.u32 %v5096, 7
        %v5098 = vsub.s32 0, %v5097
        %v5099 = vrot.slane %v4896, %v5098
        %v5100 = vlaneseq
        %v5101 = vshrl.u32 %v5100, 7
        %v5102 = vsub.s32 0, %v5101
        %v5103 = vrot.slane %v4897, %v5102
        %v5104 = vlaneseq
        %v5105 = vshrl.u32 %v5104, 7
        %v5106 = vsub.s32 0, %v5105
        %v5107 = vrot.slane %v4898, %v5106
        %v5108 = vlaneseq
        %v5109 = vshrl.u32 %v5108, 7
        %v5110 = vsub.s32 0, %v5109
        %v5111 = vrot.slane %v4899, %v5110
        %v5112 = vlaneseq
        %v5113 = vshrl.u32 %v5112, 7
        %v5114 = vsub.s32 0, %v5113
        %v5115 = vrot.slane %v4900, %v5114
        %v5116 = vlaneseq
        %v5117 = vshrl.u32 %v5116, 7
        %v5118 = vsub.s32 0, %v5117
        %v5119 = vrot.slane %v4901, %v5118
        %v5120 = vlaneseq
        %v5121 = vshrl.u32 %v5120, 7
        %v5122 = vsub.s32 0, %v5121
        %v5123 = vrot.slane %v4902, %v5122
        %v5124 = vlaneseq
        %v5125 = vshrl.u32 %v5124, 7
        %v5126 = vsub.s32 0, %v5125
        %v5127 = vrot.slane %v4903, %v5126
        %v5128 = vlaneseq
        %v5129 = vshrl.u32 %v5128, 7
        %v5130 = vsub.s32 0, %v5129
        %v5131 = vrot.slane %v4904, %v5130
        %v5132 = vlaneseq
        %v5133 = vshrl.u32 %v5132, 7
        %v5134 = vsub.s32 0, %v5133
        %v5135 = vrot.slane %v4905, %v5134
        %v5136 = vlaneseq
        %v5137 = vshrl.u32 %v5136, 7
        %v5138 = vsub.s32 0, %v5137
        %v5139 = vrot.slane %v4906, %v5138
        %v5140 = vlaneseq
        %v5141 = vshrl.u32 %v5140, 7
        %v5142 = vsub.s32 0, %v5141
        %v5143 = vrot.slane %v4907, %v5142
        %v5144 = vlaneseq
        %v5145 = vshrl.u32 %v5144, 7
        %v5146 = vsub.s32 0, %v5145
        %v5147 = vrot.slane %v4908, %v5146
        %v5148 = vlaneseq
        %v5149 = vshrl.u32 %v5148, 7
        %v5150 = vsub.s32 0, %v5149
        %v5151 = vrot.slane %v4909, %v5150
        %v5152 = vlaneseq
        %v5153 = vshrl.u32 %v5152, 7
        %v5154 = vsub.s32 0, %v5153
        %v5155 = vrot.slane %v4910, %v5154
        %v5156 = vlaneseq
        %v5157 = vshrl.u32 %v5156, 7
        %v5158 = vsub.s32 0, %v5157
        %v5159 = vrot.slane %v4911, %v5158
        %v5160 = vlaneseq
        %v5161 = vshrl.u32 %v5160, 7
        %v5162 = vsub.s32 0, %v5161
        %v5163 = vrot.slane %v4912, %v5162
        %v5164 = vlaneseq
        %v5165 = vshrl.u32 %v5164, 7
        %v5166 = vsub.s32 0, %v5165
        %v5167 = vrot.slane %v4913, %v5166
        %v5168 = vlaneseq
        %v5169 = vshrl.u32 %v5168, 7
        %v5170 = vsub.s32 0, %v5169
        %v5171 = vrot.slane %v4914, %v5170
        %v5172 = vlaneseq
        %v5173 = vshrl.u32 %v5172, 7
        %v5174 = vsub.s32 0, %v5173
        %v5175 = vrot.slane %v4915, %v5174
        %v5176 = vlaneseq
        %v5177 = vshrl.u32 %v5176, 7
        %v5178 = vsub.s32 0, %v5177
        %v5179 = vrot.slane %v4916, %v5178
        %v5180 = vlaneseq
        %v5181 = vshrl.u32 %v5180, 7
        %v5182 = vsub.s32 0, %v5181
        %v5183 = vrot.slane %v4917, %v5182
        %v5184 = vlaneseq
        %v5185 = vshrl.u32 %v5184, 7
        %v5186 = vsub.s32 0, %v5185
        %v5187 = vrot.slane %v4918, %v5186
        %v5188 = vlaneseq
        %v5189 = vshrl.u32 %v5188, 7
        %v5190 = vsub.s32 0, %v5189
        %v5191 = vrot.slane %v4919, %v5190
        %v5192 = vlaneseq
        %v5193 = vshrl.u32 %v5192, 7
        %v5194 = vsub.s32 0, %v5193
        %v5195 = vrot.slane %v4920, %v5194
        %v5196 = vlaneseq
        %v5197 = vshrl.u32 %v5196, 7
        %v5198 = vsub.s32 0, %v5197
        %v5199 = vrot.slane %v4921, %v5198
        %v5200 = vlaneseq
        %v5201 = vshrl.u32 %v5200, 7
        %v5202 = vsub.s32 0, %v5201
        %v5203 = vrot.slane %v4922, %v5202
        %v5204 = vlaneseq
        %v5205 = vshrl.u32 %v5204, 7
        %v5206 = vsub.s32 0, %v5205
        %v5207 = vrot.slane %v4923, %v5206
        %v5208 = vlaneseq
        %v5209 = vshrl.u32 %v5208, 7
        %v5210 = vsub.s32 0, %v5209
        %v5211 = vrot.slane %v4924, %v5210
        %v5212 = vlaneseq
        %v5213 = vshrl.u32 %v5212, 7
        %v5214 = vsub.s32 0, %v5213
        %v5215 = vrot.slane %v4925, %v5214
        %v5216 = vlaneseq
        %v5217 = vshrl.u32 %v5216, 7
        %v5218 = vsub.s32 0, %v5217
        %v5219 = vrot.slane %v4926, %v5218
        %v5220 = vlaneseq
        %v5221 = vshrl.u32 %v5220, 7
        %v5222 = vsub.s32 0, %v5221
        %v5223 = vrot.slane %v4927, %v5222
        %v5224 = vlaneseq
        %v5225 = vshrl.u32 %v5224, 7
        %v5226 = vsub.s32 0, %v5225
        %v5227 = vrot.slane %v4928, %v5226
        %v5228 = vlaneseq
        %v5229 = vshrl.u32 %v5228, 7
        %v5230 = vsub.s32 0, %v5229
        %v5231 = vrot.slane %v4929, %v5230
        %v5232 = vlaneseq
        %v5233 = vshrl.u32 %v5232, 7
        %v5234 = vsub.s32 0, %v5233
        %v5235 = vrot.slane %v4930, %v5234
        %v5236 = vlaneseq
        %v5237 = vshrl.u32 %v5236, 7
        %v5238 = vsub.s32 0, %v5237
        %v5239 = vrot.slane %v4931, %v5238
        %v5240 = vlaneseq
        %v5241 = vshrl.u32 %v5240, 7
        %v5242 = vsub.s32 0, %v5241
        %v5243 = vrot.slane %v4932, %v5242
        %v5244 = vlaneseq
        %v5245 = vshrl.u32 %v5244, 7
        %v5246 = vsub.s32 0, %v5245
        %v5247 = vrot.slane %v4933, %v5246
        %v5248 = vlaneseq
        %v5249 = vshrl.u32 %v5248, 7
        %v5250 = vsub.s32 0, %v5249
        %v5251 = vrot.slane %v4934, %v5250
        %v5252 = vlaneseq
        %v5253 = vshrl.u32 %v5252, 7
        %v5254 = vsub.s32 0, %v5253
        %v5255 = vrot.slane %v4935, %v5254
        %v5256 = vlaneseq
        %v5257 = vshrl.u32 %v5256, 7
        %v5258 = vsub.s32 0, %v5257
        %v5259 = vrot.slane %v4936, %v5258
        %v5260 = vlaneseq
        %v5261 = vshrl.u32 %v5260, 7
        %v5262 = vsub.s32 0, %v5261
        %v5263 = vrot.slane %v4937, %v5262
        %v5264 = vlaneseq
        %v5265 = vshrl.u32 %v5264, 7
        %v5266 = vsub.s32 0, %v5265
        %v5267 = vrot.slane %v4938, %v5266
        %v5268 = vlaneseq
        %v5269 = vshrl.u32 %v5268, 7
        %v5270 = vsub.s32 0, %v5269
        %v5271 = vrot.slane %v4939, %v5270
        %v5272 = vlaneseq
        %v5273 = vshrl.u32 %v5272, 7
        %v5274 = vsub.s32 0, %v5273
        %v5275 = vrot.slane %v4940, %v5274
        %v5276 = vlaneseq
        %v5277 = vshrl.u32 %v5276, 7
        %v5278 = vsub.s32 0, %v5277
        %v5279 = vrot.slane %v4941, %v5278
        %v5280 = vlaneseq
        %v5281 = vshrl.u32 %v5280, 7
        %v5282 = vsub.s32 0, %v5281
        %v5283 = vrot.slane %v4942, %v5282
        %v5284 = vlaneseq
        %v5285 = vshrl.u32 %v5284, 7
        %v5286 = vsub.s32 0, %v5285
        %v5287 = vrot.slane %v4943, %v5286
        %vm5288 = vcmask 1041409
        %v5289 = vsel %vm5288, %v5039, %v5035
        %vm5290 = vcmask 1042434
        %v5291 = vsel %vm5290, %v5043, %v5289
        %vm5292 = vcmask 1043459
        %v5293 = vsel %vm5292, %v5047, %v5291
        %vm5294 = vcmask 1044484
        %v5295 = vsel %vm5294, %v5051, %v5293
        %vm5296 = vcmask 1045509
        %v5297 = vsel %vm5296, %v5055, %v5295
        %vm5298 = vcmask 1046534
        %v5299 = vsel %vm5298, %v5059, %v5297
        %vm5300 = vcmask 1047559
        %v5301 = vsel %vm5300, %v5063, %v5299
        %v5302 = vsel %vm5288, %v5071, %v5067
        %v5303 = vsel %vm5290, %v5075, %v5302
        %v5304 = vsel %vm5292, %v5079, %v5303
        %v5305 = vsel %vm5294, %v5083, %v5304
        %v5306 = vsel %vm5296, %v5087, %v5305
        %v5307 = vsel %vm5298, %v5091, %v5306
        %v5308 = vsel %vm5300, %v5095, %v5307
        %v5309 = vsel %vm5288, %v5103, %v5099
        %v5310 = vsel %vm5290, %v5107, %v5309
        %v5311 = vsel %vm5292, %v5111, %v5310
        %v5312 = vsel %vm5294, %v5115, %v5311
        %v5313 = vsel %vm5296, %v5119, %v5312
        %v5314 = vsel %vm5298, %v5123, %v5313
        %v5315 = vsel %vm5300, %v5127, %v5314
        %v5316 = vsel %vm5288, %v5135, %v5131
        %v5317 = vsel %vm5290, %v5139, %v5316
        %v5318 = vsel %vm5292, %v5143, %v5317
        %v5319 = vsel %vm5294, %v5147, %v5318
        %v5320 = vsel %vm5296, %v5151, %v5319
        %v5321 = vsel %vm5298, %v5155, %v5320
        %v5322 = vsel %vm5300, %v5159, %v5321
        %v5323 = vsel %vm5288, %v5167, %v5163
        %v5324 = vsel %vm5290, %v5171, %v5323
        %v5325 = vsel %vm5292, %v5175, %v5324
        %v5326 = vsel %vm5294, %v5179, %v5325
        %v5327 = vsel %vm5296, %v5183, %v5326
        %v5328 = vsel %vm5298, %v5187, %v5327
        %v5329 = vsel %vm5300, %v5191, %v5328
        %v5330 = vsel %vm5288, %v5199, %v5195
        %v5331 = vsel %vm5290, %v5203, %v5330
        %v5332 = vsel %vm5292, %v5207, %v5331
        %v5333 = vsel %vm5294, %v5211, %v5332
        %v5334 = vsel %vm5296, %v5215, %v5333
        %v5335 = vsel %vm5298, %v5219, %v5334
        %v5336 = vsel %vm5300, %v5223, %v5335
        %v5337 = vsel %vm5288, %v5231, %v5227
        %v5338 = vsel %vm5290, %v5235, %v5337
        %v5339 = vsel %vm5292, %v5239, %v5338
        %v5340 = vsel %vm5294, %v5243, %v5339
        %v5341 = vsel %vm5296, %v5247, %v5340
        %v5342 = vsel %vm5298, %v5251, %v5341
        %v5343 = vsel %vm5300, %v5255, %v5342
        %v5344 = vsel %vm5288, %v5263, %v5259
        %v5345 = vsel %vm5290, %v5267, %v5344
        %v5346 = vsel %vm5292, %v5271, %v5345
        %v5347 = vsel %vm5294, %v5275, %v5346
        %v5348 = vsel %vm5296, %v5279, %v5347
        %v5349 = vsel %vm5298, %v5283, %v5348
        %v5350 = vsel %vm5300, %v5287, %v5349
        %5359 = vst [vmem:[%s4951 + $0x8] sm:$0xff] %v5301
        %5360 = vst [vmem:[%s4951 + $0x20] sm:$0xff] %v5308
        %5361 = vst [vmem:[%s4951 + $0x38] sm:$0xff] %v5315
        %5362 = vst [vmem:[%s4951 + $0x50] sm:$0xff] %v5322
        %5363 = vst [vmem:[%s4951 + $0x68] sm:$0xff] %v5329
        %5364 = vst [vmem:[%s4951 + $0x80] sm:$0xff] %v5336
        %5365 = vst [vmem:[%s4951 + $0x98] sm:$0xff] %v5343
        %5366 = vst [vmem:[%s4951 + $0xb0] sm:$0xff] %v5350
        %v5367 = vld [vmem:[#allocation3] sm:$0xff]
        %v5368 = vld [vmem:[#allocation3 + $0x8] sm:$0xff]
        %v5369 = vld [vmem:[#allocation3 + $0x10] sm:$0xff]
        %v5370 = vld [vmem:[#allocation3 + $0x18] sm:$0xff]
        %v5371 = vld [vmem:[#allocation3 + $0x20] sm:$0xff]
        %v5372 = vld [vmem:[#allocation3 + $0x28] sm:$0xff]
        %v5373 = vld [vmem:[#allocation3 + $0x30] sm:$0xff]
        %v5374 = vld [vmem:[#allocation3 + $0x38] sm:$0xff]
        %v5375 = vld [vmem:[#allocation3 + $0x40] sm:$0xff]
        %v5376 = vld [vmem:[#allocation3 + $0x48] sm:$0xff]
        %v5377 = vld [vmem:[#allocation3 + $0x50] sm:$0xff]
        %v5378 = vld [vmem:[#allocation3 + $0x58] sm:$0xff]
        %v5379 = vld [vmem:[#allocation3 + $0x60] sm:$0xff]
        %v5380 = vld [vmem:[#allocation3 + $0x68] sm:$0xff]
        %v5381 = vld [vmem:[#allocation3 + $0x70] sm:$0xff]
        %v5382 = vld [vmem:[#allocation3 + $0x78] sm:$0xff]
        %v5383 = vld [vmem:[#allocation3 + $0x80] sm:$0xff]
        %v5384 = vld [vmem:[#allocation3 + $0x88] sm:$0xff]
        %v5385 = vld [vmem:[#allocation3 + $0x90] sm:$0xff]
        %v5386 = vld [vmem:[#allocation3 + $0x98] sm:$0xff]
        %v5387 = vld [vmem:[#allocation3 + $0xa0] sm:$0xff]
        %v5388 = vld [vmem:[#allocation3 + $0xa8] sm:$0xff]
        %v5389 = vld [vmem:[#allocation3 + $0xb0] sm:$0xff]
        %v5390 = vld [vmem:[#allocation3 + $0xb8] sm:$0xff]
        %v5391 = vrot.slane %v5367, 7
        %v5392 = vrot.slane %v5368, 7
        %v5393 = vrot.slane %v5370, 7
        %v5394 = vrot.slane %v5371, 7
        %v5395 = vrot.slane %v5373, 7
        %v5396 = vrot.slane %v5374, 7
        %v5397 = vrot.slane %v5376, 7
        %v5398 = vrot.slane %v5377, 7
        %v5399 = vrot.slane %v5379, 7
        %v5400 = vrot.slane %v5380, 7
        %v5401 = vrot.slane %v5382, 7
        %v5402 = vrot.slane %v5383, 7
        %v5403 = vrot.slane %v5385, 7
        %v5404 = vrot.slane %v5386, 7
        %v5405 = vrot.slane %v5388, 7
        %v5406 = vrot.slane %v5389, 7
        %v5407 = vsel %vm528, %v5405, %v5406
        %v5408 = vsel %vm528, %v5403, %v5404
        %v5409 = vsel %vm528, %v5401, %v5402
        %v5410 = vsel %vm528, %v5399, %v5400
        %v5411 = vsel %vm528, %v5397, %v5398
        %v5412 = vsel %vm528, %v5395, %v5396
        %v5413 = vsel %vm528, %v5393, %v5394
        %v5414 = vsel %vm528, %v5391, %v5392
        %v5415 = vld [vmem:[#allocation5] sm:$0xff]
        %v5416 = vld [vmem:[#allocation5 + $0x8] sm:$0xff]
        %v5417 = vld [vmem:[#allocation5 + $0x10] sm:$0xff]
        %v5418 = vld [vmem:[#allocation5 + $0x18] sm:$0xff]
        %v5419 = vld [vmem:[#allocation5 + $0x20] sm:$0xff]
        %v5420 = vld [vmem:[#allocation5 + $0x28] sm:$0xff]
        %v5421 = vld [vmem:[#allocation5 + $0x30] sm:$0xff]
        %v5422 = vld [vmem:[#allocation5 + $0x38] sm:$0xff]
        %v5423 = vld [vmem:[#allocation5 + $0x40] sm:$0xff]
        %v5424 = vld [vmem:[#allocation5 + $0x48] sm:$0xff]
        %v5425 = vld [vmem:[#allocation5 + $0x50] sm:$0xff]
        %v5426 = vld [vmem:[#allocation5 + $0x58] sm:$0xff]
        %v5427 = vld [vmem:[#allocation5 + $0x60] sm:$0xff]
        %v5428 = vld [vmem:[#allocation5 + $0x68] sm:$0xff]
        %v5429 = vld [vmem:[#allocation5 + $0x70] sm:$0xff]
        %v5430 = vld [vmem:[#allocation5 + $0x78] sm:$0xff]
        %s5431 = scalar_lea.vmem [#allocation5], 128
        %v5432 = vld [vmem:[%s5431] sm:$0xff]
        %v5433 = vld [vmem:[%s5431 + $0x8] sm:$0xff]
        %v5434 = vld [vmem:[%s5431 + $0x10] sm:$0xff]
        %v5435 = vld [vmem:[%s5431 + $0x18] sm:$0xff]
        %v5436 = vld [vmem:[%s5431 + $0x20] sm:$0xff]
        %v5437 = vld [vmem:[%s5431 + $0x28] sm:$0xff]
        %v5438 = vld [vmem:[%s5431 + $0x30] sm:$0xff]
        %v5439 = vld [vmem:[%s5431 + $0x38] sm:$0xff]
        %v5440 = vld [vmem:[%s5431 + $0x40] sm:$0xff]
        %v5441 = vld [vmem:[%s5431 + $0x48] sm:$0xff]
        %v5442 = vld [vmem:[%s5431 + $0x50] sm:$0xff]
        %v5443 = vld [vmem:[%s5431 + $0x58] sm:$0xff]
        %v5444 = vld [vmem:[%s5431 + $0x60] sm:$0xff]
        %v5445 = vld [vmem:[%s5431 + $0x68] sm:$0xff]
        %v5446 = vld [vmem:[%s5431 + $0x70] sm:$0xff]
        %v5447 = vld [vmem:[%s5431 + $0x78] sm:$0xff]
        %5448 = vmatprep.subr.mxu0 0.0
        %5449 = vmatpush1.msra.mxu0 %v5432
        %5450 = vmatprep.subr.mxu0 0.0
        %5451 = vmatpush1.msra.mxu0 %v5433
        %5452 = vmatprep.subr.mxu0 0.0
        %5453 = vmatpush1.msra.mxu0 %v5434
        %5454 = vmatprep.subr.mxu0 0.0
        %5455 = vmatpush1.msra.mxu0 %v5435
        %5456 = vmatprep.subr.mxu0 0.0
        %5457 = vmatpush1.msra.mxu0 %v5436
        %5458 = vmatprep.subr.mxu0 0.0
        %5459 = vmatpush1.msra.mxu0 %v5437
        %5460 = vmatprep.subr.mxu0 0.0
        %5461 = vmatpush1.msra.mxu0 %v5438
        %5462 = vmatprep.subr.mxu0 0.0
        %5463 = vmatpush1.msra.mxu0 %v5439
        %5464 = vmatprep.subr.mxu0 0.0
        %5465 = vmatpush1.msra.mxu0 %v5440
        %5466 = vmatprep.subr.mxu0 0.0
        %5467 = vmatpush1.msra.mxu0 %v5441
        %5468 = vmatprep.subr.mxu0 0.0
        %5469 = vmatpush1.msra.mxu0 %v5442
        %5470 = vmatprep.subr.mxu0 0.0
        %5471 = vmatpush1.msra.mxu0 %v5443
        %5472 = vmatprep.subr.mxu0 0.0
        %5473 = vmatpush1.msra.mxu0 %v5444
        %5474 = vmatprep.subr.mxu0 0.0
        %5475 = vmatpush1.msra.mxu0 %v5445
        %5476 = vmatprep.subr.mxu0 0.0
        %5477 = vmatpush1.msra.mxu0 %v5446
        %5478 = vmatprep.subr.mxu0 0.0
        %5479 = vmatpush1.msra.mxu0 %v5447
        %5480 = vmatprep.subr.mxu0 0.0
        %5481 = vmatpush1.msra.mxu0 0.0
        %5482 = vmatprep.subr.mxu0 0.0
        %5483 = vmatpush1.msra.mxu0 0.0
        %5484 = vmatprep.subr.mxu0 0.0
        %5485 = vmatpush1.msra.mxu0 0.0
        %5486 = vmatprep.subr.mxu0 0.0
        %5487 = vmatpush1.msra.mxu0 0.0
        %5488 = vmatprep.subr.mxu0 0.0
        %5489 = vmatpush1.msra.mxu0 0.0
        %5490 = vmatprep.subr.mxu0 0.0
        %5491 = vmatpush1.msra.mxu0 0.0
        %5492 = vmatprep.subr.mxu0 0.0
        %5493 = vmatpush1.msra.mxu0 0.0
        %5494 = vmatprep.subr.mxu0 0.0
        %5495 = vmatpush1.msra.mxu0 0.0
        %5496 = vmatprep.subr.mxu0 0.0
        %5497 = vmatpush1.msra.mxu0 0.0
        %5498 = vmatprep.subr.mxu0 0.0
        %5499 = vmatpush1.msra.mxu0 0.0
        %5500 = vmatprep.subr.mxu0 0.0
        %5501 = vmatpush1.msra.mxu0 0.0
        %5502 = vmatprep.subr.mxu0 0.0
        %5503 = vmatpush1.msra.mxu0 0.0
        %5504 = vmatprep.subr.mxu0 0.0
        %5505 = vmatpush1.msra.mxu0 0.0
        %5506 = vmatprep.subr.mxu0 0.0
        %5507 = vmatpush1.msra.mxu0 0.0
        %5508 = vmatprep.subr.mxu0 0.0
        %5509 = vmatpush1.msra.mxu0 0.0
        %5510 = vmatprep.subr.mxu0 0.0
        %5511 = vmatpush1.msra.mxu0 0.0
        %5512 = vmatprep.mubr.f32.mxu0 0.0
        %5513 = vmatmul.mubr.f32.gmra.mrb[0].mxu0 %v5368
        %v5514 = vpop.f32.mrb[0].mxu0
        %v5515 = vadd.f32 0.0, %v5514
        %v5516 = vpop.f32.mrb[0].mxu0
        %5517 = vmatprep.mubr.f32.mxu0 0.0
        %5518 = vmatmul.mubr.f32.gmra.mrb[0].mxu0 %v5371
        %v5519 = vpop.f32.mrb[0].mxu0
        %v5520 = vadd.f32 0.0, %v5519
        %v5521 = vpop.f32.mrb[0].mxu0
        %5522 = vmatprep.mubr.f32.mxu0 0.0
        %5523 = vmatmul.mubr.f32.gmra.mrb[0].mxu0 %v5374
        %v5524 = vpop.f32.mrb[0].mxu0
        %v5525 = vadd.f32 0.0, %v5524
        %v5526 = vpop.f32.mrb[0].mxu0
        %5527 = vmatprep.mubr.f32.mxu0 0.0
        %5528 = vmatmul.mubr.f32.gmra.mrb[0].mxu0 %v5377
        %v5529 = vpop.f32.mrb[0].mxu0
        %v5530 = vadd.f32 0.0, %v5529
        %v5531 = vpop.f32.mrb[0].mxu0
        %5532 = vmatprep.mubr.f32.mxu0 0.0
        %5533 = vmatmul.mubr.f32.gmra.mrb[0].mxu0 %v5380
        %v5534 = vpop.f32.mrb[0].mxu0
        %v5535 = vadd.f32 0.0, %v5534
        %v5536 = vpop.f32.mrb[0].mxu0
        %5537 = vmatprep.mubr.f32.mxu0 0.0
        %5538 = vmatmul.mubr.f32.gmra.mrb[0].mxu0 %v5383
        %v5539 = vpop.f32.mrb[0].mxu0
        %v5540 = vadd.f32 0.0, %v5539
        %v5541 = vpop.f32.mrb[0].mxu0
        %5542 = vmatprep.mubr.f32.mxu0 0.0
        %5543 = vmatmul.mubr.f32.gmra.mrb[0].mxu0 %v5386
        %v5544 = vpop.f32.mrb[0].mxu0
        %v5545 = vadd.f32 0.0, %v5544
        %v5546 = vpop.f32.mrb[0].mxu0
        %5547 = vmatprep.mubr.f32.mxu0 0.0
        %5548 = vmatmul.mubr.f32.gmra.mrb[0].mxu0 %v5389
        %v5549 = vpop.f32.mrb[0].mxu0
        %v5550 = vadd.f32 0.0, %v5549
        %v5551 = vpop.f32.mrb[0].mxu0
        %5552 = vdwg.mxu0
        %5553 = vmatprep.subr.mxu0 0.0
        %5554 = vmatpush1.msra.mxu0 %v5415
        %5555 = vmatprep.subr.mxu0 0.0
        %5556 = vmatpush1.msra.mxu0 %v5416
        %5557 = vmatprep.subr.mxu0 0.0
        %5558 = vmatpush1.msra.mxu0 %v5417
        %5559 = vmatprep.subr.mxu0 0.0
        %5560 = vmatpush1.msra.mxu0 %v5418
        %5561 = vmatprep.subr.mxu0 0.0
        %5562 = vmatpush1.msra.mxu0 %v5419
        %5563 = vmatprep.subr.mxu0 0.0
        %5564 = vmatpush1.msra.mxu0 %v5420
        %5565 = vmatprep.subr.mxu0 0.0
        %5566 = vmatpush1.msra.mxu0 %v5421
        %5567 = vmatprep.subr.mxu0 0.0
        %5568 = vmatpush1.msra.mxu0 %v5422
        %5569 = vmatprep.subr.mxu0 0.0
        %5570 = vmatpush1.msra.mxu0 %v5423
        %5571 = vmatprep.subr.mxu0 0.0
        %5572 = vmatpush1.msra.mxu0 %v5424
        %5573 = vmatprep.subr.mxu0 0.0
        %5574 = vmatpush1.msra.mxu0 %v5425
        %5575 = vmatprep.subr.mxu0 0.0
        %5576 = vmatpush1.msra.mxu0 %v5426
        %5577 = vmatprep.subr.mxu0 0.0
        %5578 = vmatpush1.msra.mxu0 %v5427
        %5579 = vmatprep.subr.mxu0 0.0
        %5580 = vmatpush1.msra.mxu0 %v5428
        %5581 = vmatprep.subr.mxu0 0.0
        %5582 = vmatpush1.msra.mxu0 %v5429
        %5583 = vmatprep.subr.mxu0 0.0
        %5584 = vmatpush1.msra.mxu0 %v5430
        %5585 = vmatprep.subr.mxu0 0.0
        %5586 = vmatpush1.msra.mxu0 0.0
        %5587 = vmatprep.subr.mxu0 0.0
        %5588 = vmatpush1.msra.mxu0 0.0
        %5589 = vmatprep.subr.mxu0 0.0
        %5590 = vmatpush1.msra.mxu0 0.0
        %5591 = vmatprep.subr.mxu0 0.0
        %5592 = vmatpush1.msra.mxu0 0.0
        %5593 = vmatprep.subr.mxu0 0.0
        %5594 = vmatpush1.msra.mxu0 0.0
        %5595 = vmatprep.subr.mxu0 0.0
        %5596 = vmatpush1.msra.mxu0 0.0
        %5597 = vmatprep.subr.mxu0 0.0
        %5598 = vmatpush1.msra.mxu0 0.0
        %5599 = vmatprep.subr.mxu0 0.0
        %5600 = vmatpush1.msra.mxu0 0.0
        %5601 = vmatprep.subr.mxu0 0.0
        %5602 = vmatpush1.msra.mxu0 0.0
        %5603 = vmatprep.subr.mxu0 0.0
        %5604 = vmatpush1.msra.mxu0 0.0
        %5605 = vmatprep.subr.mxu0 0.0
        %5606 = vmatpush1.msra.mxu0 0.0
        %5607 = vmatprep.subr.mxu0 0.0
        %5608 = vmatpush1.msra.mxu0 0.0
        %5609 = vmatprep.subr.mxu0 0.0
        %5610 = vmatpush1.msra.mxu0 0.0
        %5611 = vmatprep.subr.mxu0 0.0
        %5612 = vmatpush1.msra.mxu0 0.0
        %5613 = vmatprep.subr.mxu0 0.0
        %5614 = vmatpush1.msra.mxu0 0.0
        %5615 = vmatprep.subr.mxu0 0.0
        %5616 = vmatpush1.msra.mxu0 0.0
        %5617 = vmatprep.mubr.f32.mxu0 0.0
        %5618 = vmatmul.mubr.f32.gmra.mrb[0].mxu0 %v5414
        %v5619 = vpop.f32.mrb[0].mxu0
        %v5620 = vadd.f32 %v5515, %v5619
        %v5621 = vpop.f32.mrb[0].mxu0
        %5622 = vmatprep.mubr.f32.mxu0 0.0
        %5623 = vmatmul.mubr.f32.gmra.mrb[0].mxu0 %v5413
        %v5624 = vpop.f32.mrb[0].mxu0
        %v5625 = vadd.f32 %v5520, %v5624
        %v5626 = vpop.f32.mrb[0].mxu0
        %5627 = vmatprep.mubr.f32.mxu0 0.0
        %5628 = vmatmul.mubr.f32.gmra.mrb[0].mxu0 %v5412
        %v5629 = vpop.f32.mrb[0].mxu0
        %v5630 = vadd.f32 %v5525, %v5629
        %v5631 = vpop.f32.mrb[0].mxu0
        %5632 = vmatprep.mubr.f32.mxu0 0.0
        %5633 = vmatmul.mubr.f32.gmra.mrb[0].mxu0 %v5411
        %v5634 = vpop.f32.mrb[0].mxu0
        %v5635 = vadd.f32 %v5530, %v5634
        %v5636 = vpop.f32.mrb[0].mxu0
        %5637 = vmatprep.mubr.f32.mxu0 0.0
        %5638 = vmatmul.mubr.f32.gmra.mrb[0].mxu0 %v5410
        %v5639 = vpop.f32.mrb[0].mxu0
        %v5640 = vadd.f32 %v5535, %v5639
        %v5641 = vpop.f32.mrb[0].mxu0
        %5642 = vmatprep.mubr.f32.mxu0 0.0
        %5643 = vmatmul.mubr.f32.gmra.mrb[0].mxu0 %v5409
        %v5644 = vpop.f32.mrb[0].mxu0
        %v5645 = vadd.f32 %v5540, %v5644
        %v5646 = vpop.f32.mrb[0].mxu0
        %5647 = vmatprep.mubr.f32.mxu0 0.0
        %5648 = vmatmul.mubr.f32.gmra.mrb[0].mxu0 %v5408
        %v5649 = vpop.f32.mrb[0].mxu0
        %v5650 = vadd.f32 %v5545, %v5649
        %v5651 = vpop.f32.mrb[0].mxu0
        %5652 = vmatprep.mubr.f32.mxu0 0.0
        %5653 = vmatmul.mubr.f32.gmra.mrb[0].mxu0 %v5407
        %v5654 = vpop.f32.mrb[0].mxu0
        %v5655 = vadd.f32 %v5550, %v5654
        %v5656 = vpop.f32.mrb[0].mxu0
        %5657 = vdwg.mxu0
        %v5658 = vrot.slane %v5368, 1
        %v5659 = vrot.slane %v5369, 1
        %v5660 = vrot.slane %v5371, 1
        %v5661 = vrot.slane %v5372, 1
        %v5662 = vrot.slane %v5374, 1
        %v5663 = vrot.slane %v5375, 1
        %v5664 = vrot.slane %v5377, 1
        %v5665 = vrot.slane %v5378, 1
        %v5666 = vrot.slane %v5380, 1
        %v5667 = vrot.slane %v5381, 1
        %v5668 = vrot.slane %v5383, 1
        %v5669 = vrot.slane %v5384, 1
        %v5670 = vrot.slane %v5386, 1
        %v5671 = vrot.slane %v5387, 1
        %v5672 = vrot.slane %v5389, 1
        %v5673 = vrot.slane %v5390, 1
        %v5674 = vsel %vm1261, %v5672, %v5673
        %v5675 = vsel %vm1261, %v5670, %v5671
        %v5676 = vsel %vm1261, %v5668, %v5669
        %v5677 = vsel %vm1261, %v5666, %v5667
        %v5678 = vsel %vm1261, %v5664, %v5665
        %v5679 = vsel %vm1261, %v5662, %v5663
        %v5680 = vsel %vm1261, %v5660, %v5661
        %v5681 = vsel %vm1261, %v5658, %v5659
        %s5682 = scalar_lea.vmem [#allocation5], 256
        %v5683 = vld [vmem:[%s5682] sm:$0xff]
        %v5684 = vld [vmem:[%s5682 + $0x8] sm:$0xff]
        %v5685 = vld [vmem:[%s5682 + $0x10] sm:$0xff]
        %v5686 = vld [vmem:[%s5682 + $0x18] sm:$0xff]
        %v5687 = vld [vmem:[%s5682 + $0x20] sm:$0xff]
        %v5688 = vld [vmem:[%s5682 + $0x28] sm:$0xff]
        %v5689 = vld [vmem:[%s5682 + $0x30] sm:$0xff]
        %v5690 = vld [vmem:[%s5682 + $0x38] sm:$0xff]
        %v5691 = vld [vmem:[%s5682 + $0x40] sm:$0xff]
        %v5692 = vld [vmem:[%s5682 + $0x48] sm:$0xff]
        %v5693 = vld [vmem:[%s5682 + $0x50] sm:$0xff]
        %v5694 = vld [vmem:[%s5682 + $0x58] sm:$0xff]
        %v5695 = vld [vmem:[%s5682 + $0x60] sm:$0xff]
        %v5696 = vld [vmem:[%s5682 + $0x68] sm:$0xff]
        %v5697 = vld [vmem:[%s5682 + $0x70] sm:$0xff]
        %v5698 = vld [vmem:[%s5682 + $0x78] sm:$0xff]
        %5699 = vmatprep.subr.mxu0 0.0
        %5700 = vmatpush1.msra.mxu0 %v5683
        %5701 = vmatprep.subr.mxu0 0.0
        %5702 = vmatpush1.msra.mxu0 %v5684
        %5703 = vmatprep.subr.mxu0 0.0
        %5704 = vmatpush1.msra.mxu0 %v5685
        %5705 = vmatprep.subr.mxu0 0.0
        %5706 = vmatpush1.msra.mxu0 %v5686
        %5707 = vmatprep.subr.mxu0 0.0
        %5708 = vmatpush1.msra.mxu0 %v5687
        %5709 = vmatprep.subr.mxu0 0.0
        %5710 = vmatpush1.msra.mxu0 %v5688
        %5711 = vmatprep.subr.mxu0 0.0
        %5712 = vmatpush1.msra.mxu0 %v5689
        %5713 = vmatprep.subr.mxu0 0.0
        %5714 = vmatpush1.msra.mxu0 %v5690
        %5715 = vmatprep.subr.mxu0 0.0
        %5716 = vmatpush1.msra.mxu0 %v5691
        %5717 = vmatprep.subr.mxu0 0.0
        %5718 = vmatpush1.msra.mxu0 %v5692
        %5719 = vmatprep.subr.mxu0 0.0
        %5720 = vmatpush1.msra.mxu0 %v5693
        %5721 = vmatprep.subr.mxu0 0.0
        %5722 = vmatpush1.msra.mxu0 %v5694
        %5723 = vmatprep.subr.mxu0 0.0
        %5724 = vmatpush1.msra.mxu0 %v5695
        %5725 = vmatprep.subr.mxu0 0.0
        %5726 = vmatpush1.msra.mxu0 %v5696
        %5727 = vmatprep.subr.mxu0 0.0
        %5728 = vmatpush1.msra.mxu0 %v5697
        %5729 = vmatprep.subr.mxu0 0.0
        %5730 = vmatpush1.msra.mxu0 %v5698
        %5731 = vmatprep.subr.mxu0 0.0
        %5732 = vmatpush1.msra.mxu0 0.0
        %5733 = vmatprep.subr.mxu0 0.0
        %5734 = vmatpush1.msra.mxu0 0.0
        %5735 = vmatprep.subr.mxu0 0.0
        %5736 = vmatpush1.msra.mxu0 0.0
        %5737 = vmatprep.subr.mxu0 0.0
        %5738 = vmatpush1.msra.mxu0 0.0
        %5739 = vmatprep.subr.mxu0 0.0
        %5740 = vmatpush1.msra.mxu0 0.0
        %5741 = vmatprep.subr.mxu0 0.0
        %5742 = vmatpush1.msra.mxu0 0.0
        %5743 = vmatprep.subr.mxu0 0.0
        %5744 = vmatpush1.msra.mxu0 0.0
        %5745 = vmatprep.subr.mxu0 0.0
        %5746 = vmatpush1.msra.mxu0 0.0
        %5747 = vmatprep.subr.mxu0 0.0
        %5748 = vmatpush1.msra.mxu0 0.0
        %5749 = vmatprep.subr.mxu0 0.0
        %5750 = vmatpush1.msra.mxu0 0.0
        %5751 = vmatprep.subr.mxu0 0.0
        %5752 = vmatpush1.msra.mxu0 0.0
        %5753 = vmatprep.subr.mxu0 0.0
        %5754 = vmatpush1.msra.mxu0 0.0
        %5755 = vmatprep.subr.mxu0 0.0
        %5756 = vmatpush1.msra.mxu0 0.0
        %5757 = vmatprep.subr.mxu0 0.0
        %5758 = vmatpush1.msra.mxu0 0.0
        %5759 = vmatprep.subr.mxu0 0.0
        %5760 = vmatpush1.msra.mxu0 0.0
        %5761 = vmatprep.subr.mxu0 0.0
        %5762 = vmatpush1.msra.mxu0 0.0
        %5763 = vmatprep.mubr.f32.mxu0 0.0
        %5764 = vmatmul.mubr.f32.gmra.mrb[0].mxu0 %v5681
        %v5765 = vpop.f32.mrb[0].mxu0
        %v5766 = vadd.f32 0.0, %v5765
        %v5767 = vpop.f32.mrb[0].mxu0
        %5768 = vmatprep.mubr.f32.mxu0 0.0
        %5769 = vmatmul.mubr.f32.gmra.mrb[0].mxu0 %v5680
        %v5770 = vpop.f32.mrb[0].mxu0
        %v5771 = vadd.f32 0.0, %v5770
        %v5772 = vpop.f32.mrb[0].mxu0
        %5773 = vmatprep.mubr.f32.mxu0 0.0
        %5774 = vmatmul.mubr.f32.gmra.mrb[0].mxu0 %v5679
        %v5775 = vpop.f32.mrb[0].mxu0
        %v5776 = vadd.f32 0.0, %v5775
        %v5777 = vpop.f32.mrb[0].mxu0
        %5778 = vmatprep.mubr.f32.mxu0 0.0
        %5779 = vmatmul.mubr.f32.gmra.mrb[0].mxu0 %v5678
        %v5780 = vpop.f32.mrb[0].mxu0
        %v5781 = vadd.f32 0.0, %v5780
        %v5782 = vpop.f32.mrb[0].mxu0
        %5783 = vmatprep.mubr.f32.mxu0 0.0
        %5784 = vmatmul.mubr.f32.gmra.mrb[0].mxu0 %v5677
        %v5785 = vpop.f32.mrb[0].mxu0
        %v5786 = vadd.f32 0.0, %v5785
        %v5787 = vpop.f32.mrb[0].mxu0
        %5788 = vmatprep.mubr.f32.mxu0 0.0
        %5789 = vmatmul.mubr.f32.gmra.mrb[0].mxu0 %v5676
        %v5790 = vpop.f32.mrb[0].mxu0
        %v5791 = vadd.f32 0.0, %v5790
        %v5792 = vpop.f32.mrb[0].mxu0
        %5793 = vmatprep.mubr.f32.mxu0 0.0
        %5794 = vmatmul.mubr.f32.gmra.mrb[0].mxu0 %v5675
        %v5795 = vpop.f32.mrb[0].mxu0
        %v5796 = vadd.f32 0.0, %v5795
        %v5797 = vpop.f32.mrb[0].mxu0
        %5798 = vmatprep.mubr.f32.mxu0 0.0
        %5799 = vmatmul.mubr.f32.gmra.mrb[0].mxu0 %v5674
        %v5800 = vpop.f32.mrb[0].mxu0
        %v5801 = vadd.f32 0.0, %v5800
        %v5802 = vpop.f32.mrb[0].mxu0
        %5803 = vdwg.mxu0
        %v5804 = vadd.f32 %v5620, %v5766
        %v5805 = vadd.f32 %v5625, %v5771
        %v5806 = vadd.f32 %v5630, %v5776
        %v5807 = vadd.f32 %v5635, %v5781
        %v5808 = vadd.f32 %v5640, %v5786
        %v5809 = vadd.f32 %v5645, %v5791
        %v5810 = vadd.f32 %v5650, %v5796
        %v5811 = vadd.f32 %v5655, %v5801
        %v5812 = vld [vmem:[%s4951] sm:$0xff]
        %v5813 = vld [vmem:[%s4951 + $0x8] sm:$0xff]
        %v5814 = vld [vmem:[%s4951 + $0x10] sm:$0xff]
        %v5815 = vld [vmem:[%s4951 + $0x18] sm:$0xff]
        %v5816 = vld [vmem:[%s4951 + $0x20] sm:$0xff]
        %v5817 = vld [vmem:[%s4951 + $0x28] sm:$0xff]
        %v5818 = vld [vmem:[%s4951 + $0x30] sm:$0xff]
        %v5819 = vld [vmem:[%s4951 + $0x38] sm:$0xff]
        %v5820 = vld [vmem:[%s4951 + $0x40] sm:$0xff]
        %v5821 = vld [vmem:[%s4951 + $0x48] sm:$0xff]
        %v5822 = vld [vmem:[%s4951 + $0x50] sm:$0xff]
        %v5823 = vld [vmem:[%s4951 + $0x58] sm:$0xff]
        %v5824 = vld [vmem:[%s4951 + $0x60] sm:$0xff]
        %v5825 = vld [vmem:[%s4951 + $0x68] sm:$0xff]
        %v5826 = vld [vmem:[%s4951 + $0x70] sm:$0xff]
        %v5827 = vld [vmem:[%s4951 + $0x78] sm:$0xff]
        %v5828 = vld [vmem:[%s4951 + $0x80] sm:$0xff]
        %v5829 = vld [vmem:[%s4951 + $0x88] sm:$0xff]
        %v5830 = vld [vmem:[%s4951 + $0x90] sm:$0xff]
        %v5831 = vld [vmem:[%s4951 + $0x98] sm:$0xff]
        %v5832 = vld [vmem:[%s4951 + $0xa0] sm:$0xff]
        %v5833 = vld [vmem:[%s4951 + $0xa8] sm:$0xff]
        %v5834 = vld [vmem:[%s4951 + $0xb0] sm:$0xff]
        %v5835 = vld [vmem:[%s4951 + $0xb8] sm:$0xff]
        %v5836 = vrot.slane %v5812, 7
        %v5837 = vrot.slane %v5813, 7
        %v5838 = vrot.slane %v5815, 7
        %v5839 = vrot.slane %v5816, 7
        %v5840 = vrot.slane %v5818, 7
        %v5841 = vrot.slane %v5819, 7
        %v5842 = vrot.slane %v5821, 7
        %v5843 = vrot.slane %v5822, 7
        %v5844 = vrot.slane %v5824, 7
        %v5845 = vrot.slane %v5825, 7
        %v5846 = vrot.slane %v5827, 7
        %v5847 = vrot.slane %v5828, 7
        %v5848 = vrot.slane %v5830, 7
        %v5849 = vrot.slane %v5831, 7
        %v5850 = vrot.slane %v5833, 7
        %v5851 = vrot.slane %v5834, 7
        %v5852 = vsel %vm528, %v5850, %v5851
        %v5853 = vsel %vm528, %v5848, %v5849
        %v5854 = vsel %vm528, %v5846, %v5847
        %v5855 = vsel %vm528, %v5844, %v5845
        %v5856 = vsel %vm528, %v5842, %v5843
        %v5857 = vsel %vm528, %v5840, %v5841
        %v5858 = vsel %vm528, %v5838, %v5839
        %v5859 = vsel %vm528, %v5836, %v5837
        %s5860 = scalar_lea.vmem [#allocation5], 384
        %v5861 = vld [vmem:[%s5860] sm:$0xff]
        %v5862 = vld [vmem:[%s5860 + $0x8] sm:$0xff]
        %v5863 = vld [vmem:[%s5860 + $0x10] sm:$0xff]
        %v5864 = vld [vmem:[%s5860 + $0x18] sm:$0xff]
        %v5865 = vld [vmem:[%s5860 + $0x20] sm:$0xff]
        %v5866 = vld [vmem:[%s5860 + $0x28] sm:$0xff]
        %v5867 = vld [vmem:[%s5860 + $0x30] sm:$0xff]
        %v5868 = vld [vmem:[%s5860 + $0x38] sm:$0xff]
        %v5869 = vld [vmem:[%s5860 + $0x40] sm:$0xff]
        %v5870 = vld [vmem:[%s5860 + $0x48] sm:$0xff]
        %v5871 = vld [vmem:[%s5860 + $0x50] sm:$0xff]
        %v5872 = vld [vmem:[%s5860 + $0x58] sm:$0xff]
        %v5873 = vld [vmem:[%s5860 + $0x60] sm:$0xff]
        %v5874 = vld [vmem:[%s5860 + $0x68] sm:$0xff]
        %v5875 = vld [vmem:[%s5860 + $0x70] sm:$0xff]
        %v5876 = vld [vmem:[%s5860 + $0x78] sm:$0xff]
        %5877 = vmatprep.subr.mxu0 0.0
        %5878 = vmatpush1.msra.mxu0 %v5861
        %5879 = vmatprep.subr.mxu0 0.0
        %5880 = vmatpush1.msra.mxu0 %v5862
        %5881 = vmatprep.subr.mxu0 0.0
        %5882 = vmatpush1.msra.mxu0 %v5863
        %5883 = vmatprep.subr.mxu0 0.0
        %5884 = vmatpush1.msra.mxu0 %v5864
        %5885 = vmatprep.subr.mxu0 0.0
        %5886 = vmatpush1.msra.mxu0 %v5865
        %5887 = vmatprep.subr.mxu0 0.0
        %5888 = vmatpush1.msra.mxu0 %v5866
        %5889 = vmatprep.subr.mxu0 0.0
        %5890 = vmatpush1.msra.mxu0 %v5867
        %5891 = vmatprep.subr.mxu0 0.0
        %5892 = vmatpush1.msra.mxu0 %v5868
        %5893 = vmatprep.subr.mxu0 0.0
        %5894 = vmatpush1.msra.mxu0 %v5869
        %5895 = vmatprep.subr.mxu0 0.0
        %5896 = vmatpush1.msra.mxu0 %v5870
        %5897 = vmatprep.subr.mxu0 0.0
        %5898 = vmatpush1.msra.mxu0 %v5871
        %5899 = vmatprep.subr.mxu0 0.0
        %5900 = vmatpush1.msra.mxu0 %v5872
        %5901 = vmatprep.subr.mxu0 0.0
        %5902 = vmatpush1.msra.mxu0 %v5873
        %5903 = vmatprep.subr.mxu0 0.0
        %5904 = vmatpush1.msra.mxu0 %v5874
        %5905 = vmatprep.subr.mxu0 0.0
        %5906 = vmatpush1.msra.mxu0 %v5875
        %5907 = vmatprep.subr.mxu0 0.0
        %5908 = vmatpush1.msra.mxu0 %v5876
        %5909 = vmatprep.subr.mxu0 0.0
        %5910 = vmatpush1.msra.mxu0 0.0
        %5911 = vmatprep.subr.mxu0 0.0
        %5912 = vmatpush1.msra.mxu0 0.0
        %5913 = vmatprep.subr.mxu0 0.0
        %5914 = vmatpush1.msra.mxu0 0.0
        %5915 = vmatprep.subr.mxu0 0.0
        %5916 = vmatpush1.msra.mxu0 0.0
        %5917 = vmatprep.subr.mxu0 0.0
        %5918 = vmatpush1.msra.mxu0 0.0
        %5919 = vmatprep.subr.mxu0 0.0
        %5920 = vmatpush1.msra.mxu0 0.0
        %5921 = vmatprep.subr.mxu0 0.0
        %5922 = vmatpush1.msra.mxu0 0.0
        %5923 = vmatprep.subr.mxu0 0.0
        %5924 = vmatpush1.msra.mxu0 0.0
        %5925 = vmatprep.subr.mxu0 0.0
        %5926 = vmatpush1.msra.mxu0 0.0
        %5927 = vmatprep.subr.mxu0 0.0
        %5928 = vmatpush1.msra.mxu0 0.0
        %5929 = vmatprep.subr.mxu0 0.0
        %5930 = vmatpush1.msra.mxu0 0.0
        %5931 = vmatprep.subr.mxu0 0.0
        %5932 = vmatpush1.msra.mxu0 0.0
        %5933 = vmatprep.subr.mxu0 0.0
        %5934 = vmatpush1.msra.mxu0 0.0
        %5935 = vmatprep.subr.mxu0 0.0
        %5936 = vmatpush1.msra.mxu0 0.0
        %5937 = vmatprep.subr.mxu0 0.0
        %5938 = vmatpush1.msra.mxu0 0.0
        %5939 = vmatprep.subr.mxu0 0.0
        %5940 = vmatpush1.msra.mxu0 0.0
        %5941 = vmatprep.mubr.f32.mxu0 0.0
        %5942 = vmatmul.mubr.f32.gmra.mrb[0].mxu0 %v5859
        %v5943 = vpop.f32.mrb[0].mxu0
        %v5944 = vadd.f32 0.0, %v5943
        %v5945 = vpop.f32.mrb[0].mxu0
        %5946 = vmatprep.mubr.f32.mxu0 0.0
        %5947 = vmatmul.mubr.f32.gmra.mrb[0].mxu0 %v5858
        %v5948 = vpop.f32.mrb[0].mxu0
        %v5949 = vadd.f32 0.0, %v5948
        %v5950 = vpop.f32.mrb[0].mxu0
        %5951 = vmatprep.mubr.f32.mxu0 0.0
        %5952 = vmatmul.mubr.f32.gmra.mrb[0].mxu0 %v5857
        %v5953 = vpop.f32.mrb[0].mxu0
        %v5954 = vadd.f32 0.0, %v5953
        %v5955 = vpop.f32.mrb[0].mxu0
        %5956 = vmatprep.mubr.f32.mxu0 0.0
        %5957 = vmatmul.mubr.f32.gmra.mrb[0].mxu0 %v5856
        %v5958 = vpop.f32.mrb[0].mxu0
        %v5959 = vadd.f32 0.0, %v5958
        %v5960 = vpop.f32.mrb[0].mxu0
        %5961 = vmatprep.mubr.f32.mxu0 0.0
        %5962 = vmatmul.mubr.f32.gmra.mrb[0].mxu0 %v5855
        %v5963 = vpop.f32.mrb[0].mxu0
        %v5964 = vadd.f32 0.0, %v5963
        %v5965 = vpop.f32.mrb[0].mxu0
        %5966 = vmatprep.mubr.f32.mxu0 0.0
        %5967 = vmatmul.mubr.f32.gmra.mrb[0].mxu0 %v5854
        %v5968 = vpop.f32.mrb[0].mxu0
        %v5969 = vadd.f32 0.0, %v5968
        %v5970 = vpop.f32.mrb[0].mxu0
        %5971 = vmatprep.mubr.f32.mxu0 0.0
        %5972 = vmatmul.mubr.f32.gmra.mrb[0].mxu0 %v5853
        %v5973 = vpop.f32.mrb[0].mxu0
        %v5974 = vadd.f32 0.0, %v5973
        %v5975 = vpop.f32.mrb[0].mxu0
        %5976 = vmatprep.mubr.f32.mxu0 0.0
        %5977 = vmatmul.mubr.f32.gmra.mrb[0].mxu0 %v5852
        %v5978 = vpop.f32.mrb[0].mxu0
        %v5979 = vadd.f32 0.0, %v5978
        %v5980 = vpop.f32.mrb[0].mxu0
        %5981 = vdwg.mxu0
        %v5982 = vadd.f32 %v5804, %v5944
        %v5983 = vadd.f32 %v5805, %v5949
        %v5984 = vadd.f32 %v5806, %v5954
        %v5985 = vadd.f32 %v5807, %v5959
        %v5986 = vadd.f32 %v5808, %v5964
        %v5987 = vadd.f32 %v5809, %v5969
        %v5988 = vadd.f32 %v5810, %v5974
        %v5989 = vadd.f32 %v5811, %v5979
        %s5990 = scalar_lea.vmem [#allocation5], 512
        %v5991 = vld [vmem:[%s5990] sm:$0xff]
        %v5992 = vld [vmem:[%s5990 + $0x8] sm:$0xff]
        %v5993 = vld [vmem:[%s5990 + $0x10] sm:$0xff]
        %v5994 = vld [vmem:[%s5990 + $0x18] sm:$0xff]
        %v5995 = vld [vmem:[%s5990 + $0x20] sm:$0xff]
        %v5996 = vld [vmem:[%s5990 + $0x28] sm:$0xff]
        %v5997 = vld [vmem:[%s5990 + $0x30] sm:$0xff]
        %v5998 = vld [vmem:[%s5990 + $0x38] sm:$0xff]
        %v5999 = vld [vmem:[%s5990 + $0x40] sm:$0xff]
        %v6000 = vld [vmem:[%s5990 + $0x48] sm:$0xff]
        %v6001 = vld [vmem:[%s5990 + $0x50] sm:$0xff]
        %v6002 = vld [vmem:[%s5990 + $0x58] sm:$0xff]
        %v6003 = vld [vmem:[%s5990 + $0x60] sm:$0xff]
        %v6004 = vld [vmem:[%s5990 + $0x68] sm:$0xff]
        %v6005 = vld [vmem:[%s5990 + $0x70] sm:$0xff]
        %v6006 = vld [vmem:[%s5990 + $0x78] sm:$0xff]
        %6007 = vmatprep.subr.mxu0 0.0
        %6008 = vmatpush1.msra.mxu0 %v5991
        %6009 = vmatprep.subr.mxu0 0.0
        %6010 = vmatpush1.msra.mxu0 %v5992
        %6011 = vmatprep.subr.mxu0 0.0
        %6012 = vmatpush1.msra.mxu0 %v5993
        %6013 = vmatprep.subr.mxu0 0.0
        %6014 = vmatpush1.msra.mxu0 %v5994
        %6015 = vmatprep.subr.mxu0 0.0
        %6016 = vmatpush1.msra.mxu0 %v5995
        %6017 = vmatprep.subr.mxu0 0.0
        %6018 = vmatpush1.msra.mxu0 %v5996
        %6019 = vmatprep.subr.mxu0 0.0
        %6020 = vmatpush1.msra.mxu0 %v5997
        %6021 = vmatprep.subr.mxu0 0.0
        %6022 = vmatpush1.msra.mxu0 %v5998
        %6023 = vmatprep.subr.mxu0 0.0
        %6024 = vmatpush1.msra.mxu0 %v5999
        %6025 = vmatprep.subr.mxu0 0.0
        %6026 = vmatpush1.msra.mxu0 %v6000
        %6027 = vmatprep.subr.mxu0 0.0
        %6028 = vmatpush1.msra.mxu0 %v6001
        %6029 = vmatprep.subr.mxu0 0.0
        %6030 = vmatpush1.msra.mxu0 %v6002
        %6031 = vmatprep.subr.mxu0 0.0
        %6032 = vmatpush1.msra.mxu0 %v6003
        %6033 = vmatprep.subr.mxu0 0.0
        %6034 = vmatpush1.msra.mxu0 %v6004
        %6035 = vmatprep.subr.mxu0 0.0
        %6036 = vmatpush1.msra.mxu0 %v6005
        %6037 = vmatprep.subr.mxu0 0.0
        %6038 = vmatpush1.msra.mxu0 %v6006
        %6039 = vmatprep.subr.mxu0 0.0
        %6040 = vmatpush1.msra.mxu0 0.0
        %6041 = vmatprep.subr.mxu0 0.0
        %6042 = vmatpush1.msra.mxu0 0.0
        %6043 = vmatprep.subr.mxu0 0.0
        %6044 = vmatpush1.msra.mxu0 0.0
        %6045 = vmatprep.subr.mxu0 0.0
        %6046 = vmatpush1.msra.mxu0 0.0
        %6047 = vmatprep.subr.mxu0 0.0
        %6048 = vmatpush1.msra.mxu0 0.0
        %6049 = vmatprep.subr.mxu0 0.0
        %6050 = vmatpush1.msra.mxu0 0.0
        %6051 = vmatprep.subr.mxu0 0.0
        %6052 = vmatpush1.msra.mxu0 0.0
        %6053 = vmatprep.subr.mxu0 0.0
        %6054 = vmatpush1.msra.mxu0 0.0
        %6055 = vmatprep.subr.mxu0 0.0
        %6056 = vmatpush1.msra.mxu0 0.0
        %6057 = vmatprep.subr.mxu0 0.0
        %6058 = vmatpush1.msra.mxu0 0.0
        %6059 = vmatprep.subr.mxu0 0.0
        %6060 = vmatpush1.msra.mxu0 0.0
        %6061 = vmatprep.subr.mxu0 0.0
        %6062 = vmatpush1.msra.mxu0 0.0
        %6063 = vmatprep.subr.mxu0 0.0
        %6064 = vmatpush1.msra.mxu0 0.0
        %6065 = vmatprep.subr.mxu0 0.0
        %6066 = vmatpush1.msra.mxu0 0.0
        %6067 = vmatprep.subr.mxu0 0.0
        %6068 = vmatpush1.msra.mxu0 0.0
        %6069 = vmatprep.subr.mxu0 0.0
        %6070 = vmatpush1.msra.mxu0 0.0
        %6071 = vmatprep.mubr.f32.mxu0 0.0
        %6072 = vmatmul.mubr.f32.gmra.mrb[0].mxu0 %v5813
        %v6073 = vpop.f32.mrb[0].mxu0
        %v6074 = vadd.f32 0.0, %v6073
        %v6075 = vpop.f32.mrb[0].mxu0
        %6076 = vmatprep.mubr.f32.mxu0 0.0
        %6077 = vmatmul.mubr.f32.gmra.mrb[0].mxu0 %v5816
        %v6078 = vpop.f32.mrb[0].mxu0
        %v6079 = vadd.f32 0.0, %v6078
        %v6080 = vpop.f32.mrb[0].mxu0
        %6081 = vmatprep.mubr.f32.mxu0 0.0
        %6082 = vmatmul.mubr.f32.gmra.mrb[0].mxu0 %v5819
        %v6083 = vpop.f32.mrb[0].mxu0
        %v6084 = vadd.f32 0.0, %v6083
        %v6085 = vpop.f32.mrb[0].mxu0
        %6086 = vmatprep.mubr.f32.mxu0 0.0
        %6087 = vmatmul.mubr.f32.gmra.mrb[0].mxu0 %v5822
        %v6088 = vpop.f32.mrb[0].mxu0
        %v6089 = vadd.f32 0.0, %v6088
        %v6090 = vpop.f32.mrb[0].mxu0
        %6091 = vmatprep.mubr.f32.mxu0 0.0
        %6092 = vmatmul.mubr.f32.gmra.mrb[0].mxu0 %v5825
        %v6093 = vpop.f32.mrb[0].mxu0
        %v6094 = vadd.f32 0.0, %v6093
        %v6095 = vpop.f32.mrb[0].mxu0
        %6096 = vmatprep.mubr.f32.mxu0 0.0
        %6097 = vmatmul.mubr.f32.gmra.mrb[0].mxu0 %v5828
        %v6098 = vpop.f32.mrb[0].mxu0
        %v6099 = vadd.f32 0.0, %v6098
        %v6100 = vpop.f32.mrb[0].mxu0
        %6101 = vmatprep.mubr.f32.mxu0 0.0
        %6102 = vmatmul.mubr.f32.gmra.mrb[0].mxu0 %v5831
        %v6103 = vpop.f32.mrb[0].mxu0
        %v6104 = vadd.f32 0.0, %v6103
        %v6105 = vpop.f32.mrb[0].mxu0
        %6106 = vmatprep.mubr.f32.mxu0 0.0
        %6107 = vmatmul.mubr.f32.gmra.mrb[0].mxu0 %v5834
        %v6108 = vpop.f32.mrb[0].mxu0
        %v6109 = vadd.f32 0.0, %v6108
        %v6110 = vpop.f32.mrb[0].mxu0
        %6111 = vdwg.mxu0
        %v6112 = vadd.f32 %v5982, %v6074
        %v6113 = vadd.f32 %v5983, %v6079
        %v6114 = vadd.f32 %v5984, %v6084
        %v6115 = vadd.f32 %v5985, %v6089
        %v6116 = vadd.f32 %v5986, %v6094
        %v6117 = vadd.f32 %v5987, %v6099
        %v6118 = vadd.f32 %v5988, %v6104
        %v6119 = vadd.f32 %v5989, %v6109
        %v6120 = vrot.slane %v5813, 1
        %v6121 = vrot.slane %v5814, 1
        %v6122 = vrot.slane %v5816, 1
        %v6123 = vrot.slane %v5817, 1
        %v6124 = vrot.slane %v5819, 1
        %v6125 = vrot.slane %v5820, 1
        %v6126 = vrot.slane %v5822, 1
        %v6127 = vrot.slane %v5823, 1
        %v6128 = vrot.slane %v5825, 1
        %v6129 = vrot.slane %v5826, 1
        %v6130 = vrot.slane %v5828, 1
        %v6131 = vrot.slane %v5829, 1
        %v6132 = vrot.slane %v5831, 1
        %v6133 = vrot.slane %v5832, 1
        %v6134 = vrot.slane %v5834, 1
        %v6135 = vrot.slane %v5835, 1
        %v6136 = vsel %vm1261, %v6134, %v6135
        %v6137 = vsel %vm1261, %v6132, %v6133
        %v6138 = vsel %vm1261, %v6130, %v6131
        %v6139 = vsel %vm1261, %v6128, %v6129
        %v6140 = vsel %vm1261, %v6126, %v6127
        %v6141 = vsel %vm1261, %v6124, %v6125
        %v6142 = vsel %vm1261, %v6122, %v6123
        %v6143 = vsel %vm1261, %v6120, %v6121
        %s6144 = scalar_lea.vmem [#allocation5], 640
        %v6145 = vld [vmem:[%s6144] sm:$0xff]
        %v6146 = vld [vmem:[%s6144 + $0x8] sm:$0xff]
        %v6147 = vld [vmem:[%s6144 + $0x10] sm:$0xff]
        %v6148 = vld [vmem:[%s6144 + $0x18] sm:$0xff]
        %v6149 = vld [vmem:[%s6144 + $0x20] sm:$0xff]
        %v6150 = vld [vmem:[%s6144 + $0x28] sm:$0xff]
        %v6151 = vld [vmem:[%s6144 + $0x30] sm:$0xff]
        %v6152 = vld [vmem:[%s6144 + $0x38] sm:$0xff]
        %v6153 = vld [vmem:[%s6144 + $0x40] sm:$0xff]
        %v6154 = vld [vmem:[%s6144 + $0x48] sm:$0xff]
        %v6155 = vld [vmem:[%s6144 + $0x50] sm:$0xff]
        %v6156 = vld [vmem:[%s6144 + $0x58] sm:$0xff]
        %v6157 = vld [vmem:[%s6144 + $0x60] sm:$0xff]
        %v6158 = vld [vmem:[%s6144 + $0x68] sm:$0xff]
        %v6159 = vld [vmem:[%s6144 + $0x70] sm:$0xff]
        %v6160 = vld [vmem:[%s6144 + $0x78] sm:$0xff]
        %6161 = vmatprep.subr.mxu0 0.0
        %6162 = vmatpush1.msra.mxu0 %v6145
        %6163 = vmatprep.subr.mxu0 0.0
        %6164 = vmatpush1.msra.mxu0 %v6146
        %6165 = vmatprep.subr.mxu0 0.0
        %6166 = vmatpush1.msra.mxu0 %v6147
        %6167 = vmatprep.subr.mxu0 0.0
        %6168 = vmatpush1.msra.mxu0 %v6148
        %6169 = vmatprep.subr.mxu0 0.0
        %6170 = vmatpush1.msra.mxu0 %v6149
        %6171 = vmatprep.subr.mxu0 0.0
        %6172 = vmatpush1.msra.mxu0 %v6150
        %6173 = vmatprep.subr.mxu0 0.0
        %6174 = vmatpush1.msra.mxu0 %v6151
        %6175 = vmatprep.subr.mxu0 0.0
        %6176 = vmatpush1.msra.mxu0 %v6152
        %6177 = vmatprep.subr.mxu0 0.0
        %6178 = vmatpush1.msra.mxu0 %v6153
        %6179 = vmatprep.subr.mxu0 0.0
        %6180 = vmatpush1.msra.mxu0 %v6154
        %6181 = vmatprep.subr.mxu0 0.0
        %6182 = vmatpush1.msra.mxu0 %v6155
        %6183 = vmatprep.subr.mxu0 0.0
        %6184 = vmatpush1.msra.mxu0 %v6156
        %6185 = vmatprep.subr.mxu0 0.0
        %6186 = vmatpush1.msra.mxu0 %v6157
        %6187 = vmatprep.subr.mxu0 0.0
        %6188 = vmatpush1.msra.mxu0 %v6158
        %6189 = vmatprep.subr.mxu0 0.0
        %6190 = vmatpush1.msra.mxu0 %v6159
        %6191 = vmatprep.subr.mxu0 0.0
        %6192 = vmatpush1.msra.mxu0 %v6160
        %6193 = vmatprep.subr.mxu0 0.0
        %6194 = vmatpush1.msra.mxu0 0.0
        %6195 = vmatprep.subr.mxu0 0.0
        %6196 = vmatpush1.msra.mxu0 0.0
        %6197 = vmatprep.subr.mxu0 0.0
        %6198 = vmatpush1.msra.mxu0 0.0
        %6199 = vmatprep.subr.mxu0 0.0
        %6200 = vmatpush1.msra.mxu0 0.0
        %6201 = vmatprep.subr.mxu0 0.0
        %6202 = vmatpush1.msra.mxu0 0.0
        %6203 = vmatprep.subr.mxu0 0.0
        %6204 = vmatpush1.msra.mxu0 0.0
        %6205 = vmatprep.subr.mxu0 0.0
        %6206 = vmatpush1.msra.mxu0 0.0
        %6207 = vmatprep.subr.mxu0 0.0
        %6208 = vmatpush1.msra.mxu0 0.0
        %6209 = vmatprep.subr.mxu0 0.0
        %6210 = vmatpush1.msra.mxu0 0.0
        %6211 = vmatprep.subr.mxu0 0.0
        %6212 = vmatpush1.msra.mxu0 0.0
        %6213 = vmatprep.subr.mxu0 0.0
        %6214 = vmatpush1.msra.mxu0 0.0
        %6215 = vmatprep.subr.mxu0 0.0
        %6216 = vmatpush1.msra.mxu0 0.0
        %6217 = vmatprep.subr.mxu0 0.0
        %6218 = vmatpush1.msra.mxu0 0.0
        %6219 = vmatprep.subr.mxu0 0.0
        %6220 = vmatpush1.msra.mxu0 0.0
        %6221 = vmatprep.subr.mxu0 0.0
        %6222 = vmatpush1.msra.mxu0 0.0
        %6223 = vmatprep.subr.mxu0 0.0
        %6224 = vmatpush1.msra.mxu0 0.0
        %6225 = vmatprep.mubr.f32.mxu0 0.0
        %6226 = vmatmul.mubr.f32.gmra.mrb[0].mxu0 %v6143
        %v6227 = vpop.f32.mrb[0].mxu0
        %v6228 = vadd.f32 0.0, %v6227
        %v6229 = vpop.f32.mrb[0].mxu0
        %6230 = vmatprep.mubr.f32.mxu0 0.0
        %6231 = vmatmul.mubr.f32.gmra.mrb[0].mxu0 %v6142
        %v6232 = vpop.f32.mrb[0].mxu0
        %v6233 = vadd.f32 0.0, %v6232
        %v6234 = vpop.f32.mrb[0].mxu0
        %6235 = vmatprep.mubr.f32.mxu0 0.0
        %6236 = vmatmul.mubr.f32.gmra.mrb[0].mxu0 %v6141
        %v6237 = vpop.f32.mrb[0].mxu0
        %v6238 = vadd.f32 0.0, %v6237
        %v6239 = vpop.f32.mrb[0].mxu0
        %6240 = vmatprep.mubr.f32.mxu0 0.0
        %6241 = vmatmul.mubr.f32.gmra.mrb[0].mxu0 %v6140
        %v6242 = vpop.f32.mrb[0].mxu0
        %v6243 = vadd.f32 0.0, %v6242
        %v6244 = vpop.f32.mrb[0].mxu0
        %6245 = vmatprep.mubr.f32.mxu0 0.0
        %6246 = vmatmul.mubr.f32.gmra.mrb[0].mxu0 %v6139
        %v6247 = vpop.f32.mrb[0].mxu0
        %v6248 = vadd.f32 0.0, %v6247
        %v6249 = vpop.f32.mrb[0].mxu0
        %6250 = vmatprep.mubr.f32.mxu0 0.0
        %6251 = vmatmul.mubr.f32.gmra.mrb[0].mxu0 %v6138
        %v6252 = vpop.f32.mrb[0].mxu0
        %v6253 = vadd.f32 0.0, %v6252
        %v6254 = vpop.f32.mrb[0].mxu0
        %6255 = vmatprep.mubr.f32.mxu0 0.0
        %6256 = vmatmul.mubr.f32.gmra.mrb[0].mxu0 %v6137
        %v6257 = vpop.f32.mrb[0].mxu0
        %v6258 = vadd.f32 0.0, %v6257
        %v6259 = vpop.f32.mrb[0].mxu0
        %6260 = vmatprep.mubr.f32.mxu0 0.0
        %6261 = vmatmul.mubr.f32.gmra.mrb[0].mxu0 %v6136
        %v6262 = vpop.f32.mrb[0].mxu0
        %v6263 = vadd.f32 0.0, %v6262
        %v6264 = vpop.f32.mrb[0].mxu0
        %6265 = vdwg.mxu0
        %v6266 = vadd.f32 %v6112, %v6228
        %v6267 = vadd.f32 %v6113, %v6233
        %v6268 = vadd.f32 %v6114, %v6238
        %v6269 = vadd.f32 %v6115, %v6243
        %v6270 = vadd.f32 %v6116, %v6248
        %v6271 = vadd.f32 %v6117, %v6253
        %v6272 = vadd.f32 %v6118, %v6258
        %v6273 = vadd.f32 %v6119, %v6263
        %s6274 = scalar_lea.vmem [#allocation3], 48
        %v6275 = vld [vmem:[%s6274] sm:$0xff]
        %v6276 = vld [vmem:[%s6274 + $0x8] sm:$0xff]
        %v6277 = vld [vmem:[%s6274 + $0x10] sm:$0xff]
        %v6278 = vld [vmem:[%s6274 + $0x18] sm:$0xff]
        %v6279 = vld [vmem:[%s6274 + $0x20] sm:$0xff]
        %v6280 = vld [vmem:[%s6274 + $0x28] sm:$0xff]
        %v6281 = vld [vmem:[%s6274 + $0x30] sm:$0xff]
        %v6282 = vld [vmem:[%s6274 + $0x38] sm:$0xff]
        %v6283 = vld [vmem:[%s6274 + $0x40] sm:$0xff]
        %v6284 = vld [vmem:[%s6274 + $0x48] sm:$0xff]
        %v6285 = vld [vmem:[%s6274 + $0x50] sm:$0xff]
        %v6286 = vld [vmem:[%s6274 + $0x58] sm:$0xff]
        %v6287 = vld [vmem:[%s6274 + $0x60] sm:$0xff]
        %v6288 = vld [vmem:[%s6274 + $0x68] sm:$0xff]
        %v6289 = vld [vmem:[%s6274 + $0x70] sm:$0xff]
        %v6290 = vld [vmem:[%s6274 + $0x78] sm:$0xff]
        %v6291 = vld [vmem:[%s6274 + $0x80] sm:$0xff]
        %v6292 = vld [vmem:[%s6274 + $0x88] sm:$0xff]
        %v6293 = vld [vmem:[%s6274 + $0x90] sm:$0xff]
        %v6294 = vld [vmem:[%s6274 + $0x98] sm:$0xff]
        %v6295 = vld [vmem:[%s6274 + $0xa0] sm:$0xff]
        %v6296 = vld [vmem:[%s6274 + $0xa8] sm:$0xff]
        %v6297 = vld [vmem:[%s6274 + $0xb0] sm:$0xff]
        %v6298 = vld [vmem:[%s6274 + $0xb8] sm:$0xff]
        %v6299 = vrot.slane %v6275, 7
        %v6300 = vrot.slane %v6276, 7
        %v6301 = vrot.slane %v6278, 7
        %v6302 = vrot.slane %v6279, 7
        %v6303 = vrot.slane %v6281, 7
        %v6304 = vrot.slane %v6282, 7
        %v6305 = vrot.slane %v6284, 7
        %v6306 = vrot.slane %v6285, 7
        %v6307 = vrot.slane %v6287, 7
        %v6308 = vrot.slane %v6288, 7
        %v6309 = vrot.slane %v6290, 7
        %v6310 = vrot.slane %v6291, 7
        %v6311 = vrot.slane %v6293, 7
        %v6312 = vrot.slane %v6294, 7
        %v6313 = vrot.slane %v6296, 7
        %v6314 = vrot.slane %v6297, 7
        %v6315 = vsel %vm528, %v6313, %v6314
        %v6316 = vsel %vm528, %v6311, %v6312
        %v6317 = vsel %vm528, %v6309, %v6310
        %v6318 = vsel %vm528, %v6307, %v6308
        %v6319 = vsel %vm528, %v6305, %v6306
        %v6320 = vsel %vm528, %v6303, %v6304
        %v6321 = vsel %vm528, %v6301, %v6302
        %v6322 = vsel %vm528, %v6299, %v6300
        %s6323 = scalar_lea.vmem [#allocation5], 768
        %v6324 = vld [vmem:[%s6323] sm:$0xff]
        %v6325 = vld [vmem:[%s6323 + $0x8] sm:$0xff]
        %v6326 = vld [vmem:[%s6323 + $0x10] sm:$0xff]
        %v6327 = vld [vmem:[%s6323 + $0x18] sm:$0xff]
        %v6328 = vld [vmem:[%s6323 + $0x20] sm:$0xff]
        %v6329 = vld [vmem:[%s6323 + $0x28] sm:$0xff]
        %v6330 = vld [vmem:[%s6323 + $0x30] sm:$0xff]
        %v6331 = vld [vmem:[%s6323 + $0x38] sm:$0xff]
        %v6332 = vld [vmem:[%s6323 + $0x40] sm:$0xff]
        %v6333 = vld [vmem:[%s6323 + $0x48] sm:$0xff]
        %v6334 = vld [vmem:[%s6323 + $0x50] sm:$0xff]
        %v6335 = vld [vmem:[%s6323 + $0x58] sm:$0xff]
        %v6336 = vld [vmem:[%s6323 + $0x60] sm:$0xff]
        %v6337 = vld [vmem:[%s6323 + $0x68] sm:$0xff]
        %v6338 = vld [vmem:[%s6323 + $0x70] sm:$0xff]
        %v6339 = vld [vmem:[%s6323 + $0x78] sm:$0xff]
        %6340 = vmatprep.subr.mxu0 0.0
        %6341 = vmatpush1.msra.mxu0 %v6324
        %6342 = vmatprep.subr.mxu0 0.0
        %6343 = vmatpush1.msra.mxu0 %v6325
        %6344 = vmatprep.subr.mxu0 0.0
        %6345 = vmatpush1.msra.mxu0 %v6326
        %6346 = vmatprep.subr.mxu0 0.0
        %6347 = vmatpush1.msra.mxu0 %v6327
        %6348 = vmatprep.subr.mxu0 0.0
        %6349 = vmatpush1.msra.mxu0 %v6328
        %6350 = vmatprep.subr.mxu0 0.0
        %6351 = vmatpush1.msra.mxu0 %v6329
        %6352 = vmatprep.subr.mxu0 0.0
        %6353 = vmatpush1.msra.mxu0 %v6330
        %6354 = vmatprep.subr.mxu0 0.0
        %6355 = vmatpush1.msra.mxu0 %v6331
        %6356 = vmatprep.subr.mxu0 0.0
        %6357 = vmatpush1.msra.mxu0 %v6332
        %6358 = vmatprep.subr.mxu0 0.0
        %6359 = vmatpush1.msra.mxu0 %v6333
        %6360 = vmatprep.subr.mxu0 0.0
        %6361 = vmatpush1.msra.mxu0 %v6334
        %6362 = vmatprep.subr.mxu0 0.0
        %6363 = vmatpush1.msra.mxu0 %v6335
        %6364 = vmatprep.subr.mxu0 0.0
        %6365 = vmatpush1.msra.mxu0 %v6336
        %6366 = vmatprep.subr.mxu0 0.0
        %6367 = vmatpush1.msra.mxu0 %v6337
        %6368 = vmatprep.subr.mxu0 0.0
        %6369 = vmatpush1.msra.mxu0 %v6338
        %6370 = vmatprep.subr.mxu0 0.0
        %6371 = vmatpush1.msra.mxu0 %v6339
        %6372 = vmatprep.subr.mxu0 0.0
        %6373 = vmatpush1.msra.mxu0 0.0
        %6374 = vmatprep.subr.mxu0 0.0
        %6375 = vmatpush1.msra.mxu0 0.0
        %6376 = vmatprep.subr.mxu0 0.0
        %6377 = vmatpush1.msra.mxu0 0.0
        %6378 = vmatprep.subr.mxu0 0.0
        %6379 = vmatpush1.msra.mxu0 0.0
        %6380 = vmatprep.subr.mxu0 0.0
        %6381 = vmatpush1.msra.mxu0 0.0
        %6382 = vmatprep.subr.mxu0 0.0
        %6383 = vmatpush1.msra.mxu0 0.0
        %6384 = vmatprep.subr.mxu0 0.0
        %6385 = vmatpush1.msra.mxu0 0.0
        %6386 = vmatprep.subr.mxu0 0.0
        %6387 = vmatpush1.msra.mxu0 0.0
        %6388 = vmatprep.subr.mxu0 0.0
        %6389 = vmatpush1.msra.mxu0 0.0
        %6390 = vmatprep.subr.mxu0 0.0
        %6391 = vmatpush1.msra.mxu0 0.0
        %6392 = vmatprep.subr.mxu0 0.0
        %6393 = vmatpush1.msra.mxu0 0.0
        %6394 = vmatprep.subr.mxu0 0.0
        %6395 = vmatpush1.msra.mxu0 0.0
        %6396 = vmatprep.subr.mxu0 0.0
        %6397 = vmatpush1.msra.mxu0 0.0
        %6398 = vmatprep.subr.mxu0 0.0
        %6399 = vmatpush1.msra.mxu0 0.0
        %6400 = vmatprep.subr.mxu0 0.0
        %6401 = vmatpush1.msra.mxu0 0.0
        %6402 = vmatprep.subr.mxu0 0.0
        %6403 = vmatpush1.msra.mxu0 0.0
        %6404 = vmatprep.mubr.f32.mxu0 0.0
        %6405 = vmatmul.mubr.f32.gmra.mrb[0].mxu0 %v6322
        %v6406 = vpop.f32.mrb[0].mxu0
        %v6407 = vadd.f32 0.0, %v6406
        %v6408 = vpop.f32.mrb[0].mxu0
        %6409 = vmatprep.mubr.f32.mxu0 0.0
        %6410 = vmatmul.mubr.f32.gmra.mrb[0].mxu0 %v6321
        %v6411 = vpop.f32.mrb[0].mxu0
        %v6412 = vadd.f32 0.0, %v6411
        %v6413 = vpop.f32.mrb[0].mxu0
        %6414 = vmatprep.mubr.f32.mxu0 0.0
        %6415 = vmatmul.mubr.f32.gmra.mrb[0].mxu0 %v6320
        %v6416 = vpop.f32.mrb[0].mxu0
        %v6417 = vadd.f32 0.0, %v6416
        %v6418 = vpop.f32.mrb[0].mxu0
        %6419 = vmatprep.mubr.f32.mxu0 0.0
        %6420 = vmatmul.mubr.f32.gmra.mrb[0].mxu0 %v6319
        %v6421 = vpop.f32.mrb[0].mxu0
        %v6422 = vadd.f32 0.0, %v6421
        %v6423 = vpop.f32.mrb[0].mxu0
        %6424 = vmatprep.mubr.f32.mxu0 0.0
        %6425 = vmatmul.mubr.f32.gmra.mrb[0].mxu0 %v6318
        %v6426 = vpop.f32.mrb[0].mxu0
        %v6427 = vadd.f32 0.0, %v6426
        %v6428 = vpop.f32.mrb[0].mxu0
        %6429 = vmatprep.mubr.f32.mxu0 0.0
        %6430 = vmatmul.mubr.f32.gmra.mrb[0].mxu0 %v6317
        %v6431 = vpop.f32.mrb[0].mxu0
        %v6432 = vadd.f32 0.0, %v6431
        %v6433 = vpop.f32.mrb[0].mxu0
        %6434 = vmatprep.mubr.f32.mxu0 0.0
        %6435 = vmatmul.mubr.f32.gmra.mrb[0].mxu0 %v6316
        %v6436 = vpop.f32.mrb[0].mxu0
        %v6437 = vadd.f32 0.0, %v6436
        %v6438 = vpop.f32.mrb[0].mxu0
        %6439 = vmatprep.mubr.f32.mxu0 0.0
        %6440 = vmatmul.mubr.f32.gmra.mrb[0].mxu0 %v6315
        %v6441 = vpop.f32.mrb[0].mxu0
        %v6442 = vadd.f32 0.0, %v6441
        %v6443 = vpop.f32.mrb[0].mxu0
        %6444 = vdwg.mxu0
        %v6445 = vadd.f32 %v6266, %v6407
        %v6446 = vadd.f32 %v6267, %v6412
        %v6447 = vadd.f32 %v6268, %v6417
        %v6448 = vadd.f32 %v6269, %v6422
        %v6449 = vadd.f32 %v6270, %v6427
        %v6450 = vadd.f32 %v6271, %v6432
        %v6451 = vadd.f32 %v6272, %v6437
        %v6452 = vadd.f32 %v6273, %v6442
        %s6453 = scalar_lea.vmem [#allocation5], 896
        %v6454 = vld [vmem:[%s6453] sm:$0xff]
        %v6455 = vld [vmem:[%s6453 + $0x8] sm:$0xff]
        %v6456 = vld [vmem:[%s6453 + $0x10] sm:$0xff]
        %v6457 = vld [vmem:[%s6453 + $0x18] sm:$0xff]
        %v6458 = vld [vmem:[%s6453 + $0x20] sm:$0xff]
        %v6459 = vld [vmem:[%s6453 + $0x28] sm:$0xff]
        %v6460 = vld [vmem:[%s6453 + $0x30] sm:$0xff]
        %v6461 = vld [vmem:[%s6453 + $0x38] sm:$0xff]
        %v6462 = vld [vmem:[%s6453 + $0x40] sm:$0xff]
        %v6463 = vld [vmem:[%s6453 + $0x48] sm:$0xff]
        %v6464 = vld [vmem:[%s6453 + $0x50] sm:$0xff]
        %v6465 = vld [vmem:[%s6453 + $0x58] sm:$0xff]
        %v6466 = vld [vmem:[%s6453 + $0x60] sm:$0xff]
        %v6467 = vld [vmem:[%s6453 + $0x68] sm:$0xff]
        %v6468 = vld [vmem:[%s6453 + $0x70] sm:$0xff]
        %v6469 = vld [vmem:[%s6453 + $0x78] sm:$0xff]
        %6470 = vmatprep.subr.mxu0 0.0
        %6471 = vmatpush1.msra.mxu0 %v6454
        %6472 = vmatprep.subr.mxu0 0.0
        %6473 = vmatpush1.msra.mxu0 %v6455
        %6474 = vmatprep.subr.mxu0 0.0
        %6475 = vmatpush1.msra.mxu0 %v6456
        %6476 = vmatprep.subr.mxu0 0.0
        %6477 = vmatpush1.msra.mxu0 %v6457
        %6478 = vmatprep.subr.mxu0 0.0
        %6479 = vmatpush1.msra.mxu0 %v6458
        %6480 = vmatprep.subr.mxu0 0.0
        %6481 = vmatpush1.msra.mxu0 %v6459
        %6482 = vmatprep.subr.mxu0 0.0
        %6483 = vmatpush1.msra.mxu0 %v6460
        %6484 = vmatprep.subr.mxu0 0.0
        %6485 = vmatpush1.msra.mxu0 %v6461
        %6486 = vmatprep.subr.mxu0 0.0
        %6487 = vmatpush1.msra.mxu0 %v6462
        %6488 = vmatprep.subr.mxu0 0.0
        %6489 = vmatpush1.msra.mxu0 %v6463
        %6490 = vmatprep.subr.mxu0 0.0
        %6491 = vmatpush1.msra.mxu0 %v6464
        %6492 = vmatprep.subr.mxu0 0.0
        %6493 = vmatpush1.msra.mxu0 %v6465
        %6494 = vmatprep.subr.mxu0 0.0
        %6495 = vmatpush1.msra.mxu0 %v6466
        %6496 = vmatprep.subr.mxu0 0.0
        %6497 = vmatpush1.msra.mxu0 %v6467
        %6498 = vmatprep.subr.mxu0 0.0
        %6499 = vmatpush1.msra.mxu0 %v6468
        %6500 = vmatprep.subr.mxu0 0.0
        %6501 = vmatpush1.msra.mxu0 %v6469
        %6502 = vmatprep.subr.mxu0 0.0
        %6503 = vmatpush1.msra.mxu0 0.0
        %6504 = vmatprep.subr.mxu0 0.0
        %6505 = vmatpush1.msra.mxu0 0.0
        %6506 = vmatprep.subr.mxu0 0.0
        %6507 = vmatpush1.msra.mxu0 0.0
        %6508 = vmatprep.subr.mxu0 0.0
        %6509 = vmatpush1.msra.mxu0 0.0
        %6510 = vmatprep.subr.mxu0 0.0
        %6511 = vmatpush1.msra.mxu0 0.0
        %6512 = vmatprep.subr.mxu0 0.0
        %6513 = vmatpush1.msra.mxu0 0.0
        %6514 = vmatprep.subr.mxu0 0.0
        %6515 = vmatpush1.msra.mxu0 0.0
        %6516 = vmatprep.subr.mxu0 0.0
        %6517 = vmatpush1.msra.mxu0 0.0
        %6518 = vmatprep.subr.mxu0 0.0
        %6519 = vmatpush1.msra.mxu0 0.0
        %6520 = vmatprep.subr.mxu0 0.0
        %6521 = vmatpush1.msra.mxu0 0.0
        %6522 = vmatprep.subr.mxu0 0.0
        %6523 = vmatpush1.msra.mxu0 0.0
        %6524 = vmatprep.subr.mxu0 0.0
        %6525 = vmatpush1.msra.mxu0 0.0
        %6526 = vmatprep.subr.mxu0 0.0
        %6527 = vmatpush1.msra.mxu0 0.0
        %6528 = vmatprep.subr.mxu0 0.0
        %6529 = vmatpush1.msra.mxu0 0.0
        %6530 = vmatprep.subr.mxu0 0.0
        %6531 = vmatpush1.msra.mxu0 0.0
        %6532 = vmatprep.subr.mxu0 0.0
        %6533 = vmatpush1.msra.mxu0 0.0
        %6534 = vmatprep.mubr.f32.mxu0 0.0
        %6535 = vmatmul.mubr.f32.gmra.mrb[0].mxu0 %v6276
        %v6536 = vpop.f32.mrb[0].mxu0
        %v6537 = vadd.f32 0.0, %v6536
        %v6538 = vpop.f32.mrb[0].mxu0
        %6539 = vmatprep.mubr.f32.mxu0 0.0
        %6540 = vmatmul.mubr.f32.gmra.mrb[0].mxu0 %v6279
        %v6541 = vpop.f32.mrb[0].mxu0
        %v6542 = vadd.f32 0.0, %v6541
        %v6543 = vpop.f32.mrb[0].mxu0
        %6544 = vmatprep.mubr.f32.mxu0 0.0
        %6545 = vmatmul.mubr.f32.gmra.mrb[0].mxu0 %v6282
        %v6546 = vpop.f32.mrb[0].mxu0
        %v6547 = vadd.f32 0.0, %v6546
        %v6548 = vpop.f32.mrb[0].mxu0
        %6549 = vmatprep.mubr.f32.mxu0 0.0
        %6550 = vmatmul.mubr.f32.gmra.mrb[0].mxu0 %v6285
        %v6551 = vpop.f32.mrb[0].mxu0
        %v6552 = vadd.f32 0.0, %v6551
        %v6553 = vpop.f32.mrb[0].mxu0
        %6554 = vmatprep.mubr.f32.mxu0 0.0
        %6555 = vmatmul.mubr.f32.gmra.mrb[0].mxu0 %v6288
        %v6556 = vpop.f32.mrb[0].mxu0
        %v6557 = vadd.f32 0.0, %v6556
        %v6558 = vpop.f32.mrb[0].mxu0
        %6559 = vmatprep.mubr.f32.mxu0 0.0
        %6560 = vmatmul.mubr.f32.gmra.mrb[0].mxu0 %v6291
        %v6561 = vpop.f32.mrb[0].mxu0
        %v6562 = vadd.f32 0.0, %v6561
        %v6563 = vpop.f32.mrb[0].mxu0
        %6564 = vmatprep.mubr.f32.mxu0 0.0
        %6565 = vmatmul.mubr.f32.gmra.mrb[0].mxu0 %v6294
        %v6566 = vpop.f32.mrb[0].mxu0
        %v6567 = vadd.f32 0.0, %v6566
        %v6568 = vpop.f32.mrb[0].mxu0
        %6569 = vmatprep.mubr.f32.mxu0 0.0
        %6570 = vmatmul.mubr.f32.gmra.mrb[0].mxu0 %v6297
        %v6571 = vpop.f32.mrb[0].mxu0
        %v6572 = vadd.f32 0.0, %v6571
        %v6573 = vpop.f32.mrb[0].mxu0
        %6574 = vdwg.mxu0
        %v6575 = vadd.f32 %v6445, %v6537
        %v6576 = vadd.f32 %v6446, %v6542
        %v6577 = vadd.f32 %v6447, %v6547
        %v6578 = vadd.f32 %v6448, %v6552
        %v6579 = vadd.f32 %v6449, %v6557
        %v6580 = vadd.f32 %v6450, %v6562
        %v6581 = vadd.f32 %v6451, %v6567
        %v6582 = vadd.f32 %v6452, %v6572
        %v6583 = vrot.slane %v6276, 1
        %v6584 = vrot.slane %v6277, 1
        %v6585 = vrot.slane %v6279, 1
        %v6586 = vrot.slane %v6280, 1
        %v6587 = vrot.slane %v6282, 1
        %v6588 = vrot.slane %v6283, 1
        %v6589 = vrot.slane %v6285, 1
        %v6590 = vrot.slane %v6286, 1
        %v6591 = vrot.slane %v6288, 1
        %v6592 = vrot.slane %v6289, 1
        %v6593 = vrot.slane %v6291, 1
        %v6594 = vrot.slane %v6292, 1
        %v6595 = vrot.slane %v6294, 1
        %v6596 = vrot.slane %v6295, 1
        %v6597 = vrot.slane %v6297, 1
        %v6598 = vrot.slane %v6298, 1
        %v6599 = vsel %vm1261, %v6597, %v6598
        %v6600 = vsel %vm1261, %v6595, %v6596
        %v6601 = vsel %vm1261, %v6593, %v6594
        %v6602 = vsel %vm1261, %v6591, %v6592
        %v6603 = vsel %vm1261, %v6589, %v6590
        %v6604 = vsel %vm1261, %v6587, %v6588
        %v6605 = vsel %vm1261, %v6585, %v6586
        %v6606 = vsel %vm1261, %v6583, %v6584
        %s6607 = scalar_lea.vmem [#allocation5], 1024
        %v6608 = vld [vmem:[%s6607] sm:$0xff]
        %v6609 = vld [vmem:[%s6607 + $0x8] sm:$0xff]
        %v6610 = vld [vmem:[%s6607 + $0x10] sm:$0xff]
        %v6611 = vld [vmem:[%s6607 + $0x18] sm:$0xff]
        %v6612 = vld [vmem:[%s6607 + $0x20] sm:$0xff]
        %v6613 = vld [vmem:[%s6607 + $0x28] sm:$0xff]
        %v6614 = vld [vmem:[%s6607 + $0x30] sm:$0xff]
        %v6615 = vld [vmem:[%s6607 + $0x38] sm:$0xff]
        %v6616 = vld [vmem:[%s6607 + $0x40] sm:$0xff]
        %v6617 = vld [vmem:[%s6607 + $0x48] sm:$0xff]
        %v6618 = vld [vmem:[%s6607 + $0x50] sm:$0xff]
        %v6619 = vld [vmem:[%s6607 + $0x58] sm:$0xff]
        %v6620 = vld [vmem:[%s6607 + $0x60] sm:$0xff]
        %v6621 = vld [vmem:[%s6607 + $0x68] sm:$0xff]
        %v6622 = vld [vmem:[%s6607 + $0x70] sm:$0xff]
        %v6623 = vld [vmem:[%s6607 + $0x78] sm:$0xff]
        %6624 = vmatprep.subr.mxu0 0.0
        %6625 = vmatpush1.msra.mxu0 %v6608
        %6626 = vmatprep.subr.mxu0 0.0
        %6627 = vmatpush1.msra.mxu0 %v6609
        %6628 = vmatprep.subr.mxu0 0.0
        %6629 = vmatpush1.msra.mxu0 %v6610
        %6630 = vmatprep.subr.mxu0 0.0
        %6631 = vmatpush1.msra.mxu0 %v6611
        %6632 = vmatprep.subr.mxu0 0.0
        %6633 = vmatpush1.msra.mxu0 %v6612
        %6634 = vmatprep.subr.mxu0 0.0
        %6635 = vmatpush1.msra.mxu0 %v6613
        %6636 = vmatprep.subr.mxu0 0.0
        %6637 = vmatpush1.msra.mxu0 %v6614
        %6638 = vmatprep.subr.mxu0 0.0
        %6639 = vmatpush1.msra.mxu0 %v6615
        %6640 = vmatprep.subr.mxu0 0.0
        %6641 = vmatpush1.msra.mxu0 %v6616
        %6642 = vmatprep.subr.mxu0 0.0
        %6643 = vmatpush1.msra.mxu0 %v6617
        %6644 = vmatprep.subr.mxu0 0.0
        %6645 = vmatpush1.msra.mxu0 %v6618
        %6646 = vmatprep.subr.mxu0 0.0
        %6647 = vmatpush1.msra.mxu0 %v6619
        %6648 = vmatprep.subr.mxu0 0.0
        %6649 = vmatpush1.msra.mxu0 %v6620
        %6650 = vmatprep.subr.mxu0 0.0
        %6651 = vmatpush1.msra.mxu0 %v6621
        %6652 = vmatprep.subr.mxu0 0.0
        %6653 = vmatpush1.msra.mxu0 %v6622
        %6654 = vmatprep.subr.mxu0 0.0
        %6655 = vmatpush1.msra.mxu0 %v6623
        %6656 = vmatprep.subr.mxu0 0.0
        %6657 = vmatpush1.msra.mxu0 0.0
        %6658 = vmatprep.subr.mxu0 0.0
        %6659 = vmatpush1.msra.mxu0 0.0
        %6660 = vmatprep.subr.mxu0 0.0
        %6661 = vmatpush1.msra.mxu0 0.0
        %6662 = vmatprep.subr.mxu0 0.0
        %6663 = vmatpush1.msra.mxu0 0.0
        %6664 = vmatprep.subr.mxu0 0.0
        %6665 = vmatpush1.msra.mxu0 0.0
        %6666 = vmatprep.subr.mxu0 0.0
        %6667 = vmatpush1.msra.mxu0 0.0
        %6668 = vmatprep.subr.mxu0 0.0
        %6669 = vmatpush1.msra.mxu0 0.0
        %6670 = vmatprep.subr.mxu0 0.0
        %6671 = vmatpush1.msra.mxu0 0.0
        %6672 = vmatprep.subr.mxu0 0.0
        %6673 = vmatpush1.msra.mxu0 0.0
        %6674 = vmatprep.subr.mxu0 0.0
        %6675 = vmatpush1.msra.mxu0 0.0
        %6676 = vmatprep.subr.mxu0 0.0
        %6677 = vmatpush1.msra.mxu0 0.0
        %6678 = vmatprep.subr.mxu0 0.0
        %6679 = vmatpush1.msra.mxu0 0.0
        %6680 = vmatprep.subr.mxu0 0.0
        %6681 = vmatpush1.msra.mxu0 0.0
        %6682 = vmatprep.subr.mxu0 0.0
        %6683 = vmatpush1.msra.mxu0 0.0
        %6684 = vmatprep.subr.mxu0 0.0
        %6685 = vmatpush1.msra.mxu0 0.0
        %6686 = vmatprep.subr.mxu0 0.0
        %6687 = vmatpush1.msra.mxu0 0.0
        %6688 = vmatprep.mubr.f32.mxu0 0.0
        %6689 = vmatmul.mubr.f32.gmra.mrb[0].mxu0 %v6606
        %v6690 = vpop.f32.mrb[0].mxu0
        %v6691 = vadd.f32 0.0, %v6690
        %v6692 = vpop.f32.mrb[0].mxu0
        %6693 = vmatprep.mubr.f32.mxu0 0.0
        %6694 = vmatmul.mubr.f32.gmra.mrb[0].mxu0 %v6605
        %v6695 = vpop.f32.mrb[0].mxu0
        %v6696 = vadd.f32 0.0, %v6695
        %v6697 = vpop.f32.mrb[0].mxu0
        %6698 = vmatprep.mubr.f32.mxu0 0.0
        %6699 = vmatmul.mubr.f32.gmra.mrb[0].mxu0 %v6604
        %v6700 = vpop.f32.mrb[0].mxu0
        %v6701 = vadd.f32 0.0, %v6700
        %v6702 = vpop.f32.mrb[0].mxu0
        %6703 = vmatprep.mubr.f32.mxu0 0.0
        %6704 = vmatmul.mubr.f32.gmra.mrb[0].mxu0 %v6603
        %v6705 = vpop.f32.mrb[0].mxu0
        %v6706 = vadd.f32 0.0, %v6705
        %v6707 = vpop.f32.mrb[0].mxu0
        %6708 = vmatprep.mubr.f32.mxu0 0.0
        %6709 = vmatmul.mubr.f32.gmra.mrb[0].mxu0 %v6602
        %v6710 = vpop.f32.mrb[0].mxu0
        %v6711 = vadd.f32 0.0, %v6710
        %v6712 = vpop.f32.mrb[0].mxu0
        %6713 = vmatprep.mubr.f32.mxu0 0.0
        %6714 = vmatmul.mubr.f32.gmra.mrb[0].mxu0 %v6601
        %v6715 = vpop.f32.mrb[0].mxu0
        %v6716 = vadd.f32 0.0, %v6715
        %v6717 = vpop.f32.mrb[0].mxu0
        %6718 = vmatprep.mubr.f32.mxu0 0.0
        %6719 = vmatmul.mubr.f32.gmra.mrb[0].mxu0 %v6600
        %v6720 = vpop.f32.mrb[0].mxu0
        %v6721 = vadd.f32 0.0, %v6720
        %v6722 = vpop.f32.mrb[0].mxu0
        %6723 = vmatprep.mubr.f32.mxu0 0.0
        %6724 = vmatmul.mubr.f32.gmra.mrb[0].mxu0 %v6599
        %v6725 = vpop.f32.mrb[0].mxu0
        %v6726 = vadd.f32 0.0, %v6725
        %v6727 = vpop.f32.mrb[0].mxu0
        %6728 = vdwg.mxu0
        %v6729 = vadd.f32 %v6575, %v6691
        %v6730 = vadd.f32 %v6576, %v6696
        %v6731 = vadd.f32 %v6577, %v6701
        %v6732 = vadd.f32 %v6578, %v6706
        %v6733 = vadd.f32 %v6579, %v6711
        %v6734 = vadd.f32 %v6580, %v6716
        %v6735 = vadd.f32 %v6581, %v6721
        %v6736 = vadd.f32 %v6582, %v6726
        %v6737 = vld [vmem:[%s4] sm:$0x1]
        %v6739 = vlaneseq
        %v6740 = vshrl.u32 %v6739, 7
        %v6741 = vsub.s32 0, %v6740
        %v6742 = vrot.slane %v6737, %v6741
        %v6744 = vadd.f32 %v6729, %v6742
        %v6745 = vadd.f32 %v6730, %v6742
        %v6746 = vadd.f32 %v6731, %v6742
        %v6747 = vadd.f32 %v6732, %v6742
        %v6748 = vadd.f32 %v6733, %v6742
        %v6749 = vadd.f32 %v6734, %v6742
        %v6750 = vadd.f32 %v6735, %v6742
        %v6751 = vadd.f32 %v6736, %v6742
        %v6752 = vmax.f32 %v6744, 0.0
        %v6753 = vmax.f32 %v6745, 0.0
        %v6754 = vmax.f32 %v6746, 0.0
        %v6755 = vmax.f32 %v6747, 0.0
        %v6756 = vmax.f32 %v6748, 0.0
        %v6757 = vmax.f32 %v6749, 0.0
        %v6758 = vmax.f32 %v6750, 0.0
        %v6759 = vmax.f32 %v6751, 0.0
        %6760 = vst [vmem:[#allocation4] sm:$0xff] 0.0
        %6761 = vst [vmem:[#allocation4 + $0x8] sm:$0xff] 0.0
        %6762 = vst [vmem:[#allocation4 + $0x10] sm:$0xff] 0.0
        %s6763 = scalar_lea.vmem [#allocation4], 216
        %6764 = vst [vmem:[%s6763] sm:$0xff] 0.0
        %6765 = vst [vmem:[%s6763 + $0x8] sm:$0xff] 0.0
        %6766 = vst [vmem:[%s6763 + $0x10] sm:$0xff] 0.0
        %s6767 = scalar_lea.vmem [#allocation4], 24
        %6768 = vst [vmem:[%s6767] sm:$0xff] 0.0
        %6769 = vst [vmem:[%s6767 + $0x18] sm:$0xff] 0.0
        %6770 = vst [vmem:[%s6767 + $0x30] sm:$0xff] 0.0
        %6771 = vst [vmem:[%s6767 + $0x48] sm:$0xff] 0.0
        %6772 = vst [vmem:[%s6767 + $0x60] sm:$0xff] 0.0
        %6773 = vst [vmem:[%s6767 + $0x78] sm:$0xff] 0.0
        %6774 = vst [vmem:[%s6767 + $0x90] sm:$0xff] 0.0
        %6775 = vst [vmem:[%s6767 + $0xa8] sm:$0xff] 0.0
        %6776 = vst [vmem:[%s6767 + $0x10] sm:$0xff] 0.0
        %6777 = vst [vmem:[%s6767 + $0x28] sm:$0xff] 0.0
        %6778 = vst [vmem:[%s6767 + $0x40] sm:$0xff] 0.0
        %6779 = vst [vmem:[%s6767 + $0x58] sm:$0xff] 0.0
        %6780 = vst [vmem:[%s6767 + $0x70] sm:$0xff] 0.0
        %6781 = vst [vmem:[%s6767 + $0x88] sm:$0xff] 0.0
        %6782 = vst [vmem:[%s6767 + $0xa0] sm:$0xff] 0.0
        %6783 = vst [vmem:[%s6767 + $0xb8] sm:$0xff] 0.0
        %6784 = vst [vmem:[%s6767 + $0x8] sm:$0xff] %v6752
        %6785 = vst [vmem:[%s6767 + $0x20] sm:$0xff] %v6753
        %6786 = vst [vmem:[%s6767 + $0x38] sm:$0xff] %v6754
        %6787 = vst [vmem:[%s6767 + $0x50] sm:$0xff] %v6755
        %6788 = vst [vmem:[%s6767 + $0x68] sm:$0xff] %v6756
        %6789 = vst [vmem:[%s6767 + $0x80] sm:$0xff] %v6757
        %6790 = vst [vmem:[%s6767 + $0x98] sm:$0xff] %v6758
        %6791 = vst [vmem:[%s6767 + $0xb0] sm:$0xff] %v6759
        %v6792 = vld [vmem:[#allocation4] sm:$0xff]
        %v6793 = vld [vmem:[#allocation4 + $0x8] sm:$0xff]
        %v6794 = vld [vmem:[#allocation4 + $0x10] sm:$0xff]
        %v6795 = vld [vmem:[#allocation4 + $0x18] sm:$0xff]
        %v6796 = vld [vmem:[#allocation4 + $0x20] sm:$0xff]
        %v6797 = vld [vmem:[#allocation4 + $0x28] sm:$0xff]
        %v6798 = vld [vmem:[#allocation4 + $0x30] sm:$0xff]
        %v6799 = vld [vmem:[#allocation4 + $0x38] sm:$0xff]
        %v6800 = vld [vmem:[#allocation4 + $0x40] sm:$0xff]
        %v6801 = vld [vmem:[#allocation4 + $0x48] sm:$0xff]
        %v6802 = vld [vmem:[#allocation4 + $0x50] sm:$0xff]
        %v6803 = vld [vmem:[#allocation4 + $0x58] sm:$0xff]
        %v6804 = vld [vmem:[#allocation4 + $0x60] sm:$0xff]
        %v6805 = vld [vmem:[#allocation4 + $0x68] sm:$0xff]
        %v6806 = vld [vmem:[#allocation4 + $0x70] sm:$0xff]
        %v6807 = vld [vmem:[#allocation4 + $0x78] sm:$0xff]
        %v6808 = vld [vmem:[#allocation4 + $0x80] sm:$0xff]
        %v6809 = vld [vmem:[#allocation4 + $0x88] sm:$0xff]
        %v6810 = vld [vmem:[#allocation4 + $0x90] sm:$0xff]
        %v6811 = vld [vmem:[#allocation4 + $0x98] sm:$0xff]
        %v6812 = vld [vmem:[#allocation4 + $0xa0] sm:$0xff]
        %v6813 = vld [vmem:[#allocation4 + $0xa8] sm:$0xff]
        %v6814 = vld [vmem:[#allocation4 + $0xb0] sm:$0xff]
        %v6815 = vld [vmem:[#allocation4 + $0xb8] sm:$0xff]
        %v6816 = vrot.slane %v6792, 7
        %v6817 = vrot.slane %v6793, 7
        %v6818 = vrot.slane %v6795, 7
        %v6819 = vrot.slane %v6796, 7
        %v6820 = vrot.slane %v6798, 7
        %v6821 = vrot.slane %v6799, 7
        %v6822 = vrot.slane %v6801, 7
        %v6823 = vrot.slane %v6802, 7
        %v6824 = vrot.slane %v6804, 7
        %v6825 = vrot.slane %v6805, 7
        %v6826 = vrot.slane %v6807, 7
        %v6827 = vrot.slane %v6808, 7
        %v6828 = vrot.slane %v6810, 7
        %v6829 = vrot.slane %v6811, 7
        %v6830 = vrot.slane %v6813, 7
        %v6831 = vrot.slane %v6814, 7
        %v6832 = vsel %vm528, %v6830, %v6831
        %v6833 = vsel %vm528, %v6828, %v6829
        %v6834 = vsel %vm528, %v6826, %v6827
        %v6835 = vsel %vm528, %v6824, %v6825
        %v6836 = vsel %vm528, %v6822, %v6823
        %v6837 = vsel %vm528, %v6820, %v6821
        %v6838 = vsel %vm528, %v6818, %v6819
        %v6839 = vsel %vm528, %v6816, %v6817
        %v6840 = vld [vmem:[#allocation8] sm:$0xff]
        %v6841 = vld [vmem:[#allocation8 + $0x8] sm:$0xff]
        %v6842 = vld [vmem:[#allocation8 + $0x10] sm:$0xff]
        %v6843 = vld [vmem:[#allocation8 + $0x18] sm:$0xff]
        %v6844 = vld [vmem:[#allocation8 + $0x20] sm:$0xff]
        %v6845 = vld [vmem:[#allocation8 + $0x28] sm:$0xff]
        %v6846 = vld [vmem:[#allocation8 + $0x30] sm:$0xff]
        %v6847 = vld [vmem:[#allocation8 + $0x38] sm:$0xff]
        %v6848 = vld [vmem:[#allocation8 + $0x40] sm:$0xff]
        %v6849 = vld [vmem:[#allocation8 + $0x48] sm:$0xff]
        %v6850 = vld [vmem:[#allocation8 + $0x50] sm:$0xff]
        %v6851 = vld [vmem:[#allocation8 + $0x58] sm:$0xff]
        %v6852 = vld [vmem:[#allocation8 + $0x60] sm:$0xff]
        %v6853 = vld [vmem:[#allocation8 + $0x68] sm:$0xff]
        %v6854 = vld [vmem:[#allocation8 + $0x70] sm:$0xff]
        %v6855 = vld [vmem:[#allocation8 + $0x78] sm:$0xff]
        %s6856 = scalar_lea.vmem [#allocation8], 128
        %v6857 = vld [vmem:[%s6856] sm:$0xff]
        %v6858 = vld [vmem:[%s6856 + $0x8] sm:$0xff]
        %v6859 = vld [vmem:[%s6856 + $0x10] sm:$0xff]
        %v6860 = vld [vmem:[%s6856 + $0x18] sm:$0xff]
        %v6861 = vld [vmem:[%s6856 + $0x20] sm:$0xff]
        %v6862 = vld [vmem:[%s6856 + $0x28] sm:$0xff]
        %v6863 = vld [vmem:[%s6856 + $0x30] sm:$0xff]
        %v6864 = vld [vmem:[%s6856 + $0x38] sm:$0xff]
        %v6865 = vld [vmem:[%s6856 + $0x40] sm:$0xff]
        %v6866 = vld [vmem:[%s6856 + $0x48] sm:$0xff]
        %v6867 = vld [vmem:[%s6856 + $0x50] sm:$0xff]
        %v6868 = vld [vmem:[%s6856 + $0x58] sm:$0xff]
        %v6869 = vld [vmem:[%s6856 + $0x60] sm:$0xff]
        %v6870 = vld [vmem:[%s6856 + $0x68] sm:$0xff]
        %v6871 = vld [vmem:[%s6856 + $0x70] sm:$0xff]
        %v6872 = vld [vmem:[%s6856 + $0x78] sm:$0xff]
        %6873 = vmatprep.subr.mxu0 0.0
        %6874 = vmatpush1.msra.mxu0 %v6857
        %6875 = vmatprep.subr.mxu0 0.0
        %6876 = vmatpush1.msra.mxu0 %v6858
        %6877 = vmatprep.subr.mxu0 0.0
        %6878 = vmatpush1.msra.mxu0 %v6859
        %6879 = vmatprep.subr.mxu0 0.0
        %6880 = vmatpush1.msra.mxu0 %v6860
        %6881 = vmatprep.subr.mxu0 0.0
        %6882 = vmatpush1.msra.mxu0 %v6861
        %6883 = vmatprep.subr.mxu0 0.0
        %6884 = vmatpush1.msra.mxu0 %v6862
        %6885 = vmatprep.subr.mxu0 0.0
        %6886 = vmatpush1.msra.mxu0 %v6863
        %6887 = vmatprep.subr.mxu0 0.0
        %6888 = vmatpush1.msra.mxu0 %v6864
        %6889 = vmatprep.subr.mxu0 0.0
        %6890 = vmatpush1.msra.mxu0 %v6865
        %6891 = vmatprep.subr.mxu0 0.0
        %6892 = vmatpush1.msra.mxu0 %v6866
        %6893 = vmatprep.subr.mxu0 0.0
        %6894 = vmatpush1.msra.mxu0 %v6867
        %6895 = vmatprep.subr.mxu0 0.0
        %6896 = vmatpush1.msra.mxu0 %v6868
        %6897 = vmatprep.subr.mxu0 0.0
        %6898 = vmatpush1.msra.mxu0 %v6869
        %6899 = vmatprep.subr.mxu0 0.0
        %6900 = vmatpush1.msra.mxu0 %v6870
        %6901 = vmatprep.subr.mxu0 0.0
        %6902 = vmatpush1.msra.mxu0 %v6871
        %6903 = vmatprep.subr.mxu0 0.0
        %6904 = vmatpush1.msra.mxu0 %v6872
        %6905 = vmatprep.subr.mxu0 0.0
        %6906 = vmatpush1.msra.mxu0 0.0
        %6907 = vmatprep.subr.mxu0 0.0
        %6908 = vmatpush1.msra.mxu0 0.0
        %6909 = vmatprep.subr.mxu0 0.0
        %6910 = vmatpush1.msra.mxu0 0.0
        %6911 = vmatprep.subr.mxu0 0.0
        %6912 = vmatpush1.msra.mxu0 0.0
        %6913 = vmatprep.subr.mxu0 0.0
        %6914 = vmatpush1.msra.mxu0 0.0
        %6915 = vmatprep.subr.mxu0 0.0
        %6916 = vmatpush1.msra.mxu0 0.0
        %6917 = vmatprep.subr.mxu0 0.0
        %6918 = vmatpush1.msra.mxu0 0.0
        %6919 = vmatprep.subr.mxu0 0.0
        %6920 = vmatpush1.msra.mxu0 0.0
        %6921 = vmatprep.subr.mxu0 0.0
        %6922 = vmatpush1.msra.mxu0 0.0
        %6923 = vmatprep.subr.mxu0 0.0
        %6924 = vmatpush1.msra.mxu0 0.0
        %6925 = vmatprep.subr.mxu0 0.0
        %6926 = vmatpush1.msra.mxu0 0.0
        %6927 = vmatprep.subr.mxu0 0.0
        %6928 = vmatpush1.msra.mxu0 0.0
        %6929 = vmatprep.subr.mxu0 0.0
        %6930 = vmatpush1.msra.mxu0 0.0
        %6931 = vmatprep.subr.mxu0 0.0
        %6932 = vmatpush1.msra.mxu0 0.0
        %6933 = vmatprep.subr.mxu0 0.0
        %6934 = vmatpush1.msra.mxu0 0.0
        %6935 = vmatprep.subr.mxu0 0.0
        %6936 = vmatpush1.msra.mxu0 0.0
        %6937 = vmatprep.mubr.f32.mxu0 0.0
        %6938 = vmatmul.mubr.f32.gmra.mrb[0].mxu0 %v6793
        %v6939 = vpop.f32.mrb[0].mxu0
        %v6940 = vadd.f32 0.0, %v6939
        %v6941 = vpop.f32.mrb[0].mxu0
        %6942 = vmatprep.mubr.f32.mxu0 0.0
        %6943 = vmatmul.mubr.f32.gmra.mrb[0].mxu0 %v6796
        %v6944 = vpop.f32.mrb[0].mxu0
        %v6945 = vadd.f32 0.0, %v6944
        %v6946 = vpop.f32.mrb[0].mxu0
        %6947 = vmatprep.mubr.f32.mxu0 0.0
        %6948 = vmatmul.mubr.f32.gmra.mrb[0].mxu0 %v6799
        %v6949 = vpop.f32.mrb[0].mxu0
        %v6950 = vadd.f32 0.0, %v6949
        %v6951 = vpop.f32.mrb[0].mxu0
        %6952 = vmatprep.mubr.f32.mxu0 0.0
        %6953 = vmatmul.mubr.f32.gmra.mrb[0].mxu0 %v6802
        %v6954 = vpop.f32.mrb[0].mxu0
        %v6955 = vadd.f32 0.0, %v6954
        %v6956 = vpop.f32.mrb[0].mxu0
        %6957 = vmatprep.mubr.f32.mxu0 0.0
        %6958 = vmatmul.mubr.f32.gmra.mrb[0].mxu0 %v6805
        %v6959 = vpop.f32.mrb[0].mxu0
        %v6960 = vadd.f32 0.0, %v6959
        %v6961 = vpop.f32.mrb[0].mxu0
        %6962 = vmatprep.mubr.f32.mxu0 0.0
        %6963 = vmatmul.mubr.f32.gmra.mrb[0].mxu0 %v6808
        %v6964 = vpop.f32.mrb[0].mxu0
        %v6965 = vadd.f32 0.0, %v6964
        %v6966 = vpop.f32.mrb[0].mxu0
        %6967 = vmatprep.mubr.f32.mxu0 0.0
        %6968 = vmatmul.mubr.f32.gmra.mrb[0].mxu0 %v6811
        %v6969 = vpop.f32.mrb[0].mxu0
        %v6970 = vadd.f32 0.0, %v6969
        %v6971 = vpop.f32.mrb[0].mxu0
        %6972 = vmatprep.mubr.f32.mxu0 0.0
        %6973 = vmatmul.mubr.f32.gmra.mrb[0].mxu0 %v6814
        %v6974 = vpop.f32.mrb[0].mxu0
        %v6975 = vadd.f32 0.0, %v6974
        %v6976 = vpop.f32.mrb[0].mxu0
        %6977 = vdwg.mxu0
        %6978 = vmatprep.subr.mxu0 0.0
        %6979 = vmatpush1.msra.mxu0 %v6840
        %6980 = vmatprep.subr.mxu0 0.0
        %6981 = vmatpush1.msra.mxu0 %v6841
        %6982 = vmatprep.subr.mxu0 0.0
        %6983 = vmatpush1.msra.mxu0 %v6842
        %6984 = vmatprep.subr.mxu0 0.0
        %6985 = vmatpush1.msra.mxu0 %v6843
        %6986 = vmatprep.subr.mxu0 0.0
        %6987 = vmatpush1.msra.mxu0 %v6844
        %6988 = vmatprep.subr.mxu0 0.0
        %6989 = vmatpush1.msra.mxu0 %v6845
        %6990 = vmatprep.subr.mxu0 0.0
        %6991 = vmatpush1.msra.mxu0 %v6846
        %6992 = vmatprep.subr.mxu0 0.0
        %6993 = vmatpush1.msra.mxu0 %v6847
        %6994 = vmatprep.subr.mxu0 0.0
        %6995 = vmatpush1.msra.mxu0 %v6848
        %6996 = vmatprep.subr.mxu0 0.0
        %6997 = vmatpush1.msra.mxu0 %v6849
        %6998 = vmatprep.subr.mxu0 0.0
        %6999 = vmatpush1.msra.mxu0 %v6850
        %7000 = vmatprep.subr.mxu0 0.0
        %7001 = vmatpush1.msra.mxu0 %v6851
        %7002 = vmatprep.subr.mxu0 0.0
        %7003 = vmatpush1.msra.mxu0 %v6852
        %7004 = vmatprep.subr.mxu0 0.0
        %7005 = vmatpush1.msra.mxu0 %v6853
        %7006 = vmatprep.subr.mxu0 0.0
        %7007 = vmatpush1.msra.mxu0 %v6854
        %7008 = vmatprep.subr.mxu0 0.0
        %7009 = vmatpush1.msra.mxu0 %v6855
        %7010 = vmatprep.subr.mxu0 0.0
        %7011 = vmatpush1.msra.mxu0 0.0
        %7012 = vmatprep.subr.mxu0 0.0
        %7013 = vmatpush1.msra.mxu0 0.0
        %7014 = vmatprep.subr.mxu0 0.0
        %7015 = vmatpush1.msra.mxu0 0.0
        %7016 = vmatprep.subr.mxu0 0.0
        %7017 = vmatpush1.msra.mxu0 0.0
        %7018 = vmatprep.subr.mxu0 0.0
        %7019 = vmatpush1.msra.mxu0 0.0
        %7020 = vmatprep.subr.mxu0 0.0
        %7021 = vmatpush1.msra.mxu0 0.0
        %7022 = vmatprep.subr.mxu0 0.0
        %7023 = vmatpush1.msra.mxu0 0.0
        %7024 = vmatprep.subr.mxu0 0.0
        %7025 = vmatpush1.msra.mxu0 0.0
        %7026 = vmatprep.subr.mxu0 0.0
        %7027 = vmatpush1.msra.mxu0 0.0
        %7028 = vmatprep.subr.mxu0 0.0
        %7029 = vmatpush1.msra.mxu0 0.0
        %7030 = vmatprep.subr.mxu0 0.0
        %7031 = vmatpush1.msra.mxu0 0.0
        %7032 = vmatprep.subr.mxu0 0.0
        %7033 = vmatpush1.msra.mxu0 0.0
        %7034 = vmatprep.subr.mxu0 0.0
        %7035 = vmatpush1.msra.mxu0 0.0
        %7036 = vmatprep.subr.mxu0 0.0
        %7037 = vmatpush1.msra.mxu0 0.0
        %7038 = vmatprep.subr.mxu0 0.0
        %7039 = vmatpush1.msra.mxu0 0.0
        %7040 = vmatprep.subr.mxu0 0.0
        %7041 = vmatpush1.msra.mxu0 0.0
        %7042 = vmatprep.mubr.f32.mxu0 0.0
        %7043 = vmatmul.mubr.f32.gmra.mrb[0].mxu0 %v6839
        %v7044 = vpop.f32.mrb[0].mxu0
        %v7045 = vadd.f32 %v6940, %v7044
        %v7046 = vpop.f32.mrb[0].mxu0
        %7047 = vmatprep.mubr.f32.mxu0 0.0
        %7048 = vmatmul.mubr.f32.gmra.mrb[0].mxu0 %v6838
        %v7049 = vpop.f32.mrb[0].mxu0
        %v7050 = vadd.f32 %v6945, %v7049
        %v7051 = vpop.f32.mrb[0].mxu0
        %7052 = vmatprep.mubr.f32.mxu0 0.0
        %7053 = vmatmul.mubr.f32.gmra.mrb[0].mxu0 %v6837
        %v7054 = vpop.f32.mrb[0].mxu0
        %v7055 = vadd.f32 %v6950, %v7054
        %v7056 = vpop.f32.mrb[0].mxu0
        %7057 = vmatprep.mubr.f32.mxu0 0.0
        %7058 = vmatmul.mubr.f32.gmra.mrb[0].mxu0 %v6836
        %v7059 = vpop.f32.mrb[0].mxu0
        %v7060 = vadd.f32 %v6955, %v7059
        %v7061 = vpop.f32.mrb[0].mxu0
        %7062 = vmatprep.mubr.f32.mxu0 0.0
        %7063 = vmatmul.mubr.f32.gmra.mrb[0].mxu0 %v6835
        %v7064 = vpop.f32.mrb[0].mxu0
        %v7065 = vadd.f32 %v6960, %v7064
        %v7066 = vpop.f32.mrb[0].mxu0
        %7067 = vmatprep.mubr.f32.mxu0 0.0
        %7068 = vmatmul.mubr.f32.gmra.mrb[0].mxu0 %v6834
        %v7069 = vpop.f32.mrb[0].mxu0
        %v7070 = vadd.f32 %v6965, %v7069
        %v7071 = vpop.f32.mrb[0].mxu0
        %7072 = vmatprep.mubr.f32.mxu0 0.0
        %7073 = vmatmul.mubr.f32.gmra.mrb[0].mxu0 %v6833
        %v7074 = vpop.f32.mrb[0].mxu0
        %v7075 = vadd.f32 %v6970, %v7074
        %v7076 = vpop.f32.mrb[0].mxu0
        %7077 = vmatprep.mubr.f32.mxu0 0.0
        %7078 = vmatmul.mubr.f32.gmra.mrb[0].mxu0 %v6832
        %v7079 = vpop.f32.mrb[0].mxu0
        %v7080 = vadd.f32 %v6975, %v7079
        %v7081 = vpop.f32.mrb[0].mxu0
        %7082 = vdwg.mxu0
        %v7083 = vrot.slane %v6793, 1
        %v7084 = vrot.slane %v6794, 1
        %v7085 = vrot.slane %v6796, 1
        %v7086 = vrot.slane %v6797, 1
        %v7087 = vrot.slane %v6799, 1
        %v7088 = vrot.slane %v6800, 1
        %v7089 = vrot.slane %v6802, 1
        %v7090 = vrot.slane %v6803, 1
        %v7091 = vrot.slane %v6805, 1
        %v7092 = vrot.slane %v6806, 1
        %v7093 = vrot.slane %v6808, 1
        %v7094 = vrot.slane %v6809, 1
        %v7095 = vrot.slane %v6811, 1
        %v7096 = vrot.slane %v6812, 1
        %v7097 = vrot.slane %v6814, 1
        %v7098 = vrot.slane %v6815, 1
        %v7099 = vsel %vm1261, %v7097, %v7098
        %v7100 = vsel %vm1261, %v7095, %v7096
        %v7101 = vsel %vm1261, %v7093, %v7094
        %v7102 = vsel %vm1261, %v7091, %v7092
        %v7103 = vsel %vm1261, %v7089, %v7090
        %v7104 = vsel %vm1261, %v7087, %v7088
        %v7105 = vsel %vm1261, %v7085, %v7086
        %v7106 = vsel %vm1261, %v7083, %v7084
        %s7107 = scalar_lea.vmem [#allocation8], 256
        %v7108 = vld [vmem:[%s7107] sm:$0xff]
        %v7109 = vld [vmem:[%s7107 + $0x8] sm:$0xff]
        %v7110 = vld [vmem:[%s7107 + $0x10] sm:$0xff]
        %v7111 = vld [vmem:[%s7107 + $0x18] sm:$0xff]
        %v7112 = vld [vmem:[%s7107 + $0x20] sm:$0xff]
        %v7113 = vld [vmem:[%s7107 + $0x28] sm:$0xff]
        %v7114 = vld [vmem:[%s7107 + $0x30] sm:$0xff]
        %v7115 = vld [vmem:[%s7107 + $0x38] sm:$0xff]
        %v7116 = vld [vmem:[%s7107 + $0x40] sm:$0xff]
        %v7117 = vld [vmem:[%s7107 + $0x48] sm:$0xff]
        %v7118 = vld [vmem:[%s7107 + $0x50] sm:$0xff]
        %v7119 = vld [vmem:[%s7107 + $0x58] sm:$0xff]
        %v7120 = vld [vmem:[%s7107 + $0x60] sm:$0xff]
        %v7121 = vld [vmem:[%s7107 + $0x68] sm:$0xff]
        %v7122 = vld [vmem:[%s7107 + $0x70] sm:$0xff]
        %v7123 = vld [vmem:[%s7107 + $0x78] sm:$0xff]
        %7124 = vmatprep.subr.mxu0 0.0
        %7125 = vmatpush1.msra.mxu0 %v7108
        %7126 = vmatprep.subr.mxu0 0.0
        %7127 = vmatpush1.msra.mxu0 %v7109
        %7128 = vmatprep.subr.mxu0 0.0
        %7129 = vmatpush1.msra.mxu0 %v7110
        %7130 = vmatprep.subr.mxu0 0.0
        %7131 = vmatpush1.msra.mxu0 %v7111
        %7132 = vmatprep.subr.mxu0 0.0
        %7133 = vmatpush1.msra.mxu0 %v7112
        %7134 = vmatprep.subr.mxu0 0.0
        %7135 = vmatpush1.msra.mxu0 %v7113
        %7136 = vmatprep.subr.mxu0 0.0
        %7137 = vmatpush1.msra.mxu0 %v7114
        %7138 = vmatprep.subr.mxu0 0.0
        %7139 = vmatpush1.msra.mxu0 %v7115
        %7140 = vmatprep.subr.mxu0 0.0
        %7141 = vmatpush1.msra.mxu0 %v7116
        %7142 = vmatprep.subr.mxu0 0.0
        %7143 = vmatpush1.msra.mxu0 %v7117
        %7144 = vmatprep.subr.mxu0 0.0
        %7145 = vmatpush1.msra.mxu0 %v7118
        %7146 = vmatprep.subr.mxu0 0.0
        %7147 = vmatpush1.msra.mxu0 %v7119
        %7148 = vmatprep.subr.mxu0 0.0
        %7149 = vmatpush1.msra.mxu0 %v7120
        %7150 = vmatprep.subr.mxu0 0.0
        %7151 = vmatpush1.msra.mxu0 %v7121
        %7152 = vmatprep.subr.mxu0 0.0
        %7153 = vmatpush1.msra.mxu0 %v7122
        %7154 = vmatprep.subr.mxu0 0.0
        %7155 = vmatpush1.msra.mxu0 %v7123
        %7156 = vmatprep.subr.mxu0 0.0
        %7157 = vmatpush1.msra.mxu0 0.0
        %7158 = vmatprep.subr.mxu0 0.0
        %7159 = vmatpush1.msra.mxu0 0.0
        %7160 = vmatprep.subr.mxu0 0.0
        %7161 = vmatpush1.msra.mxu0 0.0
        %7162 = vmatprep.subr.mxu0 0.0
        %7163 = vmatpush1.msra.mxu0 0.0
        %7164 = vmatprep.subr.mxu0 0.0
        %7165 = vmatpush1.msra.mxu0 0.0
        %7166 = vmatprep.subr.mxu0 0.0
        %7167 = vmatpush1.msra.mxu0 0.0
        %7168 = vmatprep.subr.mxu0 0.0
        %7169 = vmatpush1.msra.mxu0 0.0
        %7170 = vmatprep.subr.mxu0 0.0
        %7171 = vmatpush1.msra.mxu0 0.0
        %7172 = vmatprep.subr.mxu0 0.0
        %7173 = vmatpush1.msra.mxu0 0.0
        %7174 = vmatprep.subr.mxu0 0.0
        %7175 = vmatpush1.msra.mxu0 0.0
        %7176 = vmatprep.subr.mxu0 0.0
        %7177 = vmatpush1.msra.mxu0 0.0
        %7178 = vmatprep.subr.mxu0 0.0
        %7179 = vmatpush1.msra.mxu0 0.0
        %7180 = vmatprep.subr.mxu0 0.0
        %7181 = vmatpush1.msra.mxu0 0.0
        %7182 = vmatprep.subr.mxu0 0.0
        %7183 = vmatpush1.msra.mxu0 0.0
        %7184 = vmatprep.subr.mxu0 0.0
        %7185 = vmatpush1.msra.mxu0 0.0
        %7186 = vmatprep.subr.mxu0 0.0
        %7187 = vmatpush1.msra.mxu0 0.0
        %7188 = vmatprep.mubr.f32.mxu0 0.0
        %7189 = vmatmul.mubr.f32.gmra.mrb[0].mxu0 %v7106
        %v7190 = vpop.f32.mrb[0].mxu0
        %v7191 = vadd.f32 0.0, %v7190
        %v7192 = vpop.f32.mrb[0].mxu0
        %7193 = vmatprep.mubr.f32.mxu0 0.0
        %7194 = vmatmul.mubr.f32.gmra.mrb[0].mxu0 %v7105
        %v7195 = vpop.f32.mrb[0].mxu0
        %v7196 = vadd.f32 0.0, %v7195
        %v7197 = vpop.f32.mrb[0].mxu0
        %7198 = vmatprep.mubr.f32.mxu0 0.0
        %7199 = vmatmul.mubr.f32.gmra.mrb[0].mxu0 %v7104
        %v7200 = vpop.f32.mrb[0].mxu0
        %v7201 = vadd.f32 0.0, %v7200
        %v7202 = vpop.f32.mrb[0].mxu0
        %7203 = vmatprep.mubr.f32.mxu0 0.0
        %7204 = vmatmul.mubr.f32.gmra.mrb[0].mxu0 %v7103
        %v7205 = vpop.f32.mrb[0].mxu0
        %v7206 = vadd.f32 0.0, %v7205
        %v7207 = vpop.f32.mrb[0].mxu0
        %7208 = vmatprep.mubr.f32.mxu0 0.0
        %7209 = vmatmul.mubr.f32.gmra.mrb[0].mxu0 %v7102
        %v7210 = vpop.f32.mrb[0].mxu0
        %v7211 = vadd.f32 0.0, %v7210
        %v7212 = vpop.f32.mrb[0].mxu0
        %7213 = vmatprep.mubr.f32.mxu0 0.0
        %7214 = vmatmul.mubr.f32.gmra.mrb[0].mxu0 %v7101
        %v7215 = vpop.f32.mrb[0].mxu0
        %v7216 = vadd.f32 0.0, %v7215
        %v7217 = vpop.f32.mrb[0].mxu0
        %7218 = vmatprep.mubr.f32.mxu0 0.0
        %7219 = vmatmul.mubr.f32.gmra.mrb[0].mxu0 %v7100
        %v7220 = vpop.f32.mrb[0].mxu0
        %v7221 = vadd.f32 0.0, %v7220
        %v7222 = vpop.f32.mrb[0].mxu0
        %7223 = vmatprep.mubr.f32.mxu0 0.0
        %7224 = vmatmul.mubr.f32.gmra.mrb[0].mxu0 %v7099
        %v7225 = vpop.f32.mrb[0].mxu0
        %v7226 = vadd.f32 0.0, %v7225
        %v7227 = vpop.f32.mrb[0].mxu0
        %7228 = vdwg.mxu0
        %v7229 = vadd.f32 %v7045, %v7191
        %v7230 = vadd.f32 %v7050, %v7196
        %v7231 = vadd.f32 %v7055, %v7201
        %v7232 = vadd.f32 %v7060, %v7206
        %v7233 = vadd.f32 %v7065, %v7211
        %v7234 = vadd.f32 %v7070, %v7216
        %v7235 = vadd.f32 %v7075, %v7221
        %v7236 = vadd.f32 %v7080, %v7226
        %v7237 = vld [vmem:[%s6767] sm:$0xff]
        %v7238 = vld [vmem:[%s6767 + $0x8] sm:$0xff]
        %v7239 = vld [vmem:[%s6767 + $0x10] sm:$0xff]
        %v7240 = vld [vmem:[%s6767 + $0x18] sm:$0xff]
        %v7241 = vld [vmem:[%s6767 + $0x20] sm:$0xff]
        %v7242 = vld [vmem:[%s6767 + $0x28] sm:$0xff]
        %v7243 = vld [vmem:[%s6767 + $0x30] sm:$0xff]
        %v7244 = vld [vmem:[%s6767 + $0x38] sm:$0xff]
        %v7245 = vld [vmem:[%s6767 + $0x40] sm:$0xff]
        %v7246 = vld [vmem:[%s6767 + $0x48] sm:$0xff]
        %v7247 = vld [vmem:[%s6767 + $0x50] sm:$0xff]
        %v7248 = vld [vmem:[%s6767 + $0x58] sm:$0xff]
        %v7249 = vld [vmem:[%s6767 + $0x60] sm:$0xff]
        %v7250 = vld [vmem:[%s6767 + $0x68] sm:$0xff]
        %v7251 = vld [vmem:[%s6767 + $0x70] sm:$0xff]
        %v7252 = vld [vmem:[%s6767 + $0x78] sm:$0xff]
        %v7253 = vld [vmem:[%s6767 + $0x80] sm:$0xff]
        %v7254 = vld [vmem:[%s6767 + $0x88] sm:$0xff]
        %v7255 = vld [vmem:[%s6767 + $0x90] sm:$0xff]
        %v7256 = vld [vmem:[%s6767 + $0x98] sm:$0xff]
        %v7257 = vld [vmem:[%s6767 + $0xa0] sm:$0xff]
        %v7258 = vld [vmem:[%s6767 + $0xa8] sm:$0xff]
        %v7259 = vld [vmem:[%s6767 + $0xb0] sm:$0xff]
        %v7260 = vld [vmem:[%s6767 + $0xb8] sm:$0xff]
        %v7261 = vrot.slane %v7237, 7
        %v7262 = vrot.slane %v7238, 7
        %v7263 = vrot.slane %v7240, 7
        %v7264 = vrot.slane %v7241, 7
        %v7265 = vrot.slane %v7243, 7
        %v7266 = vrot.slane %v7244, 7
        %v7267 = vrot.slane %v7246, 7
        %v7268 = vrot.slane %v7247, 7
        %v7269 = vrot.slane %v7249, 7
        %v7270 = vrot.slane %v7250, 7
        %v7271 = vrot.slane %v7252, 7
        %v7272 = vrot.slane %v7253, 7
        %v7273 = vrot.slane %v7255, 7
        %v7274 = vrot.slane %v7256, 7
        %v7275 = vrot.slane %v7258, 7
        %v7276 = vrot.slane %v7259, 7
        %v7277 = vsel %vm528, %v7275, %v7276
        %v7278 = vsel %vm528, %v7273, %v7274
        %v7279 = vsel %vm528, %v7271, %v7272
        %v7280 = vsel %vm528, %v7269, %v7270
        %v7281 = vsel %vm528, %v7267, %v7268
        %v7282 = vsel %vm528, %v7265, %v7266
        %v7283 = vsel %vm528, %v7263, %v7264
        %v7284 = vsel %vm528, %v7261, %v7262
        %s7285 = scalar_lea.vmem [#allocation8], 384
        %v7286 = vld [vmem:[%s7285] sm:$0xff]
        %v7287 = vld [vmem:[%s7285 + $0x8] sm:$0xff]
        %v7288 = vld [vmem:[%s7285 + $0x10] sm:$0xff]
        %v7289 = vld [vmem:[%s7285 + $0x18] sm:$0xff]
        %v7290 = vld [vmem:[%s7285 + $0x20] sm:$0xff]
        %v7291 = vld [vmem:[%s7285 + $0x28] sm:$0xff]
        %v7292 = vld [vmem:[%s7285 + $0x30] sm:$0xff]
        %v7293 = vld [vmem:[%s7285 + $0x38] sm:$0xff]
        %v7294 = vld [vmem:[%s7285 + $0x40] sm:$0xff]
        %v7295 = vld [vmem:[%s7285 + $0x48] sm:$0xff]
        %v7296 = vld [vmem:[%s7285 + $0x50] sm:$0xff]
        %v7297 = vld [vmem:[%s7285 + $0x58] sm:$0xff]
        %v7298 = vld [vmem:[%s7285 + $0x60] sm:$0xff]
        %v7299 = vld [vmem:[%s7285 + $0x68] sm:$0xff]
        %v7300 = vld [vmem:[%s7285 + $0x70] sm:$0xff]
        %v7301 = vld [vmem:[%s7285 + $0x78] sm:$0xff]
        %7302 = vmatprep.subr.mxu0 0.0
        %7303 = vmatpush1.msra.mxu0 %v7286
        %7304 = vmatprep.subr.mxu0 0.0
        %7305 = vmatpush1.msra.mxu0 %v7287
        %7306 = vmatprep.subr.mxu0 0.0
        %7307 = vmatpush1.msra.mxu0 %v7288
        %7308 = vmatprep.subr.mxu0 0.0
        %7309 = vmatpush1.msra.mxu0 %v7289
        %7310 = vmatprep.subr.mxu0 0.0
        %7311 = vmatpush1.msra.mxu0 %v7290
        %7312 = vmatprep.subr.mxu0 0.0
        %7313 = vmatpush1.msra.mxu0 %v7291
        %7314 = vmatprep.subr.mxu0 0.0
        %7315 = vmatpush1.msra.mxu0 %v7292
        %7316 = vmatprep.subr.mxu0 0.0
        %7317 = vmatpush1.msra.mxu0 %v7293
        %7318 = vmatprep.subr.mxu0 0.0
        %7319 = vmatpush1.msra.mxu0 %v7294
        %7320 = vmatprep.subr.mxu0 0.0
        %7321 = vmatpush1.msra.mxu0 %v7295
        %7322 = vmatprep.subr.mxu0 0.0
        %7323 = vmatpush1.msra.mxu0 %v7296
        %7324 = vmatprep.subr.mxu0 0.0
        %7325 = vmatpush1.msra.mxu0 %v7297
        %7326 = vmatprep.subr.mxu0 0.0
        %7327 = vmatpush1.msra.mxu0 %v7298
        %7328 = vmatprep.subr.mxu0 0.0
        %7329 = vmatpush1.msra.mxu0 %v7299
        %7330 = vmatprep.subr.mxu0 0.0
        %7331 = vmatpush1.msra.mxu0 %v7300
        %7332 = vmatprep.subr.mxu0 0.0
        %7333 = vmatpush1.msra.mxu0 %v7301
        %7334 = vmatprep.subr.mxu0 0.0
        %7335 = vmatpush1.msra.mxu0 0.0
        %7336 = vmatprep.subr.mxu0 0.0
        %7337 = vmatpush1.msra.mxu0 0.0
        %7338 = vmatprep.subr.mxu0 0.0
        %7339 = vmatpush1.msra.mxu0 0.0
        %7340 = vmatprep.subr.mxu0 0.0
        %7341 = vmatpush1.msra.mxu0 0.0
        %7342 = vmatprep.subr.mxu0 0.0
        %7343 = vmatpush1.msra.mxu0 0.0
        %7344 = vmatprep.subr.mxu0 0.0
        %7345 = vmatpush1.msra.mxu0 0.0
        %7346 = vmatprep.subr.mxu0 0.0
        %7347 = vmatpush1.msra.mxu0 0.0
        %7348 = vmatprep.subr.mxu0 0.0
        %7349 = vmatpush1.msra.mxu0 0.0
        %7350 = vmatprep.subr.mxu0 0.0
        %7351 = vmatpush1.msra.mxu0 0.0
        %7352 = vmatprep.subr.mxu0 0.0
        %7353 = vmatpush1.msra.mxu0 0.0
        %7354 = vmatprep.subr.mxu0 0.0
        %7355 = vmatpush1.msra.mxu0 0.0
        %7356 = vmatprep.subr.mxu0 0.0
        %7357 = vmatpush1.msra.mxu0 0.0
        %7358 = vmatprep.subr.mxu0 0.0
        %7359 = vmatpush1.msra.mxu0 0.0
        %7360 = vmatprep.subr.mxu0 0.0
        %7361 = vmatpush1.msra.mxu0 0.0
        %7362 = vmatprep.subr.mxu0 0.0
        %7363 = vmatpush1.msra.mxu0 0.0
        %7364 = vmatprep.subr.mxu0 0.0
        %7365 = vmatpush1.msra.mxu0 0.0
        %7366 = vmatprep.mubr.f32.mxu0 0.0
        %7367 = vmatmul.mubr.f32.gmra.mrb[0].mxu0 %v7284
        %v7368 = vpop.f32.mrb[0].mxu0
        %v7369 = vadd.f32 0.0, %v7368
        %v7370 = vpop.f32.mrb[0].mxu0
        %7371 = vmatprep.mubr.f32.mxu0 0.0
        %7372 = vmatmul.mubr.f32.gmra.mrb[0].mxu0 %v7283
        %v7373 = vpop.f32.mrb[0].mxu0
        %v7374 = vadd.f32 0.0, %v7373
        %v7375 = vpop.f32.mrb[0].mxu0
        %7376 = vmatprep.mubr.f32.mxu0 0.0
        %7377 = vmatmul.mubr.f32.gmra.mrb[0].mxu0 %v7282
        %v7378 = vpop.f32.mrb[0].mxu0
        %v7379 = vadd.f32 0.0, %v7378
        %v7380 = vpop.f32.mrb[0].mxu0
        %7381 = vmatprep.mubr.f32.mxu0 0.0
        %7382 = vmatmul.mubr.f32.gmra.mrb[0].mxu0 %v7281
        %v7383 = vpop.f32.mrb[0].mxu0
        %v7384 = vadd.f32 0.0, %v7383
        %v7385 = vpop.f32.mrb[0].mxu0
        %7386 = vmatprep.mubr.f32.mxu0 0.0
        %7387 = vmatmul.mubr.f32.gmra.mrb[0].mxu0 %v7280
        %v7388 = vpop.f32.mrb[0].mxu0
        %v7389 = vadd.f32 0.0, %v7388
        %v7390 = vpop.f32.mrb[0].mxu0
        %7391 = vmatprep.mubr.f32.mxu0 0.0
        %7392 = vmatmul.mubr.f32.gmra.mrb[0].mxu0 %v7279
        %v7393 = vpop.f32.mrb[0].mxu0
        %v7394 = vadd.f32 0.0, %v7393
        %v7395 = vpop.f32.mrb[0].mxu0
        %7396 = vmatprep.mubr.f32.mxu0 0.0
        %7397 = vmatmul.mubr.f32.gmra.mrb[0].mxu0 %v7278
        %v7398 = vpop.f32.mrb[0].mxu0
        %v7399 = vadd.f32 0.0, %v7398
        %v7400 = vpop.f32.mrb[0].mxu0
        %7401 = vmatprep.mubr.f32.mxu0 0.0
        %7402 = vmatmul.mubr.f32.gmra.mrb[0].mxu0 %v7277
        %v7403 = vpop.f32.mrb[0].mxu0
        %v7404 = vadd.f32 0.0, %v7403
        %v7405 = vpop.f32.mrb[0].mxu0
        %7406 = vdwg.mxu0
        %v7407 = vadd.f32 %v7229, %v7369
        %v7408 = vadd.f32 %v7230, %v7374
        %v7409 = vadd.f32 %v7231, %v7379
        %v7410 = vadd.f32 %v7232, %v7384
        %v7411 = vadd.f32 %v7233, %v7389
        %v7412 = vadd.f32 %v7234, %v7394
        %v7413 = vadd.f32 %v7235, %v7399
        %v7414 = vadd.f32 %v7236, %v7404
        %s7415 = scalar_lea.vmem [#allocation8], 512
        %v7416 = vld [vmem:[%s7415] sm:$0xff]
        %v7417 = vld [vmem:[%s7415 + $0x8] sm:$0xff]
        %v7418 = vld [vmem:[%s7415 + $0x10] sm:$0xff]
        %v7419 = vld [vmem:[%s7415 + $0x18] sm:$0xff]
        %v7420 = vld [vmem:[%s7415 + $0x20] sm:$0xff]
        %v7421 = vld [vmem:[%s7415 + $0x28] sm:$0xff]
        %v7422 = vld [vmem:[%s7415 + $0x30] sm:$0xff]
        %v7423 = vld [vmem:[%s7415 + $0x38] sm:$0xff]
        %v7424 = vld [vmem:[%s7415 + $0x40] sm:$0xff]
        %v7425 = vld [vmem:[%s7415 + $0x48] sm:$0xff]
        %v7426 = vld [vmem:[%s7415 + $0x50] sm:$0xff]
        %v7427 = vld [vmem:[%s7415 + $0x58] sm:$0xff]
        %v7428 = vld [vmem:[%s7415 + $0x60] sm:$0xff]
        %v7429 = vld [vmem:[%s7415 + $0x68] sm:$0xff]
        %v7430 = vld [vmem:[%s7415 + $0x70] sm:$0xff]
        %v7431 = vld [vmem:[%s7415 + $0x78] sm:$0xff]
        %7432 = vmatprep.subr.mxu0 0.0
        %7433 = vmatpush1.msra.mxu0 %v7416
        %7434 = vmatprep.subr.mxu0 0.0
        %7435 = vmatpush1.msra.mxu0 %v7417
        %7436 = vmatprep.subr.mxu0 0.0
        %7437 = vmatpush1.msra.mxu0 %v7418
        %7438 = vmatprep.subr.mxu0 0.0
        %7439 = vmatpush1.msra.mxu0 %v7419
        %7440 = vmatprep.subr.mxu0 0.0
        %7441 = vmatpush1.msra.mxu0 %v7420
        %7442 = vmatprep.subr.mxu0 0.0
        %7443 = vmatpush1.msra.mxu0 %v7421
        %7444 = vmatprep.subr.mxu0 0.0
        %7445 = vmatpush1.msra.mxu0 %v7422
        %7446 = vmatprep.subr.mxu0 0.0
        %7447 = vmatpush1.msra.mxu0 %v7423
        %7448 = vmatprep.subr.mxu0 0.0
        %7449 = vmatpush1.msra.mxu0 %v7424
        %7450 = vmatprep.subr.mxu0 0.0
        %7451 = vmatpush1.msra.mxu0 %v7425
        %7452 = vmatprep.subr.mxu0 0.0
        %7453 = vmatpush1.msra.mxu0 %v7426
        %7454 = vmatprep.subr.mxu0 0.0
        %7455 = vmatpush1.msra.mxu0 %v7427
        %7456 = vmatprep.subr.mxu0 0.0
        %7457 = vmatpush1.msra.mxu0 %v7428
        %7458 = vmatprep.subr.mxu0 0.0
        %7459 = vmatpush1.msra.mxu0 %v7429
        %7460 = vmatprep.subr.mxu0 0.0
        %7461 = vmatpush1.msra.mxu0 %v7430
        %7462 = vmatprep.subr.mxu0 0.0
        %7463 = vmatpush1.msra.mxu0 %v7431
        %7464 = vmatprep.subr.mxu0 0.0
        %7465 = vmatpush1.msra.mxu0 0.0
        %7466 = vmatprep.subr.mxu0 0.0
        %7467 = vmatpush1.msra.mxu0 0.0
        %7468 = vmatprep.subr.mxu0 0.0
        %7469 = vmatpush1.msra.mxu0 0.0
        %7470 = vmatprep.subr.mxu0 0.0
        %7471 = vmatpush1.msra.mxu0 0.0
        %7472 = vmatprep.subr.mxu0 0.0
        %7473 = vmatpush1.msra.mxu0 0.0
        %7474 = vmatprep.subr.mxu0 0.0
        %7475 = vmatpush1.msra.mxu0 0.0
        %7476 = vmatprep.subr.mxu0 0.0
        %7477 = vmatpush1.msra.mxu0 0.0
        %7478 = vmatprep.subr.mxu0 0.0
        %7479 = vmatpush1.msra.mxu0 0.0
        %7480 = vmatprep.subr.mxu0 0.0
        %7481 = vmatpush1.msra.mxu0 0.0
        %7482 = vmatprep.subr.mxu0 0.0
        %7483 = vmatpush1.msra.mxu0 0.0
        %7484 = vmatprep.subr.mxu0 0.0
        %7485 = vmatpush1.msra.mxu0 0.0
        %7486 = vmatprep.subr.mxu0 0.0
        %7487 = vmatpush1.msra.mxu0 0.0
        %7488 = vmatprep.subr.mxu0 0.0
        %7489 = vmatpush1.msra.mxu0 0.0
        %7490 = vmatprep.subr.mxu0 0.0
        %7491 = vmatpush1.msra.mxu0 0.0
        %7492 = vmatprep.subr.mxu0 0.0
        %7493 = vmatpush1.msra.mxu0 0.0
        %7494 = vmatprep.subr.mxu0 0.0
        %7495 = vmatpush1.msra.mxu0 0.0
        %7496 = vmatprep.mubr.f32.mxu0 0.0
        %7497 = vmatmul.mubr.f32.gmra.mrb[0].mxu0 %v7238
        %v7498 = vpop.f32.mrb[0].mxu0
        %v7499 = vadd.f32 0.0, %v7498
        %v7500 = vpop.f32.mrb[0].mxu0
        %7501 = vmatprep.mubr.f32.mxu0 0.0
        %7502 = vmatmul.mubr.f32.gmra.mrb[0].mxu0 %v7241
        %v7503 = vpop.f32.mrb[0].mxu0
        %v7504 = vadd.f32 0.0, %v7503
        %v7505 = vpop.f32.mrb[0].mxu0
        %7506 = vmatprep.mubr.f32.mxu0 0.0
        %7507 = vmatmul.mubr.f32.gmra.mrb[0].mxu0 %v7244
        %v7508 = vpop.f32.mrb[0].mxu0
        %v7509 = vadd.f32 0.0, %v7508
        %v7510 = vpop.f32.mrb[0].mxu0
        %7511 = vmatprep.mubr.f32.mxu0 0.0
        %7512 = vmatmul.mubr.f32.gmra.mrb[0].mxu0 %v7247
        %v7513 = vpop.f32.mrb[0].mxu0
        %v7514 = vadd.f32 0.0, %v7513
        %v7515 = vpop.f32.mrb[0].mxu0
        %7516 = vmatprep.mubr.f32.mxu0 0.0
        %7517 = vmatmul.mubr.f32.gmra.mrb[0].mxu0 %v7250
        %v7518 = vpop.f32.mrb[0].mxu0
        %v7519 = vadd.f32 0.0, %v7518
        %v7520 = vpop.f32.mrb[0].mxu0
        %7521 = vmatprep.mubr.f32.mxu0 0.0
        %7522 = vmatmul.mubr.f32.gmra.mrb[0].mxu0 %v7253
        %v7523 = vpop.f32.mrb[0].mxu0
        %v7524 = vadd.f32 0.0, %v7523
        %v7525 = vpop.f32.mrb[0].mxu0
        %7526 = vmatprep.mubr.f32.mxu0 0.0
        %7527 = vmatmul.mubr.f32.gmra.mrb[0].mxu0 %v7256
        %v7528 = vpop.f32.mrb[0].mxu0
        %v7529 = vadd.f32 0.0, %v7528
        %v7530 = vpop.f32.mrb[0].mxu0
        %7531 = vmatprep.mubr.f32.mxu0 0.0
        %7532 = vmatmul.mubr.f32.gmra.mrb[0].mxu0 %v7259
        %v7533 = vpop.f32.mrb[0].mxu0
        %v7534 = vadd.f32 0.0, %v7533
        %v7535 = vpop.f32.mrb[0].mxu0
        %7536 = vdwg.mxu0
        %v7537 = vadd.f32 %v7407, %v7499
        %v7538 = vadd.f32 %v7408, %v7504
        %v7539 = vadd.f32 %v7409, %v7509
        %v7540 = vadd.f32 %v7410, %v7514
        %v7541 = vadd.f32 %v7411, %v7519
        %v7542 = vadd.f32 %v7412, %v7524
        %v7543 = vadd.f32 %v7413, %v7529
        %v7544 = vadd.f32 %v7414, %v7534
        %v7545 = vrot.slane %v7238, 1
        %v7546 = vrot.slane %v7239, 1
        %v7547 = vrot.slane %v7241, 1
        %v7548 = vrot.slane %v7242, 1
        %v7549 = vrot.slane %v7244, 1
        %v7550 = vrot.slane %v7245, 1
        %v7551 = vrot.slane %v7247, 1
        %v7552 = vrot.slane %v7248, 1
        %v7553 = vrot.slane %v7250, 1
        %v7554 = vrot.slane %v7251, 1
        %v7555 = vrot.slane %v7253, 1
        %v7556 = vrot.slane %v7254, 1
        %v7557 = vrot.slane %v7256, 1
        %v7558 = vrot.slane %v7257, 1
        %v7559 = vrot.slane %v7259, 1
        %v7560 = vrot.slane %v7260, 1
        %v7561 = vsel %vm1261, %v7559, %v7560
        %v7562 = vsel %vm1261, %v7557, %v7558
        %v7563 = vsel %vm1261, %v7555, %v7556
        %v7564 = vsel %vm1261, %v7553, %v7554
        %v7565 = vsel %vm1261, %v7551, %v7552
        %v7566 = vsel %vm1261, %v7549, %v7550
        %v7567 = vsel %vm1261, %v7547, %v7548
        %v7568 = vsel %vm1261, %v7545, %v7546
        %s7569 = scalar_lea.vmem [#allocation8], 640
        %v7570 = vld [vmem:[%s7569] sm:$0xff]
        %v7571 = vld [vmem:[%s7569 + $0x8] sm:$0xff]
        %v7572 = vld [vmem:[%s7569 + $0x10] sm:$0xff]
        %v7573 = vld [vmem:[%s7569 + $0x18] sm:$0xff]
        %v7574 = vld [vmem:[%s7569 + $0x20] sm:$0xff]
        %v7575 = vld [vmem:[%s7569 + $0x28] sm:$0xff]
        %v7576 = vld [vmem:[%s7569 + $0x30] sm:$0xff]
        %v7577 = vld [vmem:[%s7569 + $0x38] sm:$0xff]
        %v7578 = vld [vmem:[%s7569 + $0x40] sm:$0xff]
        %v7579 = vld [vmem:[%s7569 + $0x48] sm:$0xff]
        %v7580 = vld [vmem:[%s7569 + $0x50] sm:$0xff]
        %v7581 = vld [vmem:[%s7569 + $0x58] sm:$0xff]
        %v7582 = vld [vmem:[%s7569 + $0x60] sm:$0xff]
        %v7583 = vld [vmem:[%s7569 + $0x68] sm:$0xff]
        %v7584 = vld [vmem:[%s7569 + $0x70] sm:$0xff]
        %v7585 = vld [vmem:[%s7569 + $0x78] sm:$0xff]
        %7586 = vmatprep.subr.mxu0 0.0
        %7587 = vmatpush1.msra.mxu0 %v7570
        %7588 = vmatprep.subr.mxu0 0.0
        %7589 = vmatpush1.msra.mxu0 %v7571
        %7590 = vmatprep.subr.mxu0 0.0
        %7591 = vmatpush1.msra.mxu0 %v7572
        %7592 = vmatprep.subr.mxu0 0.0
        %7593 = vmatpush1.msra.mxu0 %v7573
        %7594 = vmatprep.subr.mxu0 0.0
        %7595 = vmatpush1.msra.mxu0 %v7574
        %7596 = vmatprep.subr.mxu0 0.0
        %7597 = vmatpush1.msra.mxu0 %v7575
        %7598 = vmatprep.subr.mxu0 0.0
        %7599 = vmatpush1.msra.mxu0 %v7576
        %7600 = vmatprep.subr.mxu0 0.0
        %7601 = vmatpush1.msra.mxu0 %v7577
        %7602 = vmatprep.subr.mxu0 0.0
        %7603 = vmatpush1.msra.mxu0 %v7578
        %7604 = vmatprep.subr.mxu0 0.0
        %7605 = vmatpush1.msra.mxu0 %v7579
        %7606 = vmatprep.subr.mxu0 0.0
        %7607 = vmatpush1.msra.mxu0 %v7580
        %7608 = vmatprep.subr.mxu0 0.0
        %7609 = vmatpush1.msra.mxu0 %v7581
        %7610 = vmatprep.subr.mxu0 0.0
        %7611 = vmatpush1.msra.mxu0 %v7582
        %7612 = vmatprep.subr.mxu0 0.0
        %7613 = vmatpush1.msra.mxu0 %v7583
        %7614 = vmatprep.subr.mxu0 0.0
        %7615 = vmatpush1.msra.mxu0 %v7584
        %7616 = vmatprep.subr.mxu0 0.0
        %7617 = vmatpush1.msra.mxu0 %v7585
        %7618 = vmatprep.subr.mxu0 0.0
        %7619 = vmatpush1.msra.mxu0 0.0
        %7620 = vmatprep.subr.mxu0 0.0
        %7621 = vmatpush1.msra.mxu0 0.0
        %7622 = vmatprep.subr.mxu0 0.0
        %7623 = vmatpush1.msra.mxu0 0.0
        %7624 = vmatprep.subr.mxu0 0.0
        %7625 = vmatpush1.msra.mxu0 0.0
        %7626 = vmatprep.subr.mxu0 0.0
        %7627 = vmatpush1.msra.mxu0 0.0
        %7628 = vmatprep.subr.mxu0 0.0
        %7629 = vmatpush1.msra.mxu0 0.0
        %7630 = vmatprep.subr.mxu0 0.0
        %7631 = vmatpush1.msra.mxu0 0.0
        %7632 = vmatprep.subr.mxu0 0.0
        %7633 = vmatpush1.msra.mxu0 0.0
        %7634 = vmatprep.subr.mxu0 0.0
        %7635 = vmatpush1.msra.mxu0 0.0
        %7636 = vmatprep.subr.mxu0 0.0
        %7637 = vmatpush1.msra.mxu0 0.0
        %7638 = vmatprep.subr.mxu0 0.0
        %7639 = vmatpush1.msra.mxu0 0.0
        %7640 = vmatprep.subr.mxu0 0.0
        %7641 = vmatpush1.msra.mxu0 0.0
        %7642 = vmatprep.subr.mxu0 0.0
        %7643 = vmatpush1.msra.mxu0 0.0
        %7644 = vmatprep.subr.mxu0 0.0
        %7645 = vmatpush1.msra.mxu0 0.0
        %7646 = vmatprep.subr.mxu0 0.0
        %7647 = vmatpush1.msra.mxu0 0.0
        %7648 = vmatprep.subr.mxu0 0.0
        %7649 = vmatpush1.msra.mxu0 0.0
        %7650 = vmatprep.mubr.f32.mxu0 0.0
        %7651 = vmatmul.mubr.f32.gmra.mrb[0].mxu0 %v7568
        %v7652 = vpop.f32.mrb[0].mxu0
        %v7653 = vadd.f32 0.0, %v7652
        %v7654 = vpop.f32.mrb[0].mxu0
        %7655 = vmatprep.mubr.f32.mxu0 0.0
        %7656 = vmatmul.mubr.f32.gmra.mrb[0].mxu0 %v7567
        %v7657 = vpop.f32.mrb[0].mxu0
        %v7658 = vadd.f32 0.0, %v7657
        %v7659 = vpop.f32.mrb[0].mxu0
        %7660 = vmatprep.mubr.f32.mxu0 0.0
        %7661 = vmatmul.mubr.f32.gmra.mrb[0].mxu0 %v7566
        %v7662 = vpop.f32.mrb[0].mxu0
        %v7663 = vadd.f32 0.0, %v7662
        %v7664 = vpop.f32.mrb[0].mxu0
        %7665 = vmatprep.mubr.f32.mxu0 0.0
        %7666 = vmatmul.mubr.f32.gmra.mrb[0].mxu0 %v7565
        %v7667 = vpop.f32.mrb[0].mxu0
        %v7668 = vadd.f32 0.0, %v7667
        %v7669 = vpop.f32.mrb[0].mxu0
        %7670 = vmatprep.mubr.f32.mxu0 0.0
        %7671 = vmatmul.mubr.f32.gmra.mrb[0].mxu0 %v7564
        %v7672 = vpop.f32.mrb[0].mxu0
        %v7673 = vadd.f32 0.0, %v7672
        %v7674 = vpop.f32.mrb[0].mxu0
        %7675 = vmatprep.mubr.f32.mxu0 0.0
        %7676 = vmatmul.mubr.f32.gmra.mrb[0].mxu0 %v7563
        %v7677 = vpop.f32.mrb[0].mxu0
        %v7678 = vadd.f32 0.0, %v7677
        %v7679 = vpop.f32.mrb[0].mxu0
        %7680 = vmatprep.mubr.f32.mxu0 0.0
        %7681 = vmatmul.mubr.f32.gmra.mrb[0].mxu0 %v7562
        %v7682 = vpop.f32.mrb[0].mxu0
        %v7683 = vadd.f32 0.0, %v7682
        %v7684 = vpop.f32.mrb[0].mxu0
        %7685 = vmatprep.mubr.f32.mxu0 0.0
        %7686 = vmatmul.mubr.f32.gmra.mrb[0].mxu0 %v7561
        %v7687 = vpop.f32.mrb[0].mxu0
        %v7688 = vadd.f32 0.0, %v7687
        %v7689 = vpop.f32.mrb[0].mxu0
        %7690 = vdwg.mxu0
        %v7691 = vadd.f32 %v7537, %v7653
        %v7692 = vadd.f32 %v7538, %v7658
        %v7693 = vadd.f32 %v7539, %v7663
        %v7694 = vadd.f32 %v7540, %v7668
        %v7695 = vadd.f32 %v7541, %v7673
        %v7696 = vadd.f32 %v7542, %v7678
        %v7697 = vadd.f32 %v7543, %v7683
        %v7698 = vadd.f32 %v7544, %v7688
        %s7699 = scalar_lea.vmem [#allocation4], 48
        %v7700 = vld [vmem:[%s7699] sm:$0xff]
        %v7701 = vld [vmem:[%s7699 + $0x8] sm:$0xff]
        %v7702 = vld [vmem:[%s7699 + $0x10] sm:$0xff]
        %v7703 = vld [vmem:[%s7699 + $0x18] sm:$0xff]
        %v7704 = vld [vmem:[%s7699 + $0x20] sm:$0xff]
        %v7705 = vld [vmem:[%s7699 + $0x28] sm:$0xff]
        %v7706 = vld [vmem:[%s7699 + $0x30] sm:$0xff]
        %v7707 = vld [vmem:[%s7699 + $0x38] sm:$0xff]
        %v7708 = vld [vmem:[%s7699 + $0x40] sm:$0xff]
        %v7709 = vld [vmem:[%s7699 + $0x48] sm:$0xff]
        %v7710 = vld [vmem:[%s7699 + $0x50] sm:$0xff]
        %v7711 = vld [vmem:[%s7699 + $0x58] sm:$0xff]
        %v7712 = vld [vmem:[%s7699 + $0x60] sm:$0xff]
        %v7713 = vld [vmem:[%s7699 + $0x68] sm:$0xff]
        %v7714 = vld [vmem:[%s7699 + $0x70] sm:$0xff]
        %v7715 = vld [vmem:[%s7699 + $0x78] sm:$0xff]
        %v7716 = vld [vmem:[%s7699 + $0x80] sm:$0xff]
        %v7717 = vld [vmem:[%s7699 + $0x88] sm:$0xff]
        %v7718 = vld [vmem:[%s7699 + $0x90] sm:$0xff]
        %v7719 = vld [vmem:[%s7699 + $0x98] sm:$0xff]
        %v7720 = vld [vmem:[%s7699 + $0xa0] sm:$0xff]
        %v7721 = vld [vmem:[%s7699 + $0xa8] sm:$0xff]
        %v7722 = vld [vmem:[%s7699 + $0xb0] sm:$0xff]
        %v7723 = vld [vmem:[%s7699 + $0xb8] sm:$0xff]
        %v7724 = vrot.slane %v7700, 7
        %v7725 = vrot.slane %v7701, 7
        %v7726 = vrot.slane %v7703, 7
        %v7727 = vrot.slane %v7704, 7
        %v7728 = vrot.slane %v7706, 7
        %v7729 = vrot.slane %v7707, 7
        %v7730 = vrot.slane %v7709, 7
        %v7731 = vrot.slane %v7710, 7
        %v7732 = vrot.slane %v7712, 7
        %v7733 = vrot.slane %v7713, 7
        %v7734 = vrot.slane %v7715, 7
        %v7735 = vrot.slane %v7716, 7
        %v7736 = vrot.slane %v7718, 7
        %v7737 = vrot.slane %v7719, 7
        %v7738 = vrot.slane %v7721, 7
        %v7739 = vrot.slane %v7722, 7
        %v7740 = vsel %vm528, %v7738, %v7739
        %v7741 = vsel %vm528, %v7736, %v7737
        %v7742 = vsel %vm528, %v7734, %v7735
        %v7743 = vsel %vm528, %v7732, %v7733
        %v7744 = vsel %vm528, %v7730, %v7731
        %v7745 = vsel %vm528, %v7728, %v7729
        %v7746 = vsel %vm528, %v7726, %v7727
        %v7747 = vsel %vm528, %v7724, %v7725
        %s7748 = scalar_lea.vmem [#allocation8], 768
        %v7749 = vld [vmem:[%s7748] sm:$0xff]
        %v7750 = vld [vmem:[%s7748 + $0x8] sm:$0xff]
        %v7751 = vld [vmem:[%s7748 + $0x10] sm:$0xff]
        %v7752 = vld [vmem:[%s7748 + $0x18] sm:$0xff]
        %v7753 = vld [vmem:[%s7748 + $0x20] sm:$0xff]
        %v7754 = vld [vmem:[%s7748 + $0x28] sm:$0xff]
        %v7755 = vld [vmem:[%s7748 + $0x30] sm:$0xff]
        %v7756 = vld [vmem:[%s7748 + $0x38] sm:$0xff]
        %v7757 = vld [vmem:[%s7748 + $0x40] sm:$0xff]
        %v7758 = vld [vmem:[%s7748 + $0x48] sm:$0xff]
        %v7759 = vld [vmem:[%s7748 + $0x50] sm:$0xff]
        %v7760 = vld [vmem:[%s7748 + $0x58] sm:$0xff]
        %v7761 = vld [vmem:[%s7748 + $0x60] sm:$0xff]
        %v7762 = vld [vmem:[%s7748 + $0x68] sm:$0xff]
        %v7763 = vld [vmem:[%s7748 + $0x70] sm:$0xff]
        %v7764 = vld [vmem:[%s7748 + $0x78] sm:$0xff]
        %7765 = vmatprep.subr.mxu0 0.0
        %7766 = vmatpush1.msra.mxu0 %v7749
        %7767 = vmatprep.subr.mxu0 0.0
        %7768 = vmatpush1.msra.mxu0 %v7750
        %7769 = vmatprep.subr.mxu0 0.0
        %7770 = vmatpush1.msra.mxu0 %v7751
        %7771 = vmatprep.subr.mxu0 0.0
        %7772 = vmatpush1.msra.mxu0 %v7752
        %7773 = vmatprep.subr.mxu0 0.0
        %7774 = vmatpush1.msra.mxu0 %v7753
        %7775 = vmatprep.subr.mxu0 0.0
        %7776 = vmatpush1.msra.mxu0 %v7754
        %7777 = vmatprep.subr.mxu0 0.0
        %7778 = vmatpush1.msra.mxu0 %v7755
        %7779 = vmatprep.subr.mxu0 0.0
        %7780 = vmatpush1.msra.mxu0 %v7756
        %7781 = vmatprep.subr.mxu0 0.0
        %7782 = vmatpush1.msra.mxu0 %v7757
        %7783 = vmatprep.subr.mxu0 0.0
        %7784 = vmatpush1.msra.mxu0 %v7758
        %7785 = vmatprep.subr.mxu0 0.0
        %7786 = vmatpush1.msra.mxu0 %v7759
        %7787 = vmatprep.subr.mxu0 0.0
        %7788 = vmatpush1.msra.mxu0 %v7760
        %7789 = vmatprep.subr.mxu0 0.0
        %7790 = vmatpush1.msra.mxu0 %v7761
        %7791 = vmatprep.subr.mxu0 0.0
        %7792 = vmatpush1.msra.mxu0 %v7762
        %7793 = vmatprep.subr.mxu0 0.0
        %7794 = vmatpush1.msra.mxu0 %v7763
        %7795 = vmatprep.subr.mxu0 0.0
        %7796 = vmatpush1.msra.mxu0 %v7764
        %7797 = vmatprep.subr.mxu0 0.0
        %7798 = vmatpush1.msra.mxu0 0.0
        %7799 = vmatprep.subr.mxu0 0.0
        %7800 = vmatpush1.msra.mxu0 0.0
        %7801 = vmatprep.subr.mxu0 0.0
        %7802 = vmatpush1.msra.mxu0 0.0
        %7803 = vmatprep.subr.mxu0 0.0
        %7804 = vmatpush1.msra.mxu0 0.0
        %7805 = vmatprep.subr.mxu0 0.0
        %7806 = vmatpush1.msra.mxu0 0.0
        %7807 = vmatprep.subr.mxu0 0.0
        %7808 = vmatpush1.msra.mxu0 0.0
        %7809 = vmatprep.subr.mxu0 0.0
        %7810 = vmatpush1.msra.mxu0 0.0
        %7811 = vmatprep.subr.mxu0 0.0
        %7812 = vmatpush1.msra.mxu0 0.0
        %7813 = vmatprep.subr.mxu0 0.0
        %7814 = vmatpush1.msra.mxu0 0.0
        %7815 = vmatprep.subr.mxu0 0.0
        %7816 = vmatpush1.msra.mxu0 0.0
        %7817 = vmatprep.subr.mxu0 0.0
        %7818 = vmatpush1.msra.mxu0 0.0
        %7819 = vmatprep.subr.mxu0 0.0
        %7820 = vmatpush1.msra.mxu0 0.0
        %7821 = vmatprep.subr.mxu0 0.0
        %7822 = vmatpush1.msra.mxu0 0.0
        %7823 = vmatprep.subr.mxu0 0.0
        %7824 = vmatpush1.msra.mxu0 0.0
        %7825 = vmatprep.subr.mxu0 0.0
        %7826 = vmatpush1.msra.mxu0 0.0
        %7827 = vmatprep.subr.mxu0 0.0
        %7828 = vmatpush1.msra.mxu0 0.0
        %7829 = vmatprep.mubr.f32.mxu0 0.0
        %7830 = vmatmul.mubr.f32.gmra.mrb[0].mxu0 %v7747
        %v7831 = vpop.f32.mrb[0].mxu0
        %v7832 = vadd.f32 0.0, %v7831
        %v7833 = vpop.f32.mrb[0].mxu0
        %7834 = vmatprep.mubr.f32.mxu0 0.0
        %7835 = vmatmul.mubr.f32.gmra.mrb[0].mxu0 %v7746
        %v7836 = vpop.f32.mrb[0].mxu0
        %v7837 = vadd.f32 0.0, %v7836
        %v7838 = vpop.f32.mrb[0].mxu0
        %7839 = vmatprep.mubr.f32.mxu0 0.0
        %7840 = vmatmul.mubr.f32.gmra.mrb[0].mxu0 %v7745
        %v7841 = vpop.f32.mrb[0].mxu0
        %v7842 = vadd.f32 0.0, %v7841
        %v7843 = vpop.f32.mrb[0].mxu0
        %7844 = vmatprep.mubr.f32.mxu0 0.0
        %7845 = vmatmul.mubr.f32.gmra.mrb[0].mxu0 %v7744
        %v7846 = vpop.f32.mrb[0].mxu0
        %v7847 = vadd.f32 0.0, %v7846
        %v7848 = vpop.f32.mrb[0].mxu0
        %7849 = vmatprep.mubr.f32.mxu0 0.0
        %7850 = vmatmul.mubr.f32.gmra.mrb[0].mxu0 %v7743
        %v7851 = vpop.f32.mrb[0].mxu0
        %v7852 = vadd.f32 0.0, %v7851
        %v7853 = vpop.f32.mrb[0].mxu0
        %7854 = vmatprep.mubr.f32.mxu0 0.0
        %7855 = vmatmul.mubr.f32.gmra.mrb[0].mxu0 %v7742
        %v7856 = vpop.f32.mrb[0].mxu0
        %v7857 = vadd.f32 0.0, %v7856
        %v7858 = vpop.f32.mrb[0].mxu0
        %7859 = vmatprep.mubr.f32.mxu0 0.0
        %7860 = vmatmul.mubr.f32.gmra.mrb[0].mxu0 %v7741
        %v7861 = vpop.f32.mrb[0].mxu0
        %v7862 = vadd.f32 0.0, %v7861
        %v7863 = vpop.f32.mrb[0].mxu0
        %7864 = vmatprep.mubr.f32.mxu0 0.0
        %7865 = vmatmul.mubr.f32.gmra.mrb[0].mxu0 %v7740
        %v7866 = vpop.f32.mrb[0].mxu0
        %v7867 = vadd.f32 0.0, %v7866
        %v7868 = vpop.f32.mrb[0].mxu0
        %7869 = vdwg.mxu0
        %v7870 = vadd.f32 %v7691, %v7832
        %v7871 = vadd.f32 %v7692, %v7837
        %v7872 = vadd.f32 %v7693, %v7842
        %v7873 = vadd.f32 %v7694, %v7847
        %v7874 = vadd.f32 %v7695, %v7852
        %v7875 = vadd.f32 %v7696, %v7857
        %v7876 = vadd.f32 %v7697, %v7862
        %v7877 = vadd.f32 %v7698, %v7867
        %s7878 = scalar_lea.vmem [#allocation8], 896
        %v7879 = vld [vmem:[%s7878] sm:$0xff]
        %v7880 = vld [vmem:[%s7878 + $0x8] sm:$0xff]
        %v7881 = vld [vmem:[%s7878 + $0x10] sm:$0xff]
        %v7882 = vld [vmem:[%s7878 + $0x18] sm:$0xff]
        %v7883 = vld [vmem:[%s7878 + $0x20] sm:$0xff]
        %v7884 = vld [vmem:[%s7878 + $0x28] sm:$0xff]
        %v7885 = vld [vmem:[%s7878 + $0x30] sm:$0xff]
        %v7886 = vld [vmem:[%s7878 + $0x38] sm:$0xff]
        %v7887 = vld [vmem:[%s7878 + $0x40] sm:$0xff]
        %v7888 = vld [vmem:[%s7878 + $0x48] sm:$0xff]
        %v7889 = vld [vmem:[%s7878 + $0x50] sm:$0xff]
        %v7890 = vld [vmem:[%s7878 + $0x58] sm:$0xff]
        %v7891 = vld [vmem:[%s7878 + $0x60] sm:$0xff]
        %v7892 = vld [vmem:[%s7878 + $0x68] sm:$0xff]
        %v7893 = vld [vmem:[%s7878 + $0x70] sm:$0xff]
        %v7894 = vld [vmem:[%s7878 + $0x78] sm:$0xff]
        %7895 = vmatprep.subr.mxu0 0.0
        %7896 = vmatpush1.msra.mxu0 %v7879
        %7897 = vmatprep.subr.mxu0 0.0
        %7898 = vmatpush1.msra.mxu0 %v7880
        %7899 = vmatprep.subr.mxu0 0.0
        %7900 = vmatpush1.msra.mxu0 %v7881
        %7901 = vmatprep.subr.mxu0 0.0
        %7902 = vmatpush1.msra.mxu0 %v7882
        %7903 = vmatprep.subr.mxu0 0.0
        %7904 = vmatpush1.msra.mxu0 %v7883
        %7905 = vmatprep.subr.mxu0 0.0
        %7906 = vmatpush1.msra.mxu0 %v7884
        %7907 = vmatprep.subr.mxu0 0.0
        %7908 = vmatpush1.msra.mxu0 %v7885
        %7909 = vmatprep.subr.mxu0 0.0
        %7910 = vmatpush1.msra.mxu0 %v7886
        %7911 = vmatprep.subr.mxu0 0.0
        %7912 = vmatpush1.msra.mxu0 %v7887
        %7913 = vmatprep.subr.mxu0 0.0
        %7914 = vmatpush1.msra.mxu0 %v7888
        %7915 = vmatprep.subr.mxu0 0.0
        %7916 = vmatpush1.msra.mxu0 %v7889
        %7917 = vmatprep.subr.mxu0 0.0
        %7918 = vmatpush1.msra.mxu0 %v7890
        %7919 = vmatprep.subr.mxu0 0.0
        %7920 = vmatpush1.msra.mxu0 %v7891
        %7921 = vmatprep.subr.mxu0 0.0
        %7922 = vmatpush1.msra.mxu0 %v7892
        %7923 = vmatprep.subr.mxu0 0.0
        %7924 = vmatpush1.msra.mxu0 %v7893
        %7925 = vmatprep.subr.mxu0 0.0
        %7926 = vmatpush1.msra.mxu0 %v7894
        %7927 = vmatprep.subr.mxu0 0.0
        %7928 = vmatpush1.msra.mxu0 0.0
        %7929 = vmatprep.subr.mxu0 0.0
        %7930 = vmatpush1.msra.mxu0 0.0
        %7931 = vmatprep.subr.mxu0 0.0
        %7932 = vmatpush1.msra.mxu0 0.0
        %7933 = vmatprep.subr.mxu0 0.0
        %7934 = vmatpush1.msra.mxu0 0.0
        %7935 = vmatprep.subr.mxu0 0.0
        %7936 = vmatpush1.msra.mxu0 0.0
        %7937 = vmatprep.subr.mxu0 0.0
        %7938 = vmatpush1.msra.mxu0 0.0
        %7939 = vmatprep.subr.mxu0 0.0
        %7940 = vmatpush1.msra.mxu0 0.0
        %7941 = vmatprep.subr.mxu0 0.0
        %7942 = vmatpush1.msra.mxu0 0.0
        %7943 = vmatprep.subr.mxu0 0.0
        %7944 = vmatpush1.msra.mxu0 0.0
        %7945 = vmatprep.subr.mxu0 0.0
        %7946 = vmatpush1.msra.mxu0 0.0
        %7947 = vmatprep.subr.mxu0 0.0
        %7948 = vmatpush1.msra.mxu0 0.0
        %7949 = vmatprep.subr.mxu0 0.0
        %7950 = vmatpush1.msra.mxu0 0.0
        %7951 = vmatprep.subr.mxu0 0.0
        %7952 = vmatpush1.msra.mxu0 0.0
        %7953 = vmatprep.subr.mxu0 0.0
        %7954 = vmatpush1.msra.mxu0 0.0
        %7955 = vmatprep.subr.mxu0 0.0
        %7956 = vmatpush1.msra.mxu0 0.0
        %7957 = vmatprep.subr.mxu0 0.0
        %7958 = vmatpush1.msra.mxu0 0.0
        %7959 = vmatprep.mubr.f32.mxu0 0.0
        %7960 = vmatmul.mubr.f32.gmra.mrb[0].mxu0 %v7701
        %v7961 = vpop.f32.mrb[0].mxu0
        %v7962 = vadd.f32 0.0, %v7961
        %v7963 = vpop.f32.mrb[0].mxu0
        %7964 = vmatprep.mubr.f32.mxu0 0.0
        %7965 = vmatmul.mubr.f32.gmra.mrb[0].mxu0 %v7704
        %v7966 = vpop.f32.mrb[0].mxu0
        %v7967 = vadd.f32 0.0, %v7966
        %v7968 = vpop.f32.mrb[0].mxu0
        %7969 = vmatprep.mubr.f32.mxu0 0.0
        %7970 = vmatmul.mubr.f32.gmra.mrb[0].mxu0 %v7707
        %v7971 = vpop.f32.mrb[0].mxu0
        %v7972 = vadd.f32 0.0, %v7971
        %v7973 = vpop.f32.mrb[0].mxu0
        %7974 = vmatprep.mubr.f32.mxu0 0.0
        %7975 = vmatmul.mubr.f32.gmra.mrb[0].mxu0 %v7710
        %v7976 = vpop.f32.mrb[0].mxu0
        %v7977 = vadd.f32 0.0, %v7976
        %v7978 = vpop.f32.mrb[0].mxu0
        %7979 = vmatprep.mubr.f32.mxu0 0.0
        %7980 = vmatmul.mubr.f32.gmra.mrb[0].mxu0 %v7713
        %v7981 = vpop.f32.mrb[0].mxu0
        %v7982 = vadd.f32 0.0, %v7981
        %v7983 = vpop.f32.mrb[0].mxu0
        %7984 = vmatprep.mubr.f32.mxu0 0.0
        %7985 = vmatmul.mubr.f32.gmra.mrb[0].mxu0 %v7716
        %v7986 = vpop.f32.mrb[0].mxu0
        %v7987 = vadd.f32 0.0, %v7986
        %v7988 = vpop.f32.mrb[0].mxu0
        %7989 = vmatprep.mubr.f32.mxu0 0.0
        %7990 = vmatmul.mubr.f32.gmra.mrb[0].mxu0 %v7719
        %v7991 = vpop.f32.mrb[0].mxu0
        %v7992 = vadd.f32 0.0, %v7991
        %v7993 = vpop.f32.mrb[0].mxu0
        %7994 = vmatprep.mubr.f32.mxu0 0.0
        %7995 = vmatmul.mubr.f32.gmra.mrb[0].mxu0 %v7722
        %v7996 = vpop.f32.mrb[0].mxu0
        %v7997 = vadd.f32 0.0, %v7996
        %v7998 = vpop.f32.mrb[0].mxu0
        %7999 = vdwg.mxu0
        %v8000 = vadd.f32 %v7870, %v7962
        %v8001 = vadd.f32 %v7871, %v7967
        %v8002 = vadd.f32 %v7872, %v7972
        %v8003 = vadd.f32 %v7873, %v7977
        %v8004 = vadd.f32 %v7874, %v7982
        %v8005 = vadd.f32 %v7875, %v7987
        %v8006 = vadd.f32 %v7876, %v7992
        %v8007 = vadd.f32 %v7877, %v7997
        %v8008 = vrot.slane %v7701, 1
        %v8009 = vrot.slane %v7702, 1
        %v8010 = vrot.slane %v7704, 1
        %v8011 = vrot.slane %v7705, 1
        %v8012 = vrot.slane %v7707, 1
        %v8013 = vrot.slane %v7708, 1
        %v8014 = vrot.slane %v7710, 1
        %v8015 = vrot.slane %v7711, 1
        %v8016 = vrot.slane %v7713, 1
        %v8017 = vrot.slane %v7714, 1
        %v8018 = vrot.slane %v7716, 1
        %v8019 = vrot.slane %v7717, 1
        %v8020 = vrot.slane %v7719, 1
        %v8021 = vrot.slane %v7720, 1
        %v8022 = vrot.slane %v7722, 1
        %v8023 = vrot.slane %v7723, 1
        %v8024 = vsel %vm1261, %v8022, %v8023
        %v8025 = vsel %vm1261, %v8020, %v8021
        %v8026 = vsel %vm1261, %v8018, %v8019
        %v8027 = vsel %vm1261, %v8016, %v8017
        %v8028 = vsel %vm1261, %v8014, %v8015
        %v8029 = vsel %vm1261, %v8012, %v8013
        %v8030 = vsel %vm1261, %v8010, %v8011
        %v8031 = vsel %vm1261, %v8008, %v8009
        %s8032 = scalar_lea.vmem [#allocation8], 1024
        %v8033 = vld [vmem:[%s8032] sm:$0xff]
        %v8034 = vld [vmem:[%s8032 + $0x8] sm:$0xff]
        %v8035 = vld [vmem:[%s8032 + $0x10] sm:$0xff]
        %v8036 = vld [vmem:[%s8032 + $0x18] sm:$0xff]
        %v8037 = vld [vmem:[%s8032 + $0x20] sm:$0xff]
        %v8038 = vld [vmem:[%s8032 + $0x28] sm:$0xff]
        %v8039 = vld [vmem:[%s8032 + $0x30] sm:$0xff]
        %v8040 = vld [vmem:[%s8032 + $0x38] sm:$0xff]
        %v8041 = vld [vmem:[%s8032 + $0x40] sm:$0xff]
        %v8042 = vld [vmem:[%s8032 + $0x48] sm:$0xff]
        %v8043 = vld [vmem:[%s8032 + $0x50] sm:$0xff]
        %v8044 = vld [vmem:[%s8032 + $0x58] sm:$0xff]
        %v8045 = vld [vmem:[%s8032 + $0x60] sm:$0xff]
        %v8046 = vld [vmem:[%s8032 + $0x68] sm:$0xff]
        %v8047 = vld [vmem:[%s8032 + $0x70] sm:$0xff]
        %v8048 = vld [vmem:[%s8032 + $0x78] sm:$0xff]
        %8049 = vmatprep.subr.mxu0 0.0
        %8050 = vmatpush1.msra.mxu0 %v8033
        %8051 = vmatprep.subr.mxu0 0.0
        %8052 = vmatpush1.msra.mxu0 %v8034
        %8053 = vmatprep.subr.mxu0 0.0
        %8054 = vmatpush1.msra.mxu0 %v8035
        %8055 = vmatprep.subr.mxu0 0.0
        %8056 = vmatpush1.msra.mxu0 %v8036
        %8057 = vmatprep.subr.mxu0 0.0
        %8058 = vmatpush1.msra.mxu0 %v8037
        %8059 = vmatprep.subr.mxu0 0.0
        %8060 = vmatpush1.msra.mxu0 %v8038
        %8061 = vmatprep.subr.mxu0 0.0
        %8062 = vmatpush1.msra.mxu0 %v8039
        %8063 = vmatprep.subr.mxu0 0.0
        %8064 = vmatpush1.msra.mxu0 %v8040
        %8065 = vmatprep.subr.mxu0 0.0
        %8066 = vmatpush1.msra.mxu0 %v8041
        %8067 = vmatprep.subr.mxu0 0.0
        %8068 = vmatpush1.msra.mxu0 %v8042
        %8069 = vmatprep.subr.mxu0 0.0
        %8070 = vmatpush1.msra.mxu0 %v8043
        %8071 = vmatprep.subr.mxu0 0.0
        %8072 = vmatpush1.msra.mxu0 %v8044
        %8073 = vmatprep.subr.mxu0 0.0
        %8074 = vmatpush1.msra.mxu0 %v8045
        %8075 = vmatprep.subr.mxu0 0.0
        %8076 = vmatpush1.msra.mxu0 %v8046
        %8077 = vmatprep.subr.mxu0 0.0
        %8078 = vmatpush1.msra.mxu0 %v8047
        %8079 = vmatprep.subr.mxu0 0.0
        %8080 = vmatpush1.msra.mxu0 %v8048
        %8081 = vmatprep.subr.mxu0 0.0
        %8082 = vmatpush1.msra.mxu0 0.0
        %8083 = vmatprep.subr.mxu0 0.0
        %8084 = vmatpush1.msra.mxu0 0.0
        %8085 = vmatprep.subr.mxu0 0.0
        %8086 = vmatpush1.msra.mxu0 0.0
        %8087 = vmatprep.subr.mxu0 0.0
        %8088 = vmatpush1.msra.mxu0 0.0
        %8089 = vmatprep.subr.mxu0 0.0
        %8090 = vmatpush1.msra.mxu0 0.0
        %8091 = vmatprep.subr.mxu0 0.0
        %8092 = vmatpush1.msra.mxu0 0.0
        %8093 = vmatprep.subr.mxu0 0.0
        %8094 = vmatpush1.msra.mxu0 0.0
        %8095 = vmatprep.subr.mxu0 0.0
        %8096 = vmatpush1.msra.mxu0 0.0
        %8097 = vmatprep.subr.mxu0 0.0
        %8098 = vmatpush1.msra.mxu0 0.0
        %8099 = vmatprep.subr.mxu0 0.0
        %8100 = vmatpush1.msra.mxu0 0.0
        %8101 = vmatprep.subr.mxu0 0.0
        %8102 = vmatpush1.msra.mxu0 0.0
        %8103 = vmatprep.subr.mxu0 0.0
        %8104 = vmatpush1.msra.mxu0 0.0
        %8105 = vmatprep.subr.mxu0 0.0
        %8106 = vmatpush1.msra.mxu0 0.0
        %8107 = vmatprep.subr.mxu0 0.0
        %8108 = vmatpush1.msra.mxu0 0.0
        %8109 = vmatprep.subr.mxu0 0.0
        %8110 = vmatpush1.msra.mxu0 0.0
        %8111 = vmatprep.subr.mxu0 0.0
        %8112 = vmatpush1.msra.mxu0 0.0
        %8113 = vmatprep.mubr.f32.mxu0 0.0
        %8114 = vmatmul.mubr.f32.gmra.mrb[0].mxu0 %v8031
        %v8115 = vpop.f32.mrb[0].mxu0
        %v8116 = vadd.f32 0.0, %v8115
        %v8117 = vpop.f32.mrb[0].mxu0
        %8118 = vmatprep.mubr.f32.mxu0 0.0
        %8119 = vmatmul.mubr.f32.gmra.mrb[0].mxu0 %v8030
        %v8120 = vpop.f32.mrb[0].mxu0
        %v8121 = vadd.f32 0.0, %v8120
        %v8122 = vpop.f32.mrb[0].mxu0
        %8123 = vmatprep.mubr.f32.mxu0 0.0
        %8124 = vmatmul.mubr.f32.gmra.mrb[0].mxu0 %v8029
        %v8125 = vpop.f32.mrb[0].mxu0
        %v8126 = vadd.f32 0.0, %v8125
        %v8127 = vpop.f32.mrb[0].mxu0
        %8128 = vmatprep.mubr.f32.mxu0 0.0
        %8129 = vmatmul.mubr.f32.gmra.mrb[0].mxu0 %v8028
        %v8130 = vpop.f32.mrb[0].mxu0
        %v8131 = vadd.f32 0.0, %v8130
        %v8132 = vpop.f32.mrb[0].mxu0
        %8133 = vmatprep.mubr.f32.mxu0 0.0
        %8134 = vmatmul.mubr.f32.gmra.mrb[0].mxu0 %v8027
        %v8135 = vpop.f32.mrb[0].mxu0
        %v8136 = vadd.f32 0.0, %v8135
        %v8137 = vpop.f32.mrb[0].mxu0
        %8138 = vmatprep.mubr.f32.mxu0 0.0
        %8139 = vmatmul.mubr.f32.gmra.mrb[0].mxu0 %v8026
        %v8140 = vpop.f32.mrb[0].mxu0
        %v8141 = vadd.f32 0.0, %v8140
        %v8142 = vpop.f32.mrb[0].mxu0
        %8143 = vmatprep.mubr.f32.mxu0 0.0
        %8144 = vmatmul.mubr.f32.gmra.mrb[0].mxu0 %v8025
        %v8145 = vpop.f32.mrb[0].mxu0
        %v8146 = vadd.f32 0.0, %v8145
        %v8147 = vpop.f32.mrb[0].mxu0
        %8148 = vmatprep.mubr.f32.mxu0 0.0
        %8149 = vmatmul.mubr.f32.gmra.mrb[0].mxu0 %v8024
        %v8150 = vpop.f32.mrb[0].mxu0
        %v8151 = vadd.f32 0.0, %v8150
        %v8152 = vpop.f32.mrb[0].mxu0
        %8153 = vdwg.mxu0
        %v8154 = vadd.f32 %v8000, %v8116
        %v8155 = vadd.f32 %v8001, %v8121
        %v8156 = vadd.f32 %v8002, %v8126
        %v8157 = vadd.f32 %v8003, %v8131
        %v8158 = vadd.f32 %v8004, %v8136
        %v8159 = vadd.f32 %v8005, %v8141
        %v8160 = vadd.f32 %v8006, %v8146
        %v8161 = vadd.f32 %v8007, %v8151
        %v8162 = vld [vmem:[%s6] sm:$0x1]
        %v8164 = vlaneseq
        %v8165 = vshrl.u32 %v8164, 7
        %v8166 = vsub.s32 0, %v8165
        %v8167 = vrot.slane %v8162, %v8166
        %v8169 = vadd.f32 %v8154, %v8167
        %v8170 = vadd.f32 %v8155, %v8167
        %v8171 = vadd.f32 %v8156, %v8167
        %v8172 = vadd.f32 %v8157, %v8167
        %v8173 = vadd.f32 %v8158, %v8167
        %v8174 = vadd.f32 %v8159, %v8167
        %v8175 = vadd.f32 %v8160, %v8167
        %v8176 = vadd.f32 %v8161, %v8167
        %v8177 = vmax.f32 %v8169, 0.0
        %v8178 = vmax.f32 %v8170, 0.0
        %v8179 = vmax.f32 %v8171, 0.0
        %v8180 = vmax.f32 %v8172, 0.0
        %v8181 = vmax.f32 %v8173, 0.0
        %v8182 = vmax.f32 %v8174, 0.0
        %v8183 = vmax.f32 %v8175, 0.0
        %v8184 = vmax.f32 %v8176, 0.0
        %v8185 = vmax.f32 %v8177, %v8178
        %v8186 = vmax.f32 %v8179, %v8180
        %v8187 = vmax.f32 %v8181, %v8182
        %v8188 = vmax.f32 %v8183, %v8184
        %v8193 = vcombine.high %v8185, %v8185
        %v8195 = vunpack.c.l.s4 1983009808
        %v8196 = vunpack.c.0.s8 %v8195
        %v8197 = vlaneseq
        %v8198 = vshrl.u32 %v8197, 7
        %v8199 = vsub.s32 %v8196, %v8198
        %v8200 = vrot.slane %v8185, %v8199
        %v8202 = vunpack.c.l.s4 1983009808
        %v8203 = vunpack.c.0.s8 %v8202
        %v8204 = vlaneseq
        %v8205 = vshrl.u32 %v8204, 7
        %v8206 = vsub.s32 %v8203, %v8205
        %v8207 = vrot.slane %v8193, %v8206
        %v8208 = vcombine.high %v8200, %v8200
        %v8209 = vcombine.high %v8207, %v8207
        %v8210 = vcombine.high %v8186, %v8186
        %v8212 = vunpack.c.l.s4 1983009808
        %v8213 = vunpack.c.0.s8 %v8212
        %v8214 = vlaneseq
        %v8215 = vshrl.u32 %v8214, 7
        %v8216 = vsub.s32 %v8213, %v8215
        %v8217 = vrot.slane %v8186, %v8216
        %v8219 = vunpack.c.l.s4 1983009808
        %v8220 = vunpack.c.0.s8 %v8219
        %v8221 = vlaneseq
        %v8222 = vshrl.u32 %v8221, 7
        %v8223 = vsub.s32 %v8220, %v8222
        %v8224 = vrot.slane %v8210, %v8223
        %v8225 = vcombine.high %v8217, %v8217
        %v8226 = vcombine.high %v8224, %v8224
        %v8227 = vcombine.high %v8187, %v8187
        %v8229 = vunpack.c.l.s4 1983009808
        %v8230 = vunpack.c.0.s8 %v8229
        %v8231 = vlaneseq
        %v8232 = vshrl.u32 %v8231, 7
        %v8233 = vsub.s32 %v8230, %v8232
        %v8234 = vrot.slane %v8187, %v8233
        %v8236 = vunpack.c.l.s4 1983009808
        %v8237 = vunpack.c.0.s8 %v8236
        %v8238 = vlaneseq
        %v8239 = vshrl.u32 %v8238, 7
        %v8240 = vsub.s32 %v8237, %v8239
        %v8241 = vrot.slane %v8227, %v8240
        %v8242 = vcombine.high %v8234, %v8234
        %v8243 = vcombine.high %v8241, %v8241
        %v8244 = vcombine.high %v8188, %v8188
        %v8246 = vunpack.c.l.s4 1983009808
        %v8247 = vunpack.c.0.s8 %v8246
        %v8248 = vlaneseq
        %v8249 = vshrl.u32 %v8248, 7
        %v8250 = vsub.s32 %v8247, %v8249
        %v8251 = vrot.slane %v8188, %v8250
        %v8253 = vunpack.c.l.s4 1983009808
        %v8254 = vunpack.c.0.s8 %v8253
        %v8255 = vlaneseq
        %v8256 = vshrl.u32 %v8255, 7
        %v8257 = vsub.s32 %v8254, %v8256
        %v8258 = vrot.slane %v8244, %v8257
        %v8259 = vcombine.high %v8251, %v8251
        %v8260 = vcombine.high %v8258, %v8258
        %v8277 = vrot.slane %v8200, 7
        %v8278 = vrot.slane %v8277, 2
        %v8279 = vrot.slane %v8208, 7
        %v8280 = vrot.slane %v8279, 2
        %v8281 = vrot.slane %v8207, 7
        %v8282 = vrot.slane %v8281, 2
        %v8283 = vrot.slane %v8209, 7
        %v8284 = vrot.slane %v8283, 2
        %v8285 = vrot.slane %v8217, 7
        %v8286 = vrot.slane %v8285, 2
        %v8287 = vrot.slane %v8225, 7
        %v8288 = vrot.slane %v8287, 2
        %v8289 = vrot.slane %v8224, 7
        %v8290 = vrot.slane %v8289, 2
        %v8291 = vrot.slane %v8226, 7
        %v8292 = vrot.slane %v8291, 2
        %v8293 = vrot.slane %v8234, 7
        %v8294 = vrot.slane %v8293, 2
        %v8295 = vrot.slane %v8242, 7
        %v8296 = vrot.slane %v8295, 2
        %v8297 = vrot.slane %v8241, 7
        %v8298 = vrot.slane %v8297, 2
        %v8299 = vrot.slane %v8243, 7
        %v8300 = vrot.slane %v8299, 2
        %v8301 = vrot.slane %v8251, 7
        %v8302 = vrot.slane %v8301, 2
        %v8303 = vrot.slane %v8259, 7
        %v8304 = vrot.slane %v8303, 2
        %v8305 = vrot.slane %v8258, 7
        %v8306 = vrot.slane %v8305, 2
        %v8307 = vrot.slane %v8260, 7
        %v8308 = vrot.slane %v8307, 2
        %v8325 = vmax.f32 %v8200, %v8278
        %v8326 = vmax.f32 %v8208, %v8280
        %v8327 = vmax.f32 %v8207, %v8282
        %v8328 = vmax.f32 %v8209, %v8284
        %v8329 = vmax.f32 %v8217, %v8286
        %v8330 = vmax.f32 %v8225, %v8288
        %v8331 = vmax.f32 %v8224, %v8290
        %v8332 = vmax.f32 %v8226, %v8292
        %v8333 = vmax.f32 %v8234, %v8294
        %v8334 = vmax.f32 %v8242, %v8296
        %v8335 = vmax.f32 %v8241, %v8298
        %v8336 = vmax.f32 %v8243, %v8300
        %v8337 = vmax.f32 %v8251, %v8302
        %v8338 = vmax.f32 %v8259, %v8304
        %v8339 = vmax.f32 %v8258, %v8306
        %v8340 = vmax.f32 %v8260, %v8308
        %v8357 = vlaneseq
        %v8358 = vshrl.u32 %v8357, 7
        %v8359 = vsub.s32 0, %v8358
        %v8360 = vrot.slane %v8325, %v8359
        %v8361 = vlaneseq
        %v8362 = vshrl.u32 %v8361, 7
        %v8363 = vsub.s32 0, %v8362
        %v8364 = vrot.slane %v8326, %v8363
        %v8365 = vlaneseq
        %v8366 = vshrl.u32 %v8365, 7
        %v8367 = vsub.s32 0, %v8366
        %v8368 = vrot.slane %v8327, %v8367
        %v8369 = vlaneseq
        %v8370 = vshrl.u32 %v8369, 7
        %v8371 = vsub.s32 0, %v8370
        %v8372 = vrot.slane %v8328, %v8371
        %v8373 = vlaneseq
        %v8374 = vshrl.u32 %v8373, 7
        %v8375 = vsub.s32 0, %v8374
        %v8376 = vrot.slane %v8329, %v8375
        %v8377 = vlaneseq
        %v8378 = vshrl.u32 %v8377, 7
        %v8379 = vsub.s32 0, %v8378
        %v8380 = vrot.slane %v8330, %v8379
        %v8381 = vlaneseq
        %v8382 = vshrl.u32 %v8381, 7
        %v8383 = vsub.s32 0, %v8382
        %v8384 = vrot.slane %v8331, %v8383
        %v8385 = vlaneseq
        %v8386 = vshrl.u32 %v8385, 7
        %v8387 = vsub.s32 0, %v8386
        %v8388 = vrot.slane %v8332, %v8387
        %v8389 = vlaneseq
        %v8390 = vshrl.u32 %v8389, 7
        %v8391 = vsub.s32 0, %v8390
        %v8392 = vrot.slane %v8333, %v8391
        %v8393 = vlaneseq
        %v8394 = vshrl.u32 %v8393, 7
        %v8395 = vsub.s32 0, %v8394
        %v8396 = vrot.slane %v8334, %v8395
        %v8397 = vlaneseq
        %v8398 = vshrl.u32 %v8397, 7
        %v8399 = vsub.s32 0, %v8398
        %v8400 = vrot.slane %v8335, %v8399
        %v8401 = vlaneseq
        %v8402 = vshrl.u32 %v8401, 7
        %v8403 = vsub.s32 0, %v8402
        %v8404 = vrot.slane %v8336, %v8403
        %v8405 = vlaneseq
        %v8406 = vshrl.u32 %v8405, 7
        %v8407 = vsub.s32 0, %v8406
        %v8408 = vrot.slane %v8337, %v8407
        %v8409 = vlaneseq
        %v8410 = vshrl.u32 %v8409, 7
        %v8411 = vsub.s32 0, %v8410
        %v8412 = vrot.slane %v8338, %v8411
        %v8413 = vlaneseq
        %v8414 = vshrl.u32 %v8413, 7
        %v8415 = vsub.s32 0, %v8414
        %v8416 = vrot.slane %v8339, %v8415
        %v8417 = vlaneseq
        %v8418 = vshrl.u32 %v8417, 7
        %v8419 = vsub.s32 0, %v8418
        %v8420 = vrot.slane %v8340, %v8419
        %v8421 = vsel %vm5288, %v8364, %v8360
        %v8422 = vsel %vm5290, %v8368, %v8421
        %v8423 = vsel %vm5292, %v8372, %v8422
        %v8424 = vsel %vm5288, %v8380, %v8376
        %v8425 = vsel %vm5290, %v8384, %v8424
        %v8426 = vsel %vm5292, %v8388, %v8425
        %v8427 = vsel %vm5288, %v8396, %v8392
        %v8428 = vsel %vm5290, %v8400, %v8427
        %v8429 = vsel %vm5292, %v8404, %v8428
        %v8430 = vsel %vm5288, %v8412, %v8408
        %v8431 = vsel %vm5290, %v8416, %v8430
        %v8432 = vsel %vm5292, %v8420, %v8431
        %vm8437 = vcmask 125952
        %8438 = vst.msk [vmem:[%s301] sm:$0xf] %vm8437, %v8423
        %8439 = vst.msk [vmem:[%s301 + $0x4] sm:$0xf] %vm8437, %v8426
        %8440 = vst.msk [vmem:[%s301 + $0x8] sm:$0xf] %vm8437, %v8429
        %8441 = vst.msk [vmem:[%s301 + $0xc] sm:$0xf] %vm8437, %v8432
        %s8442 = sand.u32 %s183, 1
        %s8443 = scalar_lea.sflag [#allocation7], %s8442
        %s8444 = sand.u32 %s183, 1
        %s8445 = smul.addr %s8444, 16
        %s8446 = scalar_lea.vmem [#allocation10], %s8445
        // Predicated region
        $region57: #{vgg_no_fc_forward.1} parent=47 // pred_check
          %p8447 = pneg %p193
        $region58: #{vgg_no_fc_forward.1} parent=47 // pred_check_branch
          %8449 = sbr.rel (%p8447) target = $region60
        $region59: #{vgg_no_fc_forward.1} parent=47 // pred_region
          %s8451 = ssub.s32 256, 256
          %8452 = vsyncadd %s8443, %s8451
          %s8453 = smul.addr %s23, 4
          %s8454 = smul.addr %s8453, 64
          %s8455 = scalar_lea.hbm %s7, %s8454
          %s8456 = sshll.u32 %s8446, 4
          %s8457 = int_to_ptr.vmem [resolvable:$true] %s8456
          %8462 = dma.vmem_to_hbm [thread:$0]  %s8457, 256, %s8455, %s8443, 64, 64, 4
        $region60: #{vgg_no_fc_forward.1} parent=47 // pred_fallthru
          _
      $region48: #{vgg_no_fc_forward.1} parent=5 // pred_fallthru
        _
      %p8463 = scmp.le.s32.totalorder 2, %s18
      // Predicated region
      $region61: #{vgg_no_fc_forward.1} parent=5 // pred_check
        %p8464 = pneg %p8463
      $region62: #{vgg_no_fc_forward.1} parent=5 // pred_check_branch
        %8466 = sbr.rel (%p8464) target = $region64
      $region63: #{vgg_no_fc_forward.1} parent=5 // pred_region
        %s8467 = ssub.s32 %s18, 2
        // Predicated region
        $region65: #{vgg_no_fc_forward.1} parent=63 // pred_check
          %p8468 = pneg %p199
        $region66: #{vgg_no_fc_forward.1} parent=63 // pred_check_branch
          %8470 = sbr.rel (%p8468) target = $region68
        $region67: #{vgg_no_fc_forward.1} parent=63 // pred_region
          %s8471 = sand.u32 %s184, 1
          %s8472 = scalar_lea.sflag [#allocation7], %s8471
          %s8473 = sand.u32 %s184, 1
          %s8474 = smul.addr %s8473, 16
          %s8475 = scalar_lea.vmem [#allocation10], %s8474
          %8476 = dma.done %s8472, 256
        $region68: #{vgg_no_fc_forward.1} parent=63 // pred_fallthru
          _
      $region64: #{vgg_no_fc_forward.1} parent=5 // pred_fallthru
        _
    $region6: #{vgg_no_fc_forward.1} parent=1 // loop_footer
      %s22 = sadd.s32 1, %s18
    $region7: #{vgg_no_fc_forward.1} parent=1 // loop_footer_branch
      %17 = sbr.rel target = $region3
    $region8: #{vgg_no_fc_forward.1} parent=1 // loop_exit
      _
    %8477 = vsyncpa [#allocation6], 1
    %s8478 = scalar_lea.sflag [#allocation6], 1
    %8479 = vsyncpa %s8478, 1
    %8480 = vsyncpa [#allocation9], 1
    %8481 = vsyncpa [#allocation7], 1
    %s8482 = scalar_lea.sflag [#allocation7], 1
    %8483 = vsyncpa %s8482, 1

</llo_original>
